<compile_context>
chip_gen: v7x
topology: tpu7x:2x2x1
jax: 0.10.0
libtpu: 0.0.40
codegen_flags: <defaults>
</compile_context>

<pallas_src>
import numpy as np
import jax
import jax.numpy as jnp
from jax.experimental import pallas as pl
from jax.experimental.pallas import tpu as pltpu

_SQRT1_2 = 0.7071067811865476
_LN_EPS = 1e-5


def _gelu_erf(x):
    # exact erf GELU, matching torch.nn.GELU() default
    return 0.5 * x * (1.0 + jax.lax.erf(x * _SQRT1_2))


def _layernorm(v, g, b):
    mu = jnp.mean(v, axis=-1, keepdims=True)
    var = jnp.mean((v - mu) ** 2, axis=-1, keepdims=True)
    return (v - mu) * jax.lax.rsqrt(var + _LN_EPS) * g + b


# ----------------------------------------------------------------------------
# Fused Pallas kernel
# ----------------------------------------------------------------------------

def _make_fused_kernel(spatial_shapes, bs, N, d):
    C = 2 * d
    BF = jnp.bfloat16

    def kernel(src_ref, skip_ref, fc1w_ref, fc1b_ref,
               dw_ref, dwb_ref, pw_ref, pwb_ref,
               fc2w_ref, fc2b_ref, bmat_ref, n1g_ref, n1b_ref,
               l1w_ref, l1b_ref, l2w_ref, l2b_ref, n2g_ref, n2b_ref,
               out_ref, pad_ref):
        # ---- pass 1: per level, fc1 + GELU -> depthwise 3x3 -> pointwise 1x1 -> fc2 ----
        z_chunks = []
        total = jnp.zeros((bs, 1, 1), jnp.float32)   # per-batch running sum for ECA mean
        off = 0
        for i, (h, w) in enumerate(spatial_shapes):
            hw = h * w
            # skip_fc1 + GELU on this level's tokens (MXU: bf16 in / f32 accumulate)
            sk = skip_ref[:, off:off + hw, :].reshape(bs * hw, d)
            x = jnp.dot(sk.astype(BF), fc1w_ref[...],
                        preferred_element_type=jnp.float32) + fc1b_ref[0, :]
            x = _gelu_erf(x)

            # zero-padded halo handled in a VMEM scratch (no wrapper-side jnp.pad)
            pad_ref[...] = jnp.zeros(pad_ref.shape, jnp.float32)
            pad_ref[:, 1:h + 1, 1:w + 1, :] = x.reshape(bs, h, w, C)

            # depthwise 3x3, groups=C: 9 shifted taps on the VPU (bias hoisted out)
            acc = jnp.zeros((bs, h, w, C), jnp.float32)
            for di in range(3):
                for dj in range(3):
                    acc = acc + pad_ref[:, di:di + h, dj:dj + w, :] * dw_ref[i, di * 3 + dj, :]
            acc = acc + dwb_ref[i, :]

            # pointwise 1x1 conv, then skip_fc2 (both per-token -> fused into this level)
            y = jnp.dot(acc.reshape(bs * hw, C).astype(BF), pw_ref[i],
                        preferred_element_type=jnp.float32) + pwb_ref[i, :]
            z = jnp.dot(y.astype(BF), fc2w_ref[...],
                        preferred_element_type=jnp.float32) + fc2b_ref[0, :]
            z3 = z.reshape(bs, hw, d)
            z_chunks.append(z3)
            total = total + jnp.sum(jnp.sum(z3, axis=2, keepdims=True),
                                    axis=1, keepdims=True)
            off += hw

        # ---- ECA: per-batch global mean -> 9-tap conv along batch axis -> sigmoid ----
        mean = total / float(N * d)                                   # (bs,1,1)
        mvec = mean.reshape(1, bs)                                    # (1,bs)
        conv = jnp.sum(bmat_ref[...] * mvec, axis=1, keepdims=True)   # (bs,1)
        sig = jax.nn.sigmoid(conv).reshape(bs, 1, 1)

        # ---- pass 2: residuals + norm1 + FFN + norm2, written straight to the output ----
        off = 0
        for i, (h, w) in enumerate(spatial_shapes):
            hw = h * w
            s = (src_ref[:, off:off + hw, :] + skip_ref[:, off:off + hw, :]
                 + z_chunks[i] * sig)
            s = _layernorm(s, n1g_ref[0, :], n1b_ref[0, :])
            s2 = s.reshape(bs * hw, d)
            hdn = jnp.dot(s2.astype(BF), l1w_ref[...],
                          preferred_element_type=jnp.float32) + l1b_ref[0, :]
            hdn = jnp.maximum(hdn, 0.0)
            ff = jnp.dot(hdn.astype(BF), l2w_ref[...],
                         preferred_element_type=jnp.float32) + l2b_ref[0, :]
            o = _layernorm(s2 + ff, n2g_ref[0, :], n2b_ref[0, :])
            out_ref[:, off:off + hw, :] = o.reshape(bs, hw, d)
            off += hw
        # TODO(synk): add_channel_attention branch (dyrelu + norm_channel) not implemented
        # (module default is add_channel_attention=False).
        # TODO(synk): at real DINO sizes, grid over token tiles ("parallel") with the ECA
        # sum as a cross-tile accumulator and alias the output onto src (input_output_aliases).

    return kernel


# ----------------------------------------------------------------------------
# Wrapper
# ----------------------------------------------------------------------------

def eca_band_matrix(eca_w, bs):
    # Conv1d(1, 1, k=9, pad=4, no bias) applied along the batch axis of the per-batch
    # means (this is exactly what eca_layer does when fed a 3-D (bs, N, d) tensor),
    # expressed as a dense (bs, bs) band matrix:  out[b] = sum_j w[j - b + 4] * mean[j]
    k = jnp.arange(bs)[None, :] - jnp.arange(bs)[:, None] + 4
    valid = (k >= 0) & (k < 9)
    w = eca_w[0]
    return jnp.where(valid, w[jnp.clip(k, 0, 8)], 0.0).astype(jnp.float32)


def skip_encoder_forward(params, src, skip_input, spatial_shapes):
    """Pallas implementation of SkipEncoderLayer.forward (eval mode), one fused kernel.

    src, skip_input : (bs, N, d) float32, with N = sum(h*w over levels).
    spatial_shapes  : static list of (h, w) per level.
    """
    bs, N, d = src.shape
    C = 2 * d
    L = len(spatial_shapes)
    assert N == sum(h * w for h, w in spatial_shapes)
    Hm = max(h for h, _ in spatial_shapes)
    Wm = max(w for _, w in spatial_shapes)
    dffn = params["l1_w"].shape[1]
    BF = jnp.bfloat16

    inputs = (
        src, skip_input,
        params["fc1_w"].astype(BF), params["fc1_b"],
        jnp.stack([params[f"dw{i}_w"] for i in range(L)]),             # (L,9,C) f32 (VPU taps)
        jnp.stack([params[f"dw{i}_b"][0] for i in range(L)]),          # (L,C)
        jnp.stack([params[f"pw{i}_w"] for i in range(L)]).astype(BF),  # (L,C,C) bf16 (MXU)
        jnp.stack([params[f"pw{i}_b"][0] for i in range(L)]),          # (L,C)
        params["fc2_w"].astype(BF), params["fc2_b"],
        eca_band_matrix(params["eca_w"], bs),
        params["n1_g"], params["n1_b"],
        params["l1_w"].astype(BF), params["l1_b"],
        params["l2_w"].astype(BF), params["l2_b"],
        params["n2_g"], params["n2_b"],
    )

    flops = 2 * bs * N * (d * C + 9 * C + C * C + C * d + 2 * d * dffn)
    transcendentals = bs * N * (C + 2) + bs
    bytes_accessed = sum(int(a.size) * a.dtype.itemsize for a in inputs) + bs * N * d * 4

    kernel = _make_fused_kernel(tuple(spatial_shapes), bs, N, d)
    return pl.pallas_call(
        kernel,
        out_shape=jax.ShapeDtypeStruct((bs, N, d), jnp.float32),
        in_specs=[pl.BlockSpec(memory_space=pltpu.MemorySpace.VMEM) for _ in inputs],
        out_specs=pl.BlockSpec(memory_space=pltpu.MemorySpace.VMEM),
        scratch_shapes=[pltpu.VMEM((bs, Hm + 2, Wm + 2, C), jnp.float32)],
        cost_estimate=pl.CostEstimate(flops=flops,
                                      transcendentals=transcendentals,
                                      bytes_accessed=bytes_accessed),
    )(*inputs)


# ----------------------------------------------------------------------------
# Pure-JAX reference (mirrors the kernel's bf16-operand / f32-accumulate matmuls)
# ----------------------------------------------------------------------------

def reference_forward(params, src, skip_input, spatial_shapes):
    bs, N, d = src.shape
    C = 2 * d
    BF = jnp.bfloat16

    def mm(a, w):
        return jnp.dot(a.astype(BF), w.astype(BF), preferred_element_type=jnp.float32)

    x = mm(skip_input, params["fc1_w"]) + params["fc1_b"][0]
    x = _gelu_erf(x)
    outs, off = [], 0
    for i, (h, w) in enumerate(spatial_shapes):
        xi = x[:, off:off + h * w, :].reshape(bs, h, w, C)
        xpad = jnp.pad(xi, ((0, 0), (1, 1), (1, 1), (0, 0)))
        acc = jnp.zeros((bs, h, w, C), jnp.float32)
        for di in range(3):
            for dj in range(3):
                acc = acc + xpad[:, di:di + h, dj:dj + w, :] * params[f"dw{i}_w"][di * 3 + dj]
        acc = acc + params[f"dw{i}_b"][0]
        y = mm(acc.reshape(bs * h * w, C), params[f"pw{i}_w"]) + params[f"pw{i}_b"][0]
        outs.append(y.reshape(bs, h * w, C))
        off += h * w
    x = jnp.concatenate(outs, axis=1)                                  # (bs, N, C)
    z = mm(x.reshape(bs * N, C), params["fc2_w"]) + params["fc2_b"][0]
    z = z.reshape(bs, N, d)
    # eca: per-batch global mean, 9-tap conv over the batch axis, sigmoid scale
    means = jnp.mean(z, axis=(1, 2))
    padm = jnp.pad(means, (4, 4))
    wk = params["eca_w"][0]
    conv = jnp.stack([jnp.sum(wk * jax.lax.dynamic_slice(padm, (b,), (9,)))
                      for b in range(bs)])
    z = z * jax.nn.sigmoid(conv).reshape(bs, 1, 1)
    s = _layernorm(src + skip_input + z, params["n1_g"][0], params["n1_b"][0])
    h1 = jnp.maximum(mm(s.reshape(bs * N, d), params["l1_w"]) + params["l1_b"][0], 0.0)
    s2 = mm(h1, params["l2_w"]) + params["l2_b"][0]
    out = _layernorm(s.reshape(bs * N, d) + s2, params["n2_g"][0], params["n2_b"][0])
    return out.reshape(bs, N, d)


# ----------------------------------------------------------------------------
# Deterministic parameter init (synthetic; shapes follow SkipEncoderLayer.__init__)
# ----------------------------------------------------------------------------

def init_params(key, d, dffn):
    C = 2 * d
    keys = iter(jax.random.split(key, 32))

    def nrm(shape, scale=0.1):
        return (scale * jax.random.normal(next(keys), shape)).astype(jnp.float32)

    p = {"fc1_w": nrm((d, C)), "fc1_b": nrm((1, C), 0.02)}
    for i in range(4):
        p[f"dw{i}_w"] = nrm((9, C))          # depthwise 3x3, groups=C
        p[f"dw{i}_b"] = nrm((1, C), 0.02)
        p[f"pw{i}_w"] = nrm((C, C))          # pointwise 1x1 (Cin, Cout)
        p[f"pw{i}_b"] = nrm((1, C), 0.02)
    p["fc2_w"] = nrm((C, d)); p["fc2_b"] = nrm((1, d), 0.02)
    p["eca_w"] = nrm((1, 9), 0.2)            # Conv1d(1,1,9,bias=False)
    p["n1_g"] = jnp.ones((1, d), jnp.float32); p["n1_b"] = jnp.zeros((1, d), jnp.float32)
    p["l1_w"] = nrm((d, dffn)); p["l1_b"] = nrm((1, dffn), 0.02)
    p["l2_w"] = nrm((dffn, d)); p["l2_b"] = nrm((1, d), 0.02)
    p["n2_g"] = jnp.ones((1, d), jnp.float32); p["n2_b"] = jnp.zeros((1, d), jnp.float32)
    return p


if __name__ == "__main__":
    bs, d, dffn = 2, 32, 64
    spatial_shapes = [(8, 8), (4, 4), (2, 2), (2, 2)]          # 4 levels
    N = sum(h * w for h, w in spatial_shapes)                  # 88

    key = jax.random.PRNGKey(0)
    params = init_params(key, d, dffn)
    k1, k2 = jax.random.split(jax.random.fold_in(key, 123))
    src = jax.random.normal(k1, (bs, N, d), jnp.float32)
    skip_input = jax.random.normal(k2, (bs, N, d), jnp.float32)

    out = skip_encoder_forward(params, src, skip_input, spatial_shapes)
    out = jax.block_until_ready(out)
    assert out.shape == (bs, N, d)

    ref = jax.block_until_ready(reference_forward(params, src, skip_input, spatial_shapes))
    # Kernel and reference both use bf16 MXU operands with f32 accumulation; remaining
    # differences are op-ordering / transcendental-approximation noise.
    np.testing.assert_allclose(np.asarray(out), np.asarray(ref), atol=1e-2, rtol=1e-2)

    print("KERNEL_OK")
</pallas_src>

<mosaic_0001>
module attributes {stable_mosaic.version = 11 : i64} {
  func.func @kernel(%arg0: memref<2x88x32xf32, #tpu.memory_space<vmem>>, %arg1: memref<2x88x32xf32, #tpu.memory_space<vmem>>, %arg2: memref<32x64xbf16, #tpu.memory_space<vmem>>, %arg3: memref<1x64xf32, #tpu.memory_space<vmem>>, %arg4: memref<4x9x64xf32, #tpu.memory_space<vmem>>, %arg5: memref<4x64xf32, #tpu.memory_space<vmem>>, %arg6: memref<4x64x64xbf16, #tpu.memory_space<vmem>>, %arg7: memref<4x64xf32, #tpu.memory_space<vmem>>, %arg8: memref<64x32xbf16, #tpu.memory_space<vmem>>, %arg9: memref<1x32xf32, #tpu.memory_space<vmem>>, %arg10: memref<2x2xf32, #tpu.memory_space<vmem>>, %arg11: memref<1x32xf32, #tpu.memory_space<vmem>>, %arg12: memref<1x32xf32, #tpu.memory_space<vmem>>, %arg13: memref<32x64xbf16, #tpu.memory_space<vmem>>, %arg14: memref<1x64xf32, #tpu.memory_space<vmem>>, %arg15: memref<64x32xbf16, #tpu.memory_space<vmem>>, %arg16: memref<1x32xf32, #tpu.memory_space<vmem>>, %arg17: memref<1x32xf32, #tpu.memory_space<vmem>>, %arg18: memref<1x32xf32, #tpu.memory_space<vmem>>, %arg19: memref<2x88x32xf32, #tpu.memory_space<vmem>>, %arg20: memref<2x10x10x64xf32, #tpu.memory_space<vmem>>) attributes {dimension_semantics = [], scalar_prefetch = 0 : i64, scratch_operands = 1 : i64, tpu.core_type = #tpu.core_type<tc>} {
    %cst = arith.constant 0.000000e+00 : f32
    %0 = vector.broadcast %cst : f32 to vector<2x1x1xf32>
    %c0 = arith.constant 0 : index
    %c0_0 = arith.constant 0 : index
    %c0_1 = arith.constant 0 : index
    %1 = vector.load %arg1[%c0, %c0_0, %c0_1] : memref<2x88x32xf32, #tpu.memory_space<vmem>>, vector<2x64x32xf32>
    %2 = vector.shape_cast %1 : vector<2x64x32xf32> to vector<128x32xf32>
    %3 = arith.truncf %2 : vector<128x32xf32> to vector<128x32xbf16>
    %c0_2 = arith.constant 0 : index
    %c0_3 = arith.constant 0 : index
    %4 = vector.load %arg2[%c0_2, %c0_3] : memref<32x64xbf16, #tpu.memory_space<vmem>>, vector<32x64xbf16>
    %cst_4 = arith.constant dense<0.000000e+00> : vector<128x64xf32>
    %5 = tpu.matmul %3, %4, %cst_4 {dimension_numbers = #tpu.dot_dimension_numbers<[1], [0], [0], [1], [0, 0, 1, 1], [], []>} : vector<128x32xbf16>, vector<32x64xbf16>, vector<128x64xf32> -> vector<128x64xf32>
    %c0_5 = arith.constant 0 : index
    %c0_6 = arith.constant 0 : index
    %6 = vector.load %arg3[%c0_5, %c0_6] : memref<1x64xf32, #tpu.memory_space<vmem>>, vector<1x64xf32>
    %7 = vector.shape_cast %6 : vector<1x64xf32> to vector<64xf32>
    %8 = vector.shape_cast %7 : vector<64xf32> to vector<1x64xf32>
    %9 = vector.broadcast %8 : vector<1x64xf32> to vector<128x64xf32>
    %10 = arith.addf %5, %9 : vector<128x64xf32>
    %cst_7 = arith.constant 5.000000e-01 : f32
    %11 = vector.broadcast %cst_7 : f32 to vector<128x64xf32>
    %12 = arith.mulf %11, %10 : vector<128x64xf32>
    %cst_8 = arith.constant 0.707106769 : f32
    %13 = vector.broadcast %cst_8 : f32 to vector<128x64xf32>
    %14 = arith.mulf %10, %13 : vector<128x64xf32>
    %15 = math.erf %14 : vector<128x64xf32>
    %cst_9 = arith.constant 1.000000e+00 : f32
    %16 = vector.broadcast %cst_9 : f32 to vector<128x64xf32>
    %17 = arith.addf %16, %15 : vector<128x64xf32>
    %18 = arith.mulf %12, %17 : vector<128x64xf32>
    %cst_10 = arith.constant 0.000000e+00 : f32
    %19 = vector.broadcast %cst_10 : f32 to vector<2x10x10x64xf32>
    %c0_11 = arith.constant 0 : index
    %c0_12 = arith.constant 0 : index
    %c0_13 = arith.constant 0 : index
    %c0_14 = arith.constant 0 : index
    %20 = vector.load %arg20[%c0_11, %c0_12, %c0_13, %c0_14] : memref<2x10x10x64xf32, #tpu.memory_space<vmem>>, vector<2x10x10x64xf32>
    tpu.vector_store %arg20[%c0_11, %c0_12, %c0_13, %c0_14], %19 {strides = array<i32>} : memref<2x10x10x64xf32, #tpu.memory_space<vmem>>, vector<2x10x10x64xf32>,
    %21 = vector.shape_cast %18 : vector<128x64xf32> to vector<2x8x8x64xf32>
    %c0_15 = arith.constant 0 : index
    %c1 = arith.constant 1 : index
    %c1_16 = arith.constant 1 : index
    %c0_17 = arith.constant 0 : index
    %22 = vector.load %arg20[%c0_15, %c1, %c1_16, %c0_17] : memref<2x10x10x64xf32, #tpu.memory_space<vmem>>, vector<2x8x8x64xf32>
    tpu.vector_store %arg20[%c0_15, %c1, %c1_16, %c0_17], %21 {strides = array<i32>} : memref<2x10x10x64xf32, #tpu.memory_space<vmem>>, vector<2x8x8x64xf32>,
    %cst_18 = arith.constant 0.000000e+00 : f32
    %23 = vector.broadcast %cst_18 : f32 to vector<2x8x8x64xf32>
    %c0_19 = arith.constant 0 : index
    %c0_20 = arith.constant 0 : index
    %c0_21 = arith.constant 0 : index
    %c0_22 = arith.constant 0 : index
    %24 = vector.load %arg20[%c0_19, %c0_20, %c0_21, %c0_22] : memref<2x10x10x64xf32, #tpu.memory_space<vmem>>, vector<2x8x8x64xf32>
    %c0_23 = arith.constant 0 : index
    %c0_24 = arith.constant 0 : index
    %c0_25 = arith.constant 0 : index
    %25 = vector.load %arg4[%c0_23, %c0_24, %c0_25] : memref<4x9x64xf32, #tpu.memory_space<vmem>>, vector<1x1x64xf32>
    %26 = vector.shape_cast %25 : vector<1x1x64xf32> to vector<64xf32>
    %27 = vector.shape_cast %26 : vector<64xf32> to vector<1x1x1x64xf32>
    %28 = vector.broadcast %27 : vector<1x1x1x64xf32> to vector<2x8x8x64xf32>
    %29 = arith.mulf %24, %28 : vector<2x8x8x64xf32>
    %30 = arith.addf %23, %29 : vector<2x8x8x64xf32>
    %c0_26 = arith.constant 0 : index
    %c0_27 = arith.constant 0 : index
    %c1_28 = arith.constant 1 : index
    %c0_29 = arith.constant 0 : index
    %31 = vector.load %arg20[%c0_26, %c0_27, %c1_28, %c0_29] : memref<2x10x10x64xf32, #tpu.memory_space<vmem>>, vector<2x8x8x64xf32>
    %c0_30 = arith.constant 0 : index
    %c1_31 = arith.constant 1 : index
    %c0_32 = arith.constant 0 : index
    %32 = vector.load %arg4[%c0_30, %c1_31, %c0_32] : memref<4x9x64xf32, #tpu.memory_space<vmem>>, vector<1x1x64xf32>
    %33 = vector.shape_cast %32 : vector<1x1x64xf32> to vector<64xf32>
    %34 = vector.shape_cast %33 : vector<64xf32> to vector<1x1x1x64xf32>
    %35 = vector.broadcast %34 : vector<1x1x1x64xf32> to vector<2x8x8x64xf32>
    %36 = arith.mulf %31, %35 : vector<2x8x8x64xf32>
    %37 = arith.addf %30, %36 : vector<2x8x8x64xf32>
    %c0_33 = arith.constant 0 : index
    %c0_34 = arith.constant 0 : index
    %c2 = arith.constant 2 : index
    %c0_35 = arith.constant 0 : index
    %38 = vector.load %arg20[%c0_33, %c0_34, %c2, %c0_35] : memref<2x10x10x64xf32, #tpu.memory_space<vmem>>, vector<2x8x8x64xf32>
    %c0_36 = arith.constant 0 : index
    %c2_37 = arith.constant 2 : index
    %c0_38 = arith.constant 0 : index
    %39 = vector.load %arg4[%c0_36, %c2_37, %c0_38] : memref<4x9x64xf32, #tpu.memory_space<vmem>>, vector<1x1x64xf32>
    %40 = vector.shape_cast %39 : vector<1x1x64xf32> to vector<64xf32>
    %41 = vector.shape_cast %40 : vector<64xf32> to vector<1x1x1x64xf32>
    %42 = vector.broadcast %41 : vector<1x1x1x64xf32> to vector<2x8x8x64xf32>
    %43 = arith.mulf %38, %42 : vector<2x8x8x64xf32>
    %44 = arith.addf %37, %43 : vector<2x8x8x64xf32>
    %c0_39 = arith.constant 0 : index
    %c1_40 = arith.constant 1 : index
    %c0_41 = arith.constant 0 : index
    %c0_42 = arith.constant 0 : index
    %45 = vector.load %arg20[%c0_39, %c1_40, %c0_41, %c0_42] : memref<2x10x10x64xf32, #tpu.memory_space<vmem>>, vector<2x8x8x64xf32>
    %c0_43 = arith.constant 0 : index
    %c3 = arith.constant 3 : index
    %c0_44 = arith.constant 0 : index
    %46 = vector.load %arg4[%c0_43, %c3, %c0_44] : memref<4x9x64xf32, #tpu.memory_space<vmem>>, vector<1x1x64xf32>
    %47 = vector.shape_cast %46 : vector<1x1x64xf32> to vector<64xf32>
    %48 = vector.shape_cast %47 : vector<64xf32> to vector<1x1x1x64xf32>
    %49 = vector.broadcast %48 : vector<1x1x1x64xf32> to vector<2x8x8x64xf32>
    %50 = arith.mulf %45, %49 : vector<2x8x8x64xf32>
    %51 = arith.addf %44, %50 : vector<2x8x8x64xf32>
    %c0_45 = arith.constant 0 : index
    %c1_46 = arith.constant 1 : index
    %c1_47 = arith.constant 1 : index
    %c0_48 = arith.constant 0 : index
    %52 = vector.load %arg20[%c0_45, %c1_46, %c1_47, %c0_48] : memref<2x10x10x64xf32, #tpu.memory_space<vmem>>, vector<2x8x8x64xf32>
    %c0_49 = arith.constant 0 : index
    %c4 = arith.constant 4 : index
    %c0_50 = arith.constant 0 : index
    %53 = vector.load %arg4[%c0_49, %c4, %c0_50] : memref<4x9x64xf32, #tpu.memory_space<vmem>>, vector<1x1x64xf32>
    %54 = vector.shape_cast %53 : vector<1x1x64xf32> to vector<64xf32>
    %55 = vector.shape_cast %54 : vector<64xf32> to vector<1x1x1x64xf32>
    %56 = vector.broadcast %55 : vector<1x1x1x64xf32> to vector<2x8x8x64xf32>
    %57 = arith.mulf %52, %56 : vector<2x8x8x64xf32>
    %58 = arith.addf %51, %57 : vector<2x8x8x64xf32>
    %c0_51 = arith.constant 0 : index
    %c1_52 = arith.constant 1 : index
    %c2_53 = arith.constant 2 : index
    %c0_54 = arith.constant 0 : index
    %59 = vector.load %arg20[%c0_51, %c1_52, %c2_53, %c0_54] : memref<2x10x10x64xf32, #tpu.memory_space<vmem>>, vector<2x8x8x64xf32>
    %c0_55 = arith.constant 0 : index
    %c5 = arith.constant 5 : index
    %c0_56 = arith.constant 0 : index
    %60 = vector.load %arg4[%c0_55, %c5, %c0_56] : memref<4x9x64xf32, #tpu.memory_space<vmem>>, vector<1x1x64xf32>
    %61 = vector.shape_cast %60 : vector<1x1x64xf32> to vector<64xf32>
    %62 = vector.shape_cast %61 : vector<64xf32> to vector<1x1x1x64xf32>
    %63 = vector.broadcast %62 : vector<1x1x1x64xf32> to vector<2x8x8x64xf32>
    %64 = arith.mulf %59, %63 : vector<2x8x8x64xf32>
    %65 = arith.addf %58, %64 : vector<2x8x8x64xf32>
    %c0_57 = arith.constant 0 : index
    %c2_58 = arith.constant 2 : index
    %c0_59 = arith.constant 0 : index
    %c0_60 = arith.constant 0 : index
    %66 = vector.load %arg20[%c0_57, %c2_58, %c0_59, %c0_60] : memref<2x10x10x64xf32, #tpu.memory_space<vmem>>, vector<2x8x8x64xf32>
    %c0_61 = arith.constant 0 : index
    %c6 = arith.constant 6 : index
    %c0_62 = arith.constant 0 : index
    %67 = vector.load %arg4[%c0_61, %c6, %c0_62] : memref<4x9x64xf32, #tpu.memory_space<vmem>>, vector<1x1x64xf32>
    %68 = vector.shape_cast %67 : vector<1x1x64xf32> to vector<64xf32>
    %69 = vector.shape_cast %68 : vector<64xf32> to vector<1x1x1x64xf32>
    %70 = vector.broadcast %69 : vector<1x1x1x64xf32> to vector<2x8x8x64xf32>
    %71 = arith.mulf %66, %70 : vector<2x8x8x64xf32>
    %72 = arith.addf %65, %71 : vector<2x8x8x64xf32>
    %c0_63 = arith.constant 0 : index
    %c2_64 = arith.constant 2 : index
    %c1_65 = arith.constant 1 : index
    %c0_66 = arith.constant 0 : index
    %73 = vector.load %arg20[%c0_63, %c2_64, %c1_65, %c0_66] : memref<2x10x10x64xf32, #tpu.memory_space<vmem>>, vector<2x8x8x64xf32>
    %c0_67 = arith.constant 0 : index
    %c7 = arith.constant 7 : index
    %c0_68 = arith.constant 0 : index
    %74 = vector.load %arg4[%c0_67, %c7, %c0_68] : memref<4x9x64xf32, #tpu.memory_space<vmem>>, vector<1x1x64xf32>
    %75 = vector.shape_cast %74 : vector<1x1x64xf32> to vector<64xf32>
    %76 = vector.shape_cast %75 : vector<64xf32> to vector<1x1x1x64xf32>
    %77 = vector.broadcast %76 : vector<1x1x1x64xf32> to vector<2x8x8x64xf32>
    %78 = arith.mulf %73, %77 : vector<2x8x8x64xf32>
    %79 = arith.addf %72, %78 : vector<2x8x8x64xf32>
    %c0_69 = arith.constant 0 : index
    %c2_70 = arith.constant 2 : index
    %c2_71 = arith.constant 2 : index
    %c0_72 = arith.constant 0 : index
    %80 = vector.load %arg20[%c0_69, %c2_70, %c2_71, %c0_72] : memref<2x10x10x64xf32, #tpu.memory_space<vmem>>, vector<2x8x8x64xf32>
    %c0_73 = arith.constant 0 : index
    %c8 = arith.constant 8 : index
    %c0_74 = arith.constant 0 : index
    %81 = vector.load %arg4[%c0_73, %c8, %c0_74] : memref<4x9x64xf32, #tpu.memory_space<vmem>>, vector<1x1x64xf32>
    %82 = vector.shape_cast %81 : vector<1x1x64xf32> to vector<64xf32>
    %83 = vector.shape_cast %82 : vector<64xf32> to vector<1x1x1x64xf32>
    %84 = vector.broadcast %83 : vector<1x1x1x64xf32> to vector<2x8x8x64xf32>
    %85 = arith.mulf %80, %84 : vector<2x8x8x64xf32>
    %86 = arith.addf %79, %85 : vector<2x8x8x64xf32>
    %c0_75 = arith.constant 0 : index
    %c0_76 = arith.constant 0 : index
    %87 = vector.load %arg5[%c0_75, %c0_76] : memref<4x64xf32, #tpu.memory_space<vmem>>, vector<1x64xf32>
    %88 = vector.shape_cast %87 : vector<1x64xf32> to vector<64xf32>
    %89 = vector.shape_cast %88 : vector<64xf32> to vector<1x1x1x64xf32>
    %90 = vector.broadcast %89 : vector<1x1x1x64xf32> to vector<2x8x8x64xf32>
    %91 = arith.addf %86, %90 : vector<2x8x8x64xf32>
    %92 = vector.shape_cast %91 : vector<2x8x8x64xf32> to vector<128x64xf32>
    %93 = arith.truncf %92 : vector<128x64xf32> to vector<128x64xbf16>
    %c0_77 = arith.constant 0 : index
    %c0_78 = arith.constant 0 : index
    %c0_79 = arith.constant 0 : index
    %94 = vector.load %arg6[%c0_77, %c0_78, %c0_79] : memref<4x64x64xbf16, #tpu.memory_space<vmem>>, vector<1x64x64xbf16>
    %95 = vector.shape_cast %94 : vector<1x64x64xbf16> to vector<64x64xbf16>
    %cst_80 = arith.constant dense<0.000000e+00> : vector<128x64xf32>
    %96 = tpu.matmul %93, %95, %cst_80 {dimension_numbers = #tpu.dot_dimension_numbers<[1], [0], [0], [1], [0, 0, 1, 1], [], []>} : vector<128x64xbf16>, vector<64x64xbf16>, vector<128x64xf32> -> vector<128x64xf32>
    %c0_81 = arith.constant 0 : index
    %c0_82 = arith.constant 0 : index
    %97 = vector.load %arg7[%c0_81, %c0_82] : memref<4x64xf32, #tpu.memory_space<vmem>>, vector<1x64xf32>
    %98 = vector.shape_cast %97 : vector<1x64xf32> to vector<64xf32>
    %99 = vector.shape_cast %98 : vector<64xf32> to vector<1x64xf32>
    %100 = vector.broadcast %99 : vector<1x64xf32> to vector<128x64xf32>
    %101 = arith.addf %96, %100 : vector<128x64xf32>
    %102 = arith.truncf %101 : vector<128x64xf32> to vector<128x64xbf16>
    %c0_83 = arith.constant 0 : index
    %c0_84 = arith.constant 0 : index
    %103 = vector.load %arg8[%c0_83, %c0_84] : memref<64x32xbf16, #tpu.memory_space<vmem>>, vector<64x32xbf16>
    %cst_85 = arith.constant dense<0.000000e+00> : vector<128x32xf32>
    %104 = tpu.matmul %102, %103, %cst_85 {dimension_numbers = #tpu.dot_dimension_numbers<[1], [0], [0], [1], [0, 0, 1, 1], [], []>} : vector<128x64xbf16>, vector<64x32xbf16>, vector<128x32xf32> -> vector<128x32xf32>
    %c0_86 = arith.constant 0 : index
    %c0_87 = arith.constant 0 : index
    %105 = vector.load %arg9[%c0_86, %c0_87] : memref<1x32xf32, #tpu.memory_space<vmem>>, vector<1x32xf32>
    %106 = vector.shape_cast %105 : vector<1x32xf32> to vector<32xf32>
    %107 = vector.shape_cast %106 : vector<32xf32> to vector<1x32xf32>
    %108 = vector.broadcast %107 : vector<1x32xf32> to vector<128x32xf32>
    %109 = arith.addf %104, %108 : vector<128x32xf32>
    %110 = vector.shape_cast %109 : vector<128x32xf32> to vector<2x64x32xf32>
    %cst_88 = arith.constant dense<0.000000e+00> : vector<2x64xf32>
    %111 = vector.multi_reduction <add>, %110, %cst_88 [2] : vector<2x64x32xf32> to vector<2x64xf32>
    %112 = vector.shape_cast %111 : vector<2x64xf32> to vector<2x64x1xf32>
    %cst_89 = arith.constant dense<0.000000e+00> : vector<2x1xf32>
    %113 = vector.multi_reduction <add>, %112, %cst_89 [1] : vector<2x64x1xf32> to vector<2x1xf32>
    %114 = vector.shape_cast %113 : vector<2x1xf32> to vector<2x1x1xf32>
    %115 = arith.addf %0, %114 : vector<2x1x1xf32>
    %c0_90 = arith.constant 0 : index
    %c64 = arith.constant 64 : index
    %c0_91 = arith.constant 0 : index
    %116 = vector.load %arg1[%c0_90, %c64, %c0_91] : memref<2x88x32xf32, #tpu.memory_space<vmem>>, vector<2x16x32xf32>
    %117 = vector.shape_cast %116 : vector<2x16x32xf32> to vector<32x32xf32>
    %118 = arith.truncf %117 : vector<32x32xf32> to vector<32x32xbf16>
    %c0_92 = arith.constant 0 : index
    %c0_93 = arith.constant 0 : index
    %119 = vector.load %arg2[%c0_92, %c0_93] : memref<32x64xbf16, #tpu.memory_space<vmem>>, vector<32x64xbf16>
    %cst_94 = arith.constant dense<0.000000e+00> : vector<32x64xf32>
    %120 = tpu.matmul %118, %119, %cst_94 {dimension_numbers = #tpu.dot_dimension_numbers<[1], [0], [0], [1], [0, 0, 1, 1], [], []>} : vector<32x32xbf16>, vector<32x64xbf16>, vector<32x64xf32> -> vector<32x64xf32>
    %c0_95 = arith.constant 0 : index
    %c0_96 = arith.constant 0 : index
    %121 = vector.load %arg3[%c0_95, %c0_96] : memref<1x64xf32, #tpu.memory_space<vmem>>, vector<1x64xf32>
    %122 = vector.shape_cast %121 : vector<1x64xf32> to vector<64xf32>
    %123 = vector.shape_cast %122 : vector<64xf32> to vector<1x64xf32>
    %124 = vector.broadcast %123 : vector<1x64xf32> to vector<32x64xf32>
    %125 = arith.addf %120, %124 : vector<32x64xf32>
    %cst_97 = arith.constant 5.000000e-01 : f32
    %126 = vector.broadcast %cst_97 : f32 to vector<32x64xf32>
    %127 = arith.mulf %126, %125 : vector<32x64xf32>
    %cst_98 = arith.constant 0.707106769 : f32
    %128 = vector.broadcast %cst_98 : f32 to vector<32x64xf32>
    %129 = arith.mulf %125, %128 : vector<32x64xf32>
    %130 = math.erf %129 : vector<32x64xf32>
    %cst_99 = arith.constant 1.000000e+00 : f32
    %131 = vector.broadcast %cst_99 : f32 to vector<32x64xf32>
    %132 = arith.addf %131, %130 : vector<32x64xf32>
    %133 = arith.mulf %127, %132 : vector<32x64xf32>
    %cst_100 = arith.constant 0.000000e+00 : f32
    %134 = vector.broadcast %cst_100 : f32 to vector<2x10x10x64xf32>
    %c0_101 = arith.constant 0 : index
    %c0_102 = arith.constant 0 : index
    %c0_103 = arith.constant 0 : index
    %c0_104 = arith.constant 0 : index
    %135 = vector.load %arg20[%c0_101, %c0_102, %c0_103, %c0_104] : memref<2x10x10x64xf32, #tpu.memory_space<vmem>>, vector<2x10x10x64xf32>
    tpu.vector_store %arg20[%c0_101, %c0_102, %c0_103, %c0_104], %134 {strides = array<i32>} : memref<2x10x10x64xf32, #tpu.memory_space<vmem>>, vector<2x10x10x64xf32>,
    %136 = vector.shape_cast %133 : vector<32x64xf32> to vector<2x4x4x64xf32>
    %c0_105 = arith.constant 0 : index
    %c1_106 = arith.constant 1 : index
    %c1_107 = arith.constant 1 : index
    %c0_108 = arith.constant 0 : index
    %137 = vector.load %arg20[%c0_105, %c1_106, %c1_107, %c0_108] : memref<2x10x10x64xf32, #tpu.memory_space<vmem>>, vector<2x4x4x64xf32>
    tpu.vector_store %arg20[%c0_105, %c1_106, %c1_107, %c0_108], %136 {strides = array<i32>} : memref<2x10x10x64xf32, #tpu.memory_space<vmem>>, vector<2x4x4x64xf32>,
    %cst_109 = arith.constant 0.000000e+00 : f32
    %138 = vector.broadcast %cst_109 : f32 to vector<2x4x4x64xf32>
    %c0_110 = arith.constant 0 : index
    %c0_111 = arith.constant 0 : index
    %c0_112 = arith.constant 0 : index
    %c0_113 = arith.constant 0 : index
    %139 = vector.load %arg20[%c0_110, %c0_111, %c0_112, %c0_113] : memref<2x10x10x64xf32, #tpu.memory_space<vmem>>, vector<2x4x4x64xf32>
    %c1_114 = arith.constant 1 : index
    %c0_115 = arith.constant 0 : index
    %c0_116 = arith.constant 0 : index
    %140 = vector.load %arg4[%c1_114, %c0_115, %c0_116] : memref<4x9x64xf32, #tpu.memory_space<vmem>>, vector<1x1x64xf32>
    %141 = vector.shape_cast %140 : vector<1x1x64xf32> to vector<64xf32>
    %142 = vector.shape_cast %141 : vector<64xf32> to vector<1x1x1x64xf32>
    %143 = vector.broadcast %142 : vector<1x1x1x64xf32> to vector<2x4x4x64xf32>
    %144 = arith.mulf %139, %143 : vector<2x4x4x64xf32>
    %145 = arith.addf %138, %144 : vector<2x4x4x64xf32>
    %c0_117 = arith.constant 0 : index
    %c0_118 = arith.constant 0 : index
    %c1_119 = arith.constant 1 : index
    %c0_120 = arith.constant 0 : index
    %146 = vector.load %arg20[%c0_117, %c0_118, %c1_119, %c0_120] : memref<2x10x10x64xf32, #tpu.memory_space<vmem>>, vector<2x4x4x64xf32>
    %c1_121 = arith.constant 1 : index
    %c1_122 = arith.constant 1 : index
    %c0_123 = arith.constant 0 : index
    %147 = vector.load %arg4[%c1_121, %c1_122, %c0_123] : memref<4x9x64xf32, #tpu.memory_space<vmem>>, vector<1x1x64xf32>
    %148 = vector.shape_cast %147 : vector<1x1x64xf32> to vector<64xf32>
    %149 = vector.shape_cast %148 : vector<64xf32> to vector<1x1x1x64xf32>
    %150 = vector.broadcast %149 : vector<1x1x1x64xf32> to vector<2x4x4x64xf32>
    %151 = arith.mulf %146, %150 : vector<2x4x4x64xf32>
    %152 = arith.addf %145, %151 : vector<2x4x4x64xf32>
    %c0_124 = arith.constant 0 : index
    %c0_125 = arith.constant 0 : index
    %c2_126 = arith.constant 2 : index
    %c0_127 = arith.constant 0 : index
    %153 = vector.load %arg20[%c0_124, %c0_125, %c2_126, %c0_127] : memref<2x10x10x64xf32, #tpu.memory_space<vmem>>, vector<2x4x4x64xf32>
    %c1_128 = arith.constant 1 : index
    %c2_129 = arith.constant 2 : index
    %c0_130 = arith.constant 0 : index
    %154 = vector.load %arg4[%c1_128, %c2_129, %c0_130] : memref<4x9x64xf32, #tpu.memory_space<vmem>>, vector<1x1x64xf32>
    %155 = vector.shape_cast %154 : vector<1x1x64xf32> to vector<64xf32>
    %156 = vector.shape_cast %155 : vector<64xf32> to vector<1x1x1x64xf32>
    %157 = vector.broadcast %156 : vector<1x1x1x64xf32> to vector<2x4x4x64xf32>
    %158 = arith.mulf %153, %157 : vector<2x4x4x64xf32>
    %159 = arith.addf %152, %158 : vector<2x4x4x64xf32>
    %c0_131 = arith.constant 0 : index
    %c1_132 = arith.constant 1 : index
    %c0_133 = arith.constant 0 : index
    %c0_134 = arith.constant 0 : index
    %160 = vector.load %arg20[%c0_131, %c1_132, %c0_133, %c0_134] : memref<2x10x10x64xf32, #tpu.memory_space<vmem>>, vector<2x4x4x64xf32>
    %c1_135 = arith.constant 1 : index
    %c3_136 = arith.constant 3 : index
    %c0_137 = arith.constant 0 : index
    %161 = vector.load %arg4[%c1_135, %c3_136, %c0_137] : memref<4x9x64xf32, #tpu.memory_space<vmem>>, vector<1x1x64xf32>
    %162 = vector.shape_cast %161 : vector<1x1x64xf32> to vector<64xf32>
    %163 = vector.shape_cast %162 : vector<64xf32> to vector<1x1x1x64xf32>
    %164 = vector.broadcast %163 : vector<1x1x1x64xf32> to vector<2x4x4x64xf32>
    %165 = arith.mulf %160, %164 : vector<2x4x4x64xf32>
    %166 = arith.addf %159, %165 : vector<2x4x4x64xf32>
    %c0_138 = arith.constant 0 : index
    %c1_139 = arith.constant 1 : index
    %c1_140 = arith.constant 1 : index
    %c0_141 = arith.constant 0 : index
    %167 = vector.load %arg20[%c0_138, %c1_139, %c1_140, %c0_141] : memref<2x10x10x64xf32, #tpu.memory_space<vmem>>, vector<2x4x4x64xf32>
    %c1_142 = arith.constant 1 : index
    %c4_143 = arith.constant 4 : index
    %c0_144 = arith.constant 0 : index
    %168 = vector.load %arg4[%c1_142, %c4_143, %c0_144] : memref<4x9x64xf32, #tpu.memory_space<vmem>>, vector<1x1x64xf32>
    %169 = vector.shape_cast %168 : vector<1x1x64xf32> to vector<64xf32>
    %170 = vector.shape_cast %169 : vector<64xf32> to vector<1x1x1x64xf32>
    %171 = vector.broadcast %170 : vector<1x1x1x64xf32> to vector<2x4x4x64xf32>
    %172 = arith.mulf %167, %171 : vector<2x4x4x64xf32>
    %173 = arith.addf %166, %172 : vector<2x4x4x64xf32>
    %c0_145 = arith.constant 0 : index
    %c1_146 = arith.constant 1 : index
    %c2_147 = arith.constant 2 : index
    %c0_148 = arith.constant 0 : index
    %174 = vector.load %arg20[%c0_145, %c1_146, %c2_147, %c0_148] : memref<2x10x10x64xf32, #tpu.memory_space<vmem>>, vector<2x4x4x64xf32>
    %c1_149 = arith.constant 1 : index
    %c5_150 = arith.constant 5 : index
    %c0_151 = arith.constant 0 : index
    %175 = vector.load %arg4[%c1_149, %c5_150, %c0_151] : memref<4x9x64xf32, #tpu.memory_space<vmem>>, vector<1x1x64xf32>
    %176 = vector.shape_cast %175 : vector<1x1x64xf32> to vector<64xf32>
    %177 = vector.shape_cast %176 : vector<64xf32> to vector<1x1x1x64xf32>
    %178 = vector.broadcast %177 : vector<1x1x1x64xf32> to vector<2x4x4x64xf32>
    %179 = arith.mulf %174, %178 : vector<2x4x4x64xf32>
    %180 = arith.addf %173, %179 : vector<2x4x4x64xf32>
    %c0_152 = arith.constant 0 : index
    %c2_153 = arith.constant 2 : index
    %c0_154 = arith.constant 0 : index
    %c0_155 = arith.constant 0 : index
    %181 = vector.load %arg20[%c0_152, %c2_153, %c0_154, %c0_155] : memref<2x10x10x64xf32, #tpu.memory_space<vmem>>, vector<2x4x4x64xf32>
    %c1_156 = arith.constant 1 : index
    %c6_157 = arith.constant 6 : index
    %c0_158 = arith.constant 0 : index
    %182 = vector.load %arg4[%c1_156, %c6_157, %c0_158] : memref<4x9x64xf32, #tpu.memory_space<vmem>>, vector<1x1x64xf32>
    %183 = vector.shape_cast %182 : vector<1x1x64xf32> to vector<64xf32>
    %184 = vector.shape_cast %183 : vector<64xf32> to vector<1x1x1x64xf32>
    %185 = vector.broadcast %184 : vector<1x1x1x64xf32> to vector<2x4x4x64xf32>
    %186 = arith.mulf %181, %185 : vector<2x4x4x64xf32>
    %187 = arith.addf %180, %186 : vector<2x4x4x64xf32>
    %c0_159 = arith.constant 0 : index
    %c2_160 = arith.constant 2 : index
    %c1_161 = arith.constant 1 : index
    %c0_162 = arith.constant 0 : index
    %188 = vector.load %arg20[%c0_159, %c2_160, %c1_161, %c0_162] : memref<2x10x10x64xf32, #tpu.memory_space<vmem>>, vector<2x4x4x64xf32>
    %c1_163 = arith.constant 1 : index
    %c7_164 = arith.constant 7 : index
    %c0_165 = arith.constant 0 : index
    %189 = vector.load %arg4[%c1_163, %c7_164, %c0_165] : memref<4x9x64xf32, #tpu.memory_space<vmem>>, vector<1x1x64xf32>
    %190 = vector.shape_cast %189 : vector<1x1x64xf32> to vector<64xf32>
    %191 = vector.shape_cast %190 : vector<64xf32> to vector<1x1x1x64xf32>
    %192 = vector.broadcast %191 : vector<1x1x1x64xf32> to vector<2x4x4x64xf32>
    %193 = arith.mulf %188, %192 : vector<2x4x4x64xf32>
    %194 = arith.addf %187, %193 : vector<2x4x4x64xf32>
    %c0_166 = arith.constant 0 : index
    %c2_167 = arith.constant 2 : index
    %c2_168 = arith.constant 2 : index
    %c0_169 = arith.constant 0 : index
    %195 = vector.load %arg20[%c0_166, %c2_167, %c2_168, %c0_169] : memref<2x10x10x64xf32, #tpu.memory_space<vmem>>, vector<2x4x4x64xf32>
    %c1_170 = arith.constant 1 : index
    %c8_171 = arith.constant 8 : index
    %c0_172 = arith.constant 0 : index
    %196 = vector.load %arg4[%c1_170, %c8_171, %c0_172] : memref<4x9x64xf32, #tpu.memory_space<vmem>>, vector<1x1x64xf32>
    %197 = vector.shape_cast %196 : vector<1x1x64xf32> to vector<64xf32>
    %198 = vector.shape_cast %197 : vector<64xf32> to vector<1x1x1x64xf32>
    %199 = vector.broadcast %198 : vector<1x1x1x64xf32> to vector<2x4x4x64xf32>
    %200 = arith.mulf %195, %199 : vector<2x4x4x64xf32>
    %201 = arith.addf %194, %200 : vector<2x4x4x64xf32>
    %c1_173 = arith.constant 1 : index
    %c0_174 = arith.constant 0 : index
    %202 = vector.load %arg5[%c1_173, %c0_174] : memref<4x64xf32, #tpu.memory_space<vmem>>, vector<1x64xf32>
    %203 = vector.shape_cast %202 : vector<1x64xf32> to vector<64xf32>
    %204 = vector.shape_cast %203 : vector<64xf32> to vector<1x1x1x64xf32>
    %205 = vector.broadcast %204 : vector<1x1x1x64xf32> to vector<2x4x4x64xf32>
    %206 = arith.addf %201, %205 : vector<2x4x4x64xf32>
    %207 = vector.shape_cast %206 : vector<2x4x4x64xf32> to vector<32x64xf32>
    %208 = arith.truncf %207 : vector<32x64xf32> to vector<32x64xbf16>
    %c1_175 = arith.constant 1 : index
    %c0_176 = arith.constant 0 : index
    %c0_177 = arith.constant 0 : index
    %209 = vector.load %arg6[%c1_175, %c0_176, %c0_177] : memref<4x64x64xbf16, #tpu.memory_space<vmem>>, vector<1x64x64xbf16>
    %210 = vector.shape_cast %209 : vector<1x64x64xbf16> to vector<64x64xbf16>
    %cst_178 = arith.constant dense<0.000000e+00> : vector<32x64xf32>
    %211 = tpu.matmul %208, %210, %cst_178 {dimension_numbers = #tpu.dot_dimension_numbers<[1], [0], [0], [1], [0, 0, 1, 1], [], []>} : vector<32x64xbf16>, vector<64x64xbf16>, vector<32x64xf32> -> vector<32x64xf32>
    %c1_179 = arith.constant 1 : index
    %c0_180 = arith.constant 0 : index
    %212 = vector.load %arg7[%c1_179, %c0_180] : memref<4x64xf32, #tpu.memory_space<vmem>>, vector<1x64xf32>
    %213 = vector.shape_cast %212 : vector<1x64xf32> to vector<64xf32>
    %214 = vector.shape_cast %213 : vector<64xf32> to vector<1x64xf32>
    %215 = vector.broadcast %214 : vector<1x64xf32> to vector<32x64xf32>
    %216 = arith.addf %211, %215 : vector<32x64xf32>
    %217 = arith.truncf %216 : vector<32x64xf32> to vector<32x64xbf16>
    %c0_181 = arith.constant 0 : index
    %c0_182 = arith.constant 0 : index
    %218 = vector.load %arg8[%c0_181, %c0_182] : memref<64x32xbf16, #tpu.memory_space<vmem>>, vector<64x32xbf16>
    %cst_183 = arith.constant dense<0.000000e+00> : vector<32x32xf32>
    %219 = tpu.matmul %217, %218, %cst_183 {dimension_numbers = #tpu.dot_dimension_numbers<[1], [0], [0], [1], [0, 0, 1, 1], [], []>} : vector<32x64xbf16>, vector<64x32xbf16>, vector<32x32xf32> -> vector<32x32xf32>
    %c0_184 = arith.constant 0 : index
    %c0_185 = arith.constant 0 : index
    %220 = vector.load %arg9[%c0_184, %c0_185] : memref<1x32xf32, #tpu.memory_space<vmem>>, vector<1x32xf32>
    %221 = vector.shape_cast %220 : vector<1x32xf32> to vector<32xf32>
    %222 = vector.shape_cast %221 : vector<32xf32> to vector<1x32xf32>
    %223 = vector.broadcast %222 : vector<1x32xf32> to vector<32x32xf32>
    %224 = arith.addf %219, %223 : vector<32x32xf32>
    %225 = vector.shape_cast %224 : vector<32x32xf32> to vector<2x16x32xf32>
    %cst_186 = arith.constant dense<0.000000e+00> : vector<2x16xf32>
    %226 = vector.multi_reduction <add>, %225, %cst_186 [2] : vector<2x16x32xf32> to vector<2x16xf32>
    %227 = vector.shape_cast %226 : vector<2x16xf32> to vector<2x16x1xf32>
    %cst_187 = arith.constant dense<0.000000e+00> : vector<2x1xf32>
    %228 = vector.multi_reduction <add>, %227, %cst_187 [1] : vector<2x16x1xf32> to vector<2x1xf32>
    %229 = vector.shape_cast %228 : vector<2x1xf32> to vector<2x1x1xf32>
    %230 = arith.addf %115, %229 : vector<2x1x1xf32>
    %c0_188 = arith.constant 0 : index
    %c80 = arith.constant 80 : index
    %c0_189 = arith.constant 0 : index
    %231 = vector.load %arg1[%c0_188, %c80, %c0_189] : memref<2x88x32xf32, #tpu.memory_space<vmem>>, vector<2x4x32xf32>
    %232 = vector.shape_cast %231 : vector<2x4x32xf32> to vector<8x32xf32>
    %233 = arith.truncf %232 : vector<8x32xf32> to vector<8x32xbf16>
    %c0_190 = arith.constant 0 : index
    %c0_191 = arith.constant 0 : index
    %234 = vector.load %arg2[%c0_190, %c0_191] : memref<32x64xbf16, #tpu.memory_space<vmem>>, vector<32x64xbf16>
    %cst_192 = arith.constant dense<0.000000e+00> : vector<8x64xf32>
    %235 = tpu.matmul %233, %234, %cst_192 {dimension_numbers = #tpu.dot_dimension_numbers<[1], [0], [0], [1], [0, 0, 1, 1], [], []>} : vector<8x32xbf16>, vector<32x64xbf16>, vector<8x64xf32> -> vector<8x64xf32>
    %c0_193 = arith.constant 0 : index
    %c0_194 = arith.constant 0 : index
    %236 = vector.load %arg3[%c0_193, %c0_194] : memref<1x64xf32, #tpu.memory_space<vmem>>, vector<1x64xf32>
    %237 = vector.shape_cast %236 : vector<1x64xf32> to vector<64xf32>
    %238 = vector.shape_cast %237 : vector<64xf32> to vector<1x64xf32>
    %239 = vector.broadcast %238 : vector<1x64xf32> to vector<8x64xf32>
    %240 = arith.addf %235, %239 : vector<8x64xf32>
    %cst_195 = arith.constant 5.000000e-01 : f32
    %241 = vector.broadcast %cst_195 : f32 to vector<8x64xf32>
    %242 = arith.mulf %241, %240 : vector<8x64xf32>
    %cst_196 = arith.constant 0.707106769 : f32
    %243 = vector.broadcast %cst_196 : f32 to vector<8x64xf32>
    %244 = arith.mulf %240, %243 : vector<8x64xf32>
    %245 = math.erf %244 : vector<8x64xf32>
    %cst_197 = arith.constant 1.000000e+00 : f32
    %246 = vector.broadcast %cst_197 : f32 to vector<8x64xf32>
    %247 = arith.addf %246, %245 : vector<8x64xf32>
    %248 = arith.mulf %242, %247 : vector<8x64xf32>
    %cst_198 = arith.constant 0.000000e+00 : f32
    %249 = vector.broadcast %cst_198 : f32 to vector<2x10x10x64xf32>
    %c0_199 = arith.constant 0 : index
    %c0_200 = arith.constant 0 : index
    %c0_201 = arith.constant 0 : index
    %c0_202 = arith.constant 0 : index
    %250 = vector.load %arg20[%c0_199, %c0_200, %c0_201, %c0_202] : memref<2x10x10x64xf32, #tpu.memory_space<vmem>>, vector<2x10x10x64xf32>
    tpu.vector_store %arg20[%c0_199, %c0_200, %c0_201, %c0_202], %249 {strides = array<i32>} : memref<2x10x10x64xf32, #tpu.memory_space<vmem>>, vector<2x10x10x64xf32>,
    %251 = vector.shape_cast %248 : vector<8x64xf32> to vector<2x2x2x64xf32>
    %c0_203 = arith.constant 0 : index
    %c1_204 = arith.constant 1 : index
    %c1_205 = arith.constant 1 : index
    %c0_206 = arith.constant 0 : index
    %252 = vector.load %arg20[%c0_203, %c1_204, %c1_205, %c0_206] : memref<2x10x10x64xf32, #tpu.memory_space<vmem>>, vector<2x2x2x64xf32>
    tpu.vector_store %arg20[%c0_203, %c1_204, %c1_205, %c0_206], %251 {strides = array<i32>} : memref<2x10x10x64xf32, #tpu.memory_space<vmem>>, vector<2x2x2x64xf32>,
    %cst_207 = arith.constant 0.000000e+00 : f32
    %253 = vector.broadcast %cst_207 : f32 to vector<2x2x2x64xf32>
    %c0_208 = arith.constant 0 : index
    %c0_209 = arith.constant 0 : index
    %c0_210 = arith.constant 0 : index
    %c0_211 = arith.constant 0 : index
    %254 = vector.load %arg20[%c0_208, %c0_209, %c0_210, %c0_211] : memref<2x10x10x64xf32, #tpu.memory_space<vmem>>, vector<2x2x2x64xf32>
    %c2_212 = arith.constant 2 : index
    %c0_213 = arith.constant 0 : index
    %c0_214 = arith.constant 0 : index
    %255 = vector.load %arg4[%c2_212, %c0_213, %c0_214] : memref<4x9x64xf32, #tpu.memory_space<vmem>>, vector<1x1x64xf32>
    %256 = vector.shape_cast %255 : vector<1x1x64xf32> to vector<64xf32>
    %257 = vector.shape_cast %256 : vector<64xf32> to vector<1x1x1x64xf32>
    %258 = vector.broadcast %257 : vector<1x1x1x64xf32> to vector<2x2x2x64xf32>
    %259 = arith.mulf %254, %258 : vector<2x2x2x64xf32>
    %260 = arith.addf %253, %259 : vector<2x2x2x64xf32>
    %c0_215 = arith.constant 0 : index
    %c0_216 = arith.constant 0 : index
    %c1_217 = arith.constant 1 : index
    %c0_218 = arith.constant 0 : index
    %261 = vector.load %arg20[%c0_215, %c0_216, %c1_217, %c0_218] : memref<2x10x10x64xf32, #tpu.memory_space<vmem>>, vector<2x2x2x64xf32>
    %c2_219 = arith.constant 2 : index
    %c1_220 = arith.constant 1 : index
    %c0_221 = arith.constant 0 : index
    %262 = vector.load %arg4[%c2_219, %c1_220, %c0_221] : memref<4x9x64xf32, #tpu.memory_space<vmem>>, vector<1x1x64xf32>
    %263 = vector.shape_cast %262 : vector<1x1x64xf32> to vector<64xf32>
    %264 = vector.shape_cast %263 : vector<64xf32> to vector<1x1x1x64xf32>
    %265 = vector.broadcast %264 : vector<1x1x1x64xf32> to vector<2x2x2x64xf32>
    %266 = arith.mulf %261, %265 : vector<2x2x2x64xf32>
    %267 = arith.addf %260, %266 : vector<2x2x2x64xf32>
    %c0_222 = arith.constant 0 : index
    %c0_223 = arith.constant 0 : index
    %c2_224 = arith.constant 2 : index
    %c0_225 = arith.constant 0 : index
    %268 = vector.load %arg20[%c0_222, %c0_223, %c2_224, %c0_225] : memref<2x10x10x64xf32, #tpu.memory_space<vmem>>, vector<2x2x2x64xf32>
    %c2_226 = arith.constant 2 : index
    %c2_227 = arith.constant 2 : index
    %c0_228 = arith.constant 0 : index
    %269 = vector.load %arg4[%c2_226, %c2_227, %c0_228] : memref<4x9x64xf32, #tpu.memory_space<vmem>>, vector<1x1x64xf32>
    %270 = vector.shape_cast %269 : vector<1x1x64xf32> to vector<64xf32>
    %271 = vector.shape_cast %270 : vector<64xf32> to vector<1x1x1x64xf32>
    %272 = vector.broadcast %271 : vector<1x1x1x64xf32> to vector<2x2x2x64xf32>
    %273 = arith.mulf %268, %272 : vector<2x2x2x64xf32>
    %274 = arith.addf %267, %273 : vector<2x2x2x64xf32>
    %c0_229 = arith.constant 0 : index
    %c1_230 = arith.constant 1 : index
    %c0_231 = arith.constant 0 : index
    %c0_232 = arith.constant 0 : index
    %275 = vector.load %arg20[%c0_229, %c1_230, %c0_231, %c0_232] : memref<2x10x10x64xf32, #tpu.memory_space<vmem>>, vector<2x2x2x64xf32>
    %c2_233 = arith.constant 2 : index
    %c3_234 = arith.constant 3 : index
    %c0_235 = arith.constant 0 : index
    %276 = vector.load %arg4[%c2_233, %c3_234, %c0_235] : memref<4x9x64xf32, #tpu.memory_space<vmem>>, vector<1x1x64xf32>
    %277 = vector.shape_cast %276 : vector<1x1x64xf32> to vector<64xf32>
    %278 = vector.shape_cast %277 : vector<64xf32> to vector<1x1x1x64xf32>
    %279 = vector.broadcast %278 : vector<1x1x1x64xf32> to vector<2x2x2x64xf32>
    %280 = arith.mulf %275, %279 : vector<2x2x2x64xf32>
    %281 = arith.addf %274, %280 : vector<2x2x2x64xf32>
    %c0_236 = arith.constant 0 : index
    %c1_237 = arith.constant 1 : index
    %c1_238 = arith.constant 1 : index
    %c0_239 = arith.constant 0 : index
    %282 = vector.load %arg20[%c0_236, %c1_237, %c1_238, %c0_239] : memref<2x10x10x64xf32, #tpu.memory_space<vmem>>, vector<2x2x2x64xf32>
    %c2_240 = arith.constant 2 : index
    %c4_241 = arith.constant 4 : index
    %c0_242 = arith.constant 0 : index
    %283 = vector.load %arg4[%c2_240, %c4_241, %c0_242] : memref<4x9x64xf32, #tpu.memory_space<vmem>>, vector<1x1x64xf32>
    %284 = vector.shape_cast %283 : vector<1x1x64xf32> to vector<64xf32>
    %285 = vector.shape_cast %284 : vector<64xf32> to vector<1x1x1x64xf32>
    %286 = vector.broadcast %285 : vector<1x1x1x64xf32> to vector<2x2x2x64xf32>
    %287 = arith.mulf %282, %286 : vector<2x2x2x64xf32>
    %288 = arith.addf %281, %287 : vector<2x2x2x64xf32>
    %c0_243 = arith.constant 0 : index
    %c1_244 = arith.constant 1 : index
    %c2_245 = arith.constant 2 : index
    %c0_246 = arith.constant 0 : index
    %289 = vector.load %arg20[%c0_243, %c1_244, %c2_245, %c0_246] : memref<2x10x10x64xf32, #tpu.memory_space<vmem>>, vector<2x2x2x64xf32>
    %c2_247 = arith.constant 2 : index
    %c5_248 = arith.constant 5 : index
    %c0_249 = arith.constant 0 : index
    %290 = vector.load %arg4[%c2_247, %c5_248, %c0_249] : memref<4x9x64xf32, #tpu.memory_space<vmem>>, vector<1x1x64xf32>
    %291 = vector.shape_cast %290 : vector<1x1x64xf32> to vector<64xf32>
    %292 = vector.shape_cast %291 : vector<64xf32> to vector<1x1x1x64xf32>
    %293 = vector.broadcast %292 : vector<1x1x1x64xf32> to vector<2x2x2x64xf32>
    %294 = arith.mulf %289, %293 : vector<2x2x2x64xf32>
    %295 = arith.addf %288, %294 : vector<2x2x2x64xf32>
    %c0_250 = arith.constant 0 : index
    %c2_251 = arith.constant 2 : index
    %c0_252 = arith.constant 0 : index
    %c0_253 = arith.constant 0 : index
    %296 = vector.load %arg20[%c0_250, %c2_251, %c0_252, %c0_253] : memref<2x10x10x64xf32, #tpu.memory_space<vmem>>, vector<2x2x2x64xf32>
    %c2_254 = arith.constant 2 : index
    %c6_255 = arith.constant 6 : index
    %c0_256 = arith.constant 0 : index
    %297 = vector.load %arg4[%c2_254, %c6_255, %c0_256] : memref<4x9x64xf32, #tpu.memory_space<vmem>>, vector<1x1x64xf32>
    %298 = vector.shape_cast %297 : vector<1x1x64xf32> to vector<64xf32>
    %299 = vector.shape_cast %298 : vector<64xf32> to vector<1x1x1x64xf32>
    %300 = vector.broadcast %299 : vector<1x1x1x64xf32> to vector<2x2x2x64xf32>
    %301 = arith.mulf %296, %300 : vector<2x2x2x64xf32>
    %302 = arith.addf %295, %301 : vector<2x2x2x64xf32>
    %c0_257 = arith.constant 0 : index
    %c2_258 = arith.constant 2 : index
    %c1_259 = arith.constant 1 : index
    %c0_260 = arith.constant 0 : index
    %303 = vector.load %arg20[%c0_257, %c2_258, %c1_259, %c0_260] : memref<2x10x10x64xf32, #tpu.memory_space<vmem>>, vector<2x2x2x64xf32>
    %c2_261 = arith.constant 2 : index
    %c7_262 = arith.constant 7 : index
    %c0_263 = arith.constant 0 : index
    %304 = vector.load %arg4[%c2_261, %c7_262, %c0_263] : memref<4x9x64xf32, #tpu.memory_space<vmem>>, vector<1x1x64xf32>
    %305 = vector.shape_cast %304 : vector<1x1x64xf32> to vector<64xf32>
    %306 = vector.shape_cast %305 : vector<64xf32> to vector<1x1x1x64xf32>
    %307 = vector.broadcast %306 : vector<1x1x1x64xf32> to vector<2x2x2x64xf32>
    %308 = arith.mulf %303, %307 : vector<2x2x2x64xf32>
    %309 = arith.addf %302, %308 : vector<2x2x2x64xf32>
    %c0_264 = arith.constant 0 : index
    %c2_265 = arith.constant 2 : index
    %c2_266 = arith.constant 2 : index
    %c0_267 = arith.constant 0 : index
    %310 = vector.load %arg20[%c0_264, %c2_265, %c2_266, %c0_267] : memref<2x10x10x64xf32, #tpu.memory_space<vmem>>, vector<2x2x2x64xf32>
    %c2_268 = arith.constant 2 : index
    %c8_269 = arith.constant 8 : index
    %c0_270 = arith.constant 0 : index
    %311 = vector.load %arg4[%c2_268, %c8_269, %c0_270] : memref<4x9x64xf32, #tpu.memory_space<vmem>>, vector<1x1x64xf32>
    %312 = vector.shape_cast %311 : vector<1x1x64xf32> to vector<64xf32>
    %313 = vector.shape_cast %312 : vector<64xf32> to vector<1x1x1x64xf32>
    %314 = vector.broadcast %313 : vector<1x1x1x64xf32> to vector<2x2x2x64xf32>
    %315 = arith.mulf %310, %314 : vector<2x2x2x64xf32>
    %316 = arith.addf %309, %315 : vector<2x2x2x64xf32>
    %c2_271 = arith.constant 2 : index
    %c0_272 = arith.constant 0 : index
    %317 = vector.load %arg5[%c2_271, %c0_272] : memref<4x64xf32, #tpu.memory_space<vmem>>, vector<1x64xf32>
    %318 = vector.shape_cast %317 : vector<1x64xf32> to vector<64xf32>
    %319 = vector.shape_cast %318 : vector<64xf32> to vector<1x1x1x64xf32>
    %320 = vector.broadcast %319 : vector<1x1x1x64xf32> to vector<2x2x2x64xf32>
    %321 = arith.addf %316, %320 : vector<2x2x2x64xf32>
    %322 = vector.shape_cast %321 : vector<2x2x2x64xf32> to vector<8x64xf32>
    %323 = arith.truncf %322 : vector<8x64xf32> to vector<8x64xbf16>
    %c2_273 = arith.constant 2 : index
    %c0_274 = arith.constant 0 : index
    %c0_275 = arith.constant 0 : index
    %324 = vector.load %arg6[%c2_273, %c0_274, %c0_275] : memref<4x64x64xbf16, #tpu.memory_space<vmem>>, vector<1x64x64xbf16>
    %325 = vector.shape_cast %324 : vector<1x64x64xbf16> to vector<64x64xbf16>
    %cst_276 = arith.constant dense<0.000000e+00> : vector<8x64xf32>
    %326 = tpu.matmul %323, %325, %cst_276 {dimension_numbers = #tpu.dot_dimension_numbers<[1], [0], [0], [1], [0, 0, 1, 1], [], []>} : vector<8x64xbf16>, vector<64x64xbf16>, vector<8x64xf32> -> vector<8x64xf32>
    %c2_277 = arith.constant 2 : index
    %c0_278 = arith.constant 0 : index
    %327 = vector.load %arg7[%c2_277, %c0_278] : memref<4x64xf32, #tpu.memory_space<vmem>>, vector<1x64xf32>
    %328 = vector.shape_cast %327 : vector<1x64xf32> to vector<64xf32>
    %329 = vector.shape_cast %328 : vector<64xf32> to vector<1x64xf32>
    %330 = vector.broadcast %329 : vector<1x64xf32> to vector<8x64xf32>
    %331 = arith.addf %326, %330 : vector<8x64xf32>
    %332 = arith.truncf %331 : vector<8x64xf32> to vector<8x64xbf16>
    %c0_279 = arith.constant 0 : index
    %c0_280 = arith.constant 0 : index
    %333 = vector.load %arg8[%c0_279, %c0_280] : memref<64x32xbf16, #tpu.memory_space<vmem>>, vector<64x32xbf16>
    %cst_281 = arith.constant dense<0.000000e+00> : vector<8x32xf32>
    %334 = tpu.matmul %332, %333, %cst_281 {dimension_numbers = #tpu.dot_dimension_numbers<[1], [0], [0], [1], [0, 0, 1, 1], [], []>} : vector<8x64xbf16>, vector<64x32xbf16>, vector<8x32xf32> -> vector<8x32xf32>
    %c0_282 = arith.constant 0 : index
    %c0_283 = arith.constant 0 : index
    %335 = vector.load %arg9[%c0_282, %c0_283] : memref<1x32xf32, #tpu.memory_space<vmem>>, vector<1x32xf32>
    %336 = vector.shape_cast %335 : vector<1x32xf32> to vector<32xf32>
    %337 = vector.shape_cast %336 : vector<32xf32> to vector<1x32xf32>
    %338 = vector.broadcast %337 : vector<1x32xf32> to vector<8x32xf32>
    %339 = arith.addf %334, %338 : vector<8x32xf32>
    %340 = vector.shape_cast %339 : vector<8x32xf32> to vector<2x4x32xf32>
    %cst_284 = arith.constant dense<0.000000e+00> : vector<2x4xf32>
    %341 = vector.multi_reduction <add>, %340, %cst_284 [2] : vector<2x4x32xf32> to vector<2x4xf32>
    %342 = vector.shape_cast %341 : vector<2x4xf32> to vector<2x4x1xf32>
    %cst_285 = arith.constant dense<0.000000e+00> : vector<2x1xf32>
    %343 = vector.multi_reduction <add>, %342, %cst_285 [1] : vector<2x4x1xf32> to vector<2x1xf32>
    %344 = vector.shape_cast %343 : vector<2x1xf32> to vector<2x1x1xf32>
    %345 = arith.addf %230, %344 : vector<2x1x1xf32>
    %c0_286 = arith.constant 0 : index
    %c84 = arith.constant 84 : index
    %c0_287 = arith.constant 0 : index
    %346 = vector.load %arg1[%c0_286, %c84, %c0_287] : memref<2x88x32xf32, #tpu.memory_space<vmem>>, vector<2x4x32xf32>
    %347 = vector.shape_cast %346 : vector<2x4x32xf32> to vector<8x32xf32>
    %348 = arith.truncf %347 : vector<8x32xf32> to vector<8x32xbf16>
    %c0_288 = arith.constant 0 : index
    %c0_289 = arith.constant 0 : index
    %349 = vector.load %arg2[%c0_288, %c0_289] : memref<32x64xbf16, #tpu.memory_space<vmem>>, vector<32x64xbf16>
    %cst_290 = arith.constant dense<0.000000e+00> : vector<8x64xf32>
    %350 = tpu.matmul %348, %349, %cst_290 {dimension_numbers = #tpu.dot_dimension_numbers<[1], [0], [0], [1], [0, 0, 1, 1], [], []>} : vector<8x32xbf16>, vector<32x64xbf16>, vector<8x64xf32> -> vector<8x64xf32>
    %c0_291 = arith.constant 0 : index
    %c0_292 = arith.constant 0 : index
    %351 = vector.load %arg3[%c0_291, %c0_292] : memref<1x64xf32, #tpu.memory_space<vmem>>, vector<1x64xf32>
    %352 = vector.shape_cast %351 : vector<1x64xf32> to vector<64xf32>
    %353 = vector.shape_cast %352 : vector<64xf32> to vector<1x64xf32>
    %354 = vector.broadcast %353 : vector<1x64xf32> to vector<8x64xf32>
    %355 = arith.addf %350, %354 : vector<8x64xf32>
    %cst_293 = arith.constant 5.000000e-01 : f32
    %356 = vector.broadcast %cst_293 : f32 to vector<8x64xf32>
    %357 = arith.mulf %356, %355 : vector<8x64xf32>
    %cst_294 = arith.constant 0.707106769 : f32
    %358 = vector.broadcast %cst_294 : f32 to vector<8x64xf32>
    %359 = arith.mulf %355, %358 : vector<8x64xf32>
    %360 = math.erf %359 : vector<8x64xf32>
    %cst_295 = arith.constant 1.000000e+00 : f32
    %361 = vector.broadcast %cst_295 : f32 to vector<8x64xf32>
    %362 = arith.addf %361, %360 : vector<8x64xf32>
    %363 = arith.mulf %357, %362 : vector<8x64xf32>
    %cst_296 = arith.constant 0.000000e+00 : f32
    %364 = vector.broadcast %cst_296 : f32 to vector<2x10x10x64xf32>
    %c0_297 = arith.constant 0 : index
    %c0_298 = arith.constant 0 : index
    %c0_299 = arith.constant 0 : index
    %c0_300 = arith.constant 0 : index
    %365 = vector.load %arg20[%c0_297, %c0_298, %c0_299, %c0_300] : memref<2x10x10x64xf32, #tpu.memory_space<vmem>>, vector<2x10x10x64xf32>
    tpu.vector_store %arg20[%c0_297, %c0_298, %c0_299, %c0_300], %364 {strides = array<i32>} : memref<2x10x10x64xf32, #tpu.memory_space<vmem>>, vector<2x10x10x64xf32>,
    %366 = vector.shape_cast %363 : vector<8x64xf32> to vector<2x2x2x64xf32>
    %c0_301 = arith.constant 0 : index
    %c1_302 = arith.constant 1 : index
    %c1_303 = arith.constant 1 : index
    %c0_304 = arith.constant 0 : index
    %367 = vector.load %arg20[%c0_301, %c1_302, %c1_303, %c0_304] : memref<2x10x10x64xf32, #tpu.memory_space<vmem>>, vector<2x2x2x64xf32>
    tpu.vector_store %arg20[%c0_301, %c1_302, %c1_303, %c0_304], %366 {strides = array<i32>} : memref<2x10x10x64xf32, #tpu.memory_space<vmem>>, vector<2x2x2x64xf32>,
    %cst_305 = arith.constant 0.000000e+00 : f32
    %368 = vector.broadcast %cst_305 : f32 to vector<2x2x2x64xf32>
    %c0_306 = arith.constant 0 : index
    %c0_307 = arith.constant 0 : index
    %c0_308 = arith.constant 0 : index
    %c0_309 = arith.constant 0 : index
    %369 = vector.load %arg20[%c0_306, %c0_307, %c0_308, %c0_309] : memref<2x10x10x64xf32, #tpu.memory_space<vmem>>, vector<2x2x2x64xf32>
    %c3_310 = arith.constant 3 : index
    %c0_311 = arith.constant 0 : index
    %c0_312 = arith.constant 0 : index
    %370 = vector.load %arg4[%c3_310, %c0_311, %c0_312] : memref<4x9x64xf32, #tpu.memory_space<vmem>>, vector<1x1x64xf32>
    %371 = vector.shape_cast %370 : vector<1x1x64xf32> to vector<64xf32>
    %372 = vector.shape_cast %371 : vector<64xf32> to vector<1x1x1x64xf32>
    %373 = vector.broadcast %372 : vector<1x1x1x64xf32> to vector<2x2x2x64xf32>
    %374 = arith.mulf %369, %373 : vector<2x2x2x64xf32>
    %375 = arith.addf %368, %374 : vector<2x2x2x64xf32>
    %c0_313 = arith.constant 0 : index
    %c0_314 = arith.constant 0 : index
    %c1_315 = arith.constant 1 : index
    %c0_316 = arith.constant 0 : index
    %376 = vector.load %arg20[%c0_313, %c0_314, %c1_315, %c0_316] : memref<2x10x10x64xf32, #tpu.memory_space<vmem>>, vector<2x2x2x64xf32>
    %c3_317 = arith.constant 3 : index
    %c1_318 = arith.constant 1 : index
    %c0_319 = arith.constant 0 : index
    %377 = vector.load %arg4[%c3_317, %c1_318, %c0_319] : memref<4x9x64xf32, #tpu.memory_space<vmem>>, vector<1x1x64xf32>
    %378 = vector.shape_cast %377 : vector<1x1x64xf32> to vector<64xf32>
    %379 = vector.shape_cast %378 : vector<64xf32> to vector<1x1x1x64xf32>
    %380 = vector.broadcast %379 : vector<1x1x1x64xf32> to vector<2x2x2x64xf32>
    %381 = arith.mulf %376, %380 : vector<2x2x2x64xf32>
    %382 = arith.addf %375, %381 : vector<2x2x2x64xf32>
    %c0_320 = arith.constant 0 : index
    %c0_321 = arith.constant 0 : index
    %c2_322 = arith.constant 2 : index
    %c0_323 = arith.constant 0 : index
    %383 = vector.load %arg20[%c0_320, %c0_321, %c2_322, %c0_323] : memref<2x10x10x64xf32, #tpu.memory_space<vmem>>, vector<2x2x2x64xf32>
    %c3_324 = arith.constant 3 : index
    %c2_325 = arith.constant 2 : index
    %c0_326 = arith.constant 0 : index
    %384 = vector.load %arg4[%c3_324, %c2_325, %c0_326] : memref<4x9x64xf32, #tpu.memory_space<vmem>>, vector<1x1x64xf32>
    %385 = vector.shape_cast %384 : vector<1x1x64xf32> to vector<64xf32>
    %386 = vector.shape_cast %385 : vector<64xf32> to vector<1x1x1x64xf32>
    %387 = vector.broadcast %386 : vector<1x1x1x64xf32> to vector<2x2x2x64xf32>
    %388 = arith.mulf %383, %387 : vector<2x2x2x64xf32>
    %389 = arith.addf %382, %388 : vector<2x2x2x64xf32>
    %c0_327 = arith.constant 0 : index
    %c1_328 = arith.constant 1 : index
    %c0_329 = arith.constant 0 : index
    %c0_330 = arith.constant 0 : index
    %390 = vector.load %arg20[%c0_327, %c1_328, %c0_329, %c0_330] : memref<2x10x10x64xf32, #tpu.memory_space<vmem>>, vector<2x2x2x64xf32>
    %c3_331 = arith.constant 3 : index
    %c3_332 = arith.constant 3 : index
    %c0_333 = arith.constant 0 : index
    %391 = vector.load %arg4[%c3_331, %c3_332, %c0_333] : memref<4x9x64xf32, #tpu.memory_space<vmem>>, vector<1x1x64xf32>
    %392 = vector.shape_cast %391 : vector<1x1x64xf32> to vector<64xf32>
    %393 = vector.shape_cast %392 : vector<64xf32> to vector<1x1x1x64xf32>
    %394 = vector.broadcast %393 : vector<1x1x1x64xf32> to vector<2x2x2x64xf32>
    %395 = arith.mulf %390, %394 : vector<2x2x2x64xf32>
    %396 = arith.addf %389, %395 : vector<2x2x2x64xf32>
    %c0_334 = arith.constant 0 : index
    %c1_335 = arith.constant 1 : index
    %c1_336 = arith.constant 1 : index
    %c0_337 = arith.constant 0 : index
    %397 = vector.load %arg20[%c0_334, %c1_335, %c1_336, %c0_337] : memref<2x10x10x64xf32, #tpu.memory_space<vmem>>, vector<2x2x2x64xf32>
    %c3_338 = arith.constant 3 : index
    %c4_339 = arith.constant 4 : index
    %c0_340 = arith.constant 0 : index
    %398 = vector.load %arg4[%c3_338, %c4_339, %c0_340] : memref<4x9x64xf32, #tpu.memory_space<vmem>>, vector<1x1x64xf32>
    %399 = vector.shape_cast %398 : vector<1x1x64xf32> to vector<64xf32>
    %400 = vector.shape_cast %399 : vector<64xf32> to vector<1x1x1x64xf32>
    %401 = vector.broadcast %400 : vector<1x1x1x64xf32> to vector<2x2x2x64xf32>
    %402 = arith.mulf %397, %401 : vector<2x2x2x64xf32>
    %403 = arith.addf %396, %402 : vector<2x2x2x64xf32>
    %c0_341 = arith.constant 0 : index
    %c1_342 = arith.constant 1 : index
    %c2_343 = arith.constant 2 : index
    %c0_344 = arith.constant 0 : index
    %404 = vector.load %arg20[%c0_341, %c1_342, %c2_343, %c0_344] : memref<2x10x10x64xf32, #tpu.memory_space<vmem>>, vector<2x2x2x64xf32>
    %c3_345 = arith.constant 3 : index
    %c5_346 = arith.constant 5 : index
    %c0_347 = arith.constant 0 : index
    %405 = vector.load %arg4[%c3_345, %c5_346, %c0_347] : memref<4x9x64xf32, #tpu.memory_space<vmem>>, vector<1x1x64xf32>
    %406 = vector.shape_cast %405 : vector<1x1x64xf32> to vector<64xf32>
    %407 = vector.shape_cast %406 : vector<64xf32> to vector<1x1x1x64xf32>
    %408 = vector.broadcast %407 : vector<1x1x1x64xf32> to vector<2x2x2x64xf32>
    %409 = arith.mulf %404, %408 : vector<2x2x2x64xf32>
    %410 = arith.addf %403, %409 : vector<2x2x2x64xf32>
    %c0_348 = arith.constant 0 : index
    %c2_349 = arith.constant 2 : index
    %c0_350 = arith.constant 0 : index
    %c0_351 = arith.constant 0 : index
    %411 = vector.load %arg20[%c0_348, %c2_349, %c0_350, %c0_351] : memref<2x10x10x64xf32, #tpu.memory_space<vmem>>, vector<2x2x2x64xf32>
    %c3_352 = arith.constant 3 : index
    %c6_353 = arith.constant 6 : index
    %c0_354 = arith.constant 0 : index
    %412 = vector.load %arg4[%c3_352, %c6_353, %c0_354] : memref<4x9x64xf32, #tpu.memory_space<vmem>>, vector<1x1x64xf32>
    %413 = vector.shape_cast %412 : vector<1x1x64xf32> to vector<64xf32>
    %414 = vector.shape_cast %413 : vector<64xf32> to vector<1x1x1x64xf32>
    %415 = vector.broadcast %414 : vector<1x1x1x64xf32> to vector<2x2x2x64xf32>
    %416 = arith.mulf %411, %415 : vector<2x2x2x64xf32>
    %417 = arith.addf %410, %416 : vector<2x2x2x64xf32>
    %c0_355 = arith.constant 0 : index
    %c2_356 = arith.constant 2 : index
    %c1_357 = arith.constant 1 : index
    %c0_358 = arith.constant 0 : index
    %418 = vector.load %arg20[%c0_355, %c2_356, %c1_357, %c0_358] : memref<2x10x10x64xf32, #tpu.memory_space<vmem>>, vector<2x2x2x64xf32>
    %c3_359 = arith.constant 3 : index
    %c7_360 = arith.constant 7 : index
    %c0_361 = arith.constant 0 : index
    %419 = vector.load %arg4[%c3_359, %c7_360, %c0_361] : memref<4x9x64xf32, #tpu.memory_space<vmem>>, vector<1x1x64xf32>
    %420 = vector.shape_cast %419 : vector<1x1x64xf32> to vector<64xf32>
    %421 = vector.shape_cast %420 : vector<64xf32> to vector<1x1x1x64xf32>
    %422 = vector.broadcast %421 : vector<1x1x1x64xf32> to vector<2x2x2x64xf32>
    %423 = arith.mulf %418, %422 : vector<2x2x2x64xf32>
    %424 = arith.addf %417, %423 : vector<2x2x2x64xf32>
    %c0_362 = arith.constant 0 : index
    %c2_363 = arith.constant 2 : index
    %c2_364 = arith.constant 2 : index
    %c0_365 = arith.constant 0 : index
    %425 = vector.load %arg20[%c0_362, %c2_363, %c2_364, %c0_365] : memref<2x10x10x64xf32, #tpu.memory_space<vmem>>, vector<2x2x2x64xf32>
    %c3_366 = arith.constant 3 : index
    %c8_367 = arith.constant 8 : index
    %c0_368 = arith.constant 0 : index
    %426 = vector.load %arg4[%c3_366, %c8_367, %c0_368] : memref<4x9x64xf32, #tpu.memory_space<vmem>>, vector<1x1x64xf32>
    %427 = vector.shape_cast %426 : vector<1x1x64xf32> to vector<64xf32>
    %428 = vector.shape_cast %427 : vector<64xf32> to vector<1x1x1x64xf32>
    %429 = vector.broadcast %428 : vector<1x1x1x64xf32> to vector<2x2x2x64xf32>
    %430 = arith.mulf %425, %429 : vector<2x2x2x64xf32>
    %431 = arith.addf %424, %430 : vector<2x2x2x64xf32>
    %c3_369 = arith.constant 3 : index
    %c0_370 = arith.constant 0 : index
    %432 = vector.load %arg5[%c3_369, %c0_370] : memref<4x64xf32, #tpu.memory_space<vmem>>, vector<1x64xf32>
    %433 = vector.shape_cast %432 : vector<1x64xf32> to vector<64xf32>
    %434 = vector.shape_cast %433 : vector<64xf32> to vector<1x1x1x64xf32>
    %435 = vector.broadcast %434 : vector<1x1x1x64xf32> to vector<2x2x2x64xf32>
    %436 = arith.addf %431, %435 : vector<2x2x2x64xf32>
    %437 = vector.shape_cast %436 : vector<2x2x2x64xf32> to vector<8x64xf32>
    %438 = arith.truncf %437 : vector<8x64xf32> to vector<8x64xbf16>
    %c3_371 = arith.constant 3 : index
    %c0_372 = arith.constant 0 : index
    %c0_373 = arith.constant 0 : index
    %439 = vector.load %arg6[%c3_371, %c0_372, %c0_373] : memref<4x64x64xbf16, #tpu.memory_space<vmem>>, vector<1x64x64xbf16>
    %440 = vector.shape_cast %439 : vector<1x64x64xbf16> to vector<64x64xbf16>
    %cst_374 = arith.constant dense<0.000000e+00> : vector<8x64xf32>
    %441 = tpu.matmul %438, %440, %cst_374 {dimension_numbers = #tpu.dot_dimension_numbers<[1], [0], [0], [1], [0, 0, 1, 1], [], []>} : vector<8x64xbf16>, vector<64x64xbf16>, vector<8x64xf32> -> vector<8x64xf32>
    %c3_375 = arith.constant 3 : index
    %c0_376 = arith.constant 0 : index
    %442 = vector.load %arg7[%c3_375, %c0_376] : memref<4x64xf32, #tpu.memory_space<vmem>>, vector<1x64xf32>
    %443 = vector.shape_cast %442 : vector<1x64xf32> to vector<64xf32>
    %444 = vector.shape_cast %443 : vector<64xf32> to vector<1x64xf32>
    %445 = vector.broadcast %444 : vector<1x64xf32> to vector<8x64xf32>
    %446 = arith.addf %441, %445 : vector<8x64xf32>
    %447 = arith.truncf %446 : vector<8x64xf32> to vector<8x64xbf16>
    %c0_377 = arith.constant 0 : index
    %c0_378 = arith.constant 0 : index
    %448 = vector.load %arg8[%c0_377, %c0_378] : memref<64x32xbf16, #tpu.memory_space<vmem>>, vector<64x32xbf16>
    %cst_379 = arith.constant dense<0.000000e+00> : vector<8x32xf32>
    %449 = tpu.matmul %447, %448, %cst_379 {dimension_numbers = #tpu.dot_dimension_numbers<[1], [0], [0], [1], [0, 0, 1, 1], [], []>} : vector<8x64xbf16>, vector<64x32xbf16>, vector<8x32xf32> -> vector<8x32xf32>
    %c0_380 = arith.constant 0 : index
    %c0_381 = arith.constant 0 : index
    %450 = vector.load %arg9[%c0_380, %c0_381] : memref<1x32xf32, #tpu.memory_space<vmem>>, vector<1x32xf32>
    %451 = vector.shape_cast %450 : vector<1x32xf32> to vector<32xf32>
    %452 = vector.shape_cast %451 : vector<32xf32> to vector<1x32xf32>
    %453 = vector.broadcast %452 : vector<1x32xf32> to vector<8x32xf32>
    %454 = arith.addf %449, %453 : vector<8x32xf32>
    %455 = vector.shape_cast %454 : vector<8x32xf32> to vector<2x4x32xf32>
    %cst_382 = arith.constant dense<0.000000e+00> : vector<2x4xf32>
    %456 = vector.multi_reduction <add>, %455, %cst_382 [2] : vector<2x4x32xf32> to vector<2x4xf32>
    %457 = vector.shape_cast %456 : vector<2x4xf32> to vector<2x4x1xf32>
    %cst_383 = arith.constant dense<0.000000e+00> : vector<2x1xf32>
    %458 = vector.multi_reduction <add>, %457, %cst_383 [1] : vector<2x4x1xf32> to vector<2x1xf32>
    %459 = vector.shape_cast %458 : vector<2x1xf32> to vector<2x1x1xf32>
    %460 = arith.addf %345, %459 : vector<2x1x1xf32>
    %cst_384 = arith.constant 2.816000e+03 : f32
    %461 = vector.broadcast %cst_384 : f32 to vector<2x1x1xf32>
    %462 = arith.divf %460, %461 : vector<2x1x1xf32>
    %463 = vector.shape_cast %462 : vector<2x1x1xf32> to vector<1x2xf32>
    %c0_385 = arith.constant 0 : index
    %c0_386 = arith.constant 0 : index
    %464 = vector.load %arg10[%c0_385, %c0_386] : memref<2x2xf32, #tpu.memory_space<vmem>>, vector<2x2xf32>
    %465 = vector.broadcast %463 : vector<1x2xf32> to vector<2x2xf32>
    %466 = arith.mulf %464, %465 : vector<2x2xf32>
    %cst_387 = arith.constant dense<0.000000e+00> : vector<2xf32>
    %467 = vector.multi_reduction <add>, %466, %cst_387 [1] : vector<2x2xf32> to vector<2xf32>
    %468 = vector.shape_cast %467 : vector<2xf32> to vector<2x1xf32>
    %469 = arith.negf %468 : vector<2x1xf32>
    %470 = math.exp %469 : vector<2x1xf32>
    %cst_388 = arith.constant 1.000000e+00 : f32
    %471 = vector.broadcast %cst_388 : f32 to vector<2x1xf32>
    %472 = arith.addf %471, %470 : vector<2x1xf32>
    %473 = arith.divf %471, %472 : vector<2x1xf32>
    %474 = vector.shape_cast %473 : vector<2x1xf32> to vector<2x1x1xf32>
    %c0_389 = arith.constant 0 : index
    %c0_390 = arith.constant 0 : index
    %c0_391 = arith.constant 0 : index
    %475 = vector.load %arg0[%c0_389, %c0_390, %c0_391] : memref<2x88x32xf32, #tpu.memory_space<vmem>>, vector<2x64x32xf32>
    %c0_392 = arith.constant 0 : index
    %c0_393 = arith.constant 0 : index
    %c0_394 = arith.constant 0 : index
    %476 = vector.load %arg1[%c0_392, %c0_393, %c0_394] : memref<2x88x32xf32, #tpu.memory_space<vmem>>, vector<2x64x32xf32>
    %477 = arith.addf %475, %476 : vector<2x64x32xf32>
    %478 = vector.broadcast %474 : vector<2x1x1xf32> to vector<2x64x32xf32>
    %479 = arith.mulf %110, %478 : vector<2x64x32xf32>
    %480 = arith.addf %477, %479 : vector<2x64x32xf32>
    %c0_395 = arith.constant 0 : index
    %c0_396 = arith.constant 0 : index
    %481 = vector.load %arg11[%c0_395, %c0_396] : memref<1x32xf32, #tpu.memory_space<vmem>>, vector<1x32xf32>
    %482 = vector.shape_cast %481 : vector<1x32xf32> to vector<32xf32>
    %c0_397 = arith.constant 0 : index
    %c0_398 = arith.constant 0 : index
    %483 = vector.load %arg12[%c0_397, %c0_398] : memref<1x32xf32, #tpu.memory_space<vmem>>, vector<1x32xf32>
    %484 = vector.shape_cast %483 : vector<1x32xf32> to vector<32xf32>
    %cst_399 = arith.constant dense<0.000000e+00> : vector<2x64xf32>
    %485 = vector.multi_reduction <add>, %480, %cst_399 [2] : vector<2x64x32xf32> to vector<2x64xf32>
    %486 = vector.shape_cast %485 : vector<2x64xf32> to vector<2x64x1xf32>
    %cst_400 = arith.constant 3.200000e+01 : f32
    %487 = vector.broadcast %cst_400 : f32 to vector<2x64x1xf32>
    %488 = arith.divf %486, %487 : vector<2x64x1xf32>
    %489 = vector.broadcast %488 : vector<2x64x1xf32> to vector<2x64x32xf32>
    %490 = arith.subf %480, %489 : vector<2x64x32xf32>
    %491 = arith.mulf %490, %490 : vector<2x64x32xf32>
    %cst_401 = arith.constant dense<0.000000e+00> : vector<2x64xf32>
    %492 = vector.multi_reduction <add>, %491, %cst_401 [2] : vector<2x64x32xf32> to vector<2x64xf32>
    %493 = vector.shape_cast %492 : vector<2x64xf32> to vector<2x64x1xf32>
    %cst_402 = arith.constant 3.200000e+01 : f32
    %494 = vector.broadcast %cst_402 : f32 to vector<2x64x1xf32>
    %495 = arith.divf %493, %494 : vector<2x64x1xf32>
    %496 = vector.broadcast %488 : vector<2x64x1xf32> to vector<2x64x32xf32>
    %497 = arith.subf %480, %496 : vector<2x64x32xf32>
    %cst_403 = arith.constant 9.99999974E-6 : f32
    %498 = vector.broadcast %cst_403 : f32 to vector<2x64x1xf32>
    %499 = arith.addf %495, %498 : vector<2x64x1xf32>
    %500 = math.rsqrt %499 : vector<2x64x1xf32>
    %501 = vector.broadcast %500 : vector<2x64x1xf32> to vector<2x64x32xf32>
    %502 = arith.mulf %497, %501 : vector<2x64x32xf32>
    %503 = vector.shape_cast %482 : vector<32xf32> to vector<1x1x32xf32>
    %504 = vector.broadcast %503 : vector<1x1x32xf32> to vector<2x64x32xf32>
    %505 = arith.mulf %502, %504 : vector<2x64x32xf32>
    %506 = vector.shape_cast %484 : vector<32xf32> to vector<1x1x32xf32>
    %507 = vector.broadcast %506 : vector<1x1x32xf32> to vector<2x64x32xf32>
    %508 = arith.addf %505, %507 : vector<2x64x32xf32>
    %509 = vector.shape_cast %508 : vector<2x64x32xf32> to vector<128x32xf32>
    %510 = arith.truncf %509 : vector<128x32xf32> to vector<128x32xbf16>
    %c0_404 = arith.constant 0 : index
    %c0_405 = arith.constant 0 : index
    %511 = vector.load %arg13[%c0_404, %c0_405] : memref<32x64xbf16, #tpu.memory_space<vmem>>, vector<32x64xbf16>
    %cst_406 = arith.constant dense<0.000000e+00> : vector<128x64xf32>
    %512 = tpu.matmul %510, %511, %cst_406 {dimension_numbers = #tpu.dot_dimension_numbers<[1], [0], [0], [1], [0, 0, 1, 1], [], []>} : vector<128x32xbf16>, vector<32x64xbf16>, vector<128x64xf32> -> vector<128x64xf32>
    %c0_407 = arith.constant 0 : index
    %c0_408 = arith.constant 0 : index
    %513 = vector.load %arg14[%c0_407, %c0_408] : memref<1x64xf32, #tpu.memory_space<vmem>>, vector<1x64xf32>
    %514 = vector.shape_cast %513 : vector<1x64xf32> to vector<64xf32>
    %515 = vector.shape_cast %514 : vector<64xf32> to vector<1x64xf32>
    %516 = vector.broadcast %515 : vector<1x64xf32> to vector<128x64xf32>
    %517 = arith.addf %512, %516 : vector<128x64xf32>
    %cst_409 = arith.constant 0.000000e+00 : f32
    %518 = vector.broadcast %cst_409 : f32 to vector<128x64xf32>
    %519 = arith.maximumf %517, %518 : vector<128x64xf32>
    %520 = arith.truncf %519 : vector<128x64xf32> to vector<128x64xbf16>
    %c0_410 = arith.constant 0 : index
    %c0_411 = arith.constant 0 : index
    %521 = vector.load %arg15[%c0_410, %c0_411] : memref<64x32xbf16, #tpu.memory_space<vmem>>, vector<64x32xbf16>
    %cst_412 = arith.constant dense<0.000000e+00> : vector<128x32xf32>
    %522 = tpu.matmul %520, %521, %cst_412 {dimension_numbers = #tpu.dot_dimension_numbers<[1], [0], [0], [1], [0, 0, 1, 1], [], []>} : vector<128x64xbf16>, vector<64x32xbf16>, vector<128x32xf32> -> vector<128x32xf32>
    %c0_413 = arith.constant 0 : index
    %c0_414 = arith.constant 0 : index
    %523 = vector.load %arg16[%c0_413, %c0_414] : memref<1x32xf32, #tpu.memory_space<vmem>>, vector<1x32xf32>
    %524 = vector.shape_cast %523 : vector<1x32xf32> to vector<32xf32>
    %525 = vector.shape_cast %524 : vector<32xf32> to vector<1x32xf32>
    %526 = vector.broadcast %525 : vector<1x32xf32> to vector<128x32xf32>
    %527 = arith.addf %522, %526 : vector<128x32xf32>
    %528 = arith.addf %509, %527 : vector<128x32xf32>
    %c0_415 = arith.constant 0 : index
    %c0_416 = arith.constant 0 : index
    %529 = vector.load %arg17[%c0_415, %c0_416] : memref<1x32xf32, #tpu.memory_space<vmem>>, vector<1x32xf32>
    %530 = vector.shape_cast %529 : vector<1x32xf32> to vector<32xf32>
    %c0_417 = arith.constant 0 : index
    %c0_418 = arith.constant 0 : index
    %531 = vector.load %arg18[%c0_417, %c0_418] : memref<1x32xf32, #tpu.memory_space<vmem>>, vector<1x32xf32>
    %532 = vector.shape_cast %531 : vector<1x32xf32> to vector<32xf32>
    %cst_419 = arith.constant dense<0.000000e+00> : vector<128xf32>
    %533 = vector.multi_reduction <add>, %528, %cst_419 [1] : vector<128x32xf32> to vector<128xf32>
    %534 = vector.shape_cast %533 : vector<128xf32> to vector<128x1xf32>
    %cst_420 = arith.constant 3.200000e+01 : f32
    %535 = vector.broadcast %cst_420 : f32 to vector<128x1xf32>
    %536 = arith.divf %534, %535 : vector<128x1xf32>
    %537 = vector.broadcast %536 : vector<128x1xf32> to vector<128x32xf32>
    %538 = arith.subf %528, %537 : vector<128x32xf32>
    %539 = arith.mulf %538, %538 : vector<128x32xf32>
    %cst_421 = arith.constant dense<0.000000e+00> : vector<128xf32>
    %540 = vector.multi_reduction <add>, %539, %cst_421 [1] : vector<128x32xf32> to vector<128xf32>
    %541 = vector.shape_cast %540 : vector<128xf32> to vector<128x1xf32>
    %cst_422 = arith.constant 3.200000e+01 : f32
    %542 = vector.broadcast %cst_422 : f32 to vector<128x1xf32>
    %543 = arith.divf %541, %542 : vector<128x1xf32>
    %544 = vector.broadcast %536 : vector<128x1xf32> to vector<128x32xf32>
    %545 = arith.subf %528, %544 : vector<128x32xf32>
    %cst_423 = arith.constant 9.99999974E-6 : f32
    %546 = vector.broadcast %cst_423 : f32 to vector<128x1xf32>
    %547 = arith.addf %543, %546 : vector<128x1xf32>
    %548 = math.rsqrt %547 : vector<128x1xf32>
    %549 = vector.broadcast %548 : vector<128x1xf32> to vector<128x32xf32>
    %550 = arith.mulf %545, %549 : vector<128x32xf32>
    %551 = vector.shape_cast %530 : vector<32xf32> to vector<1x32xf32>
    %552 = vector.broadcast %551 : vector<1x32xf32> to vector<128x32xf32>
    %553 = arith.mulf %550, %552 : vector<128x32xf32>
    %554 = vector.shape_cast %532 : vector<32xf32> to vector<1x32xf32>
    %555 = vector.broadcast %554 : vector<1x32xf32> to vector<128x32xf32>
    %556 = arith.addf %553, %555 : vector<128x32xf32>
    %557 = vector.shape_cast %556 : vector<128x32xf32> to vector<2x64x32xf32>
    %c0_424 = arith.constant 0 : index
    %c0_425 = arith.constant 0 : index
    %c0_426 = arith.constant 0 : index
    %558 = vector.load %arg19[%c0_424, %c0_425, %c0_426] : memref<2x88x32xf32, #tpu.memory_space<vmem>>, vector<2x64x32xf32>
    tpu.vector_store %arg19[%c0_424, %c0_425, %c0_426], %557 {strides = array<i32>} : memref<2x88x32xf32, #tpu.memory_space<vmem>>, vector<2x64x32xf32>,
    %c0_427 = arith.constant 0 : index
    %c64_428 = arith.constant 64 : index
    %c0_429 = arith.constant 0 : index
    %559 = vector.load %arg0[%c0_427, %c64_428, %c0_429] : memref<2x88x32xf32, #tpu.memory_space<vmem>>, vector<2x16x32xf32>
    %c0_430 = arith.constant 0 : index
    %c64_431 = arith.constant 64 : index
    %c0_432 = arith.constant 0 : index
    %560 = vector.load %arg1[%c0_430, %c64_431, %c0_432] : memref<2x88x32xf32, #tpu.memory_space<vmem>>, vector<2x16x32xf32>
    %561 = arith.addf %559, %560 : vector<2x16x32xf32>
    %562 = vector.broadcast %474 : vector<2x1x1xf32> to vector<2x16x32xf32>
    %563 = arith.mulf %225, %562 : vector<2x16x32xf32>
    %564 = arith.addf %561, %563 : vector<2x16x32xf32>
    %c0_433 = arith.constant 0 : index
    %c0_434 = arith.constant 0 : index
    %565 = vector.load %arg11[%c0_433, %c0_434] : memref<1x32xf32, #tpu.memory_space<vmem>>, vector<1x32xf32>
    %566 = vector.shape_cast %565 : vector<1x32xf32> to vector<32xf32>
    %c0_435 = arith.constant 0 : index
    %c0_436 = arith.constant 0 : index
    %567 = vector.load %arg12[%c0_435, %c0_436] : memref<1x32xf32, #tpu.memory_space<vmem>>, vector<1x32xf32>
    %568 = vector.shape_cast %567 : vector<1x32xf32> to vector<32xf32>
    %cst_437 = arith.constant dense<0.000000e+00> : vector<2x16xf32>
    %569 = vector.multi_reduction <add>, %564, %cst_437 [2] : vector<2x16x32xf32> to vector<2x16xf32>
    %570 = vector.shape_cast %569 : vector<2x16xf32> to vector<2x16x1xf32>
    %cst_438 = arith.constant 3.200000e+01 : f32
    %571 = vector.broadcast %cst_438 : f32 to vector<2x16x1xf32>
    %572 = arith.divf %570, %571 : vector<2x16x1xf32>
    %573 = vector.broadcast %572 : vector<2x16x1xf32> to vector<2x16x32xf32>
    %574 = arith.subf %564, %573 : vector<2x16x32xf32>
    %575 = arith.mulf %574, %574 : vector<2x16x32xf32>
    %cst_439 = arith.constant dense<0.000000e+00> : vector<2x16xf32>
    %576 = vector.multi_reduction <add>, %575, %cst_439 [2] : vector<2x16x32xf32> to vector<2x16xf32>
    %577 = vector.shape_cast %576 : vector<2x16xf32> to vector<2x16x1xf32>
    %cst_440 = arith.constant 3.200000e+01 : f32
    %578 = vector.broadcast %cst_440 : f32 to vector<2x16x1xf32>
    %579 = arith.divf %577, %578 : vector<2x16x1xf32>
    %580 = vector.broadcast %572 : vector<2x16x1xf32> to vector<2x16x32xf32>
    %581 = arith.subf %564, %580 : vector<2x16x32xf32>
    %cst_441 = arith.constant 9.99999974E-6 : f32
    %582 = vector.broadcast %cst_441 : f32 to vector<2x16x1xf32>
    %583 = arith.addf %579, %582 : vector<2x16x1xf32>
    %584 = math.rsqrt %583 : vector<2x16x1xf32>
    %585 = vector.broadcast %584 : vector<2x16x1xf32> to vector<2x16x32xf32>
    %586 = arith.mulf %581, %585 : vector<2x16x32xf32>
    %587 = vector.shape_cast %566 : vector<32xf32> to vector<1x1x32xf32>
    %588 = vector.broadcast %587 : vector<1x1x32xf32> to vector<2x16x32xf32>
    %589 = arith.mulf %586, %588 : vector<2x16x32xf32>
    %590 = vector.shape_cast %568 : vector<32xf32> to vector<1x1x32xf32>
    %591 = vector.broadcast %590 : vector<1x1x32xf32> to vector<2x16x32xf32>
    %592 = arith.addf %589, %591 : vector<2x16x32xf32>
    %593 = vector.shape_cast %592 : vector<2x16x32xf32> to vector<32x32xf32>
    %594 = arith.truncf %593 : vector<32x32xf32> to vector<32x32xbf16>
    %c0_442 = arith.constant 0 : index
    %c0_443 = arith.constant 0 : index
    %595 = vector.load %arg13[%c0_442, %c0_443] : memref<32x64xbf16, #tpu.memory_space<vmem>>, vector<32x64xbf16>
    %cst_444 = arith.constant dense<0.000000e+00> : vector<32x64xf32>
    %596 = tpu.matmul %594, %595, %cst_444 {dimension_numbers = #tpu.dot_dimension_numbers<[1], [0], [0], [1], [0, 0, 1, 1], [], []>} : vector<32x32xbf16>, vector<32x64xbf16>, vector<32x64xf32> -> vector<32x64xf32>
    %c0_445 = arith.constant 0 : index
    %c0_446 = arith.constant 0 : index
    %597 = vector.load %arg14[%c0_445, %c0_446] : memref<1x64xf32, #tpu.memory_space<vmem>>, vector<1x64xf32>
    %598 = vector.shape_cast %597 : vector<1x64xf32> to vector<64xf32>
    %599 = vector.shape_cast %598 : vector<64xf32> to vector<1x64xf32>
    %600 = vector.broadcast %599 : vector<1x64xf32> to vector<32x64xf32>
    %601 = arith.addf %596, %600 : vector<32x64xf32>
    %cst_447 = arith.constant 0.000000e+00 : f32
    %602 = vector.broadcast %cst_447 : f32 to vector<32x64xf32>
    %603 = arith.maximumf %601, %602 : vector<32x64xf32>
    %604 = arith.truncf %603 : vector<32x64xf32> to vector<32x64xbf16>
    %c0_448 = arith.constant 0 : index
    %c0_449 = arith.constant 0 : index
    %605 = vector.load %arg15[%c0_448, %c0_449] : memref<64x32xbf16, #tpu.memory_space<vmem>>, vector<64x32xbf16>
    %cst_450 = arith.constant dense<0.000000e+00> : vector<32x32xf32>
    %606 = tpu.matmul %604, %605, %cst_450 {dimension_numbers = #tpu.dot_dimension_numbers<[1], [0], [0], [1], [0, 0, 1, 1], [], []>} : vector<32x64xbf16>, vector<64x32xbf16>, vector<32x32xf32> -> vector<32x32xf32>
    %c0_451 = arith.constant 0 : index
    %c0_452 = arith.constant 0 : index
    %607 = vector.load %arg16[%c0_451, %c0_452] : memref<1x32xf32, #tpu.memory_space<vmem>>, vector<1x32xf32>
    %608 = vector.shape_cast %607 : vector<1x32xf32> to vector<32xf32>
    %609 = vector.shape_cast %608 : vector<32xf32> to vector<1x32xf32>
    %610 = vector.broadcast %609 : vector<1x32xf32> to vector<32x32xf32>
    %611 = arith.addf %606, %610 : vector<32x32xf32>
    %612 = arith.addf %593, %611 : vector<32x32xf32>
    %c0_453 = arith.constant 0 : index
    %c0_454 = arith.constant 0 : index
    %613 = vector.load %arg17[%c0_453, %c0_454] : memref<1x32xf32, #tpu.memory_space<vmem>>, vector<1x32xf32>
    %614 = vector.shape_cast %613 : vector<1x32xf32> to vector<32xf32>
    %c0_455 = arith.constant 0 : index
    %c0_456 = arith.constant 0 : index
    %615 = vector.load %arg18[%c0_455, %c0_456] : memref<1x32xf32, #tpu.memory_space<vmem>>, vector<1x32xf32>
    %616 = vector.shape_cast %615 : vector<1x32xf32> to vector<32xf32>
    %cst_457 = arith.constant dense<0.000000e+00> : vector<32xf32>
    %617 = vector.multi_reduction <add>, %612, %cst_457 [1] : vector<32x32xf32> to vector<32xf32>
    %618 = vector.shape_cast %617 : vector<32xf32> to vector<32x1xf32>
    %cst_458 = arith.constant 3.200000e+01 : f32
    %619 = vector.broadcast %cst_458 : f32 to vector<32x1xf32>
    %620 = arith.divf %618, %619 : vector<32x1xf32>
    %621 = vector.broadcast %620 : vector<32x1xf32> to vector<32x32xf32>
    %622 = arith.subf %612, %621 : vector<32x32xf32>
    %623 = arith.mulf %622, %622 : vector<32x32xf32>
    %cst_459 = arith.constant dense<0.000000e+00> : vector<32xf32>
    %624 = vector.multi_reduction <add>, %623, %cst_459 [1] : vector<32x32xf32> to vector<32xf32>
    %625 = vector.shape_cast %624 : vector<32xf32> to vector<32x1xf32>
    %cst_460 = arith.constant 3.200000e+01 : f32
    %626 = vector.broadcast %cst_460 : f32 to vector<32x1xf32>
    %627 = arith.divf %625, %626 : vector<32x1xf32>
    %628 = vector.broadcast %620 : vector<32x1xf32> to vector<32x32xf32>
    %629 = arith.subf %612, %628 : vector<32x32xf32>
    %cst_461 = arith.constant 9.99999974E-6 : f32
    %630 = vector.broadcast %cst_461 : f32 to vector<32x1xf32>
    %631 = arith.addf %627, %630 : vector<32x1xf32>
    %632 = math.rsqrt %631 : vector<32x1xf32>
    %633 = vector.broadcast %632 : vector<32x1xf32> to vector<32x32xf32>
    %634 = arith.mulf %629, %633 : vector<32x32xf32>
    %635 = vector.shape_cast %614 : vector<32xf32> to vector<1x32xf32>
    %636 = vector.broadcast %635 : vector<1x32xf32> to vector<32x32xf32>
    %637 = arith.mulf %634, %636 : vector<32x32xf32>
    %638 = vector.shape_cast %616 : vector<32xf32> to vector<1x32xf32>
    %639 = vector.broadcast %638 : vector<1x32xf32> to vector<32x32xf32>
    %640 = arith.addf %637, %639 : vector<32x32xf32>
    %641 = vector.shape_cast %640 : vector<32x32xf32> to vector<2x16x32xf32>
    %c0_462 = arith.constant 0 : index
    %c64_463 = arith.constant 64 : index
    %c0_464 = arith.constant 0 : index
    %642 = vector.load %arg19[%c0_462, %c64_463, %c0_464] : memref<2x88x32xf32, #tpu.memory_space<vmem>>, vector<2x16x32xf32>
    tpu.vector_store %arg19[%c0_462, %c64_463, %c0_464], %641 {strides = array<i32>} : memref<2x88x32xf32, #tpu.memory_space<vmem>>, vector<2x16x32xf32>,
    %c0_465 = arith.constant 0 : index
    %c80_466 = arith.constant 80 : index
    %c0_467 = arith.constant 0 : index
    %643 = vector.load %arg0[%c0_465, %c80_466, %c0_467] : memref<2x88x32xf32, #tpu.memory_space<vmem>>, vector<2x4x32xf32>
    %c0_468 = arith.constant 0 : index
    %c80_469 = arith.constant 80 : index
    %c0_470 = arith.constant 0 : index
    %644 = vector.load %arg1[%c0_468, %c80_469, %c0_470] : memref<2x88x32xf32, #tpu.memory_space<vmem>>, vector<2x4x32xf32>
    %645 = arith.addf %643, %644 : vector<2x4x32xf32>
    %646 = vector.broadcast %474 : vector<2x1x1xf32> to vector<2x4x32xf32>
    %647 = arith.mulf %340, %646 : vector<2x4x32xf32>
    %648 = arith.addf %645, %647 : vector<2x4x32xf32>
    %c0_471 = arith.constant 0 : index
    %c0_472 = arith.constant 0 : index
    %649 = vector.load %arg11[%c0_471, %c0_472] : memref<1x32xf32, #tpu.memory_space<vmem>>, vector<1x32xf32>
    %650 = vector.shape_cast %649 : vector<1x32xf32> to vector<32xf32>
    %c0_473 = arith.constant 0 : index
    %c0_474 = arith.constant 0 : index
    %651 = vector.load %arg12[%c0_473, %c0_474] : memref<1x32xf32, #tpu.memory_space<vmem>>, vector<1x32xf32>
    %652 = vector.shape_cast %651 : vector<1x32xf32> to vector<32xf32>
    %cst_475 = arith.constant dense<0.000000e+00> : vector<2x4xf32>
    %653 = vector.multi_reduction <add>, %648, %cst_475 [2] : vector<2x4x32xf32> to vector<2x4xf32>
    %654 = vector.shape_cast %653 : vector<2x4xf32> to vector<2x4x1xf32>
    %cst_476 = arith.constant 3.200000e+01 : f32
    %655 = vector.broadcast %cst_476 : f32 to vector<2x4x1xf32>
    %656 = arith.divf %654, %655 : vector<2x4x1xf32>
    %657 = vector.broadcast %656 : vector<2x4x1xf32> to vector<2x4x32xf32>
    %658 = arith.subf %648, %657 : vector<2x4x32xf32>
    %659 = arith.mulf %658, %658 : vector<2x4x32xf32>
    %cst_477 = arith.constant dense<0.000000e+00> : vector<2x4xf32>
    %660 = vector.multi_reduction <add>, %659, %cst_477 [2] : vector<2x4x32xf32> to vector<2x4xf32>
    %661 = vector.shape_cast %660 : vector<2x4xf32> to vector<2x4x1xf32>
    %cst_478 = arith.constant 3.200000e+01 : f32
    %662 = vector.broadcast %cst_478 : f32 to vector<2x4x1xf32>
    %663 = arith.divf %661, %662 : vector<2x4x1xf32>
    %664 = vector.broadcast %656 : vector<2x4x1xf32> to vector<2x4x32xf32>
    %665 = arith.subf %648, %664 : vector<2x4x32xf32>
    %cst_479 = arith.constant 9.99999974E-6 : f32
    %666 = vector.broadcast %cst_479 : f32 to vector<2x4x1xf32>
    %667 = arith.addf %663, %666 : vector<2x4x1xf32>
    %668 = math.rsqrt %667 : vector<2x4x1xf32>
    %669 = vector.broadcast %668 : vector<2x4x1xf32> to vector<2x4x32xf32>
    %670 = arith.mulf %665, %669 : vector<2x4x32xf32>
    %671 = vector.shape_cast %650 : vector<32xf32> to vector<1x1x32xf32>
    %672 = vector.broadcast %671 : vector<1x1x32xf32> to vector<2x4x32xf32>
    %673 = arith.mulf %670, %672 : vector<2x4x32xf32>
    %674 = vector.shape_cast %652 : vector<32xf32> to vector<1x1x32xf32>
    %675 = vector.broadcast %674 : vector<1x1x32xf32> to vector<2x4x32xf32>
    %676 = arith.addf %673, %675 : vector<2x4x32xf32>
    %677 = vector.shape_cast %676 : vector<2x4x32xf32> to vector<8x32xf32>
    %678 = arith.truncf %677 : vector<8x32xf32> to vector<8x32xbf16>
    %c0_480 = arith.constant 0 : index
    %c0_481 = arith.constant 0 : index
    %679 = vector.load %arg13[%c0_480, %c0_481] : memref<32x64xbf16, #tpu.memory_space<vmem>>, vector<32x64xbf16>
    %cst_482 = arith.constant dense<0.000000e+00> : vector<8x64xf32>
    %680 = tpu.matmul %678, %679, %cst_482 {dimension_numbers = #tpu.dot_dimension_numbers<[1], [0], [0], [1], [0, 0, 1, 1], [], []>} : vector<8x32xbf16>, vector<32x64xbf16>, vector<8x64xf32> -> vector<8x64xf32>
    %c0_483 = arith.constant 0 : index
    %c0_484 = arith.constant 0 : index
    %681 = vector.load %arg14[%c0_483, %c0_484] : memref<1x64xf32, #tpu.memory_space<vmem>>, vector<1x64xf32>
    %682 = vector.shape_cast %681 : vector<1x64xf32> to vector<64xf32>
    %683 = vector.shape_cast %682 : vector<64xf32> to vector<1x64xf32>
    %684 = vector.broadcast %683 : vector<1x64xf32> to vector<8x64xf32>
    %685 = arith.addf %680, %684 : vector<8x64xf32>
    %cst_485 = arith.constant 0.000000e+00 : f32
    %686 = vector.broadcast %cst_485 : f32 to vector<8x64xf32>
    %687 = arith.maximumf %685, %686 : vector<8x64xf32>
    %688 = arith.truncf %687 : vector<8x64xf32> to vector<8x64xbf16>
    %c0_486 = arith.constant 0 : index
    %c0_487 = arith.constant 0 : index
    %689 = vector.load %arg15[%c0_486, %c0_487] : memref<64x32xbf16, #tpu.memory_space<vmem>>, vector<64x32xbf16>
    %cst_488 = arith.constant dense<0.000000e+00> : vector<8x32xf32>
    %690 = tpu.matmul %688, %689, %cst_488 {dimension_numbers = #tpu.dot_dimension_numbers<[1], [0], [0], [1], [0, 0, 1, 1], [], []>} : vector<8x64xbf16>, vector<64x32xbf16>, vector<8x32xf32> -> vector<8x32xf32>
    %c0_489 = arith.constant 0 : index
    %c0_490 = arith.constant 0 : index
    %691 = vector.load %arg16[%c0_489, %c0_490] : memref<1x32xf32, #tpu.memory_space<vmem>>, vector<1x32xf32>
    %692 = vector.shape_cast %691 : vector<1x32xf32> to vector<32xf32>
    %693 = vector.shape_cast %692 : vector<32xf32> to vector<1x32xf32>
    %694 = vector.broadcast %693 : vector<1x32xf32> to vector<8x32xf32>
    %695 = arith.addf %690, %694 : vector<8x32xf32>
    %696 = arith.addf %677, %695 : vector<8x32xf32>
    %c0_491 = arith.constant 0 : index
    %c0_492 = arith.constant 0 : index
    %697 = vector.load %arg17[%c0_491, %c0_492] : memref<1x32xf32, #tpu.memory_space<vmem>>, vector<1x32xf32>
    %698 = vector.shape_cast %697 : vector<1x32xf32> to vector<32xf32>
    %c0_493 = arith.constant 0 : index
    %c0_494 = arith.constant 0 : index
    %699 = vector.load %arg18[%c0_493, %c0_494] : memref<1x32xf32, #tpu.memory_space<vmem>>, vector<1x32xf32>
    %700 = vector.shape_cast %699 : vector<1x32xf32> to vector<32xf32>
    %cst_495 = arith.constant dense<0.000000e+00> : vector<8xf32>
    %701 = vector.multi_reduction <add>, %696, %cst_495 [1] : vector<8x32xf32> to vector<8xf32>
    %702 = vector.shape_cast %701 : vector<8xf32> to vector<8x1xf32>
    %cst_496 = arith.constant 3.200000e+01 : f32
    %703 = vector.broadcast %cst_496 : f32 to vector<8x1xf32>
    %704 = arith.divf %702, %703 : vector<8x1xf32>
    %705 = vector.broadcast %704 : vector<8x1xf32> to vector<8x32xf32>
    %706 = arith.subf %696, %705 : vector<8x32xf32>
    %707 = arith.mulf %706, %706 : vector<8x32xf32>
    %cst_497 = arith.constant dense<0.000000e+00> : vector<8xf32>
    %708 = vector.multi_reduction <add>, %707, %cst_497 [1] : vector<8x32xf32> to vector<8xf32>
    %709 = vector.shape_cast %708 : vector<8xf32> to vector<8x1xf32>
    %cst_498 = arith.constant 3.200000e+01 : f32
    %710 = vector.broadcast %cst_498 : f32 to vector<8x1xf32>
    %711 = arith.divf %709, %710 : vector<8x1xf32>
    %712 = vector.broadcast %704 : vector<8x1xf32> to vector<8x32xf32>
    %713 = arith.subf %696, %712 : vector<8x32xf32>
    %cst_499 = arith.constant 9.99999974E-6 : f32
    %714 = vector.broadcast %cst_499 : f32 to vector<8x1xf32>
    %715 = arith.addf %711, %714 : vector<8x1xf32>
    %716 = math.rsqrt %715 : vector<8x1xf32>
    %717 = vector.broadcast %716 : vector<8x1xf32> to vector<8x32xf32>
    %718 = arith.mulf %713, %717 : vector<8x32xf32>
    %719 = vector.shape_cast %698 : vector<32xf32> to vector<1x32xf32>
    %720 = vector.broadcast %719 : vector<1x32xf32> to vector<8x32xf32>
    %721 = arith.mulf %718, %720 : vector<8x32xf32>
    %722 = vector.shape_cast %700 : vector<32xf32> to vector<1x32xf32>
    %723 = vector.broadcast %722 : vector<1x32xf32> to vector<8x32xf32>
    %724 = arith.addf %721, %723 : vector<8x32xf32>
    %725 = vector.shape_cast %724 : vector<8x32xf32> to vector<2x4x32xf32>
    %c0_500 = arith.constant 0 : index
    %c80_501 = arith.constant 80 : index
    %c0_502 = arith.constant 0 : index
    %726 = vector.load %arg19[%c0_500, %c80_501, %c0_502] : memref<2x88x32xf32, #tpu.memory_space<vmem>>, vector<2x4x32xf32>
    tpu.vector_store %arg19[%c0_500, %c80_501, %c0_502], %725 {strides = array<i32>} : memref<2x88x32xf32, #tpu.memory_space<vmem>>, vector<2x4x32xf32>,
    %c0_503 = arith.constant 0 : index
    %c84_504 = arith.constant 84 : index
    %c0_505 = arith.constant 0 : index
    %727 = vector.load %arg0[%c0_503, %c84_504, %c0_505] : memref<2x88x32xf32, #tpu.memory_space<vmem>>, vector<2x4x32xf32>
    %c0_506 = arith.constant 0 : index
    %c84_507 = arith.constant 84 : index
    %c0_508 = arith.constant 0 : index
    %728 = vector.load %arg1[%c0_506, %c84_507, %c0_508] : memref<2x88x32xf32, #tpu.memory_space<vmem>>, vector<2x4x32xf32>
    %729 = arith.addf %727, %728 : vector<2x4x32xf32>
    %730 = vector.broadcast %474 : vector<2x1x1xf32> to vector<2x4x32xf32>
    %731 = arith.mulf %455, %730 : vector<2x4x32xf32>
    %732 = arith.addf %729, %731 : vector<2x4x32xf32>
    %c0_509 = arith.constant 0 : index
    %c0_510 = arith.constant 0 : index
    %733 = vector.load %arg11[%c0_509, %c0_510] : memref<1x32xf32, #tpu.memory_space<vmem>>, vector<1x32xf32>
    %734 = vector.shape_cast %733 : vector<1x32xf32> to vector<32xf32>
    %c0_511 = arith.constant 0 : index
    %c0_512 = arith.constant 0 : index
    %735 = vector.load %arg12[%c0_511, %c0_512] : memref<1x32xf32, #tpu.memory_space<vmem>>, vector<1x32xf32>
    %736 = vector.shape_cast %735 : vector<1x32xf32> to vector<32xf32>
    %cst_513 = arith.constant dense<0.000000e+00> : vector<2x4xf32>
    %737 = vector.multi_reduction <add>, %732, %cst_513 [2] : vector<2x4x32xf32> to vector<2x4xf32>
    %738 = vector.shape_cast %737 : vector<2x4xf32> to vector<2x4x1xf32>
    %cst_514 = arith.constant 3.200000e+01 : f32
    %739 = vector.broadcast %cst_514 : f32 to vector<2x4x1xf32>
    %740 = arith.divf %738, %739 : vector<2x4x1xf32>
    %741 = vector.broadcast %740 : vector<2x4x1xf32> to vector<2x4x32xf32>
    %742 = arith.subf %732, %741 : vector<2x4x32xf32>
    %743 = arith.mulf %742, %742 : vector<2x4x32xf32>
    %cst_515 = arith.constant dense<0.000000e+00> : vector<2x4xf32>
    %744 = vector.multi_reduction <add>, %743, %cst_515 [2] : vector<2x4x32xf32> to vector<2x4xf32>
    %745 = vector.shape_cast %744 : vector<2x4xf32> to vector<2x4x1xf32>
    %cst_516 = arith.constant 3.200000e+01 : f32
    %746 = vector.broadcast %cst_516 : f32 to vector<2x4x1xf32>
    %747 = arith.divf %745, %746 : vector<2x4x1xf32>
    %748 = vector.broadcast %740 : vector<2x4x1xf32> to vector<2x4x32xf32>
    %749 = arith.subf %732, %748 : vector<2x4x32xf32>
    %cst_517 = arith.constant 9.99999974E-6 : f32
    %750 = vector.broadcast %cst_517 : f32 to vector<2x4x1xf32>
    %751 = arith.addf %747, %750 : vector<2x4x1xf32>
    %752 = math.rsqrt %751 : vector<2x4x1xf32>
    %753 = vector.broadcast %752 : vector<2x4x1xf32> to vector<2x4x32xf32>
    %754 = arith.mulf %749, %753 : vector<2x4x32xf32>
    %755 = vector.shape_cast %734 : vector<32xf32> to vector<1x1x32xf32>
    %756 = vector.broadcast %755 : vector<1x1x32xf32> to vector<2x4x32xf32>
    %757 = arith.mulf %754, %756 : vector<2x4x32xf32>
    %758 = vector.shape_cast %736 : vector<32xf32> to vector<1x1x32xf32>
    %759 = vector.broadcast %758 : vector<1x1x32xf32> to vector<2x4x32xf32>
    %760 = arith.addf %757, %759 : vector<2x4x32xf32>
    %761 = vector.shape_cast %760 : vector<2x4x32xf32> to vector<8x32xf32>
    %762 = arith.truncf %761 : vector<8x32xf32> to vector<8x32xbf16>
    %c0_518 = arith.constant 0 : index
    %c0_519 = arith.constant 0 : index
    %763 = vector.load %arg13[%c0_518, %c0_519] : memref<32x64xbf16, #tpu.memory_space<vmem>>, vector<32x64xbf16>
    %cst_520 = arith.constant dense<0.000000e+00> : vector<8x64xf32>
    %764 = tpu.matmul %762, %763, %cst_520 {dimension_numbers = #tpu.dot_dimension_numbers<[1], [0], [0], [1], [0, 0, 1, 1], [], []>} : vector<8x32xbf16>, vector<32x64xbf16>, vector<8x64xf32> -> vector<8x64xf32>
    %c0_521 = arith.constant 0 : index
    %c0_522 = arith.constant 0 : index
    %765 = vector.load %arg14[%c0_521, %c0_522] : memref<1x64xf32, #tpu.memory_space<vmem>>, vector<1x64xf32>
    %766 = vector.shape_cast %765 : vector<1x64xf32> to vector<64xf32>
    %767 = vector.shape_cast %766 : vector<64xf32> to vector<1x64xf32>
    %768 = vector.broadcast %767 : vector<1x64xf32> to vector<8x64xf32>
    %769 = arith.addf %764, %768 : vector<8x64xf32>
    %cst_523 = arith.constant 0.000000e+00 : f32
    %770 = vector.broadcast %cst_523 : f32 to vector<8x64xf32>
    %771 = arith.maximumf %769, %770 : vector<8x64xf32>
    %772 = arith.truncf %771 : vector<8x64xf32> to vector<8x64xbf16>
    %c0_524 = arith.constant 0 : index
    %c0_525 = arith.constant 0 : index
    %773 = vector.load %arg15[%c0_524, %c0_525] : memref<64x32xbf16, #tpu.memory_space<vmem>>, vector<64x32xbf16>
    %cst_526 = arith.constant dense<0.000000e+00> : vector<8x32xf32>
    %774 = tpu.matmul %772, %773, %cst_526 {dimension_numbers = #tpu.dot_dimension_numbers<[1], [0], [0], [1], [0, 0, 1, 1], [], []>} : vector<8x64xbf16>, vector<64x32xbf16>, vector<8x32xf32> -> vector<8x32xf32>
    %c0_527 = arith.constant 0 : index
    %c0_528 = arith.constant 0 : index
    %775 = vector.load %arg16[%c0_527, %c0_528] : memref<1x32xf32, #tpu.memory_space<vmem>>, vector<1x32xf32>
    %776 = vector.shape_cast %775 : vector<1x32xf32> to vector<32xf32>
    %777 = vector.shape_cast %776 : vector<32xf32> to vector<1x32xf32>
    %778 = vector.broadcast %777 : vector<1x32xf32> to vector<8x32xf32>
    %779 = arith.addf %774, %778 : vector<8x32xf32>
    %780 = arith.addf %761, %779 : vector<8x32xf32>
    %c0_529 = arith.constant 0 : index
    %c0_530 = arith.constant 0 : index
    %781 = vector.load %arg17[%c0_529, %c0_530] : memref<1x32xf32, #tpu.memory_space<vmem>>, vector<1x32xf32>
    %782 = vector.shape_cast %781 : vector<1x32xf32> to vector<32xf32>
    %c0_531 = arith.constant 0 : index
    %c0_532 = arith.constant 0 : index
    %783 = vector.load %arg18[%c0_531, %c0_532] : memref<1x32xf32, #tpu.memory_space<vmem>>, vector<1x32xf32>
    %784 = vector.shape_cast %783 : vector<1x32xf32> to vector<32xf32>
    %cst_533 = arith.constant dense<0.000000e+00> : vector<8xf32>
    %785 = vector.multi_reduction <add>, %780, %cst_533 [1] : vector<8x32xf32> to vector<8xf32>
    %786 = vector.shape_cast %785 : vector<8xf32> to vector<8x1xf32>
    %cst_534 = arith.constant 3.200000e+01 : f32
    %787 = vector.broadcast %cst_534 : f32 to vector<8x1xf32>
    %788 = arith.divf %786, %787 : vector<8x1xf32>
    %789 = vector.broadcast %788 : vector<8x1xf32> to vector<8x32xf32>
    %790 = arith.subf %780, %789 : vector<8x32xf32>
    %791 = arith.mulf %790, %790 : vector<8x32xf32>
    %cst_535 = arith.constant dense<0.000000e+00> : vector<8xf32>
    %792 = vector.multi_reduction <add>, %791, %cst_535 [1] : vector<8x32xf32> to vector<8xf32>
    %793 = vector.shape_cast %792 : vector<8xf32> to vector<8x1xf32>
    %cst_536 = arith.constant 3.200000e+01 : f32
    %794 = vector.broadcast %cst_536 : f32 to vector<8x1xf32>
    %795 = arith.divf %793, %794 : vector<8x1xf32>
    %796 = vector.broadcast %788 : vector<8x1xf32> to vector<8x32xf32>
    %797 = arith.subf %780, %796 : vector<8x32xf32>
    %cst_537 = arith.constant 9.99999974E-6 : f32
    %798 = vector.broadcast %cst_537 : f32 to vector<8x1xf32>
    %799 = arith.addf %795, %798 : vector<8x1xf32>
    %800 = math.rsqrt %799 : vector<8x1xf32>
    %801 = vector.broadcast %800 : vector<8x1xf32> to vector<8x32xf32>
    %802 = arith.mulf %797, %801 : vector<8x32xf32>
    %803 = vector.shape_cast %782 : vector<32xf32> to vector<1x32xf32>
    %804 = vector.broadcast %803 : vector<1x32xf32> to vector<8x32xf32>
    %805 = arith.mulf %802, %804 : vector<8x32xf32>
    %806 = vector.shape_cast %784 : vector<32xf32> to vector<1x32xf32>
    %807 = vector.broadcast %806 : vector<1x32xf32> to vector<8x32xf32>
    %808 = arith.addf %805, %807 : vector<8x32xf32>
    %809 = vector.shape_cast %808 : vector<8x32xf32> to vector<2x4x32xf32>
    %c0_538 = arith.constant 0 : index
    %c84_539 = arith.constant 84 : index
    %c0_540 = arith.constant 0 : index
    %810 = vector.load %arg19[%c0_538, %c84_539, %c0_540] : memref<2x88x32xf32, #tpu.memory_space<vmem>>, vector<2x4x32xf32>
    tpu.vector_store %arg19[%c0_538, %c84_539, %c0_540], %809 {strides = array<i32>} : memref<2x88x32xf32, #tpu.memory_space<vmem>>, vector<2x4x32xf32>,
    return
  }
}

</mosaic_0001>

<llo_original>
// kernel: tpu_custom_call.1
$region0: #{tpu_custom_call.1}
  #allocation0 [shape = 'u32[]', space=smem, size = 0x4, offset = 0x4, fixed_abs, tag = 'smem constant byte address 0x4 - core index']
  #allocation1 [shape = 'u32[144,128]{1,0:T(1,128)}', space=vmem, size = 0x12000, scoped, tag = 'internal scratch']
  #allocation2 [shape = 'f32[2,10,10,64]{3,2,1,0:T(8,128)}', space=vmem, size = 0x28000, scoped, tag = 'scratch operand']
  %s0 = inlined_call_operand.vmem [shape: f32[2,88,32], index: 0, kind: input, shape index: {}]
  %s1 = inlined_call_operand.vmem [shape: f32[2,88,32], index: 1, kind: input, shape index: {}]
  %s2 = inlined_call_operand.vmem [shape: bf16[32,64], index: 2, kind: input, shape index: {}]
  %s3 = inlined_call_operand.vmem [shape: f32[1,64], index: 3, kind: input, shape index: {}]
  %s4 = inlined_call_operand.vmem [shape: f32[4,9,64], index: 4, kind: input, shape index: {}]
  %s5 = inlined_call_operand.vmem [shape: f32[4,64], index: 5, kind: input, shape index: {}]
  %s6 = inlined_call_operand.vmem [shape: bf16[4,64,64], index: 6, kind: input, shape index: {}]
  %s7 = inlined_call_operand.vmem [shape: f32[4,64], index: 7, kind: input, shape index: {}]
  %s8 = inlined_call_operand.vmem [shape: bf16[64,32], index: 8, kind: input, shape index: {}]
  %s9 = inlined_call_operand.vmem [shape: f32[1,32], index: 9, kind: input, shape index: {}]
  %s10 = inlined_call_operand.vmem [shape: f32[2,2], index: 10, kind: input, shape index: {}]
  %s11 = inlined_call_operand.vmem [shape: f32[1,32], index: 11, kind: input, shape index: {}]
  %s12 = inlined_call_operand.vmem [shape: f32[1,32], index: 12, kind: input, shape index: {}]
  %s13 = inlined_call_operand.vmem [shape: bf16[32,64], index: 13, kind: input, shape index: {}]
  %s14 = inlined_call_operand.vmem [shape: f32[1,64], index: 14, kind: input, shape index: {}]
  %s15 = inlined_call_operand.vmem [shape: bf16[64,32], index: 15, kind: input, shape index: {}]
  %s16 = inlined_call_operand.vmem [shape: f32[1,32], index: 16, kind: input, shape index: {}]
  %s17 = inlined_call_operand.vmem [shape: f32[1,32], index: 17, kind: input, shape index: {}]
  %s18 = inlined_call_operand.vmem [shape: f32[1,32], index: 18, kind: input, shape index: {}]
  %s19 = inlined_call_operand.vmem [shape: f32[2,88,32], index: 19, kind: output, shape index: {}]
  %s20 = sld [smem:[#allocation0]]
  $region86: #{tpu_custom_call.1} parent=0
    _
  %s22 = ssub.s32 1, %s20
  %s23 = scalar_select 0, %s22, %s20
  // Predicated region
  $region2: #{tpu_custom_call.1} parent=0 // pred_check
    _
  $region3: #{tpu_custom_call.1} parent=0 // pred_check_branch
    %25 = sbr.rel (0) target = $region5
  $region4: #{tpu_custom_call.1} parent=0 // pred_region
    _
  $region5: #{tpu_custom_call.1} parent=0 // pred_fallthru
    _
  // Predicated region
  $region6: #{tpu_custom_call.1} parent=0 // pred_check
    _
  $region7: #{tpu_custom_call.1} parent=0 // pred_check_branch
    %27 = sbr.rel (0) target = $region9
  $region8: #{tpu_custom_call.1} parent=0 // pred_region
    _
  $region9: #{tpu_custom_call.1} parent=0 // pred_fallthru
    _
  // Predicated region
  $region10: #{tpu_custom_call.1} parent=0 // pred_check
    _
  $region11: #{tpu_custom_call.1} parent=0 // pred_check_branch
    %29 = sbr.rel (0) target = $region13
  $region12: #{tpu_custom_call.1} parent=0 // pred_region
    _
  $region13: #{tpu_custom_call.1} parent=0 // pred_fallthru
    _
  // Predicated region
  $region14: #{tpu_custom_call.1} parent=0 // pred_check
    _
  $region15: #{tpu_custom_call.1} parent=0 // pred_check_branch
    %31 = sbr.rel (0) target = $region17
  $region16: #{tpu_custom_call.1} parent=0 // pred_region
    _
  $region17: #{tpu_custom_call.1} parent=0 // pred_fallthru
    _
  // Predicated region
  $region18: #{tpu_custom_call.1} parent=0 // pred_check
    _
  $region19: #{tpu_custom_call.1} parent=0 // pred_check_branch
    %33 = sbr.rel (0) target = $region21
  $region20: #{tpu_custom_call.1} parent=0 // pred_region
    _
  $region21: #{tpu_custom_call.1} parent=0 // pred_fallthru
    _
  // Predicated region
  $region22: #{tpu_custom_call.1} parent=0 // pred_check
    _
  $region23: #{tpu_custom_call.1} parent=0 // pred_check_branch
    %35 = sbr.rel (0) target = $region25
  $region24: #{tpu_custom_call.1} parent=0 // pred_region
    _
  $region25: #{tpu_custom_call.1} parent=0 // pred_fallthru
    _
  // Predicated region
  $region26: #{tpu_custom_call.1} parent=0 // pred_check
    _
  $region27: #{tpu_custom_call.1} parent=0 // pred_check_branch
    %37 = sbr.rel (0) target = $region29
  $region28: #{tpu_custom_call.1} parent=0 // pred_region
    _
  $region29: #{tpu_custom_call.1} parent=0 // pred_fallthru
    _
  // Predicated region
  $region30: #{tpu_custom_call.1} parent=0 // pred_check
    _
  $region31: #{tpu_custom_call.1} parent=0 // pred_check_branch
    %39 = sbr.rel (0) target = $region33
  $region32: #{tpu_custom_call.1} parent=0 // pred_region
    _
  $region33: #{tpu_custom_call.1} parent=0 // pred_fallthru
    _
  // Predicated region
  $region34: #{tpu_custom_call.1} parent=0 // pred_check
    _
  $region35: #{tpu_custom_call.1} parent=0 // pred_check_branch
    %41 = sbr.rel (0) target = $region37
  $region36: #{tpu_custom_call.1} parent=0 // pred_region
    _
  $region37: #{tpu_custom_call.1} parent=0 // pred_fallthru
    _
  // Predicated region
  $region38: #{tpu_custom_call.1} parent=0 // pred_check
    _
  $region39: #{tpu_custom_call.1} parent=0 // pred_check_branch
    %43 = sbr.rel (0) target = $region41
  $region40: #{tpu_custom_call.1} parent=0 // pred_region
    _
  $region41: #{tpu_custom_call.1} parent=0 // pred_fallthru
    _
  // Predicated region
  $region42: #{tpu_custom_call.1} parent=0 // pred_check
    _
  $region43: #{tpu_custom_call.1} parent=0 // pred_check_branch
    %45 = sbr.rel (0) target = $region45
  $region44: #{tpu_custom_call.1} parent=0 // pred_region
    _
  $region45: #{tpu_custom_call.1} parent=0 // pred_fallthru
    _
  // Predicated region
  $region46: #{tpu_custom_call.1} parent=0 // pred_check
    _
  $region47: #{tpu_custom_call.1} parent=0 // pred_check_branch
    %47 = sbr.rel (0) target = $region49
  $region48: #{tpu_custom_call.1} parent=0 // pred_region
    _
  $region49: #{tpu_custom_call.1} parent=0 // pred_fallthru
    _
  // Predicated region
  $region50: #{tpu_custom_call.1} parent=0 // pred_check
    _
  $region51: #{tpu_custom_call.1} parent=0 // pred_check_branch
    %49 = sbr.rel (0) target = $region53
  $region52: #{tpu_custom_call.1} parent=0 // pred_region
    _
  $region53: #{tpu_custom_call.1} parent=0 // pred_fallthru
    _
  // Predicated region
  $region54: #{tpu_custom_call.1} parent=0 // pred_check
    _
  $region55: #{tpu_custom_call.1} parent=0 // pred_check_branch
    %51 = sbr.rel (0) target = $region57
  $region56: #{tpu_custom_call.1} parent=0 // pred_region
    _
  $region57: #{tpu_custom_call.1} parent=0 // pred_fallthru
    _
  // Predicated region
  $region58: #{tpu_custom_call.1} parent=0 // pred_check
    _
  $region59: #{tpu_custom_call.1} parent=0 // pred_check_branch
    %53 = sbr.rel (0) target = $region61
  $region60: #{tpu_custom_call.1} parent=0 // pred_region
    _
  $region61: #{tpu_custom_call.1} parent=0 // pred_fallthru
    _
  // Predicated region
  $region62: #{tpu_custom_call.1} parent=0 // pred_check
    _
  $region63: #{tpu_custom_call.1} parent=0 // pred_check_branch
    %55 = sbr.rel (0) target = $region65
  $region64: #{tpu_custom_call.1} parent=0 // pred_region
    _
  $region65: #{tpu_custom_call.1} parent=0 // pred_fallthru
    _
  // Predicated region
  $region66: #{tpu_custom_call.1} parent=0 // pred_check
    _
  $region67: #{tpu_custom_call.1} parent=0 // pred_check_branch
    %57 = sbr.rel (0) target = $region69
  $region68: #{tpu_custom_call.1} parent=0 // pred_region
    _
  $region69: #{tpu_custom_call.1} parent=0 // pred_fallthru
    _
  // Predicated region
  $region70: #{tpu_custom_call.1} parent=0 // pred_check
    _
  $region71: #{tpu_custom_call.1} parent=0 // pred_check_branch
    %59 = sbr.rel (0) target = $region73
  $region72: #{tpu_custom_call.1} parent=0 // pred_region
    _
  $region73: #{tpu_custom_call.1} parent=0 // pred_fallthru
    _
  // Predicated region
  $region74: #{tpu_custom_call.1} parent=0 // pred_check
    _
  $region75: #{tpu_custom_call.1} parent=0 // pred_check_branch
    %61 = sbr.rel (0) target = $region77
  $region76: #{tpu_custom_call.1} parent=0 // pred_region
    _
  $region77: #{tpu_custom_call.1} parent=0 // pred_fallthru
    _
  %v63 = vld [vmem:[%s1] sm:$0xff]
  %v64 = vld [vmem:[%s1 + $0x8] sm:$0xff]
  %v65 = vld [vmem:[%s1 + $0x10] sm:$0xff]
  %v66 = vld [vmem:[%s1 + $0x18] sm:$0xff]
  %v67 = vld [vmem:[%s1 + $0x20] sm:$0xff]
  %v68 = vld [vmem:[%s1 + $0x28] sm:$0xff]
  %v69 = vld [vmem:[%s1 + $0x30] sm:$0xff]
  %v70 = vld [vmem:[%s1 + $0x38] sm:$0xff]
  %v71 = vld [vmem:[%s1 + $0x58] sm:$0xff]
  %v72 = vld [vmem:[%s1 + $0x60] sm:$0xff]
  %v73 = vld [vmem:[%s1 + $0x68] sm:$0xff]
  %v74 = vld [vmem:[%s1 + $0x70] sm:$0xff]
  %v75 = vld [vmem:[%s1 + $0x78] sm:$0xff]
  %v76 = vld [vmem:[%s1 + $0x80] sm:$0xff]
  %v77 = vld [vmem:[%s1 + $0x88] sm:$0xff]
  %v78 = vld [vmem:[%s1 + $0x90] sm:$0xff]
  %v79 = vpack.c.bf16 %v64, %v63
  %v80 = vpack.c.bf16 %v66, %v65
  %v81 = vpack.c.bf16 %v68, %v67
  %v82 = vpack.c.bf16 %v70, %v69
  %v83 = vpack.c.bf16 %v72, %v71
  %v84 = vpack.c.bf16 %v74, %v73
  %v85 = vpack.c.bf16 %v76, %v75
  %v86 = vpack.c.bf16 %v78, %v77
  %v87 = vld [vmem:[%s2] sm:$0xf]
  %v88 = vld [vmem:[%s2 + $0x4] sm:$0xf]
  %v89 = vld [vmem:[%s2 + $0x8] sm:$0xf]
  %v90 = vld [vmem:[%s2 + $0xc] sm:$0xf]
  %v91 = vld [vmem:[%s3] sm:$0x1]
  %v93 = vlaneseq
  %v94 = vshrl.u32 %v93, 7
  %v95 = vsub.s32 0, %v94
  %v96 = vrot.slane %v91, %v95
  %v102 = vunpack.c.l.b16 %v87
  %v103 = vunpack.c.l.b16 %v88
  %v104 = vunpack.c.l.b16 %v89
  %v105 = vunpack.c.l.b16 %v90
  %v106 = vpack.c.b16 %v103, %v102
  %v107 = vpack.c.b16 %v105, %v104
  %vm110 = vcmask 261120
  %v112 = vsel %vm110, %v79, 0
  %v115 = vsel %vm110, %v80, 0
  %v118 = vsel %vm110, %v81, 0
  %v121 = vsel %vm110, %v82, 0
  %v124 = vsel %vm110, %v83, 0
  %v127 = vsel %vm110, %v84, 0
  %v130 = vsel %vm110, %v85, 0
  %v133 = vsel %vm110, %v86, 0
  %135 = vmatprep.subr.bf16.mxu0 0
  %136 = vmatpush1.bf16.msra.mxu0 %v106
  %137 = vmatprep.subr.bf16.mxu0 0
  %138 = vmatpush1.bf16.msra.mxu0 %v107
  %139 = vmatprep.subr.bf16.mxu0 0
  %140 = vmatpush1.bf16.msra.mxu0 0
  %141 = vmatprep.subr.bf16.mxu0 0
  %142 = vmatpush1.bf16.msra.mxu0 0
  %143 = vmatprep.subr.bf16.mxu0 0
  %144 = vmatpush1.bf16.msra.mxu0 0
  %145 = vmatprep.subr.bf16.mxu0 0
  %146 = vmatpush1.bf16.msra.mxu0 0
  %147 = vmatprep.subr.bf16.mxu0 0
  %148 = vmatpush1.bf16.msra.mxu0 0
  %149 = vmatprep.subr.bf16.mxu0 0
  %150 = vmatpush1.bf16.msra.mxu0 0
  %151 = vmatprep.subr.bf16.mxu0 0
  %152 = vmatpush1.bf16.msra.mxu0 0
  %153 = vmatprep.subr.bf16.mxu0 0
  %154 = vmatpush1.bf16.msra.mxu0 0
  %155 = vmatprep.subr.bf16.mxu0 0
  %156 = vmatpush1.bf16.msra.mxu0 0
  %157 = vmatprep.subr.bf16.mxu0 0
  %158 = vmatpush1.bf16.msra.mxu0 0
  %159 = vmatprep.subr.bf16.mxu0 0
  %160 = vmatpush1.bf16.msra.mxu0 0
  %161 = vmatprep.subr.bf16.mxu0 0
  %162 = vmatpush1.bf16.msra.mxu0 0
  %163 = vmatprep.subr.bf16.mxu0 0
  %164 = vmatpush1.bf16.msra.mxu0 0
  %165 = vmatprep.subr.bf16.mxu0 0
  %166 = vmatpush1.bf16.msra.mxu0 0
  %167 = vmatprep.mubr.bf16.mxu0 0
  %168 = vmatmul.mubr.bf16.gmra.mrb[0].mxu0 %v112
  %v169 = vpop.f32.mrb[0].mxu0
  %v170 = vadd.f32 %v96, %v169
  %v171 = vpop.f32.mrb[0].mxu0
  %v172 = vpop.f32.mrb[0].mxu0
  %v173 = vadd.f32 %v96, %v172
  %v174 = vpop.f32.mrb[0].mxu0
  %175 = vmatprep.mubr.bf16.mxu0 0
  %176 = vmatmul.mubr.bf16.gmra.mrb[0].mxu0 %v115
  %v177 = vpop.f32.mrb[0].mxu0
  %v178 = vadd.f32 %v96, %v177
  %v179 = vpop.f32.mrb[0].mxu0
  %v180 = vpop.f32.mrb[0].mxu0
  %v181 = vadd.f32 %v96, %v180
  %v182 = vpop.f32.mrb[0].mxu0
  %183 = vmatprep.mubr.bf16.mxu0 0
  %184 = vmatmul.mubr.bf16.gmra.mrb[0].mxu0 %v118
  %v185 = vpop.f32.mrb[0].mxu0
  %v186 = vadd.f32 %v96, %v185
  %v187 = vpop.f32.mrb[0].mxu0
  %v188 = vpop.f32.mrb[0].mxu0
  %v189 = vadd.f32 %v96, %v188
  %v190 = vpop.f32.mrb[0].mxu0
  %191 = vmatprep.mubr.bf16.mxu0 0
  %192 = vmatmul.mubr.bf16.gmra.mrb[0].mxu0 %v121
  %v193 = vpop.f32.mrb[0].mxu0
  %v194 = vadd.f32 %v96, %v193
  %v195 = vpop.f32.mrb[0].mxu0
  %v196 = vpop.f32.mrb[0].mxu0
  %v197 = vadd.f32 %v96, %v196
  %v198 = vpop.f32.mrb[0].mxu0
  %199 = vmatprep.mubr.bf16.mxu0 0
  %200 = vmatmul.mubr.bf16.gmra.mrb[0].mxu0 %v124
  %v201 = vpop.f32.mrb[0].mxu0
  %v202 = vadd.f32 %v96, %v201
  %v203 = vpop.f32.mrb[0].mxu0
  %v204 = vpop.f32.mrb[0].mxu0
  %v205 = vadd.f32 %v96, %v204
  %v206 = vpop.f32.mrb[0].mxu0
  %207 = vmatprep.mubr.bf16.mxu0 0
  %208 = vmatmul.mubr.bf16.gmra.mrb[0].mxu0 %v127
  %v209 = vpop.f32.mrb[0].mxu0
  %v210 = vadd.f32 %v96, %v209
  %v211 = vpop.f32.mrb[0].mxu0
  %v212 = vpop.f32.mrb[0].mxu0
  %v213 = vadd.f32 %v96, %v212
  %v214 = vpop.f32.mrb[0].mxu0
  %215 = vmatprep.mubr.bf16.mxu0 0
  %216 = vmatmul.mubr.bf16.gmra.mrb[0].mxu0 %v130
  %v217 = vpop.f32.mrb[0].mxu0
  %v218 = vadd.f32 %v96, %v217
  %v219 = vpop.f32.mrb[0].mxu0
  %v220 = vpop.f32.mrb[0].mxu0
  %v221 = vadd.f32 %v96, %v220
  %v222 = vpop.f32.mrb[0].mxu0
  %223 = vmatprep.mubr.bf16.mxu0 0
  %224 = vmatmul.mubr.bf16.gmra.mrb[0].mxu0 %v133
  %v225 = vpop.f32.mrb[0].mxu0
  %v226 = vadd.f32 %v96, %v225
  %v227 = vpop.f32.mrb[0].mxu0
  %v228 = vpop.f32.mrb[0].mxu0
  %v229 = vadd.f32 %v96, %v228
  %v230 = vpop.f32.mrb[0].mxu0
  %231 = vdwg.mxu0
  %v232 = vmul.f32 %v170, 0.5
  %v233 = vmul.f32 %v173, 0.5
  %v234 = vmul.f32 %v178, 0.5
  %v235 = vmul.f32 %v181, 0.5
  %v236 = vmul.f32 %v186, 0.5
  %v237 = vmul.f32 %v189, 0.5
  %v238 = vmul.f32 %v194, 0.5
  %v239 = vmul.f32 %v197, 0.5
  %v240 = vmul.f32 %v202, 0.5
  %v241 = vmul.f32 %v205, 0.5
  %v242 = vmul.f32 %v210, 0.5
  %v243 = vmul.f32 %v213, 0.5
  %v244 = vmul.f32 %v218, 0.5
  %v245 = vmul.f32 %v221, 0.5
  %v246 = vmul.f32 %v226, 0.5
  %v247 = vmul.f32 %v229, 0.5
  %v248 = vmul.f32 %v170, 0.70710677
  %v249 = vmul.f32 %v173, 0.70710677
  %v250 = vmul.f32 %v178, 0.70710677
  %v251 = vmul.f32 %v181, 0.70710677
  %v252 = vmul.f32 %v186, 0.70710677
  %v253 = vmul.f32 %v189, 0.70710677
  %v254 = vmul.f32 %v194, 0.70710677
  %v255 = vmul.f32 %v197, 0.70710677
  %v256 = vmul.f32 %v202, 0.70710677
  %v257 = vmul.f32 %v205, 0.70710677
  %v258 = vmul.f32 %v210, 0.70710677
  %v259 = vmul.f32 %v213, 0.70710677
  %v260 = vmul.f32 %v218, 0.70710677
  %v261 = vmul.f32 %v221, 0.70710677
  %v262 = vmul.f32 %v226, 0.70710677
  %v263 = vmul.f32 %v229, 0.70710677
  %v264 = verf.f32.pop %v248
  %v265 = verf.f32.pop %v249
  %v266 = verf.f32.pop %v250
  %v267 = verf.f32.pop %v251
  %v268 = verf.f32.pop %v252
  %v269 = verf.f32.pop %v253
  %v270 = verf.f32.pop %v254
  %v271 = verf.f32.pop %v255
  %v272 = verf.f32.pop %v256
  %v273 = verf.f32.pop %v257
  %v274 = verf.f32.pop %v258
  %v275 = verf.f32.pop %v259
  %v276 = verf.f32.pop %v260
  %v277 = verf.f32.pop %v261
  %v278 = verf.f32.pop %v262
  %v279 = verf.f32.pop %v263
  %v280 = vadd.f32 %v264, 1.0
  %v281 = vadd.f32 %v265, 1.0
  %v282 = vadd.f32 %v266, 1.0
  %v283 = vadd.f32 %v267, 1.0
  %v284 = vadd.f32 %v268, 1.0
  %v285 = vadd.f32 %v269, 1.0
  %v286 = vadd.f32 %v270, 1.0
  %v287 = vadd.f32 %v271, 1.0
  %v288 = vadd.f32 %v272, 1.0
  %v289 = vadd.f32 %v273, 1.0
  %v290 = vadd.f32 %v274, 1.0
  %v291 = vadd.f32 %v275, 1.0
  %v292 = vadd.f32 %v276, 1.0
  %v293 = vadd.f32 %v277, 1.0
  %v294 = vadd.f32 %v278, 1.0
  %v295 = vadd.f32 %v279, 1.0
  %v296 = vmul.f32 %v232, %v280
  %v297 = vmul.f32 %v233, %v281
  %v298 = vmul.f32 %v234, %v282
  %v299 = vmul.f32 %v235, %v283
  %v300 = vmul.f32 %v236, %v284
  %v301 = vmul.f32 %v237, %v285
  %v302 = vmul.f32 %v238, %v286
  %v303 = vmul.f32 %v239, %v287
  %v304 = vmul.f32 %v240, %v288
  %v305 = vmul.f32 %v241, %v289
  %v306 = vmul.f32 %v242, %v290
  %v307 = vmul.f32 %v243, %v291
  %v308 = vmul.f32 %v244, %v292
  %v309 = vmul.f32 %v245, %v293
  %v310 = vmul.f32 %v246, %v294
  %v311 = vmul.f32 %v247, %v295
  %vm312 = vcmask 523264
  %313 = vst.msk [vmem:[#allocation2] sm:$0xff] %vm312, 0.0
  %vm314 = vcmask 517120
  %315 = vst.msk [vmem:[#allocation2 + $0x8] sm:$0x3] %vm314, 0.0
  %316 = vst.msk [vmem:[#allocation2 + $0x10] sm:$0xff] %vm312, 0.0
  %317 = vst.msk [vmem:[#allocation2 + $0x18] sm:$0x3] %vm314, 0.0
  %318 = vst.msk [vmem:[#allocation2 + $0x20] sm:$0xff] %vm312, 0.0
  %319 = vst.msk [vmem:[#allocation2 + $0x28] sm:$0x3] %vm314, 0.0
  %320 = vst.msk [vmem:[#allocation2 + $0x30] sm:$0xff] %vm312, 0.0
  %321 = vst.msk [vmem:[#allocation2 + $0x38] sm:$0x3] %vm314, 0.0
  %322 = vst.msk [vmem:[#allocation2 + $0x40] sm:$0xff] %vm312, 0.0
  %323 = vst.msk [vmem:[#allocation2 + $0x48] sm:$0x3] %vm314, 0.0
  %324 = vst.msk [vmem:[#allocation2 + $0x50] sm:$0xff] %vm312, 0.0
  %325 = vst.msk [vmem:[#allocation2 + $0x58] sm:$0x3] %vm314, 0.0
  %326 = vst.msk [vmem:[#allocation2 + $0x60] sm:$0xff] %vm312, 0.0
  %327 = vst.msk [vmem:[#allocation2 + $0x68] sm:$0x3] %vm314, 0.0
  %328 = vst.msk [vmem:[#allocation2 + $0x70] sm:$0xff] %vm312, 0.0
  %329 = vst.msk [vmem:[#allocation2 + $0x78] sm:$0x3] %vm314, 0.0
  %330 = vst.msk [vmem:[#allocation2 + $0x80] sm:$0xff] %vm312, 0.0
  %331 = vst.msk [vmem:[#allocation2 + $0x88] sm:$0x3] %vm314, 0.0
  %332 = vst.msk [vmem:[#allocation2 + $0x90] sm:$0xff] %vm312, 0.0
  %333 = vst.msk [vmem:[#allocation2 + $0x98] sm:$0x3] %vm314, 0.0
  %334 = vst.msk [vmem:[#allocation2 + $0xa0] sm:$0xff] %vm312, 0.0
  %335 = vst.msk [vmem:[#allocation2 + $0xa8] sm:$0x3] %vm314, 0.0
  %336 = vst.msk [vmem:[#allocation2 + $0xb0] sm:$0xff] %vm312, 0.0
  %337 = vst.msk [vmem:[#allocation2 + $0xb8] sm:$0x3] %vm314, 0.0
  %338 = vst.msk [vmem:[#allocation2 + $0xc0] sm:$0xff] %vm312, 0.0
  %339 = vst.msk [vmem:[#allocation2 + $0xc8] sm:$0x3] %vm314, 0.0
  %340 = vst.msk [vmem:[#allocation2 + $0xd0] sm:$0xff] %vm312, 0.0
  %341 = vst.msk [vmem:[#allocation2 + $0xd8] sm:$0x3] %vm314, 0.0
  %342 = vst.msk [vmem:[#allocation2 + $0xe0] sm:$0xff] %vm312, 0.0
  %343 = vst.msk [vmem:[#allocation2 + $0xe8] sm:$0x3] %vm314, 0.0
  %344 = vst.msk [vmem:[#allocation2 + $0xf0] sm:$0xff] %vm312, 0.0
  %345 = vst.msk [vmem:[#allocation2 + $0xf8] sm:$0x3] %vm314, 0.0
  %346 = vst.msk [vmem:[#allocation2 + $0x100] sm:$0xff] %vm312, 0.0
  %347 = vst.msk [vmem:[#allocation2 + $0x108] sm:$0x3] %vm314, 0.0
  %348 = vst.msk [vmem:[#allocation2 + $0x110] sm:$0xff] %vm312, 0.0
  %349 = vst.msk [vmem:[#allocation2 + $0x118] sm:$0x3] %vm314, 0.0
  %350 = vst.msk [vmem:[#allocation2 + $0x120] sm:$0xff] %vm312, 0.0
  %351 = vst.msk [vmem:[#allocation2 + $0x128] sm:$0x3] %vm314, 0.0
  %352 = vst.msk [vmem:[#allocation2 + $0x130] sm:$0xff] %vm312, 0.0
  %353 = vst.msk [vmem:[#allocation2 + $0x138] sm:$0x3] %vm314, 0.0
  %s354 = scalar_lea.vmem [#allocation2], 16
  %355 = vst.msk [vmem:[%s354 + $0x1] sm:$0xff] %vm312, %v296
  %356 = vst.msk [vmem:[%s354 + $0x11] sm:$0xff] %vm312, %v297
  %357 = vst.msk [vmem:[%s354 + $0x21] sm:$0xff] %vm312, %v298
  %358 = vst.msk [vmem:[%s354 + $0x31] sm:$0xff] %vm312, %v299
  %359 = vst.msk [vmem:[%s354 + $0x41] sm:$0xff] %vm312, %v300
  %360 = vst.msk [vmem:[%s354 + $0x51] sm:$0xff] %vm312, %v301
  %361 = vst.msk [vmem:[%s354 + $0x61] sm:$0xff] %vm312, %v302
  %362 = vst.msk [vmem:[%s354 + $0x71] sm:$0xff] %vm312, %v303
  %363 = vst.msk [vmem:[%s354 + $0xa1] sm:$0xff] %vm312, %v304
  %364 = vst.msk [vmem:[%s354 + $0xb1] sm:$0xff] %vm312, %v305
  %365 = vst.msk [vmem:[%s354 + $0xc1] sm:$0xff] %vm312, %v306
  %366 = vst.msk [vmem:[%s354 + $0xd1] sm:$0xff] %vm312, %v307
  %367 = vst.msk [vmem:[%s354 + $0xe1] sm:$0xff] %vm312, %v308
  %368 = vst.msk [vmem:[%s354 + $0xf1] sm:$0xff] %vm312, %v309
  %369 = vst.msk [vmem:[%s354 + $0x101] sm:$0xff] %vm312, %v310
  %370 = vst.msk [vmem:[%s354 + $0x111] sm:$0xff] %vm312, %v311
  %v371 = vld [vmem:[#allocation2] sm:$0xff]
  %v372 = vld [vmem:[#allocation2 + $0x10] sm:$0xff]
  %v373 = vld [vmem:[#allocation2 + $0x20] sm:$0xff]
  %v374 = vld [vmem:[#allocation2 + $0x30] sm:$0xff]
  %v375 = vld [vmem:[#allocation2 + $0x40] sm:$0xff]
  %v376 = vld [vmem:[#allocation2 + $0x50] sm:$0xff]
  %v377 = vld [vmem:[#allocation2 + $0x60] sm:$0xff]
  %v378 = vld [vmem:[#allocation2 + $0x70] sm:$0xff]
  %v379 = vld [vmem:[#allocation2 + $0xa0] sm:$0xff]
  %v380 = vld [vmem:[#allocation2 + $0xb0] sm:$0xff]
  %v381 = vld [vmem:[#allocation2 + $0xc0] sm:$0xff]
  %v382 = vld [vmem:[#allocation2 + $0xd0] sm:$0xff]
  %v383 = vld [vmem:[#allocation2 + $0xe0] sm:$0xff]
  %v384 = vld [vmem:[#allocation2 + $0xf0] sm:$0xff]
  %v385 = vld [vmem:[#allocation2 + $0x100] sm:$0xff]
  %v386 = vld [vmem:[#allocation2 + $0x110] sm:$0xff]
  %v387 = vld [vmem:[%s4] sm:$0x1]
  %v388 = vlaneseq
  %v389 = vshrl.u32 %v388, 7
  %v390 = vsub.s32 0, %v389
  %v391 = vrot.slane %v387, %v390
  %v392 = vmul.f32 %v371, %v391
  %v393 = vmul.f32 %v372, %v391
  %v394 = vmul.f32 %v373, %v391
  %v395 = vmul.f32 %v374, %v391
  %v396 = vmul.f32 %v375, %v391
  %v397 = vmul.f32 %v376, %v391
  %v398 = vmul.f32 %v377, %v391
  %v399 = vmul.f32 %v378, %v391
  %v400 = vmul.f32 %v379, %v391
  %v401 = vmul.f32 %v380, %v391
  %v402 = vmul.f32 %v381, %v391
  %v403 = vmul.f32 %v382, %v391
  %v404 = vmul.f32 %v383, %v391
  %v405 = vmul.f32 %v384, %v391
  %v406 = vmul.f32 %v385, %v391
  %v407 = vmul.f32 %v386, %v391
  %v408 = vadd.f32 %v392, 0.0
  %v409 = vadd.f32 %v393, 0.0
  %v410 = vadd.f32 %v394, 0.0
  %v411 = vadd.f32 %v395, 0.0
  %v412 = vadd.f32 %v396, 0.0
  %v413 = vadd.f32 %v397, 0.0
  %v414 = vadd.f32 %v398, 0.0
  %v415 = vadd.f32 %v399, 0.0
  %v416 = vadd.f32 %v400, 0.0
  %v417 = vadd.f32 %v401, 0.0
  %v418 = vadd.f32 %v402, 0.0
  %v419 = vadd.f32 %v403, 0.0
  %v420 = vadd.f32 %v404, 0.0
  %v421 = vadd.f32 %v405, 0.0
  %v422 = vadd.f32 %v406, 0.0
  %v423 = vadd.f32 %v407, 0.0
  %v424 = vld [vmem:[#allocation2 + $0x1] sm:$0xff]
  %v425 = vld [vmem:[#allocation2 + $0x11] sm:$0xff]
  %v426 = vld [vmem:[#allocation2 + $0x21] sm:$0xff]
  %v427 = vld [vmem:[#allocation2 + $0x31] sm:$0xff]
  %v428 = vld [vmem:[#allocation2 + $0x41] sm:$0xff]
  %v429 = vld [vmem:[#allocation2 + $0x51] sm:$0xff]
  %v430 = vld [vmem:[#allocation2 + $0x61] sm:$0xff]
  %v431 = vld [vmem:[#allocation2 + $0x71] sm:$0xff]
  %v432 = vld [vmem:[#allocation2 + $0xa1] sm:$0xff]
  %v433 = vld [vmem:[#allocation2 + $0xb1] sm:$0xff]
  %v434 = vld [vmem:[#allocation2 + $0xc1] sm:$0xff]
  %v435 = vld [vmem:[#allocation2 + $0xd1] sm:$0xff]
  %v436 = vld [vmem:[#allocation2 + $0xe1] sm:$0xff]
  %v437 = vld [vmem:[#allocation2 + $0xf1] sm:$0xff]
  %v438 = vld [vmem:[#allocation2 + $0x101] sm:$0xff]
  %v439 = vld [vmem:[#allocation2 + $0x111] sm:$0xff]
  %v440 = vld [vmem:[%s4 + $0x1] sm:$0x1]
  %v441 = vlaneseq
  %v442 = vshrl.u32 %v441, 7
  %v443 = vsub.s32 0, %v442
  %v444 = vrot.slane %v440, %v443
  %v445 = vmul.f32 %v424, %v444
  %v446 = vmul.f32 %v425, %v444
  %v447 = vmul.f32 %v426, %v444
  %v448 = vmul.f32 %v427, %v444
  %v449 = vmul.f32 %v428, %v444
  %v450 = vmul.f32 %v429, %v444
  %v451 = vmul.f32 %v430, %v444
  %v452 = vmul.f32 %v431, %v444
  %v453 = vmul.f32 %v432, %v444
  %v454 = vmul.f32 %v433, %v444
  %v455 = vmul.f32 %v434, %v444
  %v456 = vmul.f32 %v435, %v444
  %v457 = vmul.f32 %v436, %v444
  %v458 = vmul.f32 %v437, %v444
  %v459 = vmul.f32 %v438, %v444
  %v460 = vmul.f32 %v439, %v444
  %v461 = vadd.f32 %v408, %v445
  %v462 = vadd.f32 %v409, %v446
  %v463 = vadd.f32 %v410, %v447
  %v464 = vadd.f32 %v411, %v448
  %v465 = vadd.f32 %v412, %v449
  %v466 = vadd.f32 %v413, %v450
  %v467 = vadd.f32 %v414, %v451
  %v468 = vadd.f32 %v415, %v452
  %v469 = vadd.f32 %v416, %v453
  %v470 = vadd.f32 %v417, %v454
  %v471 = vadd.f32 %v418, %v455
  %v472 = vadd.f32 %v419, %v456
  %v473 = vadd.f32 %v420, %v457
  %v474 = vadd.f32 %v421, %v458
  %v475 = vadd.f32 %v422, %v459
  %v476 = vadd.f32 %v423, %v460
  %v477 = vld [vmem:[#allocation2 + $0x2] sm:$0xff]
  %v478 = vld [vmem:[#allocation2 + $0x12] sm:$0xff]
  %v479 = vld [vmem:[#allocation2 + $0x22] sm:$0xff]
  %v480 = vld [vmem:[#allocation2 + $0x32] sm:$0xff]
  %v481 = vld [vmem:[#allocation2 + $0x42] sm:$0xff]
  %v482 = vld [vmem:[#allocation2 + $0x52] sm:$0xff]
  %v483 = vld [vmem:[#allocation2 + $0x62] sm:$0xff]
  %v484 = vld [vmem:[#allocation2 + $0x72] sm:$0xff]
  %v485 = vld [vmem:[#allocation2 + $0xa2] sm:$0xff]
  %v486 = vld [vmem:[#allocation2 + $0xb2] sm:$0xff]
  %v487 = vld [vmem:[#allocation2 + $0xc2] sm:$0xff]
  %v488 = vld [vmem:[#allocation2 + $0xd2] sm:$0xff]
  %v489 = vld [vmem:[#allocation2 + $0xe2] sm:$0xff]
  %v490 = vld [vmem:[#allocation2 + $0xf2] sm:$0xff]
  %v491 = vld [vmem:[#allocation2 + $0x102] sm:$0xff]
  %v492 = vld [vmem:[#allocation2 + $0x112] sm:$0xff]
  %v493 = vld [vmem:[%s4 + $0x2] sm:$0x1]
  %v494 = vlaneseq
  %v495 = vshrl.u32 %v494, 7
  %v496 = vsub.s32 0, %v495
  %v497 = vrot.slane %v493, %v496
  %v498 = vmul.f32 %v477, %v497
  %v499 = vmul.f32 %v478, %v497
  %v500 = vmul.f32 %v479, %v497
  %v501 = vmul.f32 %v480, %v497
  %v502 = vmul.f32 %v481, %v497
  %v503 = vmul.f32 %v482, %v497
  %v504 = vmul.f32 %v483, %v497
  %v505 = vmul.f32 %v484, %v497
  %v506 = vmul.f32 %v485, %v497
  %v507 = vmul.f32 %v486, %v497
  %v508 = vmul.f32 %v487, %v497
  %v509 = vmul.f32 %v488, %v497
  %v510 = vmul.f32 %v489, %v497
  %v511 = vmul.f32 %v490, %v497
  %v512 = vmul.f32 %v491, %v497
  %v513 = vmul.f32 %v492, %v497
  %v514 = vadd.f32 %v461, %v498
  %v515 = vadd.f32 %v462, %v499
  %v516 = vadd.f32 %v463, %v500
  %v517 = vadd.f32 %v464, %v501
  %v518 = vadd.f32 %v465, %v502
  %v519 = vadd.f32 %v466, %v503
  %v520 = vadd.f32 %v467, %v504
  %v521 = vadd.f32 %v468, %v505
  %v522 = vadd.f32 %v469, %v506
  %v523 = vadd.f32 %v470, %v507
  %v524 = vadd.f32 %v471, %v508
  %v525 = vadd.f32 %v472, %v509
  %v526 = vadd.f32 %v473, %v510
  %v527 = vadd.f32 %v474, %v511
  %v528 = vadd.f32 %v475, %v512
  %v529 = vadd.f32 %v476, %v513
  %v530 = vld [vmem:[%s354] sm:$0xff]
  %v531 = vld [vmem:[%s354 + $0x10] sm:$0xff]
  %v532 = vld [vmem:[%s354 + $0x20] sm:$0xff]
  %v533 = vld [vmem:[%s354 + $0x30] sm:$0xff]
  %v534 = vld [vmem:[%s354 + $0x40] sm:$0xff]
  %v535 = vld [vmem:[%s354 + $0x50] sm:$0xff]
  %v536 = vld [vmem:[%s354 + $0x60] sm:$0xff]
  %v537 = vld [vmem:[%s354 + $0x70] sm:$0xff]
  %v538 = vld [vmem:[%s354 + $0xa0] sm:$0xff]
  %v539 = vld [vmem:[%s354 + $0xb0] sm:$0xff]
  %v540 = vld [vmem:[%s354 + $0xc0] sm:$0xff]
  %v541 = vld [vmem:[%s354 + $0xd0] sm:$0xff]
  %v542 = vld [vmem:[%s354 + $0xe0] sm:$0xff]
  %v543 = vld [vmem:[%s354 + $0xf0] sm:$0xff]
  %v544 = vld [vmem:[%s354 + $0x100] sm:$0xff]
  %v545 = vld [vmem:[%s354 + $0x110] sm:$0xff]
  %v546 = vld [vmem:[%s4 + $0x3] sm:$0x1]
  %v547 = vlaneseq
  %v548 = vshrl.u32 %v547, 7
  %v549 = vsub.s32 0, %v548
  %v550 = vrot.slane %v546, %v549
  %v551 = vmul.f32 %v530, %v550
  %v552 = vmul.f32 %v531, %v550
  %v553 = vmul.f32 %v532, %v550
  %v554 = vmul.f32 %v533, %v550
  %v555 = vmul.f32 %v534, %v550
  %v556 = vmul.f32 %v535, %v550
  %v557 = vmul.f32 %v536, %v550
  %v558 = vmul.f32 %v537, %v550
  %v559 = vmul.f32 %v538, %v550
  %v560 = vmul.f32 %v539, %v550
  %v561 = vmul.f32 %v540, %v550
  %v562 = vmul.f32 %v541, %v550
  %v563 = vmul.f32 %v542, %v550
  %v564 = vmul.f32 %v543, %v550
  %v565 = vmul.f32 %v544, %v550
  %v566 = vmul.f32 %v545, %v550
  %v567 = vadd.f32 %v514, %v551
  %v568 = vadd.f32 %v515, %v552
  %v569 = vadd.f32 %v516, %v553
  %v570 = vadd.f32 %v517, %v554
  %v571 = vadd.f32 %v518, %v555
  %v572 = vadd.f32 %v519, %v556
  %v573 = vadd.f32 %v520, %v557
  %v574 = vadd.f32 %v521, %v558
  %v575 = vadd.f32 %v522, %v559
  %v576 = vadd.f32 %v523, %v560
  %v577 = vadd.f32 %v524, %v561
  %v578 = vadd.f32 %v525, %v562
  %v579 = vadd.f32 %v526, %v563
  %v580 = vadd.f32 %v527, %v564
  %v581 = vadd.f32 %v528, %v565
  %v582 = vadd.f32 %v529, %v566
  %v583 = vld [vmem:[%s354 + $0x1] sm:$0xff]
  %v584 = vld [vmem:[%s354 + $0x11] sm:$0xff]
  %v585 = vld [vmem:[%s354 + $0x21] sm:$0xff]
  %v586 = vld [vmem:[%s354 + $0x31] sm:$0xff]
  %v587 = vld [vmem:[%s354 + $0x41] sm:$0xff]
  %v588 = vld [vmem:[%s354 + $0x51] sm:$0xff]
  %v589 = vld [vmem:[%s354 + $0x61] sm:$0xff]
  %v590 = vld [vmem:[%s354 + $0x71] sm:$0xff]
  %v591 = vld [vmem:[%s354 + $0xa1] sm:$0xff]
  %v592 = vld [vmem:[%s354 + $0xb1] sm:$0xff]
  %v593 = vld [vmem:[%s354 + $0xc1] sm:$0xff]
  %v594 = vld [vmem:[%s354 + $0xd1] sm:$0xff]
  %v595 = vld [vmem:[%s354 + $0xe1] sm:$0xff]
  %v596 = vld [vmem:[%s354 + $0xf1] sm:$0xff]
  %v597 = vld [vmem:[%s354 + $0x101] sm:$0xff]
  %v598 = vld [vmem:[%s354 + $0x111] sm:$0xff]
  %v599 = vld [vmem:[%s4 + $0x4] sm:$0x1]
  %v600 = vlaneseq
  %v601 = vshrl.u32 %v600, 7
  %v602 = vsub.s32 0, %v601
  %v603 = vrot.slane %v599, %v602
  %v604 = vmul.f32 %v583, %v603
  %v605 = vmul.f32 %v584, %v603
  %v606 = vmul.f32 %v585, %v603
  %v607 = vmul.f32 %v586, %v603
  %v608 = vmul.f32 %v587, %v603
  %v609 = vmul.f32 %v588, %v603
  %v610 = vmul.f32 %v589, %v603
  %v611 = vmul.f32 %v590, %v603
  %v612 = vmul.f32 %v591, %v603
  %v613 = vmul.f32 %v592, %v603
  %v614 = vmul.f32 %v593, %v603
  %v615 = vmul.f32 %v594, %v603
  %v616 = vmul.f32 %v595, %v603
  %v617 = vmul.f32 %v596, %v603
  %v618 = vmul.f32 %v597, %v603
  %v619 = vmul.f32 %v598, %v603
  %v620 = vadd.f32 %v567, %v604
  %v621 = vadd.f32 %v568, %v605
  %v622 = vadd.f32 %v569, %v606
  %v623 = vadd.f32 %v570, %v607
  %v624 = vadd.f32 %v571, %v608
  %v625 = vadd.f32 %v572, %v609
  %v626 = vadd.f32 %v573, %v610
  %v627 = vadd.f32 %v574, %v611
  %v628 = vadd.f32 %v575, %v612
  %v629 = vadd.f32 %v576, %v613
  %v630 = vadd.f32 %v577, %v614
  %v631 = vadd.f32 %v578, %v615
  %v632 = vadd.f32 %v579, %v616
  %v633 = vadd.f32 %v580, %v617
  %v634 = vadd.f32 %v581, %v618
  %v635 = vadd.f32 %v582, %v619
  %v636 = vld [vmem:[%s354 + $0x2] sm:$0xff]
  %v637 = vld [vmem:[%s354 + $0x12] sm:$0xff]
  %v638 = vld [vmem:[%s354 + $0x22] sm:$0xff]
  %v639 = vld [vmem:[%s354 + $0x32] sm:$0xff]
  %v640 = vld [vmem:[%s354 + $0x42] sm:$0xff]
  %v641 = vld [vmem:[%s354 + $0x52] sm:$0xff]
  %v642 = vld [vmem:[%s354 + $0x62] sm:$0xff]
  %v643 = vld [vmem:[%s354 + $0x72] sm:$0xff]
  %v644 = vld [vmem:[%s354 + $0xa2] sm:$0xff]
  %v645 = vld [vmem:[%s354 + $0xb2] sm:$0xff]
  %v646 = vld [vmem:[%s354 + $0xc2] sm:$0xff]
  %v647 = vld [vmem:[%s354 + $0xd2] sm:$0xff]
  %v648 = vld [vmem:[%s354 + $0xe2] sm:$0xff]
  %v649 = vld [vmem:[%s354 + $0xf2] sm:$0xff]
  %v650 = vld [vmem:[%s354 + $0x102] sm:$0xff]
  %v651 = vld [vmem:[%s354 + $0x112] sm:$0xff]
  %v652 = vld [vmem:[%s4 + $0x5] sm:$0x1]
  %v653 = vlaneseq
  %v654 = vshrl.u32 %v653, 7
  %v655 = vsub.s32 0, %v654
  %v656 = vrot.slane %v652, %v655
  %v657 = vmul.f32 %v636, %v656
  %v658 = vmul.f32 %v637, %v656
  %v659 = vmul.f32 %v638, %v656
  %v660 = vmul.f32 %v639, %v656
  %v661 = vmul.f32 %v640, %v656
  %v662 = vmul.f32 %v641, %v656
  %v663 = vmul.f32 %v642, %v656
  %v664 = vmul.f32 %v643, %v656
  %v665 = vmul.f32 %v644, %v656
  %v666 = vmul.f32 %v645, %v656
  %v667 = vmul.f32 %v646, %v656
  %v668 = vmul.f32 %v647, %v656
  %v669 = vmul.f32 %v648, %v656
  %v670 = vmul.f32 %v649, %v656
  %v671 = vmul.f32 %v650, %v656
  %v672 = vmul.f32 %v651, %v656
  %v673 = vadd.f32 %v620, %v657
  %v674 = vadd.f32 %v621, %v658
  %v675 = vadd.f32 %v622, %v659
  %v676 = vadd.f32 %v623, %v660
  %v677 = vadd.f32 %v624, %v661
  %v678 = vadd.f32 %v625, %v662
  %v679 = vadd.f32 %v626, %v663
  %v680 = vadd.f32 %v627, %v664
  %v681 = vadd.f32 %v628, %v665
  %v682 = vadd.f32 %v629, %v666
  %v683 = vadd.f32 %v630, %v667
  %v684 = vadd.f32 %v631, %v668
  %v685 = vadd.f32 %v632, %v669
  %v686 = vadd.f32 %v633, %v670
  %v687 = vadd.f32 %v634, %v671
  %v688 = vadd.f32 %v635, %v672
  %s689 = scalar_lea.vmem [#allocation2], 32
  %v690 = vld [vmem:[%s689] sm:$0xff]
  %v691 = vld [vmem:[%s689 + $0x10] sm:$0xff]
  %v692 = vld [vmem:[%s689 + $0x20] sm:$0xff]
  %v693 = vld [vmem:[%s689 + $0x30] sm:$0xff]
  %v694 = vld [vmem:[%s689 + $0x40] sm:$0xff]
  %v695 = vld [vmem:[%s689 + $0x50] sm:$0xff]
  %v696 = vld [vmem:[%s689 + $0x60] sm:$0xff]
  %v697 = vld [vmem:[%s689 + $0x70] sm:$0xff]
  %v698 = vld [vmem:[%s689 + $0xa0] sm:$0xff]
  %v699 = vld [vmem:[%s689 + $0xb0] sm:$0xff]
  %v700 = vld [vmem:[%s689 + $0xc0] sm:$0xff]
  %v701 = vld [vmem:[%s689 + $0xd0] sm:$0xff]
  %v702 = vld [vmem:[%s689 + $0xe0] sm:$0xff]
  %v703 = vld [vmem:[%s689 + $0xf0] sm:$0xff]
  %v704 = vld [vmem:[%s689 + $0x100] sm:$0xff]
  %v705 = vld [vmem:[%s689 + $0x110] sm:$0xff]
  %v706 = vld [vmem:[%s4 + $0x6] sm:$0x1]
  %v707 = vlaneseq
  %v708 = vshrl.u32 %v707, 7
  %v709 = vsub.s32 0, %v708
  %v710 = vrot.slane %v706, %v709
  %v711 = vmul.f32 %v690, %v710
  %v712 = vmul.f32 %v691, %v710
  %v713 = vmul.f32 %v692, %v710
  %v714 = vmul.f32 %v693, %v710
  %v715 = vmul.f32 %v694, %v710
  %v716 = vmul.f32 %v695, %v710
  %v717 = vmul.f32 %v696, %v710
  %v718 = vmul.f32 %v697, %v710
  %v719 = vmul.f32 %v698, %v710
  %v720 = vmul.f32 %v699, %v710
  %v721 = vmul.f32 %v700, %v710
  %v722 = vmul.f32 %v701, %v710
  %v723 = vmul.f32 %v702, %v710
  %v724 = vmul.f32 %v703, %v710
  %v725 = vmul.f32 %v704, %v710
  %v726 = vmul.f32 %v705, %v710
  %v727 = vadd.f32 %v673, %v711
  %v728 = vadd.f32 %v674, %v712
  %v729 = vadd.f32 %v675, %v713
  %v730 = vadd.f32 %v676, %v714
  %v731 = vadd.f32 %v677, %v715
  %v732 = vadd.f32 %v678, %v716
  %v733 = vadd.f32 %v679, %v717
  %v734 = vadd.f32 %v680, %v718
  %v735 = vadd.f32 %v681, %v719
  %v736 = vadd.f32 %v682, %v720
  %v737 = vadd.f32 %v683, %v721
  %v738 = vadd.f32 %v684, %v722
  %v739 = vadd.f32 %v685, %v723
  %v740 = vadd.f32 %v686, %v724
  %v741 = vadd.f32 %v687, %v725
  %v742 = vadd.f32 %v688, %v726
  %v743 = vld [vmem:[%s689 + $0x1] sm:$0xff]
  %v744 = vld [vmem:[%s689 + $0x11] sm:$0xff]
  %v745 = vld [vmem:[%s689 + $0x21] sm:$0xff]
  %v746 = vld [vmem:[%s689 + $0x31] sm:$0xff]
  %v747 = vld [vmem:[%s689 + $0x41] sm:$0xff]
  %v748 = vld [vmem:[%s689 + $0x51] sm:$0xff]
  %v749 = vld [vmem:[%s689 + $0x61] sm:$0xff]
  %v750 = vld [vmem:[%s689 + $0x71] sm:$0xff]
  %v751 = vld [vmem:[%s689 + $0xa1] sm:$0xff]
  %v752 = vld [vmem:[%s689 + $0xb1] sm:$0xff]
  %v753 = vld [vmem:[%s689 + $0xc1] sm:$0xff]
  %v754 = vld [vmem:[%s689 + $0xd1] sm:$0xff]
  %v755 = vld [vmem:[%s689 + $0xe1] sm:$0xff]
  %v756 = vld [vmem:[%s689 + $0xf1] sm:$0xff]
  %v757 = vld [vmem:[%s689 + $0x101] sm:$0xff]
  %v758 = vld [vmem:[%s689 + $0x111] sm:$0xff]
  %v759 = vld [vmem:[%s4 + $0x7] sm:$0x1]
  %v760 = vlaneseq
  %v761 = vshrl.u32 %v760, 7
  %v762 = vsub.s32 0, %v761
  %v763 = vrot.slane %v759, %v762
  %v764 = vmul.f32 %v743, %v763
  %v765 = vmul.f32 %v744, %v763
  %v766 = vmul.f32 %v745, %v763
  %v767 = vmul.f32 %v746, %v763
  %v768 = vmul.f32 %v747, %v763
  %v769 = vmul.f32 %v748, %v763
  %v770 = vmul.f32 %v749, %v763
  %v771 = vmul.f32 %v750, %v763
  %v772 = vmul.f32 %v751, %v763
  %v773 = vmul.f32 %v752, %v763
  %v774 = vmul.f32 %v753, %v763
  %v775 = vmul.f32 %v754, %v763
  %v776 = vmul.f32 %v755, %v763
  %v777 = vmul.f32 %v756, %v763
  %v778 = vmul.f32 %v757, %v763
  %v779 = vmul.f32 %v758, %v763
  %v780 = vadd.f32 %v727, %v764
  %v781 = vadd.f32 %v728, %v765
  %v782 = vadd.f32 %v729, %v766
  %v783 = vadd.f32 %v730, %v767
  %v784 = vadd.f32 %v731, %v768
  %v785 = vadd.f32 %v732, %v769
  %v786 = vadd.f32 %v733, %v770
  %v787 = vadd.f32 %v734, %v771
  %v788 = vadd.f32 %v735, %v772
  %v789 = vadd.f32 %v736, %v773
  %v790 = vadd.f32 %v737, %v774
  %v791 = vadd.f32 %v738, %v775
  %v792 = vadd.f32 %v739, %v776
  %v793 = vadd.f32 %v740, %v777
  %v794 = vadd.f32 %v741, %v778
  %v795 = vadd.f32 %v742, %v779
  %v796 = vld [vmem:[%s689 + $0x2] sm:$0xff]
  %v797 = vld [vmem:[%s689 + $0x12] sm:$0xff]
  %v798 = vld [vmem:[%s689 + $0x22] sm:$0xff]
  %v799 = vld [vmem:[%s689 + $0x32] sm:$0xff]
  %v800 = vld [vmem:[%s689 + $0x42] sm:$0xff]
  %v801 = vld [vmem:[%s689 + $0x52] sm:$0xff]
  %v802 = vld [vmem:[%s689 + $0x62] sm:$0xff]
  %v803 = vld [vmem:[%s689 + $0x72] sm:$0xff]
  %v804 = vld [vmem:[%s689 + $0xa2] sm:$0xff]
  %v805 = vld [vmem:[%s689 + $0xb2] sm:$0xff]
  %v806 = vld [vmem:[%s689 + $0xc2] sm:$0xff]
  %v807 = vld [vmem:[%s689 + $0xd2] sm:$0xff]
  %v808 = vld [vmem:[%s689 + $0xe2] sm:$0xff]
  %v809 = vld [vmem:[%s689 + $0xf2] sm:$0xff]
  %v810 = vld [vmem:[%s689 + $0x102] sm:$0xff]
  %v811 = vld [vmem:[%s689 + $0x112] sm:$0xff]
  %v812 = vld [vmem:[%s4 + $0x8] sm:$0x1]
  %v813 = vlaneseq
  %v814 = vshrl.u32 %v813, 7
  %v815 = vsub.s32 0, %v814
  %v816 = vrot.slane %v812, %v815
  %v817 = vmul.f32 %v796, %v816
  %v818 = vmul.f32 %v797, %v816
  %v819 = vmul.f32 %v798, %v816
  %v820 = vmul.f32 %v799, %v816
  %v821 = vmul.f32 %v800, %v816
  %v822 = vmul.f32 %v801, %v816
  %v823 = vmul.f32 %v802, %v816
  %v824 = vmul.f32 %v803, %v816
  %v825 = vmul.f32 %v804, %v816
  %v826 = vmul.f32 %v805, %v816
  %v827 = vmul.f32 %v806, %v816
  %v828 = vmul.f32 %v807, %v816
  %v829 = vmul.f32 %v808, %v816
  %v830 = vmul.f32 %v809, %v816
  %v831 = vmul.f32 %v810, %v816
  %v832 = vmul.f32 %v811, %v816
  %v833 = vadd.f32 %v780, %v817
  %v834 = vadd.f32 %v781, %v818
  %v835 = vadd.f32 %v782, %v819
  %v836 = vadd.f32 %v783, %v820
  %v837 = vadd.f32 %v784, %v821
  %v838 = vadd.f32 %v785, %v822
  %v839 = vadd.f32 %v786, %v823
  %v840 = vadd.f32 %v787, %v824
  %v841 = vadd.f32 %v788, %v825
  %v842 = vadd.f32 %v789, %v826
  %v843 = vadd.f32 %v790, %v827
  %v844 = vadd.f32 %v791, %v828
  %v845 = vadd.f32 %v792, %v829
  %v846 = vadd.f32 %v793, %v830
  %v847 = vadd.f32 %v794, %v831
  %v848 = vadd.f32 %v795, %v832
  %v849 = vld [vmem:[%s5] sm:$0x1]
  %v850 = vlaneseq
  %v851 = vshrl.u32 %v850, 7
  %v852 = vsub.s32 0, %v851
  %v853 = vrot.slane %v849, %v852
  %v854 = vadd.f32 %v833, %v853
  %v855 = vadd.f32 %v834, %v853
  %v856 = vadd.f32 %v835, %v853
  %v857 = vadd.f32 %v836, %v853
  %v858 = vadd.f32 %v837, %v853
  %v859 = vadd.f32 %v838, %v853
  %v860 = vadd.f32 %v839, %v853
  %v861 = vadd.f32 %v840, %v853
  %v862 = vadd.f32 %v841, %v853
  %v863 = vadd.f32 %v842, %v853
  %v864 = vadd.f32 %v843, %v853
  %v865 = vadd.f32 %v844, %v853
  %v866 = vadd.f32 %v845, %v853
  %v867 = vadd.f32 %v846, %v853
  %v868 = vadd.f32 %v847, %v853
  %v869 = vadd.f32 %v848, %v853
  %v870 = vpack.c.bf16 %v855, %v854
  %v871 = vpack.c.bf16 %v857, %v856
  %v872 = vpack.c.bf16 %v859, %v858
  %v873 = vpack.c.bf16 %v861, %v860
  %v874 = vpack.c.bf16 %v863, %v862
  %v875 = vpack.c.bf16 %v865, %v864
  %v876 = vpack.c.bf16 %v867, %v866
  %v877 = vpack.c.bf16 %v869, %v868
  %v878 = vld [vmem:[%s6] sm:$0xf]
  %v879 = vld [vmem:[%s6 + $0x4] sm:$0xf]
  %v880 = vld [vmem:[%s6 + $0x8] sm:$0xf]
  %v881 = vld [vmem:[%s6 + $0xc] sm:$0xf]
  %v882 = vld [vmem:[%s6 + $0x10] sm:$0xf]
  %v883 = vld [vmem:[%s6 + $0x14] sm:$0xf]
  %v884 = vld [vmem:[%s6 + $0x18] sm:$0xf]
  %v885 = vld [vmem:[%s6 + $0x1c] sm:$0xf]
  %v886 = vld [vmem:[%s7] sm:$0x1]
  %v887 = vlaneseq
  %v888 = vshrl.u32 %v887, 7
  %v889 = vsub.s32 0, %v888
  %v890 = vrot.slane %v886, %v889
  %v899 = vunpack.c.l.b16 %v878
  %v900 = vunpack.c.l.b16 %v879
  %v901 = vunpack.c.l.b16 %v880
  %v902 = vunpack.c.l.b16 %v881
  %v903 = vunpack.c.l.b16 %v882
  %v904 = vunpack.c.l.b16 %v883
  %v905 = vunpack.c.l.b16 %v884
  %v906 = vunpack.c.l.b16 %v885
  %v907 = vpack.c.b16 %v900, %v899
  %v908 = vpack.c.b16 %v902, %v901
  %v909 = vpack.c.b16 %v904, %v903
  %v910 = vpack.c.b16 %v906, %v905
  %v916 = vsel %vm312, %v870, 0
  %v919 = vsel %vm312, %v871, 0
  %v922 = vsel %vm312, %v872, 0
  %v925 = vsel %vm312, %v873, 0
  %v928 = vsel %vm312, %v874, 0
  %v931 = vsel %vm312, %v875, 0
  %v934 = vsel %vm312, %v876, 0
  %v937 = vsel %vm312, %v877, 0
  %939 = vmatprep.subr.bf16.mxu0 0
  %940 = vmatpush1.bf16.msra.mxu0 %v907
  %941 = vmatprep.subr.bf16.mxu0 0
  %942 = vmatpush1.bf16.msra.mxu0 %v908
  %943 = vmatprep.subr.bf16.mxu0 0
  %944 = vmatpush1.bf16.msra.mxu0 %v909
  %945 = vmatprep.subr.bf16.mxu0 0
  %946 = vmatpush1.bf16.msra.mxu0 %v910
  %947 = vmatprep.subr.bf16.mxu0 0
  %948 = vmatpush1.bf16.msra.mxu0 0
  %949 = vmatprep.subr.bf16.mxu0 0
  %950 = vmatpush1.bf16.msra.mxu0 0
  %951 = vmatprep.subr.bf16.mxu0 0
  %952 = vmatpush1.bf16.msra.mxu0 0
  %953 = vmatprep.subr.bf16.mxu0 0
  %954 = vmatpush1.bf16.msra.mxu0 0
  %955 = vmatprep.subr.bf16.mxu0 0
  %956 = vmatpush1.bf16.msra.mxu0 0
  %957 = vmatprep.subr.bf16.mxu0 0
  %958 = vmatpush1.bf16.msra.mxu0 0
  %959 = vmatprep.subr.bf16.mxu0 0
  %960 = vmatpush1.bf16.msra.mxu0 0
  %961 = vmatprep.subr.bf16.mxu0 0
  %962 = vmatpush1.bf16.msra.mxu0 0
  %963 = vmatprep.subr.bf16.mxu0 0
  %964 = vmatpush1.bf16.msra.mxu0 0
  %965 = vmatprep.subr.bf16.mxu0 0
  %966 = vmatpush1.bf16.msra.mxu0 0
  %967 = vmatprep.subr.bf16.mxu0 0
  %968 = vmatpush1.bf16.msra.mxu0 0
  %969 = vmatprep.subr.bf16.mxu0 0
  %970 = vmatpush1.bf16.msra.mxu0 0
  %971 = vmatprep.mubr.bf16.mxu0 0
  %972 = vmatmul.mubr.bf16.gmra.mrb[0].mxu0 %v916
  %v973 = vpop.f32.mrb[0].mxu0
  %v974 = vadd.f32 %v890, %v973
  %v975 = vpop.f32.mrb[0].mxu0
  %v976 = vpop.f32.mrb[0].mxu0
  %v977 = vadd.f32 %v890, %v976
  %v978 = vpop.f32.mrb[0].mxu0
  %979 = vmatprep.mubr.bf16.mxu0 0
  %980 = vmatmul.mubr.bf16.gmra.mrb[0].mxu0 %v919
  %v981 = vpop.f32.mrb[0].mxu0
  %v982 = vadd.f32 %v890, %v981
  %v983 = vpop.f32.mrb[0].mxu0
  %v984 = vpop.f32.mrb[0].mxu0
  %v985 = vadd.f32 %v890, %v984
  %v986 = vpop.f32.mrb[0].mxu0
  %987 = vmatprep.mubr.bf16.mxu0 0
  %988 = vmatmul.mubr.bf16.gmra.mrb[0].mxu0 %v922
  %v989 = vpop.f32.mrb[0].mxu0
  %v990 = vadd.f32 %v890, %v989
  %v991 = vpop.f32.mrb[0].mxu0
  %v992 = vpop.f32.mrb[0].mxu0
  %v993 = vadd.f32 %v890, %v992
  %v994 = vpop.f32.mrb[0].mxu0
  %995 = vmatprep.mubr.bf16.mxu0 0
  %996 = vmatmul.mubr.bf16.gmra.mrb[0].mxu0 %v925
  %v997 = vpop.f32.mrb[0].mxu0
  %v998 = vadd.f32 %v890, %v997
  %v999 = vpop.f32.mrb[0].mxu0
  %v1000 = vpop.f32.mrb[0].mxu0
  %v1001 = vadd.f32 %v890, %v1000
  %v1002 = vpop.f32.mrb[0].mxu0
  %1003 = vmatprep.mubr.bf16.mxu0 0
  %1004 = vmatmul.mubr.bf16.gmra.mrb[0].mxu0 %v928
  %v1005 = vpop.f32.mrb[0].mxu0
  %v1006 = vadd.f32 %v890, %v1005
  %v1007 = vpop.f32.mrb[0].mxu0
  %v1008 = vpop.f32.mrb[0].mxu0
  %v1009 = vadd.f32 %v890, %v1008
  %v1010 = vpop.f32.mrb[0].mxu0
  %1011 = vmatprep.mubr.bf16.mxu0 0
  %1012 = vmatmul.mubr.bf16.gmra.mrb[0].mxu0 %v931
  %v1013 = vpop.f32.mrb[0].mxu0
  %v1014 = vadd.f32 %v890, %v1013
  %v1015 = vpop.f32.mrb[0].mxu0
  %v1016 = vpop.f32.mrb[0].mxu0
  %v1017 = vadd.f32 %v890, %v1016
  %v1018 = vpop.f32.mrb[0].mxu0
  %1019 = vmatprep.mubr.bf16.mxu0 0
  %1020 = vmatmul.mubr.bf16.gmra.mrb[0].mxu0 %v934
  %v1021 = vpop.f32.mrb[0].mxu0
  %v1022 = vadd.f32 %v890, %v1021
  %v1023 = vpop.f32.mrb[0].mxu0
  %v1024 = vpop.f32.mrb[0].mxu0
  %v1025 = vadd.f32 %v890, %v1024
  %v1026 = vpop.f32.mrb[0].mxu0
  %1027 = vmatprep.mubr.bf16.mxu0 0
  %1028 = vmatmul.mubr.bf16.gmra.mrb[0].mxu0 %v937
  %v1029 = vpop.f32.mrb[0].mxu0
  %v1030 = vadd.f32 %v890, %v1029
  %v1031 = vpop.f32.mrb[0].mxu0
  %v1032 = vpop.f32.mrb[0].mxu0
  %v1033 = vadd.f32 %v890, %v1032
  %v1034 = vpop.f32.mrb[0].mxu0
  %1035 = vdwg.mxu0
  %v1036 = vpack.c.bf16 %v977, %v974
  %v1037 = vpack.c.bf16 %v985, %v982
  %v1038 = vpack.c.bf16 %v993, %v990
  %v1039 = vpack.c.bf16 %v1001, %v998
  %v1040 = vpack.c.bf16 %v1009, %v1006
  %v1041 = vpack.c.bf16 %v1017, %v1014
  %v1042 = vpack.c.bf16 %v1025, %v1022
  %v1043 = vpack.c.bf16 %v1033, %v1030
  %v1044 = vld [vmem:[%s8] sm:$0xf]
  %v1045 = vld [vmem:[%s8 + $0x4] sm:$0xf]
  %v1046 = vld [vmem:[%s8 + $0x8] sm:$0xf]
  %v1047 = vld [vmem:[%s8 + $0xc] sm:$0xf]
  %v1048 = vld [vmem:[%s8 + $0x10] sm:$0xf]
  %v1049 = vld [vmem:[%s8 + $0x14] sm:$0xf]
  %v1050 = vld [vmem:[%s8 + $0x18] sm:$0xf]
  %v1051 = vld [vmem:[%s8 + $0x1c] sm:$0xf]
  %v1052 = vld [vmem:[%s9] sm:$0x1]
  %v1054 = vlaneseq
  %v1055 = vshrl.u32 %v1054, 7
  %v1056 = vsub.s32 0, %v1055
  %v1057 = vrot.slane %v1052, %v1056
  %v1067 = vunpack.c.l.b16 %v1044
  %v1068 = vunpack.c.l.b16 %v1045
  %v1069 = vunpack.c.l.b16 %v1046
  %v1070 = vunpack.c.l.b16 %v1047
  %v1071 = vunpack.c.l.b16 %v1048
  %v1072 = vunpack.c.l.b16 %v1049
  %v1073 = vunpack.c.l.b16 %v1050
  %v1074 = vunpack.c.l.b16 %v1051
  %v1075 = vpack.c.b16 %v1068, %v1067
  %v1076 = vpack.c.b16 %v1070, %v1069
  %v1077 = vpack.c.b16 %v1072, %v1071
  %v1078 = vpack.c.b16 %v1074, %v1073
  %v1084 = vsel %vm312, %v1036, 0
  %v1087 = vsel %vm312, %v1037, 0
  %v1090 = vsel %vm312, %v1038, 0
  %v1093 = vsel %vm312, %v1039, 0
  %v1096 = vsel %vm312, %v1040, 0
  %v1099 = vsel %vm312, %v1041, 0
  %v1102 = vsel %vm312, %v1042, 0
  %v1105 = vsel %vm312, %v1043, 0
  %1107 = vmatprep.subr.bf16.mxu0 0
  %1108 = vmatpush1.bf16.msra.mxu0 %v1075
  %1109 = vmatprep.subr.bf16.mxu0 0
  %1110 = vmatpush1.bf16.msra.mxu0 %v1076
  %1111 = vmatprep.subr.bf16.mxu0 0
  %1112 = vmatpush1.bf16.msra.mxu0 %v1077
  %1113 = vmatprep.subr.bf16.mxu0 0
  %1114 = vmatpush1.bf16.msra.mxu0 %v1078
  %1115 = vmatprep.subr.bf16.mxu0 0
  %1116 = vmatpush1.bf16.msra.mxu0 0
  %1117 = vmatprep.subr.bf16.mxu0 0
  %1118 = vmatpush1.bf16.msra.mxu0 0
  %1119 = vmatprep.subr.bf16.mxu0 0
  %1120 = vmatpush1.bf16.msra.mxu0 0
  %1121 = vmatprep.subr.bf16.mxu0 0
  %1122 = vmatpush1.bf16.msra.mxu0 0
  %1123 = vmatprep.subr.bf16.mxu0 0
  %1124 = vmatpush1.bf16.msra.mxu0 0
  %1125 = vmatprep.subr.bf16.mxu0 0
  %1126 = vmatpush1.bf16.msra.mxu0 0
  %1127 = vmatprep.subr.bf16.mxu0 0
  %1128 = vmatpush1.bf16.msra.mxu0 0
  %1129 = vmatprep.subr.bf16.mxu0 0
  %1130 = vmatpush1.bf16.msra.mxu0 0
  %1131 = vmatprep.subr.bf16.mxu0 0
  %1132 = vmatpush1.bf16.msra.mxu0 0
  %1133 = vmatprep.subr.bf16.mxu0 0
  %1134 = vmatpush1.bf16.msra.mxu0 0
  %1135 = vmatprep.subr.bf16.mxu0 0
  %1136 = vmatpush1.bf16.msra.mxu0 0
  %1137 = vmatprep.subr.bf16.mxu0 0
  %1138 = vmatpush1.bf16.msra.mxu0 0
  %1139 = vmatprep.mubr.bf16.mxu0 0
  %1140 = vmatmul.mubr.bf16.gmra.mrb[0].mxu0 %v1084
  %v1141 = vpop.f32.mrb[0].mxu0
  %v1142 = vadd.f32 %v1057, %v1141
  %v1143 = vpop.f32.mrb[0].mxu0
  %v1144 = vpop.f32.mrb[0].mxu0
  %v1145 = vadd.f32 %v1057, %v1144
  %v1146 = vpop.f32.mrb[0].mxu0
  %1147 = vmatprep.mubr.bf16.mxu0 0
  %1148 = vmatmul.mubr.bf16.gmra.mrb[0].mxu0 %v1087
  %v1149 = vpop.f32.mrb[0].mxu0
  %v1150 = vadd.f32 %v1057, %v1149
  %v1151 = vpop.f32.mrb[0].mxu0
  %v1152 = vpop.f32.mrb[0].mxu0
  %v1153 = vadd.f32 %v1057, %v1152
  %v1154 = vpop.f32.mrb[0].mxu0
  %1155 = vmatprep.mubr.bf16.mxu0 0
  %1156 = vmatmul.mubr.bf16.gmra.mrb[0].mxu0 %v1090
  %v1157 = vpop.f32.mrb[0].mxu0
  %v1158 = vadd.f32 %v1057, %v1157
  %v1159 = vpop.f32.mrb[0].mxu0
  %v1160 = vpop.f32.mrb[0].mxu0
  %v1161 = vadd.f32 %v1057, %v1160
  %v1162 = vpop.f32.mrb[0].mxu0
  %1163 = vmatprep.mubr.bf16.mxu0 0
  %1164 = vmatmul.mubr.bf16.gmra.mrb[0].mxu0 %v1093
  %v1165 = vpop.f32.mrb[0].mxu0
  %v1166 = vadd.f32 %v1057, %v1165
  %v1167 = vpop.f32.mrb[0].mxu0
  %v1168 = vpop.f32.mrb[0].mxu0
  %v1169 = vadd.f32 %v1057, %v1168
  %v1170 = vpop.f32.mrb[0].mxu0
  %1171 = vmatprep.mubr.bf16.mxu0 0
  %1172 = vmatmul.mubr.bf16.gmra.mrb[0].mxu0 %v1096
  %v1173 = vpop.f32.mrb[0].mxu0
  %v1174 = vadd.f32 %v1057, %v1173
  %v1175 = vpop.f32.mrb[0].mxu0
  %v1176 = vpop.f32.mrb[0].mxu0
  %v1177 = vadd.f32 %v1057, %v1176
  %v1178 = vpop.f32.mrb[0].mxu0
  %1179 = vmatprep.mubr.bf16.mxu0 0
  %1180 = vmatmul.mubr.bf16.gmra.mrb[0].mxu0 %v1099
  %v1181 = vpop.f32.mrb[0].mxu0
  %v1182 = vadd.f32 %v1057, %v1181
  %v1183 = vpop.f32.mrb[0].mxu0
  %v1184 = vpop.f32.mrb[0].mxu0
  %v1185 = vadd.f32 %v1057, %v1184
  %v1186 = vpop.f32.mrb[0].mxu0
  %1187 = vmatprep.mubr.bf16.mxu0 0
  %1188 = vmatmul.mubr.bf16.gmra.mrb[0].mxu0 %v1102
  %v1189 = vpop.f32.mrb[0].mxu0
  %v1190 = vadd.f32 %v1057, %v1189
  %v1191 = vpop.f32.mrb[0].mxu0
  %v1192 = vpop.f32.mrb[0].mxu0
  %v1193 = vadd.f32 %v1057, %v1192
  %v1194 = vpop.f32.mrb[0].mxu0
  %1195 = vmatprep.mubr.bf16.mxu0 0
  %1196 = vmatmul.mubr.bf16.gmra.mrb[0].mxu0 %v1105
  %v1197 = vpop.f32.mrb[0].mxu0
  %v1198 = vadd.f32 %v1057, %v1197
  %v1199 = vpop.f32.mrb[0].mxu0
  %v1200 = vpop.f32.mrb[0].mxu0
  %v1201 = vadd.f32 %v1057, %v1200
  %v1202 = vpop.f32.mrb[0].mxu0
  %1203 = vdwg.mxu0
  %v1204 = vsel %vm110, %v1142, 0.0
  %1205 = vadd.xlane.f32.xlu0 %v1204
  %v1206 = vpop.xlane.xlu0 %1205
  %v1207 = vsel %vm110, %v1145, 0.0
  %1208 = vadd.xlane.f32.xlu0 %v1207
  %v1209 = vpop.xlane.xlu0 %1208
  %v1210 = vsel %vm110, %v1150, 0.0
  %1211 = vadd.xlane.f32.xlu0 %v1210
  %v1212 = vpop.xlane.xlu0 %1211
  %v1213 = vsel %vm110, %v1153, 0.0
  %1214 = vadd.xlane.f32.xlu0 %v1213
  %v1215 = vpop.xlane.xlu0 %1214
  %v1216 = vsel %vm110, %v1158, 0.0
  %1217 = vadd.xlane.f32.xlu0 %v1216
  %v1218 = vpop.xlane.xlu0 %1217
  %v1219 = vsel %vm110, %v1161, 0.0
  %1220 = vadd.xlane.f32.xlu0 %v1219
  %v1221 = vpop.xlane.xlu0 %1220
  %v1222 = vsel %vm110, %v1166, 0.0
  %1223 = vadd.xlane.f32.xlu0 %v1222
  %v1224 = vpop.xlane.xlu0 %1223
  %v1225 = vsel %vm110, %v1169, 0.0
  %1226 = vadd.xlane.f32.xlu0 %v1225
  %v1227 = vpop.xlane.xlu0 %1226
  %v1228 = vsel %vm110, %v1174, 0.0
  %1229 = vadd.xlane.f32.xlu0 %v1228
  %v1230 = vpop.xlane.xlu0 %1229
  %v1231 = vsel %vm110, %v1177, 0.0
  %1232 = vadd.xlane.f32.xlu0 %v1231
  %v1233 = vpop.xlane.xlu0 %1232
  %v1234 = vsel %vm110, %v1182, 0.0
  %1235 = vadd.xlane.f32.xlu0 %v1234
  %v1236 = vpop.xlane.xlu0 %1235
  %v1237 = vsel %vm110, %v1185, 0.0
  %1238 = vadd.xlane.f32.xlu0 %v1237
  %v1239 = vpop.xlane.xlu0 %1238
  %v1240 = vsel %vm110, %v1190, 0.0
  %1241 = vadd.xlane.f32.xlu0 %v1240
  %v1242 = vpop.xlane.xlu0 %1241
  %v1243 = vsel %vm110, %v1193, 0.0
  %1244 = vadd.xlane.f32.xlu0 %v1243
  %v1245 = vpop.xlane.xlu0 %1244
  %v1246 = vsel %vm110, %v1198, 0.0
  %1247 = vadd.xlane.f32.xlu0 %v1246
  %v1248 = vpop.xlane.xlu0 %1247
  %v1249 = vsel %vm110, %v1201, 0.0
  %1250 = vadd.xlane.f32.xlu0 %v1249
  %v1251 = vpop.xlane.xlu0 %1250
  %v1252 = vadd.f32 %v1206, %v1209
  %v1253 = vadd.f32 %v1252, %v1212
  %v1254 = vadd.f32 %v1253, %v1215
  %v1255 = vadd.f32 %v1254, %v1218
  %v1256 = vadd.f32 %v1255, %v1221
  %v1257 = vadd.f32 %v1256, %v1224
  %v1258 = vadd.f32 %v1257, %v1227
  %v1259 = vrot.slane %v1258, 4
  %v1260 = vadd.f32 %v1258, %v1259
  %v1261 = vrot.slane %v1260, 2
  %v1262 = vadd.f32 %v1260, %v1261
  %v1263 = vrot.slane %v1262, 1
  %v1264 = vadd.f32 %v1262, %v1263
  %v1265 = vadd.f32 %v1230, %v1233
  %v1266 = vadd.f32 %v1265, %v1236
  %v1267 = vadd.f32 %v1266, %v1239
  %v1268 = vadd.f32 %v1267, %v1242
  %v1269 = vadd.f32 %v1268, %v1245
  %v1270 = vadd.f32 %v1269, %v1248
  %v1271 = vadd.f32 %v1270, %v1251
  %v1272 = vrot.slane %v1271, 4
  %v1273 = vadd.f32 %v1271, %v1272
  %v1274 = vrot.slane %v1273, 2
  %v1275 = vadd.f32 %v1273, %v1274
  %v1276 = vrot.slane %v1275, 1
  %v1277 = vadd.f32 %v1275, %v1276
  %v1278 = vadd.f32 %v1264, 0.0
  %v1279 = vadd.f32 %v1277, 0.0
  %v1280 = vld [vmem:[%s1 + $0x40] sm:$0xff]
  %v1281 = vld [vmem:[%s1 + $0x48] sm:$0xff]
  %v1282 = vld [vmem:[%s1 + $0x98] sm:$0xff]
  %v1283 = vld [vmem:[%s1 + $0xa0] sm:$0xff]
  %v1284 = vpack.c.bf16 %v1281, %v1280
  %v1285 = vpack.c.bf16 %v1283, %v1282
  %v1286 = vld [vmem:[%s2] sm:$0xf]
  %v1287 = vld [vmem:[%s2 + $0x4] sm:$0xf]
  %v1288 = vld [vmem:[%s2 + $0x8] sm:$0xf]
  %v1289 = vld [vmem:[%s2 + $0xc] sm:$0xf]
  %v1290 = vld [vmem:[%s3] sm:$0x1]
  %v1292 = vlaneseq
  %v1293 = vshrl.u32 %v1292, 7
  %v1294 = vsub.s32 0, %v1293
  %v1295 = vrot.slane %v1290, %v1294
  %v1301 = vunpack.c.l.b16 %v1286
  %v1302 = vunpack.c.l.b16 %v1287
  %v1303 = vunpack.c.l.b16 %v1288
  %v1304 = vunpack.c.l.b16 %v1289
  %v1305 = vpack.c.b16 %v1302, %v1301
  %v1306 = vpack.c.b16 %v1304, %v1303
  %v1310 = vsel %vm110, %v1284, 0
  %v1313 = vsel %vm110, %v1285, 0
  %1315 = vmatprep.subr.bf16.mxu0 0
  %1316 = vmatpush1.bf16.msra.mxu0 %v1305
  %1317 = vmatprep.subr.bf16.mxu0 0
  %1318 = vmatpush1.bf16.msra.mxu0 %v1306
  %1319 = vmatprep.subr.bf16.mxu0 0
  %1320 = vmatpush1.bf16.msra.mxu0 0
  %1321 = vmatprep.subr.bf16.mxu0 0
  %1322 = vmatpush1.bf16.msra.mxu0 0
  %1323 = vmatprep.subr.bf16.mxu0 0
  %1324 = vmatpush1.bf16.msra.mxu0 0
  %1325 = vmatprep.subr.bf16.mxu0 0
  %1326 = vmatpush1.bf16.msra.mxu0 0
  %1327 = vmatprep.subr.bf16.mxu0 0
  %1328 = vmatpush1.bf16.msra.mxu0 0
  %1329 = vmatprep.subr.bf16.mxu0 0
  %1330 = vmatpush1.bf16.msra.mxu0 0
  %1331 = vmatprep.subr.bf16.mxu0 0
  %1332 = vmatpush1.bf16.msra.mxu0 0
  %1333 = vmatprep.subr.bf16.mxu0 0
  %1334 = vmatpush1.bf16.msra.mxu0 0
  %1335 = vmatprep.subr.bf16.mxu0 0
  %1336 = vmatpush1.bf16.msra.mxu0 0
  %1337 = vmatprep.subr.bf16.mxu0 0
  %1338 = vmatpush1.bf16.msra.mxu0 0
  %1339 = vmatprep.subr.bf16.mxu0 0
  %1340 = vmatpush1.bf16.msra.mxu0 0
  %1341 = vmatprep.subr.bf16.mxu0 0
  %1342 = vmatpush1.bf16.msra.mxu0 0
  %1343 = vmatprep.subr.bf16.mxu0 0
  %1344 = vmatpush1.bf16.msra.mxu0 0
  %1345 = vmatprep.subr.bf16.mxu0 0
  %1346 = vmatpush1.bf16.msra.mxu0 0
  %1347 = vmatprep.mubr.bf16.mxu0 0
  %1348 = vmatmul.mubr.bf16.gmra.mrb[0].mxu0 %v1310
  %v1349 = vpop.f32.mrb[0].mxu0
  %v1350 = vadd.f32 %v1295, %v1349
  %v1351 = vpop.f32.mrb[0].mxu0
  %v1352 = vpop.f32.mrb[0].mxu0
  %v1353 = vadd.f32 %v1295, %v1352
  %v1354 = vpop.f32.mrb[0].mxu0
  %1355 = vmatprep.mubr.bf16.mxu0 0
  %1356 = vmatmul.mubr.bf16.gmra.mrb[0].mxu0 %v1313
  %v1357 = vpop.f32.mrb[0].mxu0
  %v1358 = vadd.f32 %v1295, %v1357
  %v1359 = vpop.f32.mrb[0].mxu0
  %v1360 = vpop.f32.mrb[0].mxu0
  %v1361 = vadd.f32 %v1295, %v1360
  %v1362 = vpop.f32.mrb[0].mxu0
  %1363 = vdwg.mxu0
  %v1364 = vmul.f32 %v1350, 0.5
  %v1365 = vmul.f32 %v1353, 0.5
  %v1366 = vmul.f32 %v1358, 0.5
  %v1367 = vmul.f32 %v1361, 0.5
  %v1368 = vmul.f32 %v1350, 0.70710677
  %v1369 = vmul.f32 %v1353, 0.70710677
  %v1370 = vmul.f32 %v1358, 0.70710677
  %v1371 = vmul.f32 %v1361, 0.70710677
  %v1372 = verf.f32.pop %v1368
  %v1373 = verf.f32.pop %v1369
  %v1374 = verf.f32.pop %v1370
  %v1375 = verf.f32.pop %v1371
  %v1376 = vadd.f32 %v1372, 1.0
  %v1377 = vadd.f32 %v1373, 1.0
  %v1378 = vadd.f32 %v1374, 1.0
  %v1379 = vadd.f32 %v1375, 1.0
  %v1380 = vmul.f32 %v1364, %v1376
  %v1381 = vmul.f32 %v1365, %v1377
  %v1382 = vmul.f32 %v1366, %v1378
  %v1383 = vmul.f32 %v1367, %v1379
  %1384 = vst.msk [vmem:[#allocation2] sm:$0xff] %vm312, 0.0
  %1385 = vst.msk [vmem:[#allocation2 + $0x8] sm:$0x3] %vm314, 0.0
  %1386 = vst.msk [vmem:[#allocation2 + $0x10] sm:$0xff] %vm312, 0.0
  %1387 = vst.msk [vmem:[#allocation2 + $0x18] sm:$0x3] %vm314, 0.0
  %1388 = vst.msk [vmem:[#allocation2 + $0x20] sm:$0xff] %vm312, 0.0
  %1389 = vst.msk [vmem:[#allocation2 + $0x28] sm:$0x3] %vm314, 0.0
  %1390 = vst.msk [vmem:[#allocation2 + $0x30] sm:$0xff] %vm312, 0.0
  %1391 = vst.msk [vmem:[#allocation2 + $0x38] sm:$0x3] %vm314, 0.0
  %1392 = vst.msk [vmem:[#allocation2 + $0x40] sm:$0xff] %vm312, 0.0
  %1393 = vst.msk [vmem:[#allocation2 + $0x48] sm:$0x3] %vm314, 0.0
  %1394 = vst.msk [vmem:[#allocation2 + $0x50] sm:$0xff] %vm312, 0.0
  %1395 = vst.msk [vmem:[#allocation2 + $0x58] sm:$0x3] %vm314, 0.0
  %1396 = vst.msk [vmem:[#allocation2 + $0x60] sm:$0xff] %vm312, 0.0
  %1397 = vst.msk [vmem:[#allocation2 + $0x68] sm:$0x3] %vm314, 0.0
  %1398 = vst.msk [vmem:[#allocation2 + $0x70] sm:$0xff] %vm312, 0.0
  %1399 = vst.msk [vmem:[#allocation2 + $0x78] sm:$0x3] %vm314, 0.0
  %1400 = vst.msk [vmem:[#allocation2 + $0x80] sm:$0xff] %vm312, 0.0
  %1401 = vst.msk [vmem:[#allocation2 + $0x88] sm:$0x3] %vm314, 0.0
  %1402 = vst.msk [vmem:[#allocation2 + $0x90] sm:$0xff] %vm312, 0.0
  %1403 = vst.msk [vmem:[#allocation2 + $0x98] sm:$0x3] %vm314, 0.0
  %1404 = vst.msk [vmem:[#allocation2 + $0xa0] sm:$0xff] %vm312, 0.0
  %1405 = vst.msk [vmem:[#allocation2 + $0xa8] sm:$0x3] %vm314, 0.0
  %1406 = vst.msk [vmem:[#allocation2 + $0xb0] sm:$0xff] %vm312, 0.0
  %1407 = vst.msk [vmem:[#allocation2 + $0xb8] sm:$0x3] %vm314, 0.0
  %1408 = vst.msk [vmem:[#allocation2 + $0xc0] sm:$0xff] %vm312, 0.0
  %1409 = vst.msk [vmem:[#allocation2 + $0xc8] sm:$0x3] %vm314, 0.0
  %1410 = vst.msk [vmem:[#allocation2 + $0xd0] sm:$0xff] %vm312, 0.0
  %1411 = vst.msk [vmem:[#allocation2 + $0xd8] sm:$0x3] %vm314, 0.0
  %1412 = vst.msk [vmem:[#allocation2 + $0xe0] sm:$0xff] %vm312, 0.0
  %1413 = vst.msk [vmem:[#allocation2 + $0xe8] sm:$0x3] %vm314, 0.0
  %1414 = vst.msk [vmem:[#allocation2 + $0xf0] sm:$0xff] %vm312, 0.0
  %1415 = vst.msk [vmem:[#allocation2 + $0xf8] sm:$0x3] %vm314, 0.0
  %1416 = vst.msk [vmem:[#allocation2 + $0x100] sm:$0xff] %vm312, 0.0
  %1417 = vst.msk [vmem:[#allocation2 + $0x108] sm:$0x3] %vm314, 0.0
  %1418 = vst.msk [vmem:[#allocation2 + $0x110] sm:$0xff] %vm312, 0.0
  %1419 = vst.msk [vmem:[#allocation2 + $0x118] sm:$0x3] %vm314, 0.0
  %1420 = vst.msk [vmem:[#allocation2 + $0x120] sm:$0xff] %vm312, 0.0
  %1421 = vst.msk [vmem:[#allocation2 + $0x128] sm:$0x3] %vm314, 0.0
  %1422 = vst.msk [vmem:[#allocation2 + $0x130] sm:$0xff] %vm312, 0.0
  %1423 = vst.msk [vmem:[#allocation2 + $0x138] sm:$0x3] %vm314, 0.0
  %v1428 = vcombine.high %v1380, %v1380
  %v1429 = vcombine.high %v1381, %v1381
  %v1430 = vcombine.high %v1382, %v1382
  %v1431 = vcombine.high %v1383, %v1383
  %vm1436 = vcmask 519168
  %1437 = vst.msk [vmem:[%s354 + $0x1] sm:$0xf] %vm1436, %v1380
  %1438 = vst.msk [vmem:[%s354 + $0x11] sm:$0xf] %vm1436, %v1428
  %1439 = vst.msk [vmem:[%s354 + $0x21] sm:$0xf] %vm1436, %v1381
  %1440 = vst.msk [vmem:[%s354 + $0x31] sm:$0xf] %vm1436, %v1429
  %1441 = vst.msk [vmem:[%s354 + $0xa1] sm:$0xf] %vm1436, %v1382
  %1442 = vst.msk [vmem:[%s354 + $0xb1] sm:$0xf] %vm1436, %v1430
  %1443 = vst.msk [vmem:[%s354 + $0xc1] sm:$0xf] %vm1436, %v1383
  %1444 = vst.msk [vmem:[%s354 + $0xd1] sm:$0xf] %vm1436, %v1431
  %v1445 = vld [vmem:[#allocation2] sm:$0xf]
  %v1446 = vld [vmem:[#allocation2 + $0x10] sm:$0xf]
  %v1447 = vld [vmem:[#allocation2 + $0x20] sm:$0xf]
  %v1448 = vld [vmem:[#allocation2 + $0x30] sm:$0xf]
  %v1449 = vld [vmem:[#allocation2 + $0xa0] sm:$0xf]
  %v1450 = vld [vmem:[#allocation2 + $0xb0] sm:$0xf]
  %v1451 = vld [vmem:[#allocation2 + $0xc0] sm:$0xf]
  %v1452 = vld [vmem:[#allocation2 + $0xd0] sm:$0xf]
  %s1453 = scalar_lea.vmem %s4, 16
  %v1454 = vld [vmem:[%s1453] sm:$0x1]
  %v1455 = vlaneseq
  %v1456 = vshrl.u32 %v1455, 7
  %v1457 = vsub.s32 0, %v1456
  %v1458 = vrot.slane %v1454, %v1457
  %v1459 = vmul.f32 %v1445, %v1458
  %v1460 = vmul.f32 %v1446, %v1458
  %v1461 = vmul.f32 %v1447, %v1458
  %v1462 = vmul.f32 %v1448, %v1458
  %v1463 = vmul.f32 %v1449, %v1458
  %v1464 = vmul.f32 %v1450, %v1458
  %v1465 = vmul.f32 %v1451, %v1458
  %v1466 = vmul.f32 %v1452, %v1458
  %v1467 = vadd.f32 %v1459, 0.0
  %v1468 = vadd.f32 %v1460, 0.0
  %v1469 = vadd.f32 %v1461, 0.0
  %v1470 = vadd.f32 %v1462, 0.0
  %v1471 = vadd.f32 %v1463, 0.0
  %v1472 = vadd.f32 %v1464, 0.0
  %v1473 = vadd.f32 %v1465, 0.0
  %v1474 = vadd.f32 %v1466, 0.0
  %v1475 = vld [vmem:[#allocation2 + $0x1] sm:$0xf]
  %v1476 = vld [vmem:[#allocation2 + $0x11] sm:$0xf]
  %v1477 = vld [vmem:[#allocation2 + $0x21] sm:$0xf]
  %v1478 = vld [vmem:[#allocation2 + $0x31] sm:$0xf]
  %v1479 = vld [vmem:[#allocation2 + $0xa1] sm:$0xf]
  %v1480 = vld [vmem:[#allocation2 + $0xb1] sm:$0xf]
  %v1481 = vld [vmem:[#allocation2 + $0xc1] sm:$0xf]
  %v1482 = vld [vmem:[#allocation2 + $0xd1] sm:$0xf]
  %v1483 = vld [vmem:[%s1453 + $0x1] sm:$0x1]
  %v1484 = vlaneseq
  %v1485 = vshrl.u32 %v1484, 7
  %v1486 = vsub.s32 0, %v1485
  %v1487 = vrot.slane %v1483, %v1486
  %v1488 = vmul.f32 %v1475, %v1487
  %v1489 = vmul.f32 %v1476, %v1487
  %v1490 = vmul.f32 %v1477, %v1487
  %v1491 = vmul.f32 %v1478, %v1487
  %v1492 = vmul.f32 %v1479, %v1487
  %v1493 = vmul.f32 %v1480, %v1487
  %v1494 = vmul.f32 %v1481, %v1487
  %v1495 = vmul.f32 %v1482, %v1487
  %v1496 = vadd.f32 %v1467, %v1488
  %v1497 = vadd.f32 %v1468, %v1489
  %v1498 = vadd.f32 %v1469, %v1490
  %v1499 = vadd.f32 %v1470, %v1491
  %v1500 = vadd.f32 %v1471, %v1492
  %v1501 = vadd.f32 %v1472, %v1493
  %v1502 = vadd.f32 %v1473, %v1494
  %v1503 = vadd.f32 %v1474, %v1495
  %v1504 = vld [vmem:[#allocation2 + $0x2] sm:$0xf]
  %v1505 = vld [vmem:[#allocation2 + $0x12] sm:$0xf]
  %v1506 = vld [vmem:[#allocation2 + $0x22] sm:$0xf]
  %v1507 = vld [vmem:[#allocation2 + $0x32] sm:$0xf]
  %v1508 = vld [vmem:[#allocation2 + $0xa2] sm:$0xf]
  %v1509 = vld [vmem:[#allocation2 + $0xb2] sm:$0xf]
  %v1510 = vld [vmem:[#allocation2 + $0xc2] sm:$0xf]
  %v1511 = vld [vmem:[#allocation2 + $0xd2] sm:$0xf]
  %v1512 = vld [vmem:[%s1453 + $0x2] sm:$0x1]
  %v1513 = vlaneseq
  %v1514 = vshrl.u32 %v1513, 7
  %v1515 = vsub.s32 0, %v1514
  %v1516 = vrot.slane %v1512, %v1515
  %v1517 = vmul.f32 %v1504, %v1516
  %v1518 = vmul.f32 %v1505, %v1516
  %v1519 = vmul.f32 %v1506, %v1516
  %v1520 = vmul.f32 %v1507, %v1516
  %v1521 = vmul.f32 %v1508, %v1516
  %v1522 = vmul.f32 %v1509, %v1516
  %v1523 = vmul.f32 %v1510, %v1516
  %v1524 = vmul.f32 %v1511, %v1516
  %v1525 = vadd.f32 %v1496, %v1517
  %v1526 = vadd.f32 %v1497, %v1518
  %v1527 = vadd.f32 %v1498, %v1519
  %v1528 = vadd.f32 %v1499, %v1520
  %v1529 = vadd.f32 %v1500, %v1521
  %v1530 = vadd.f32 %v1501, %v1522
  %v1531 = vadd.f32 %v1502, %v1523
  %v1532 = vadd.f32 %v1503, %v1524
  %v1533 = vld [vmem:[%s354] sm:$0xf]
  %v1534 = vld [vmem:[%s354 + $0x10] sm:$0xf]
  %v1535 = vld [vmem:[%s354 + $0x20] sm:$0xf]
  %v1536 = vld [vmem:[%s354 + $0x30] sm:$0xf]
  %v1537 = vld [vmem:[%s354 + $0xa0] sm:$0xf]
  %v1538 = vld [vmem:[%s354 + $0xb0] sm:$0xf]
  %v1539 = vld [vmem:[%s354 + $0xc0] sm:$0xf]
  %v1540 = vld [vmem:[%s354 + $0xd0] sm:$0xf]
  %v1541 = vld [vmem:[%s1453 + $0x3] sm:$0x1]
  %v1542 = vlaneseq
  %v1543 = vshrl.u32 %v1542, 7
  %v1544 = vsub.s32 0, %v1543
  %v1545 = vrot.slane %v1541, %v1544
  %v1546 = vmul.f32 %v1533, %v1545
  %v1547 = vmul.f32 %v1534, %v1545
  %v1548 = vmul.f32 %v1535, %v1545
  %v1549 = vmul.f32 %v1536, %v1545
  %v1550 = vmul.f32 %v1537, %v1545
  %v1551 = vmul.f32 %v1538, %v1545
  %v1552 = vmul.f32 %v1539, %v1545
  %v1553 = vmul.f32 %v1540, %v1545
  %v1554 = vadd.f32 %v1525, %v1546
  %v1555 = vadd.f32 %v1526, %v1547
  %v1556 = vadd.f32 %v1527, %v1548
  %v1557 = vadd.f32 %v1528, %v1549
  %v1558 = vadd.f32 %v1529, %v1550
  %v1559 = vadd.f32 %v1530, %v1551
  %v1560 = vadd.f32 %v1531, %v1552
  %v1561 = vadd.f32 %v1532, %v1553
  %v1562 = vld [vmem:[%s354 + $0x1] sm:$0xf]
  %v1563 = vld [vmem:[%s354 + $0x11] sm:$0xf]
  %v1564 = vld [vmem:[%s354 + $0x21] sm:$0xf]
  %v1565 = vld [vmem:[%s354 + $0x31] sm:$0xf]
  %v1566 = vld [vmem:[%s354 + $0xa1] sm:$0xf]
  %v1567 = vld [vmem:[%s354 + $0xb1] sm:$0xf]
  %v1568 = vld [vmem:[%s354 + $0xc1] sm:$0xf]
  %v1569 = vld [vmem:[%s354 + $0xd1] sm:$0xf]
  %v1570 = vld [vmem:[%s1453 + $0x4] sm:$0x1]
  %v1571 = vlaneseq
  %v1572 = vshrl.u32 %v1571, 7
  %v1573 = vsub.s32 0, %v1572
  %v1574 = vrot.slane %v1570, %v1573
  %v1575 = vmul.f32 %v1562, %v1574
  %v1576 = vmul.f32 %v1563, %v1574
  %v1577 = vmul.f32 %v1564, %v1574
  %v1578 = vmul.f32 %v1565, %v1574
  %v1579 = vmul.f32 %v1566, %v1574
  %v1580 = vmul.f32 %v1567, %v1574
  %v1581 = vmul.f32 %v1568, %v1574
  %v1582 = vmul.f32 %v1569, %v1574
  %v1583 = vadd.f32 %v1554, %v1575
  %v1584 = vadd.f32 %v1555, %v1576
  %v1585 = vadd.f32 %v1556, %v1577
  %v1586 = vadd.f32 %v1557, %v1578
  %v1587 = vadd.f32 %v1558, %v1579
  %v1588 = vadd.f32 %v1559, %v1580
  %v1589 = vadd.f32 %v1560, %v1581
  %v1590 = vadd.f32 %v1561, %v1582
  %v1591 = vld [vmem:[%s354 + $0x2] sm:$0xf]
  %v1592 = vld [vmem:[%s354 + $0x12] sm:$0xf]
  %v1593 = vld [vmem:[%s354 + $0x22] sm:$0xf]
  %v1594 = vld [vmem:[%s354 + $0x32] sm:$0xf]
  %v1595 = vld [vmem:[%s354 + $0xa2] sm:$0xf]
  %v1596 = vld [vmem:[%s354 + $0xb2] sm:$0xf]
  %v1597 = vld [vmem:[%s354 + $0xc2] sm:$0xf]
  %v1598 = vld [vmem:[%s354 + $0xd2] sm:$0xf]
  %v1599 = vld [vmem:[%s1453 + $0x5] sm:$0x1]
  %v1600 = vlaneseq
  %v1601 = vshrl.u32 %v1600, 7
  %v1602 = vsub.s32 0, %v1601
  %v1603 = vrot.slane %v1599, %v1602
  %v1604 = vmul.f32 %v1591, %v1603
  %v1605 = vmul.f32 %v1592, %v1603
  %v1606 = vmul.f32 %v1593, %v1603
  %v1607 = vmul.f32 %v1594, %v1603
  %v1608 = vmul.f32 %v1595, %v1603
  %v1609 = vmul.f32 %v1596, %v1603
  %v1610 = vmul.f32 %v1597, %v1603
  %v1611 = vmul.f32 %v1598, %v1603
  %v1612 = vadd.f32 %v1583, %v1604
  %v1613 = vadd.f32 %v1584, %v1605
  %v1614 = vadd.f32 %v1585, %v1606
  %v1615 = vadd.f32 %v1586, %v1607
  %v1616 = vadd.f32 %v1587, %v1608
  %v1617 = vadd.f32 %v1588, %v1609
  %v1618 = vadd.f32 %v1589, %v1610
  %v1619 = vadd.f32 %v1590, %v1611
  %v1620 = vld [vmem:[%s689] sm:$0xf]
  %v1621 = vld [vmem:[%s689 + $0x10] sm:$0xf]
  %v1622 = vld [vmem:[%s689 + $0x20] sm:$0xf]
  %v1623 = vld [vmem:[%s689 + $0x30] sm:$0xf]
  %v1624 = vld [vmem:[%s689 + $0xa0] sm:$0xf]
  %v1625 = vld [vmem:[%s689 + $0xb0] sm:$0xf]
  %v1626 = vld [vmem:[%s689 + $0xc0] sm:$0xf]
  %v1627 = vld [vmem:[%s689 + $0xd0] sm:$0xf]
  %v1628 = vld [vmem:[%s1453 + $0x6] sm:$0x1]
  %v1629 = vlaneseq
  %v1630 = vshrl.u32 %v1629, 7
  %v1631 = vsub.s32 0, %v1630
  %v1632 = vrot.slane %v1628, %v1631
  %v1633 = vmul.f32 %v1620, %v1632
  %v1634 = vmul.f32 %v1621, %v1632
  %v1635 = vmul.f32 %v1622, %v1632
  %v1636 = vmul.f32 %v1623, %v1632
  %v1637 = vmul.f32 %v1624, %v1632
  %v1638 = vmul.f32 %v1625, %v1632
  %v1639 = vmul.f32 %v1626, %v1632
  %v1640 = vmul.f32 %v1627, %v1632
  %v1641 = vadd.f32 %v1612, %v1633
  %v1642 = vadd.f32 %v1613, %v1634
  %v1643 = vadd.f32 %v1614, %v1635
  %v1644 = vadd.f32 %v1615, %v1636
  %v1645 = vadd.f32 %v1616, %v1637
  %v1646 = vadd.f32 %v1617, %v1638
  %v1647 = vadd.f32 %v1618, %v1639
  %v1648 = vadd.f32 %v1619, %v1640
  %v1649 = vld [vmem:[%s689 + $0x1] sm:$0xf]
  %v1650 = vld [vmem:[%s689 + $0x11] sm:$0xf]
  %v1651 = vld [vmem:[%s689 + $0x21] sm:$0xf]
  %v1652 = vld [vmem:[%s689 + $0x31] sm:$0xf]
  %v1653 = vld [vmem:[%s689 + $0xa1] sm:$0xf]
  %v1654 = vld [vmem:[%s689 + $0xb1] sm:$0xf]
  %v1655 = vld [vmem:[%s689 + $0xc1] sm:$0xf]
  %v1656 = vld [vmem:[%s689 + $0xd1] sm:$0xf]
  %v1657 = vld [vmem:[%s1453 + $0x7] sm:$0x1]
  %v1658 = vlaneseq
  %v1659 = vshrl.u32 %v1658, 7
  %v1660 = vsub.s32 0, %v1659
  %v1661 = vrot.slane %v1657, %v1660
  %v1662 = vmul.f32 %v1649, %v1661
  %v1663 = vmul.f32 %v1650, %v1661
  %v1664 = vmul.f32 %v1651, %v1661
  %v1665 = vmul.f32 %v1652, %v1661
  %v1666 = vmul.f32 %v1653, %v1661
  %v1667 = vmul.f32 %v1654, %v1661
  %v1668 = vmul.f32 %v1655, %v1661
  %v1669 = vmul.f32 %v1656, %v1661
  %v1670 = vadd.f32 %v1641, %v1662
  %v1671 = vadd.f32 %v1642, %v1663
  %v1672 = vadd.f32 %v1643, %v1664
  %v1673 = vadd.f32 %v1644, %v1665
  %v1674 = vadd.f32 %v1645, %v1666
  %v1675 = vadd.f32 %v1646, %v1667
  %v1676 = vadd.f32 %v1647, %v1668
  %v1677 = vadd.f32 %v1648, %v1669
  %v1678 = vld [vmem:[%s689 + $0x2] sm:$0xf]
  %v1679 = vld [vmem:[%s689 + $0x12] sm:$0xf]
  %v1680 = vld [vmem:[%s689 + $0x22] sm:$0xf]
  %v1681 = vld [vmem:[%s689 + $0x32] sm:$0xf]
  %v1682 = vld [vmem:[%s689 + $0xa2] sm:$0xf]
  %v1683 = vld [vmem:[%s689 + $0xb2] sm:$0xf]
  %v1684 = vld [vmem:[%s689 + $0xc2] sm:$0xf]
  %v1685 = vld [vmem:[%s689 + $0xd2] sm:$0xf]
  %v1686 = vld [vmem:[%s1453 + $0x8] sm:$0x1]
  %v1687 = vlaneseq
  %v1688 = vshrl.u32 %v1687, 7
  %v1689 = vsub.s32 0, %v1688
  %v1690 = vrot.slane %v1686, %v1689
  %v1691 = vmul.f32 %v1678, %v1690
  %v1692 = vmul.f32 %v1679, %v1690
  %v1693 = vmul.f32 %v1680, %v1690
  %v1694 = vmul.f32 %v1681, %v1690
  %v1695 = vmul.f32 %v1682, %v1690
  %v1696 = vmul.f32 %v1683, %v1690
  %v1697 = vmul.f32 %v1684, %v1690
  %v1698 = vmul.f32 %v1685, %v1690
  %v1699 = vadd.f32 %v1670, %v1691
  %v1700 = vadd.f32 %v1671, %v1692
  %v1701 = vadd.f32 %v1672, %v1693
  %v1702 = vadd.f32 %v1673, %v1694
  %v1703 = vadd.f32 %v1674, %v1695
  %v1704 = vadd.f32 %v1675, %v1696
  %v1705 = vadd.f32 %v1676, %v1697
  %v1706 = vadd.f32 %v1677, %v1698
  %v1707 = vld [vmem:[%s5 + $0x1] sm:$0x1]
  %v1708 = vlaneseq
  %v1709 = vshrl.u32 %v1708, 7
  %v1710 = vsub.s32 0, %v1709
  %v1711 = vrot.slane %v1707, %v1710
  %v1712 = vadd.f32 %v1699, %v1711
  %v1713 = vadd.f32 %v1700, %v1711
  %v1714 = vadd.f32 %v1701, %v1711
  %v1715 = vadd.f32 %v1702, %v1711
  %v1716 = vadd.f32 %v1703, %v1711
  %v1717 = vadd.f32 %v1704, %v1711
  %v1718 = vadd.f32 %v1705, %v1711
  %v1719 = vadd.f32 %v1706, %v1711
  %v1728 = vcombine.low %v1712, %v1713
  %v1729 = vcombine.low %v1714, %v1715
  %v1730 = vcombine.low %v1716, %v1717
  %v1731 = vcombine.low %v1718, %v1719
  %v1736 = vpack.c.bf16 %v1729, %v1728
  %v1737 = vpack.c.bf16 %v1731, %v1730
  %s1738 = scalar_lea.vmem %s6, 32
  %v1739 = vld [vmem:[%s1738] sm:$0xf]
  %v1740 = vld [vmem:[%s1738 + $0x4] sm:$0xf]
  %v1741 = vld [vmem:[%s1738 + $0x8] sm:$0xf]
  %v1742 = vld [vmem:[%s1738 + $0xc] sm:$0xf]
  %v1743 = vld [vmem:[%s1738 + $0x10] sm:$0xf]
  %v1744 = vld [vmem:[%s1738 + $0x14] sm:$0xf]
  %v1745 = vld [vmem:[%s1738 + $0x18] sm:$0xf]
  %v1746 = vld [vmem:[%s1738 + $0x1c] sm:$0xf]
  %v1747 = vld [vmem:[%s7 + $0x1] sm:$0x1]
  %v1748 = vlaneseq
  %v1749 = vshrl.u32 %v1748, 7
  %v1750 = vsub.s32 0, %v1749
  %v1751 = vrot.slane %v1747, %v1750
  %v1760 = vunpack.c.l.b16 %v1739
  %v1761 = vunpack.c.l.b16 %v1740
  %v1762 = vunpack.c.l.b16 %v1741
  %v1763 = vunpack.c.l.b16 %v1742
  %v1764 = vunpack.c.l.b16 %v1743
  %v1765 = vunpack.c.l.b16 %v1744
  %v1766 = vunpack.c.l.b16 %v1745
  %v1767 = vunpack.c.l.b16 %v1746
  %v1768 = vpack.c.b16 %v1761, %v1760
  %v1769 = vpack.c.b16 %v1763, %v1762
  %v1770 = vpack.c.b16 %v1765, %v1764
  %v1771 = vpack.c.b16 %v1767, %v1766
  %v1777 = vsel %vm312, %v1736, 0
  %v1780 = vsel %vm312, %v1737, 0
  %1782 = vmatprep.subr.bf16.mxu0 0
  %1783 = vmatpush1.bf16.msra.mxu0 %v1768
  %1784 = vmatprep.subr.bf16.mxu0 0
  %1785 = vmatpush1.bf16.msra.mxu0 %v1769
  %1786 = vmatprep.subr.bf16.mxu0 0
  %1787 = vmatpush1.bf16.msra.mxu0 %v1770
  %1788 = vmatprep.subr.bf16.mxu0 0
  %1789 = vmatpush1.bf16.msra.mxu0 %v1771
  %1790 = vmatprep.subr.bf16.mxu0 0
  %1791 = vmatpush1.bf16.msra.mxu0 0
  %1792 = vmatprep.subr.bf16.mxu0 0
  %1793 = vmatpush1.bf16.msra.mxu0 0
  %1794 = vmatprep.subr.bf16.mxu0 0
  %1795 = vmatpush1.bf16.msra.mxu0 0
  %1796 = vmatprep.subr.bf16.mxu0 0
  %1797 = vmatpush1.bf16.msra.mxu0 0
  %1798 = vmatprep.subr.bf16.mxu0 0
  %1799 = vmatpush1.bf16.msra.mxu0 0
  %1800 = vmatprep.subr.bf16.mxu0 0
  %1801 = vmatpush1.bf16.msra.mxu0 0
  %1802 = vmatprep.subr.bf16.mxu0 0
  %1803 = vmatpush1.bf16.msra.mxu0 0
  %1804 = vmatprep.subr.bf16.mxu0 0
  %1805 = vmatpush1.bf16.msra.mxu0 0
  %1806 = vmatprep.subr.bf16.mxu0 0
  %1807 = vmatpush1.bf16.msra.mxu0 0
  %1808 = vmatprep.subr.bf16.mxu0 0
  %1809 = vmatpush1.bf16.msra.mxu0 0
  %1810 = vmatprep.subr.bf16.mxu0 0
  %1811 = vmatpush1.bf16.msra.mxu0 0
  %1812 = vmatprep.subr.bf16.mxu0 0
  %1813 = vmatpush1.bf16.msra.mxu0 0
  %1814 = vmatprep.mubr.bf16.mxu0 0
  %1815 = vmatmul.mubr.bf16.gmra.mrb[0].mxu0 %v1777
  %v1816 = vpop.f32.mrb[0].mxu0
  %v1817 = vadd.f32 %v1751, %v1816
  %v1818 = vpop.f32.mrb[0].mxu0
  %v1819 = vpop.f32.mrb[0].mxu0
  %v1820 = vadd.f32 %v1751, %v1819
  %v1821 = vpop.f32.mrb[0].mxu0
  %1822 = vmatprep.mubr.bf16.mxu0 0
  %1823 = vmatmul.mubr.bf16.gmra.mrb[0].mxu0 %v1780
  %v1824 = vpop.f32.mrb[0].mxu0
  %v1825 = vadd.f32 %v1751, %v1824
  %v1826 = vpop.f32.mrb[0].mxu0
  %v1827 = vpop.f32.mrb[0].mxu0
  %v1828 = vadd.f32 %v1751, %v1827
  %v1829 = vpop.f32.mrb[0].mxu0
  %1830 = vdwg.mxu0
  %v1831 = vpack.c.bf16 %v1820, %v1817
  %v1832 = vpack.c.bf16 %v1828, %v1825
  %v1833 = vld [vmem:[%s8] sm:$0xf]
  %v1834 = vld [vmem:[%s8 + $0x4] sm:$0xf]
  %v1835 = vld [vmem:[%s8 + $0x8] sm:$0xf]
  %v1836 = vld [vmem:[%s8 + $0xc] sm:$0xf]
  %v1837 = vld [vmem:[%s8 + $0x10] sm:$0xf]
  %v1838 = vld [vmem:[%s8 + $0x14] sm:$0xf]
  %v1839 = vld [vmem:[%s8 + $0x18] sm:$0xf]
  %v1840 = vld [vmem:[%s8 + $0x1c] sm:$0xf]
  %v1841 = vld [vmem:[%s9] sm:$0x1]
  %v1843 = vlaneseq
  %v1844 = vshrl.u32 %v1843, 7
  %v1845 = vsub.s32 0, %v1844
  %v1846 = vrot.slane %v1841, %v1845
  %v1856 = vunpack.c.l.b16 %v1833
  %v1857 = vunpack.c.l.b16 %v1834
  %v1858 = vunpack.c.l.b16 %v1835
  %v1859 = vunpack.c.l.b16 %v1836
  %v1860 = vunpack.c.l.b16 %v1837
  %v1861 = vunpack.c.l.b16 %v1838
  %v1862 = vunpack.c.l.b16 %v1839
  %v1863 = vunpack.c.l.b16 %v1840
  %v1864 = vpack.c.b16 %v1857, %v1856
  %v1865 = vpack.c.b16 %v1859, %v1858
  %v1866 = vpack.c.b16 %v1861, %v1860
  %v1867 = vpack.c.b16 %v1863, %v1862
  %v1873 = vsel %vm312, %v1831, 0
  %v1876 = vsel %vm312, %v1832, 0
  %1878 = vmatprep.subr.bf16.mxu0 0
  %1879 = vmatpush1.bf16.msra.mxu0 %v1864
  %1880 = vmatprep.subr.bf16.mxu0 0
  %1881 = vmatpush1.bf16.msra.mxu0 %v1865
  %1882 = vmatprep.subr.bf16.mxu0 0
  %1883 = vmatpush1.bf16.msra.mxu0 %v1866
  %1884 = vmatprep.subr.bf16.mxu0 0
  %1885 = vmatpush1.bf16.msra.mxu0 %v1867
  %1886 = vmatprep.subr.bf16.mxu0 0
  %1887 = vmatpush1.bf16.msra.mxu0 0
  %1888 = vmatprep.subr.bf16.mxu0 0
  %1889 = vmatpush1.bf16.msra.mxu0 0
  %1890 = vmatprep.subr.bf16.mxu0 0
  %1891 = vmatpush1.bf16.msra.mxu0 0
  %1892 = vmatprep.subr.bf16.mxu0 0
  %1893 = vmatpush1.bf16.msra.mxu0 0
  %1894 = vmatprep.subr.bf16.mxu0 0
  %1895 = vmatpush1.bf16.msra.mxu0 0
  %1896 = vmatprep.subr.bf16.mxu0 0
  %1897 = vmatpush1.bf16.msra.mxu0 0
  %1898 = vmatprep.subr.bf16.mxu0 0
  %1899 = vmatpush1.bf16.msra.mxu0 0
  %1900 = vmatprep.subr.bf16.mxu0 0
  %1901 = vmatpush1.bf16.msra.mxu0 0
  %1902 = vmatprep.subr.bf16.mxu0 0
  %1903 = vmatpush1.bf16.msra.mxu0 0
  %1904 = vmatprep.subr.bf16.mxu0 0
  %1905 = vmatpush1.bf16.msra.mxu0 0
  %1906 = vmatprep.subr.bf16.mxu0 0
  %1907 = vmatpush1.bf16.msra.mxu0 0
  %1908 = vmatprep.subr.bf16.mxu0 0
  %1909 = vmatpush1.bf16.msra.mxu0 0
  %1910 = vmatprep.mubr.bf16.mxu0 0
  %1911 = vmatmul.mubr.bf16.gmra.mrb[0].mxu0 %v1873
  %v1912 = vpop.f32.mrb[0].mxu0
  %v1913 = vadd.f32 %v1846, %v1912
  %v1914 = vpop.f32.mrb[0].mxu0
  %v1915 = vpop.f32.mrb[0].mxu0
  %v1916 = vadd.f32 %v1846, %v1915
  %v1917 = vpop.f32.mrb[0].mxu0
  %1918 = vmatprep.mubr.bf16.mxu0 0
  %1919 = vmatmul.mubr.bf16.gmra.mrb[0].mxu0 %v1876
  %v1920 = vpop.f32.mrb[0].mxu0
  %v1921 = vadd.f32 %v1846, %v1920
  %v1922 = vpop.f32.mrb[0].mxu0
  %v1923 = vpop.f32.mrb[0].mxu0
  %v1924 = vadd.f32 %v1846, %v1923
  %v1925 = vpop.f32.mrb[0].mxu0
  %1926 = vdwg.mxu0
  %v1927 = vsel %vm110, %v1913, 0.0
  %1928 = vadd.xlane.f32.xlu0 %v1927
  %v1929 = vpop.xlane.xlu0 %1928
  %v1930 = vsel %vm110, %v1916, 0.0
  %1931 = vadd.xlane.f32.xlu0 %v1930
  %v1932 = vpop.xlane.xlu0 %1931
  %v1933 = vsel %vm110, %v1921, 0.0
  %1934 = vadd.xlane.f32.xlu0 %v1933
  %v1935 = vpop.xlane.xlu0 %1934
  %v1936 = vsel %vm110, %v1924, 0.0
  %1937 = vadd.xlane.f32.xlu0 %v1936
  %v1938 = vpop.xlane.xlu0 %1937
  %v1939 = vadd.f32 %v1929, %v1932
  %v1940 = vrot.slane %v1939, 4
  %v1941 = vadd.f32 %v1939, %v1940
  %v1942 = vrot.slane %v1941, 2
  %v1943 = vadd.f32 %v1941, %v1942
  %v1944 = vrot.slane %v1943, 1
  %v1945 = vadd.f32 %v1943, %v1944
  %v1946 = vadd.f32 %v1935, %v1938
  %v1947 = vrot.slane %v1946, 4
  %v1948 = vadd.f32 %v1946, %v1947
  %v1949 = vrot.slane %v1948, 2
  %v1950 = vadd.f32 %v1948, %v1949
  %v1951 = vrot.slane %v1950, 1
  %v1952 = vadd.f32 %v1950, %v1951
  %v1953 = vadd.f32 %v1278, %v1945
  %v1954 = vadd.f32 %v1279, %v1952
  %v1955 = vld [vmem:[%s1 + $0x50] sm:$0xf]
  %v1956 = vld [vmem:[%s1 + $0xa8] sm:$0xf]
  %v1959 = vcombine.low %v1955, %v1956
  %v1961 = vpack.c.bf16 %v1959, %v1959
  %v1962 = vld [vmem:[%s2] sm:$0xf]
  %v1963 = vld [vmem:[%s2 + $0x4] sm:$0xf]
  %v1964 = vld [vmem:[%s2 + $0x8] sm:$0xf]
  %v1965 = vld [vmem:[%s2 + $0xc] sm:$0xf]
  %v1966 = vld [vmem:[%s3] sm:$0x1]
  %v1968 = vlaneseq
  %v1969 = vshrl.u32 %v1968, 7
  %v1970 = vsub.s32 0, %v1969
  %v1971 = vrot.slane %v1966, %v1970
  %v1977 = vunpack.c.l.b16 %v1962
  %v1978 = vunpack.c.l.b16 %v1963
  %v1979 = vunpack.c.l.b16 %v1964
  %v1980 = vunpack.c.l.b16 %v1965
  %v1981 = vpack.c.b16 %v1978, %v1977
  %v1982 = vpack.c.b16 %v1980, %v1979
  %v1986 = vsel %vm110, %v1961, 0
  %1988 = vmatprep.subr.bf16.mxu0 0
  %1989 = vmatpush1.bf16.msra.mxu0 %v1981
  %1990 = vmatprep.subr.bf16.mxu0 0
  %1991 = vmatpush1.bf16.msra.mxu0 %v1982
  %1992 = vmatprep.subr.bf16.mxu0 0
  %1993 = vmatpush1.bf16.msra.mxu0 0
  %1994 = vmatprep.subr.bf16.mxu0 0
  %1995 = vmatpush1.bf16.msra.mxu0 0
  %1996 = vmatprep.subr.bf16.mxu0 0
  %1997 = vmatpush1.bf16.msra.mxu0 0
  %1998 = vmatprep.subr.bf16.mxu0 0
  %1999 = vmatpush1.bf16.msra.mxu0 0
  %2000 = vmatprep.subr.bf16.mxu0 0
  %2001 = vmatpush1.bf16.msra.mxu0 0
  %2002 = vmatprep.subr.bf16.mxu0 0
  %2003 = vmatpush1.bf16.msra.mxu0 0
  %2004 = vmatprep.subr.bf16.mxu0 0
  %2005 = vmatpush1.bf16.msra.mxu0 0
  %2006 = vmatprep.subr.bf16.mxu0 0
  %2007 = vmatpush1.bf16.msra.mxu0 0
  %2008 = vmatprep.subr.bf16.mxu0 0
  %2009 = vmatpush1.bf16.msra.mxu0 0
  %2010 = vmatprep.subr.bf16.mxu0 0
  %2011 = vmatpush1.bf16.msra.mxu0 0
  %2012 = vmatprep.subr.bf16.mxu0 0
  %2013 = vmatpush1.bf16.msra.mxu0 0
  %2014 = vmatprep.subr.bf16.mxu0 0
  %2015 = vmatpush1.bf16.msra.mxu0 0
  %2016 = vmatprep.subr.bf16.mxu0 0
  %2017 = vmatpush1.bf16.msra.mxu0 0
  %2018 = vmatprep.subr.bf16.mxu0 0
  %2019 = vmatpush1.bf16.msra.mxu0 0
  %2020 = vmatprep.mubr.bf16.mxu0 0
  %2021 = vmatmul.mubr.bf16.gmra.mrb[0].mxu0 %v1986
  %v2022 = vpop.f32.mrb[0].mxu0
  %v2023 = vadd.f32 %v1971, %v2022
  %v2024 = vpop.f32.mrb[0].mxu0
  %v2025 = vpop.f32.mrb[0].mxu0
  %v2026 = vpop.f32.mrb[0].mxu0
  %2027 = vdwg.mxu0
  %v2028 = vmul.f32 %v2023, 0.5
  %v2029 = vmul.f32 %v2023, 0.70710677
  %v2030 = verf.f32.pop %v2029
  %v2031 = vadd.f32 %v2030, 1.0
  %v2032 = vmul.f32 %v2028, %v2031
  %2033 = vst.msk [vmem:[#allocation2] sm:$0xff] %vm312, 0.0
  %2034 = vst.msk [vmem:[#allocation2 + $0x8] sm:$0x3] %vm314, 0.0
  %2035 = vst.msk [vmem:[#allocation2 + $0x10] sm:$0xff] %vm312, 0.0
  %2036 = vst.msk [vmem:[#allocation2 + $0x18] sm:$0x3] %vm314, 0.0
  %2037 = vst.msk [vmem:[#allocation2 + $0x20] sm:$0xff] %vm312, 0.0
  %2038 = vst.msk [vmem:[#allocation2 + $0x28] sm:$0x3] %vm314, 0.0
  %2039 = vst.msk [vmem:[#allocation2 + $0x30] sm:$0xff] %vm312, 0.0
  %2040 = vst.msk [vmem:[#allocation2 + $0x38] sm:$0x3] %vm314, 0.0
  %2041 = vst.msk [vmem:[#allocation2 + $0x40] sm:$0xff] %vm312, 0.0
  %2042 = vst.msk [vmem:[#allocation2 + $0x48] sm:$0x3] %vm314, 0.0
  %2043 = vst.msk [vmem:[#allocation2 + $0x50] sm:$0xff] %vm312, 0.0
  %2044 = vst.msk [vmem:[#allocation2 + $0x58] sm:$0x3] %vm314, 0.0
  %2045 = vst.msk [vmem:[#allocation2 + $0x60] sm:$0xff] %vm312, 0.0
  %2046 = vst.msk [vmem:[#allocation2 + $0x68] sm:$0x3] %vm314, 0.0
  %2047 = vst.msk [vmem:[#allocation2 + $0x70] sm:$0xff] %vm312, 0.0
  %2048 = vst.msk [vmem:[#allocation2 + $0x78] sm:$0x3] %vm314, 0.0
  %2049 = vst.msk [vmem:[#allocation2 + $0x80] sm:$0xff] %vm312, 0.0
  %2050 = vst.msk [vmem:[#allocation2 + $0x88] sm:$0x3] %vm314, 0.0
  %2051 = vst.msk [vmem:[#allocation2 + $0x90] sm:$0xff] %vm312, 0.0
  %2052 = vst.msk [vmem:[#allocation2 + $0x98] sm:$0x3] %vm314, 0.0
  %2053 = vst.msk [vmem:[#allocation2 + $0xa0] sm:$0xff] %vm312, 0.0
  %2054 = vst.msk [vmem:[#allocation2 + $0xa8] sm:$0x3] %vm314, 0.0
  %2055 = vst.msk [vmem:[#allocation2 + $0xb0] sm:$0xff] %vm312, 0.0
  %2056 = vst.msk [vmem:[#allocation2 + $0xb8] sm:$0x3] %vm314, 0.0
  %2057 = vst.msk [vmem:[#allocation2 + $0xc0] sm:$0xff] %vm312, 0.0
  %2058 = vst.msk [vmem:[#allocation2 + $0xc8] sm:$0x3] %vm314, 0.0
  %2059 = vst.msk [vmem:[#allocation2 + $0xd0] sm:$0xff] %vm312, 0.0
  %2060 = vst.msk [vmem:[#allocation2 + $0xd8] sm:$0x3] %vm314, 0.0
  %2061 = vst.msk [vmem:[#allocation2 + $0xe0] sm:$0xff] %vm312, 0.0
  %2062 = vst.msk [vmem:[#allocation2 + $0xe8] sm:$0x3] %vm314, 0.0
  %2063 = vst.msk [vmem:[#allocation2 + $0xf0] sm:$0xff] %vm312, 0.0
  %2064 = vst.msk [vmem:[#allocation2 + $0xf8] sm:$0x3] %vm314, 0.0
  %2065 = vst.msk [vmem:[#allocation2 + $0x100] sm:$0xff] %vm312, 0.0
  %2066 = vst.msk [vmem:[#allocation2 + $0x108] sm:$0x3] %vm314, 0.0
  %2067 = vst.msk [vmem:[#allocation2 + $0x110] sm:$0xff] %vm312, 0.0
  %2068 = vst.msk [vmem:[#allocation2 + $0x118] sm:$0x3] %vm314, 0.0
  %2069 = vst.msk [vmem:[#allocation2 + $0x120] sm:$0xff] %vm312, 0.0
  %2070 = vst.msk [vmem:[#allocation2 + $0x128] sm:$0x3] %vm314, 0.0
  %2071 = vst.msk [vmem:[#allocation2 + $0x130] sm:$0xff] %vm312, 0.0
  %2072 = vst.msk [vmem:[#allocation2 + $0x138] sm:$0x3] %vm314, 0.0
  %v2074 = vcombine.high %v2032, %v2032
  %v2076 = vunpack.c.l.s4 1983009808
  %v2077 = vunpack.c.0.s8 %v2076
  %v2078 = vlaneseq
  %v2079 = vshrl.u32 %v2078, 7
  %v2080 = vsub.s32 %v2077, %v2079
  %v2081 = vrot.slane %v2032, %v2080
  %v2083 = vunpack.c.l.s4 1983009808
  %v2084 = vunpack.c.0.s8 %v2083
  %v2085 = vlaneseq
  %v2086 = vshrl.u32 %v2085, 7
  %v2087 = vsub.s32 %v2084, %v2086
  %v2088 = vrot.slane %v2074, %v2087
  %v2089 = vcombine.high %v2081, %v2081
  %v2090 = vcombine.high %v2088, %v2088
  %2095 = vst.msk [vmem:[%s354 + $0x1] sm:$0x3] %vm314, %v2081
  %2096 = vst.msk [vmem:[%s354 + $0x11] sm:$0x3] %vm314, %v2089
  %2097 = vst.msk [vmem:[%s354 + $0xa1] sm:$0x3] %vm314, %v2088
  %2098 = vst.msk [vmem:[%s354 + $0xb1] sm:$0x3] %vm314, %v2090
  %v2099 = vld [vmem:[#allocation2] sm:$0x3]
  %v2100 = vld [vmem:[#allocation2 + $0x10] sm:$0x3]
  %v2101 = vld [vmem:[#allocation2 + $0xa0] sm:$0x3]
  %v2102 = vld [vmem:[#allocation2 + $0xb0] sm:$0x3]
  %s2103 = scalar_lea.vmem %s4, 32
  %v2104 = vld [vmem:[%s2103] sm:$0x1]
  %v2105 = vlaneseq
  %v2106 = vshrl.u32 %v2105, 7
  %v2107 = vsub.s32 0, %v2106
  %v2108 = vrot.slane %v2104, %v2107
  %v2109 = vmul.f32 %v2099, %v2108
  %v2110 = vmul.f32 %v2100, %v2108
  %v2111 = vmul.f32 %v2101, %v2108
  %v2112 = vmul.f32 %v2102, %v2108
  %v2113 = vadd.f32 %v2109, 0.0
  %v2114 = vadd.f32 %v2110, 0.0
  %v2115 = vadd.f32 %v2111, 0.0
  %v2116 = vadd.f32 %v2112, 0.0
  %v2117 = vld [vmem:[#allocation2 + $0x1] sm:$0x3]
  %v2118 = vld [vmem:[#allocation2 + $0x11] sm:$0x3]
  %v2119 = vld [vmem:[#allocation2 + $0xa1] sm:$0x3]
  %v2120 = vld [vmem:[#allocation2 + $0xb1] sm:$0x3]
  %v2121 = vld [vmem:[%s2103 + $0x1] sm:$0x1]
  %v2122 = vlaneseq
  %v2123 = vshrl.u32 %v2122, 7
  %v2124 = vsub.s32 0, %v2123
  %v2125 = vrot.slane %v2121, %v2124
  %v2126 = vmul.f32 %v2117, %v2125
  %v2127 = vmul.f32 %v2118, %v2125
  %v2128 = vmul.f32 %v2119, %v2125
  %v2129 = vmul.f32 %v2120, %v2125
  %v2130 = vadd.f32 %v2113, %v2126
  %v2131 = vadd.f32 %v2114, %v2127
  %v2132 = vadd.f32 %v2115, %v2128
  %v2133 = vadd.f32 %v2116, %v2129
  %v2134 = vld [vmem:[#allocation2 + $0x2] sm:$0x3]
  %v2135 = vld [vmem:[#allocation2 + $0x12] sm:$0x3]
  %v2136 = vld [vmem:[#allocation2 + $0xa2] sm:$0x3]
  %v2137 = vld [vmem:[#allocation2 + $0xb2] sm:$0x3]
  %v2138 = vld [vmem:[%s2103 + $0x2] sm:$0x1]
  %v2139 = vlaneseq
  %v2140 = vshrl.u32 %v2139, 7
  %v2141 = vsub.s32 0, %v2140
  %v2142 = vrot.slane %v2138, %v2141
  %v2143 = vmul.f32 %v2134, %v2142
  %v2144 = vmul.f32 %v2135, %v2142
  %v2145 = vmul.f32 %v2136, %v2142
  %v2146 = vmul.f32 %v2137, %v2142
  %v2147 = vadd.f32 %v2130, %v2143
  %v2148 = vadd.f32 %v2131, %v2144
  %v2149 = vadd.f32 %v2132, %v2145
  %v2150 = vadd.f32 %v2133, %v2146
  %v2151 = vld [vmem:[%s354] sm:$0x3]
  %v2152 = vld [vmem:[%s354 + $0x10] sm:$0x3]
  %v2153 = vld [vmem:[%s354 + $0xa0] sm:$0x3]
  %v2154 = vld [vmem:[%s354 + $0xb0] sm:$0x3]
  %v2155 = vld [vmem:[%s2103 + $0x3] sm:$0x1]
  %v2156 = vlaneseq
  %v2157 = vshrl.u32 %v2156, 7
  %v2158 = vsub.s32 0, %v2157
  %v2159 = vrot.slane %v2155, %v2158
  %v2160 = vmul.f32 %v2151, %v2159
  %v2161 = vmul.f32 %v2152, %v2159
  %v2162 = vmul.f32 %v2153, %v2159
  %v2163 = vmul.f32 %v2154, %v2159
  %v2164 = vadd.f32 %v2147, %v2160
  %v2165 = vadd.f32 %v2148, %v2161
  %v2166 = vadd.f32 %v2149, %v2162
  %v2167 = vadd.f32 %v2150, %v2163
  %v2168 = vld [vmem:[%s354 + $0x1] sm:$0x3]
  %v2169 = vld [vmem:[%s354 + $0x11] sm:$0x3]
  %v2170 = vld [vmem:[%s354 + $0xa1] sm:$0x3]
  %v2171 = vld [vmem:[%s354 + $0xb1] sm:$0x3]
  %v2172 = vld [vmem:[%s2103 + $0x4] sm:$0x1]
  %v2173 = vlaneseq
  %v2174 = vshrl.u32 %v2173, 7
  %v2175 = vsub.s32 0, %v2174
  %v2176 = vrot.slane %v2172, %v2175
  %v2177 = vmul.f32 %v2168, %v2176
  %v2178 = vmul.f32 %v2169, %v2176
  %v2179 = vmul.f32 %v2170, %v2176
  %v2180 = vmul.f32 %v2171, %v2176
  %v2181 = vadd.f32 %v2164, %v2177
  %v2182 = vadd.f32 %v2165, %v2178
  %v2183 = vadd.f32 %v2166, %v2179
  %v2184 = vadd.f32 %v2167, %v2180
  %v2185 = vld [vmem:[%s354 + $0x2] sm:$0x3]
  %v2186 = vld [vmem:[%s354 + $0x12] sm:$0x3]
  %v2187 = vld [vmem:[%s354 + $0xa2] sm:$0x3]
  %v2188 = vld [vmem:[%s354 + $0xb2] sm:$0x3]
  %v2189 = vld [vmem:[%s2103 + $0x5] sm:$0x1]
  %v2190 = vlaneseq
  %v2191 = vshrl.u32 %v2190, 7
  %v2192 = vsub.s32 0, %v2191
  %v2193 = vrot.slane %v2189, %v2192
  %v2194 = vmul.f32 %v2185, %v2193
  %v2195 = vmul.f32 %v2186, %v2193
  %v2196 = vmul.f32 %v2187, %v2193
  %v2197 = vmul.f32 %v2188, %v2193
  %v2198 = vadd.f32 %v2181, %v2194
  %v2199 = vadd.f32 %v2182, %v2195
  %v2200 = vadd.f32 %v2183, %v2196
  %v2201 = vadd.f32 %v2184, %v2197
  %v2202 = vld [vmem:[%s689] sm:$0x3]
  %v2203 = vld [vmem:[%s689 + $0x10] sm:$0x3]
  %v2204 = vld [vmem:[%s689 + $0xa0] sm:$0x3]
  %v2205 = vld [vmem:[%s689 + $0xb0] sm:$0x3]
  %v2206 = vld [vmem:[%s2103 + $0x6] sm:$0x1]
  %v2207 = vlaneseq
  %v2208 = vshrl.u32 %v2207, 7
  %v2209 = vsub.s32 0, %v2208
  %v2210 = vrot.slane %v2206, %v2209
  %v2211 = vmul.f32 %v2202, %v2210
  %v2212 = vmul.f32 %v2203, %v2210
  %v2213 = vmul.f32 %v2204, %v2210
  %v2214 = vmul.f32 %v2205, %v2210
  %v2215 = vadd.f32 %v2198, %v2211
  %v2216 = vadd.f32 %v2199, %v2212
  %v2217 = vadd.f32 %v2200, %v2213
  %v2218 = vadd.f32 %v2201, %v2214
  %v2219 = vld [vmem:[%s689 + $0x1] sm:$0x3]
  %v2220 = vld [vmem:[%s689 + $0x11] sm:$0x3]
  %v2221 = vld [vmem:[%s689 + $0xa1] sm:$0x3]
  %v2222 = vld [vmem:[%s689 + $0xb1] sm:$0x3]
  %v2223 = vld [vmem:[%s2103 + $0x7] sm:$0x1]
  %v2224 = vlaneseq
  %v2225 = vshrl.u32 %v2224, 7
  %v2226 = vsub.s32 0, %v2225
  %v2227 = vrot.slane %v2223, %v2226
  %v2228 = vmul.f32 %v2219, %v2227
  %v2229 = vmul.f32 %v2220, %v2227
  %v2230 = vmul.f32 %v2221, %v2227
  %v2231 = vmul.f32 %v2222, %v2227
  %v2232 = vadd.f32 %v2215, %v2228
  %v2233 = vadd.f32 %v2216, %v2229
  %v2234 = vadd.f32 %v2217, %v2230
  %v2235 = vadd.f32 %v2218, %v2231
  %v2236 = vld [vmem:[%s689 + $0x2] sm:$0x3]
  %v2237 = vld [vmem:[%s689 + $0x12] sm:$0x3]
  %v2238 = vld [vmem:[%s689 + $0xa2] sm:$0x3]
  %v2239 = vld [vmem:[%s689 + $0xb2] sm:$0x3]
  %v2240 = vld [vmem:[%s2103 + $0x8] sm:$0x1]
  %v2241 = vlaneseq
  %v2242 = vshrl.u32 %v2241, 7
  %v2243 = vsub.s32 0, %v2242
  %v2244 = vrot.slane %v2240, %v2243
  %v2245 = vmul.f32 %v2236, %v2244
  %v2246 = vmul.f32 %v2237, %v2244
  %v2247 = vmul.f32 %v2238, %v2244
  %v2248 = vmul.f32 %v2239, %v2244
  %v2249 = vadd.f32 %v2232, %v2245
  %v2250 = vadd.f32 %v2233, %v2246
  %v2251 = vadd.f32 %v2234, %v2247
  %v2252 = vadd.f32 %v2235, %v2248
  %v2253 = vld [vmem:[%s5 + $0x2] sm:$0x1]
  %v2254 = vlaneseq
  %v2255 = vshrl.u32 %v2254, 7
  %v2256 = vsub.s32 0, %v2255
  %v2257 = vrot.slane %v2253, %v2256
  %v2258 = vadd.f32 %v2249, %v2257
  %v2259 = vadd.f32 %v2250, %v2257
  %v2260 = vadd.f32 %v2251, %v2257
  %v2261 = vadd.f32 %v2252, %v2257
  %v2266 = vcombine.low %v2258, %v2259
  %v2267 = vcombine.low %v2260, %v2261
  %v2269 = vunpack.c.l.s4 1983009808
  %v2270 = vunpack.c.0.s8 %v2269
  %v2271 = vlaneseq
  %v2272 = vshrl.u32 %v2271, 7
  %v2273 = vsub.s32 %v2270, %v2272
  %v2274 = vrot.slane %v2266, %v2273
  %v2276 = vunpack.c.l.s4 1983009808
  %v2277 = vunpack.c.0.s8 %v2276
  %v2278 = vlaneseq
  %v2279 = vshrl.u32 %v2278, 7
  %v2280 = vsub.s32 %v2277, %v2279
  %v2281 = vrot.slane %v2267, %v2280
  %v2282 = vcombine.low %v2274, %v2281
  %v2284 = vpack.c.bf16 %v2282, %v2282
  %s2285 = scalar_lea.vmem %s6, 64
  %v2286 = vld [vmem:[%s2285] sm:$0xf]
  %v2287 = vld [vmem:[%s2285 + $0x4] sm:$0xf]
  %v2288 = vld [vmem:[%s2285 + $0x8] sm:$0xf]
  %v2289 = vld [vmem:[%s2285 + $0xc] sm:$0xf]
  %v2290 = vld [vmem:[%s2285 + $0x10] sm:$0xf]
  %v2291 = vld [vmem:[%s2285 + $0x14] sm:$0xf]
  %v2292 = vld [vmem:[%s2285 + $0x18] sm:$0xf]
  %v2293 = vld [vmem:[%s2285 + $0x1c] sm:$0xf]
  %v2294 = vld [vmem:[%s7 + $0x2] sm:$0x1]
  %v2295 = vlaneseq
  %v2296 = vshrl.u32 %v2295, 7
  %v2297 = vsub.s32 0, %v2296
  %v2298 = vrot.slane %v2294, %v2297
  %v2307 = vunpack.c.l.b16 %v2286
  %v2308 = vunpack.c.l.b16 %v2287
  %v2309 = vunpack.c.l.b16 %v2288
  %v2310 = vunpack.c.l.b16 %v2289
  %v2311 = vunpack.c.l.b16 %v2290
  %v2312 = vunpack.c.l.b16 %v2291
  %v2313 = vunpack.c.l.b16 %v2292
  %v2314 = vunpack.c.l.b16 %v2293
  %v2315 = vpack.c.b16 %v2308, %v2307
  %v2316 = vpack.c.b16 %v2310, %v2309
  %v2317 = vpack.c.b16 %v2312, %v2311
  %v2318 = vpack.c.b16 %v2314, %v2313
  %v2324 = vsel %vm312, %v2284, 0
  %2326 = vmatprep.subr.bf16.mxu0 0
  %2327 = vmatpush1.bf16.msra.mxu0 %v2315
  %2328 = vmatprep.subr.bf16.mxu0 0
  %2329 = vmatpush1.bf16.msra.mxu0 %v2316
  %2330 = vmatprep.subr.bf16.mxu0 0
  %2331 = vmatpush1.bf16.msra.mxu0 %v2317
  %2332 = vmatprep.subr.bf16.mxu0 0
  %2333 = vmatpush1.bf16.msra.mxu0 %v2318
  %2334 = vmatprep.subr.bf16.mxu0 0
  %2335 = vmatpush1.bf16.msra.mxu0 0
  %2336 = vmatprep.subr.bf16.mxu0 0
  %2337 = vmatpush1.bf16.msra.mxu0 0
  %2338 = vmatprep.subr.bf16.mxu0 0
  %2339 = vmatpush1.bf16.msra.mxu0 0
  %2340 = vmatprep.subr.bf16.mxu0 0
  %2341 = vmatpush1.bf16.msra.mxu0 0
  %2342 = vmatprep.subr.bf16.mxu0 0
  %2343 = vmatpush1.bf16.msra.mxu0 0
  %2344 = vmatprep.subr.bf16.mxu0 0
  %2345 = vmatpush1.bf16.msra.mxu0 0
  %2346 = vmatprep.subr.bf16.mxu0 0
  %2347 = vmatpush1.bf16.msra.mxu0 0
  %2348 = vmatprep.subr.bf16.mxu0 0
  %2349 = vmatpush1.bf16.msra.mxu0 0
  %2350 = vmatprep.subr.bf16.mxu0 0
  %2351 = vmatpush1.bf16.msra.mxu0 0
  %2352 = vmatprep.subr.bf16.mxu0 0
  %2353 = vmatpush1.bf16.msra.mxu0 0
  %2354 = vmatprep.subr.bf16.mxu0 0
  %2355 = vmatpush1.bf16.msra.mxu0 0
  %2356 = vmatprep.subr.bf16.mxu0 0
  %2357 = vmatpush1.bf16.msra.mxu0 0
  %2358 = vmatprep.mubr.bf16.mxu0 0
  %2359 = vmatmul.mubr.bf16.gmra.mrb[0].mxu0 %v2324
  %v2360 = vpop.f32.mrb[0].mxu0
  %v2361 = vadd.f32 %v2298, %v2360
  %v2362 = vpop.f32.mrb[0].mxu0
  %v2363 = vpop.f32.mrb[0].mxu0
  %v2364 = vpop.f32.mrb[0].mxu0
  %2365 = vdwg.mxu0
  %v2366 = vpack.c.bf16 %v2361, %v2361
  %v2367 = vld [vmem:[%s8] sm:$0xf]
  %v2368 = vld [vmem:[%s8 + $0x4] sm:$0xf]
  %v2369 = vld [vmem:[%s8 + $0x8] sm:$0xf]
  %v2370 = vld [vmem:[%s8 + $0xc] sm:$0xf]
  %v2371 = vld [vmem:[%s8 + $0x10] sm:$0xf]
  %v2372 = vld [vmem:[%s8 + $0x14] sm:$0xf]
  %v2373 = vld [vmem:[%s8 + $0x18] sm:$0xf]
  %v2374 = vld [vmem:[%s8 + $0x1c] sm:$0xf]
  %v2375 = vld [vmem:[%s9] sm:$0x1]
  %v2377 = vlaneseq
  %v2378 = vshrl.u32 %v2377, 7
  %v2379 = vsub.s32 0, %v2378
  %v2380 = vrot.slane %v2375, %v2379
  %v2390 = vunpack.c.l.b16 %v2367
  %v2391 = vunpack.c.l.b16 %v2368
  %v2392 = vunpack.c.l.b16 %v2369
  %v2393 = vunpack.c.l.b16 %v2370
  %v2394 = vunpack.c.l.b16 %v2371
  %v2395 = vunpack.c.l.b16 %v2372
  %v2396 = vunpack.c.l.b16 %v2373
  %v2397 = vunpack.c.l.b16 %v2374
  %v2398 = vpack.c.b16 %v2391, %v2390
  %v2399 = vpack.c.b16 %v2393, %v2392
  %v2400 = vpack.c.b16 %v2395, %v2394
  %v2401 = vpack.c.b16 %v2397, %v2396
  %v2407 = vsel %vm312, %v2366, 0
  %2409 = vmatprep.subr.bf16.mxu0 0
  %2410 = vmatpush1.bf16.msra.mxu0 %v2398
  %2411 = vmatprep.subr.bf16.mxu0 0
  %2412 = vmatpush1.bf16.msra.mxu0 %v2399
  %2413 = vmatprep.subr.bf16.mxu0 0
  %2414 = vmatpush1.bf16.msra.mxu0 %v2400
  %2415 = vmatprep.subr.bf16.mxu0 0
  %2416 = vmatpush1.bf16.msra.mxu0 %v2401
  %2417 = vmatprep.subr.bf16.mxu0 0
  %2418 = vmatpush1.bf16.msra.mxu0 0
  %2419 = vmatprep.subr.bf16.mxu0 0
  %2420 = vmatpush1.bf16.msra.mxu0 0
  %2421 = vmatprep.subr.bf16.mxu0 0
  %2422 = vmatpush1.bf16.msra.mxu0 0
  %2423 = vmatprep.subr.bf16.mxu0 0
  %2424 = vmatpush1.bf16.msra.mxu0 0
  %2425 = vmatprep.subr.bf16.mxu0 0
  %2426 = vmatpush1.bf16.msra.mxu0 0
  %2427 = vmatprep.subr.bf16.mxu0 0
  %2428 = vmatpush1.bf16.msra.mxu0 0
  %2429 = vmatprep.subr.bf16.mxu0 0
  %2430 = vmatpush1.bf16.msra.mxu0 0
  %2431 = vmatprep.subr.bf16.mxu0 0
  %2432 = vmatpush1.bf16.msra.mxu0 0
  %2433 = vmatprep.subr.bf16.mxu0 0
  %2434 = vmatpush1.bf16.msra.mxu0 0
  %2435 = vmatprep.subr.bf16.mxu0 0
  %2436 = vmatpush1.bf16.msra.mxu0 0
  %2437 = vmatprep.subr.bf16.mxu0 0
  %2438 = vmatpush1.bf16.msra.mxu0 0
  %2439 = vmatprep.subr.bf16.mxu0 0
  %2440 = vmatpush1.bf16.msra.mxu0 0
  %2441 = vmatprep.mubr.bf16.mxu0 0
  %2442 = vmatmul.mubr.bf16.gmra.mrb[0].mxu0 %v2407
  %v2443 = vpop.f32.mrb[0].mxu0
  %v2444 = vadd.f32 %v2380, %v2443
  %v2445 = vpop.f32.mrb[0].mxu0
  %v2446 = vpop.f32.mrb[0].mxu0
  %v2447 = vpop.f32.mrb[0].mxu0
  %2448 = vdwg.mxu0
  %v2450 = vcombine.high %v2444, %v2444
  %vm2452 = vcmask 257024
  %v2453 = vsel %vm2452, %v2444, 0.0
  %2454 = vadd.xlane.f32.xlu0 %v2453
  %v2455 = vpop.xlane.xlu0 %2454
  %v2456 = vsel %vm2452, %v2450, 0.0
  %2457 = vadd.xlane.f32.xlu0 %v2456
  %v2458 = vpop.xlane.xlu0 %2457
  %vm2459 = vcmask 1043456
  %v2460 = vsel %vm2459, %v2455, 0.0
  %v2461 = vrot.slane %v2460, 4
  %v2462 = vadd.f32 %v2460, %v2461
  %v2463 = vrot.slane %v2462, 2
  %v2464 = vadd.f32 %v2462, %v2463
  %v2465 = vrot.slane %v2464, 1
  %v2466 = vadd.f32 %v2464, %v2465
  %v2467 = vsel %vm2459, %v2458, 0.0
  %v2468 = vrot.slane %v2467, 4
  %v2469 = vadd.f32 %v2467, %v2468
  %v2470 = vrot.slane %v2469, 2
  %v2471 = vadd.f32 %v2469, %v2470
  %v2472 = vrot.slane %v2471, 1
  %v2473 = vadd.f32 %v2471, %v2472
  %v2474 = vadd.f32 %v1953, %v2466
  %v2475 = vadd.f32 %v1954, %v2473
  %v2476 = vld [vmem:[%s1 + $0x54] sm:$0xf]
  %v2477 = vld [vmem:[%s1 + $0xac] sm:$0xf]
  %v2480 = vcombine.low %v2476, %v2477
  %v2482 = vpack.c.bf16 %v2480, %v2480
  %v2483 = vld [vmem:[%s2] sm:$0xf]
  %v2484 = vld [vmem:[%s2 + $0x4] sm:$0xf]
  %v2485 = vld [vmem:[%s2 + $0x8] sm:$0xf]
  %v2486 = vld [vmem:[%s2 + $0xc] sm:$0xf]
  %v2487 = vld [vmem:[%s3] sm:$0x1]
  %v2489 = vlaneseq
  %v2490 = vshrl.u32 %v2489, 7
  %v2491 = vsub.s32 0, %v2490
  %v2492 = vrot.slane %v2487, %v2491
  %v2498 = vunpack.c.l.b16 %v2483
  %v2499 = vunpack.c.l.b16 %v2484
  %v2500 = vunpack.c.l.b16 %v2485
  %v2501 = vunpack.c.l.b16 %v2486
  %v2502 = vpack.c.b16 %v2499, %v2498
  %v2503 = vpack.c.b16 %v2501, %v2500
  %v2507 = vsel %vm110, %v2482, 0
  %2509 = vmatprep.subr.bf16.mxu0 0
  %2510 = vmatpush1.bf16.msra.mxu0 %v2502
  %2511 = vmatprep.subr.bf16.mxu0 0
  %2512 = vmatpush1.bf16.msra.mxu0 %v2503
  %2513 = vmatprep.subr.bf16.mxu0 0
  %2514 = vmatpush1.bf16.msra.mxu0 0
  %2515 = vmatprep.subr.bf16.mxu0 0
  %2516 = vmatpush1.bf16.msra.mxu0 0
  %2517 = vmatprep.subr.bf16.mxu0 0
  %2518 = vmatpush1.bf16.msra.mxu0 0
  %2519 = vmatprep.subr.bf16.mxu0 0
  %2520 = vmatpush1.bf16.msra.mxu0 0
  %2521 = vmatprep.subr.bf16.mxu0 0
  %2522 = vmatpush1.bf16.msra.mxu0 0
  %2523 = vmatprep.subr.bf16.mxu0 0
  %2524 = vmatpush1.bf16.msra.mxu0 0
  %2525 = vmatprep.subr.bf16.mxu0 0
  %2526 = vmatpush1.bf16.msra.mxu0 0
  %2527 = vmatprep.subr.bf16.mxu0 0
  %2528 = vmatpush1.bf16.msra.mxu0 0
  %2529 = vmatprep.subr.bf16.mxu0 0
  %2530 = vmatpush1.bf16.msra.mxu0 0
  %2531 = vmatprep.subr.bf16.mxu0 0
  %2532 = vmatpush1.bf16.msra.mxu0 0
  %2533 = vmatprep.subr.bf16.mxu0 0
  %2534 = vmatpush1.bf16.msra.mxu0 0
  %2535 = vmatprep.subr.bf16.mxu0 0
  %2536 = vmatpush1.bf16.msra.mxu0 0
  %2537 = vmatprep.subr.bf16.mxu0 0
  %2538 = vmatpush1.bf16.msra.mxu0 0
  %2539 = vmatprep.subr.bf16.mxu0 0
  %2540 = vmatpush1.bf16.msra.mxu0 0
  %2541 = vmatprep.mubr.bf16.mxu0 0
  %2542 = vmatmul.mubr.bf16.gmra.mrb[0].mxu0 %v2507
  %v2543 = vpop.f32.mrb[0].mxu0
  %v2544 = vadd.f32 %v2492, %v2543
  %v2545 = vpop.f32.mrb[0].mxu0
  %v2546 = vpop.f32.mrb[0].mxu0
  %v2547 = vpop.f32.mrb[0].mxu0
  %2548 = vdwg.mxu0
  %v2549 = vmul.f32 %v2544, 0.5
  %v2550 = vmul.f32 %v2544, 0.70710677
  %v2551 = verf.f32.pop %v2550
  %v2552 = vadd.f32 %v2551, 1.0
  %v2553 = vmul.f32 %v2549, %v2552
  %2554 = vst.msk [vmem:[#allocation2] sm:$0xff] %vm312, 0.0
  %2555 = vst.msk [vmem:[#allocation2 + $0x8] sm:$0x3] %vm314, 0.0
  %2556 = vst.msk [vmem:[#allocation2 + $0x10] sm:$0xff] %vm312, 0.0
  %2557 = vst.msk [vmem:[#allocation2 + $0x18] sm:$0x3] %vm314, 0.0
  %2558 = vst.msk [vmem:[#allocation2 + $0x20] sm:$0xff] %vm312, 0.0
  %2559 = vst.msk [vmem:[#allocation2 + $0x28] sm:$0x3] %vm314, 0.0
  %2560 = vst.msk [vmem:[#allocation2 + $0x30] sm:$0xff] %vm312, 0.0
  %2561 = vst.msk [vmem:[#allocation2 + $0x38] sm:$0x3] %vm314, 0.0
  %2562 = vst.msk [vmem:[#allocation2 + $0x40] sm:$0xff] %vm312, 0.0
  %2563 = vst.msk [vmem:[#allocation2 + $0x48] sm:$0x3] %vm314, 0.0
  %2564 = vst.msk [vmem:[#allocation2 + $0x50] sm:$0xff] %vm312, 0.0
  %2565 = vst.msk [vmem:[#allocation2 + $0x58] sm:$0x3] %vm314, 0.0
  %2566 = vst.msk [vmem:[#allocation2 + $0x60] sm:$0xff] %vm312, 0.0
  %2567 = vst.msk [vmem:[#allocation2 + $0x68] sm:$0x3] %vm314, 0.0
  %2568 = vst.msk [vmem:[#allocation2 + $0x70] sm:$0xff] %vm312, 0.0
  %2569 = vst.msk [vmem:[#allocation2 + $0x78] sm:$0x3] %vm314, 0.0
  %2570 = vst.msk [vmem:[#allocation2 + $0x80] sm:$0xff] %vm312, 0.0
  %2571 = vst.msk [vmem:[#allocation2 + $0x88] sm:$0x3] %vm314, 0.0
  %2572 = vst.msk [vmem:[#allocation2 + $0x90] sm:$0xff] %vm312, 0.0
  %2573 = vst.msk [vmem:[#allocation2 + $0x98] sm:$0x3] %vm314, 0.0
  %2574 = vst.msk [vmem:[#allocation2 + $0xa0] sm:$0xff] %vm312, 0.0
  %2575 = vst.msk [vmem:[#allocation2 + $0xa8] sm:$0x3] %vm314, 0.0
  %2576 = vst.msk [vmem:[#allocation2 + $0xb0] sm:$0xff] %vm312, 0.0
  %2577 = vst.msk [vmem:[#allocation2 + $0xb8] sm:$0x3] %vm314, 0.0
  %2578 = vst.msk [vmem:[#allocation2 + $0xc0] sm:$0xff] %vm312, 0.0
  %2579 = vst.msk [vmem:[#allocation2 + $0xc8] sm:$0x3] %vm314, 0.0
  %2580 = vst.msk [vmem:[#allocation2 + $0xd0] sm:$0xff] %vm312, 0.0
  %2581 = vst.msk [vmem:[#allocation2 + $0xd8] sm:$0x3] %vm314, 0.0
  %2582 = vst.msk [vmem:[#allocation2 + $0xe0] sm:$0xff] %vm312, 0.0
  %2583 = vst.msk [vmem:[#allocation2 + $0xe8] sm:$0x3] %vm314, 0.0
  %2584 = vst.msk [vmem:[#allocation2 + $0xf0] sm:$0xff] %vm312, 0.0
  %2585 = vst.msk [vmem:[#allocation2 + $0xf8] sm:$0x3] %vm314, 0.0
  %2586 = vst.msk [vmem:[#allocation2 + $0x100] sm:$0xff] %vm312, 0.0
  %2587 = vst.msk [vmem:[#allocation2 + $0x108] sm:$0x3] %vm314, 0.0
  %2588 = vst.msk [vmem:[#allocation2 + $0x110] sm:$0xff] %vm312, 0.0
  %2589 = vst.msk [vmem:[#allocation2 + $0x118] sm:$0x3] %vm314, 0.0
  %2590 = vst.msk [vmem:[#allocation2 + $0x120] sm:$0xff] %vm312, 0.0
  %2591 = vst.msk [vmem:[#allocation2 + $0x128] sm:$0x3] %vm314, 0.0
  %2592 = vst.msk [vmem:[#allocation2 + $0x130] sm:$0xff] %vm312, 0.0
  %2593 = vst.msk [vmem:[#allocation2 + $0x138] sm:$0x3] %vm314, 0.0
  %v2595 = vcombine.high %v2553, %v2553
  %v2597 = vunpack.c.l.s4 1983009808
  %v2598 = vunpack.c.0.s8 %v2597
  %v2599 = vlaneseq
  %v2600 = vshrl.u32 %v2599, 7
  %v2601 = vsub.s32 %v2598, %v2600
  %v2602 = vrot.slane %v2553, %v2601
  %v2604 = vunpack.c.l.s4 1983009808
  %v2605 = vunpack.c.0.s8 %v2604
  %v2606 = vlaneseq
  %v2607 = vshrl.u32 %v2606, 7
  %v2608 = vsub.s32 %v2605, %v2607
  %v2609 = vrot.slane %v2595, %v2608
  %v2610 = vcombine.high %v2602, %v2602
  %v2611 = vcombine.high %v2609, %v2609
  %2616 = vst.msk [vmem:[%s354 + $0x1] sm:$0x3] %vm314, %v2602
  %2617 = vst.msk [vmem:[%s354 + $0x11] sm:$0x3] %vm314, %v2610
  %2618 = vst.msk [vmem:[%s354 + $0xa1] sm:$0x3] %vm314, %v2609
  %2619 = vst.msk [vmem:[%s354 + $0xb1] sm:$0x3] %vm314, %v2611
  %v2620 = vld [vmem:[#allocation2] sm:$0x3]
  %v2621 = vld [vmem:[#allocation2 + $0x10] sm:$0x3]
  %v2622 = vld [vmem:[#allocation2 + $0xa0] sm:$0x3]
  %v2623 = vld [vmem:[#allocation2 + $0xb0] sm:$0x3]
  %s2624 = scalar_lea.vmem %s4, 48
  %v2625 = vld [vmem:[%s2624] sm:$0x1]
  %v2626 = vlaneseq
  %v2627 = vshrl.u32 %v2626, 7
  %v2628 = vsub.s32 0, %v2627
  %v2629 = vrot.slane %v2625, %v2628
  %v2630 = vmul.f32 %v2620, %v2629
  %v2631 = vmul.f32 %v2621, %v2629
  %v2632 = vmul.f32 %v2622, %v2629
  %v2633 = vmul.f32 %v2623, %v2629
  %v2634 = vadd.f32 %v2630, 0.0
  %v2635 = vadd.f32 %v2631, 0.0
  %v2636 = vadd.f32 %v2632, 0.0
  %v2637 = vadd.f32 %v2633, 0.0
  %v2638 = vld [vmem:[#allocation2 + $0x1] sm:$0x3]
  %v2639 = vld [vmem:[#allocation2 + $0x11] sm:$0x3]
  %v2640 = vld [vmem:[#allocation2 + $0xa1] sm:$0x3]
  %v2641 = vld [vmem:[#allocation2 + $0xb1] sm:$0x3]
  %v2642 = vld [vmem:[%s2624 + $0x1] sm:$0x1]
  %v2643 = vlaneseq
  %v2644 = vshrl.u32 %v2643, 7
  %v2645 = vsub.s32 0, %v2644
  %v2646 = vrot.slane %v2642, %v2645
  %v2647 = vmul.f32 %v2638, %v2646
  %v2648 = vmul.f32 %v2639, %v2646
  %v2649 = vmul.f32 %v2640, %v2646
  %v2650 = vmul.f32 %v2641, %v2646
  %v2651 = vadd.f32 %v2634, %v2647
  %v2652 = vadd.f32 %v2635, %v2648
  %v2653 = vadd.f32 %v2636, %v2649
  %v2654 = vadd.f32 %v2637, %v2650
  %v2655 = vld [vmem:[#allocation2 + $0x2] sm:$0x3]
  %v2656 = vld [vmem:[#allocation2 + $0x12] sm:$0x3]
  %v2657 = vld [vmem:[#allocation2 + $0xa2] sm:$0x3]
  %v2658 = vld [vmem:[#allocation2 + $0xb2] sm:$0x3]
  %v2659 = vld [vmem:[%s2624 + $0x2] sm:$0x1]
  %v2660 = vlaneseq
  %v2661 = vshrl.u32 %v2660, 7
  %v2662 = vsub.s32 0, %v2661
  %v2663 = vrot.slane %v2659, %v2662
  %v2664 = vmul.f32 %v2655, %v2663
  %v2665 = vmul.f32 %v2656, %v2663
  %v2666 = vmul.f32 %v2657, %v2663
  %v2667 = vmul.f32 %v2658, %v2663
  %v2668 = vadd.f32 %v2651, %v2664
  %v2669 = vadd.f32 %v2652, %v2665
  %v2670 = vadd.f32 %v2653, %v2666
  %v2671 = vadd.f32 %v2654, %v2667
  %v2672 = vld [vmem:[%s354] sm:$0x3]
  %v2673 = vld [vmem:[%s354 + $0x10] sm:$0x3]
  %v2674 = vld [vmem:[%s354 + $0xa0] sm:$0x3]
  %v2675 = vld [vmem:[%s354 + $0xb0] sm:$0x3]
  %v2676 = vld [vmem:[%s2624 + $0x3] sm:$0x1]
  %v2677 = vlaneseq
  %v2678 = vshrl.u32 %v2677, 7
  %v2679 = vsub.s32 0, %v2678
  %v2680 = vrot.slane %v2676, %v2679
  %v2681 = vmul.f32 %v2672, %v2680
  %v2682 = vmul.f32 %v2673, %v2680
  %v2683 = vmul.f32 %v2674, %v2680
  %v2684 = vmul.f32 %v2675, %v2680
  %v2685 = vadd.f32 %v2668, %v2681
  %v2686 = vadd.f32 %v2669, %v2682
  %v2687 = vadd.f32 %v2670, %v2683
  %v2688 = vadd.f32 %v2671, %v2684
  %v2689 = vld [vmem:[%s354 + $0x1] sm:$0x3]
  %v2690 = vld [vmem:[%s354 + $0x11] sm:$0x3]
  %v2691 = vld [vmem:[%s354 + $0xa1] sm:$0x3]
  %v2692 = vld [vmem:[%s354 + $0xb1] sm:$0x3]
  %v2693 = vld [vmem:[%s2624 + $0x4] sm:$0x1]
  %v2694 = vlaneseq
  %v2695 = vshrl.u32 %v2694, 7
  %v2696 = vsub.s32 0, %v2695
  %v2697 = vrot.slane %v2693, %v2696
  %v2698 = vmul.f32 %v2689, %v2697
  %v2699 = vmul.f32 %v2690, %v2697
  %v2700 = vmul.f32 %v2691, %v2697
  %v2701 = vmul.f32 %v2692, %v2697
  %v2702 = vadd.f32 %v2685, %v2698
  %v2703 = vadd.f32 %v2686, %v2699
  %v2704 = vadd.f32 %v2687, %v2700
  %v2705 = vadd.f32 %v2688, %v2701
  %v2706 = vld [vmem:[%s354 + $0x2] sm:$0x3]
  %v2707 = vld [vmem:[%s354 + $0x12] sm:$0x3]
  %v2708 = vld [vmem:[%s354 + $0xa2] sm:$0x3]
  %v2709 = vld [vmem:[%s354 + $0xb2] sm:$0x3]
  %v2710 = vld [vmem:[%s2624 + $0x5] sm:$0x1]
  %v2711 = vlaneseq
  %v2712 = vshrl.u32 %v2711, 7
  %v2713 = vsub.s32 0, %v2712
  %v2714 = vrot.slane %v2710, %v2713
  %v2715 = vmul.f32 %v2706, %v2714
  %v2716 = vmul.f32 %v2707, %v2714
  %v2717 = vmul.f32 %v2708, %v2714
  %v2718 = vmul.f32 %v2709, %v2714
  %v2719 = vadd.f32 %v2702, %v2715
  %v2720 = vadd.f32 %v2703, %v2716
  %v2721 = vadd.f32 %v2704, %v2717
  %v2722 = vadd.f32 %v2705, %v2718
  %v2723 = vld [vmem:[%s689] sm:$0x3]
  %v2724 = vld [vmem:[%s689 + $0x10] sm:$0x3]
  %v2725 = vld [vmem:[%s689 + $0xa0] sm:$0x3]
  %v2726 = vld [vmem:[%s689 + $0xb0] sm:$0x3]
  %v2727 = vld [vmem:[%s2624 + $0x6] sm:$0x1]
  %v2728 = vlaneseq
  %v2729 = vshrl.u32 %v2728, 7
  %v2730 = vsub.s32 0, %v2729
  %v2731 = vrot.slane %v2727, %v2730
  %v2732 = vmul.f32 %v2723, %v2731
  %v2733 = vmul.f32 %v2724, %v2731
  %v2734 = vmul.f32 %v2725, %v2731
  %v2735 = vmul.f32 %v2726, %v2731
  %v2736 = vadd.f32 %v2719, %v2732
  %v2737 = vadd.f32 %v2720, %v2733
  %v2738 = vadd.f32 %v2721, %v2734
  %v2739 = vadd.f32 %v2722, %v2735
  %v2740 = vld [vmem:[%s689 + $0x1] sm:$0x3]
  %v2741 = vld [vmem:[%s689 + $0x11] sm:$0x3]
  %v2742 = vld [vmem:[%s689 + $0xa1] sm:$0x3]
  %v2743 = vld [vmem:[%s689 + $0xb1] sm:$0x3]
  %v2744 = vld [vmem:[%s2624 + $0x7] sm:$0x1]
  %v2745 = vlaneseq
  %v2746 = vshrl.u32 %v2745, 7
  %v2747 = vsub.s32 0, %v2746
  %v2748 = vrot.slane %v2744, %v2747
  %v2749 = vmul.f32 %v2740, %v2748
  %v2750 = vmul.f32 %v2741, %v2748
  %v2751 = vmul.f32 %v2742, %v2748
  %v2752 = vmul.f32 %v2743, %v2748
  %v2753 = vadd.f32 %v2736, %v2749
  %v2754 = vadd.f32 %v2737, %v2750
  %v2755 = vadd.f32 %v2738, %v2751
  %v2756 = vadd.f32 %v2739, %v2752
  %v2757 = vld [vmem:[%s689 + $0x2] sm:$0x3]
  %v2758 = vld [vmem:[%s689 + $0x12] sm:$0x3]
  %v2759 = vld [vmem:[%s689 + $0xa2] sm:$0x3]
  %v2760 = vld [vmem:[%s689 + $0xb2] sm:$0x3]
  %v2761 = vld [vmem:[%s2624 + $0x8] sm:$0x1]
  %v2762 = vlaneseq
  %v2763 = vshrl.u32 %v2762, 7
  %v2764 = vsub.s32 0, %v2763
  %v2765 = vrot.slane %v2761, %v2764
  %v2766 = vmul.f32 %v2757, %v2765
  %v2767 = vmul.f32 %v2758, %v2765
  %v2768 = vmul.f32 %v2759, %v2765
  %v2769 = vmul.f32 %v2760, %v2765
  %v2770 = vadd.f32 %v2753, %v2766
  %v2771 = vadd.f32 %v2754, %v2767
  %v2772 = vadd.f32 %v2755, %v2768
  %v2773 = vadd.f32 %v2756, %v2769
  %v2774 = vld [vmem:[%s5 + $0x3] sm:$0x1]
  %v2775 = vlaneseq
  %v2776 = vshrl.u32 %v2775, 7
  %v2777 = vsub.s32 0, %v2776
  %v2778 = vrot.slane %v2774, %v2777
  %v2779 = vadd.f32 %v2770, %v2778
  %v2780 = vadd.f32 %v2771, %v2778
  %v2781 = vadd.f32 %v2772, %v2778
  %v2782 = vadd.f32 %v2773, %v2778
  %v2787 = vcombine.low %v2779, %v2780
  %v2788 = vcombine.low %v2781, %v2782
  %v2790 = vunpack.c.l.s4 1983009808
  %v2791 = vunpack.c.0.s8 %v2790
  %v2792 = vlaneseq
  %v2793 = vshrl.u32 %v2792, 7
  %v2794 = vsub.s32 %v2791, %v2793
  %v2795 = vrot.slane %v2787, %v2794
  %v2797 = vunpack.c.l.s4 1983009808
  %v2798 = vunpack.c.0.s8 %v2797
  %v2799 = vlaneseq
  %v2800 = vshrl.u32 %v2799, 7
  %v2801 = vsub.s32 %v2798, %v2800
  %v2802 = vrot.slane %v2788, %v2801
  %v2803 = vcombine.low %v2795, %v2802
  %v2805 = vpack.c.bf16 %v2803, %v2803
  %s2806 = scalar_lea.vmem %s6, 96
  %v2807 = vld [vmem:[%s2806] sm:$0xf]
  %v2808 = vld [vmem:[%s2806 + $0x4] sm:$0xf]
  %v2809 = vld [vmem:[%s2806 + $0x8] sm:$0xf]
  %v2810 = vld [vmem:[%s2806 + $0xc] sm:$0xf]
  %v2811 = vld [vmem:[%s2806 + $0x10] sm:$0xf]
  %v2812 = vld [vmem:[%s2806 + $0x14] sm:$0xf]
  %v2813 = vld [vmem:[%s2806 + $0x18] sm:$0xf]
  %v2814 = vld [vmem:[%s2806 + $0x1c] sm:$0xf]
  %v2815 = vld [vmem:[%s7 + $0x3] sm:$0x1]
  %v2816 = vlaneseq
  %v2817 = vshrl.u32 %v2816, 7
  %v2818 = vsub.s32 0, %v2817
  %v2819 = vrot.slane %v2815, %v2818
  %v2828 = vunpack.c.l.b16 %v2807
  %v2829 = vunpack.c.l.b16 %v2808
  %v2830 = vunpack.c.l.b16 %v2809
  %v2831 = vunpack.c.l.b16 %v2810
  %v2832 = vunpack.c.l.b16 %v2811
  %v2833 = vunpack.c.l.b16 %v2812
  %v2834 = vunpack.c.l.b16 %v2813
  %v2835 = vunpack.c.l.b16 %v2814
  %v2836 = vpack.c.b16 %v2829, %v2828
  %v2837 = vpack.c.b16 %v2831, %v2830
  %v2838 = vpack.c.b16 %v2833, %v2832
  %v2839 = vpack.c.b16 %v2835, %v2834
  %v2845 = vsel %vm312, %v2805, 0
  %2847 = vmatprep.subr.bf16.mxu0 0
  %2848 = vmatpush1.bf16.msra.mxu0 %v2836
  %2849 = vmatprep.subr.bf16.mxu0 0
  %2850 = vmatpush1.bf16.msra.mxu0 %v2837
  %2851 = vmatprep.subr.bf16.mxu0 0
  %2852 = vmatpush1.bf16.msra.mxu0 %v2838
  %2853 = vmatprep.subr.bf16.mxu0 0
  %2854 = vmatpush1.bf16.msra.mxu0 %v2839
  %2855 = vmatprep.subr.bf16.mxu0 0
  %2856 = vmatpush1.bf16.msra.mxu0 0
  %2857 = vmatprep.subr.bf16.mxu0 0
  %2858 = vmatpush1.bf16.msra.mxu0 0
  %2859 = vmatprep.subr.bf16.mxu0 0
  %2860 = vmatpush1.bf16.msra.mxu0 0
  %2861 = vmatprep.subr.bf16.mxu0 0
  %2862 = vmatpush1.bf16.msra.mxu0 0
  %2863 = vmatprep.subr.bf16.mxu0 0
  %2864 = vmatpush1.bf16.msra.mxu0 0
  %2865 = vmatprep.subr.bf16.mxu0 0
  %2866 = vmatpush1.bf16.msra.mxu0 0
  %2867 = vmatprep.subr.bf16.mxu0 0
  %2868 = vmatpush1.bf16.msra.mxu0 0
  %2869 = vmatprep.subr.bf16.mxu0 0
  %2870 = vmatpush1.bf16.msra.mxu0 0
  %2871 = vmatprep.subr.bf16.mxu0 0
  %2872 = vmatpush1.bf16.msra.mxu0 0
  %2873 = vmatprep.subr.bf16.mxu0 0
  %2874 = vmatpush1.bf16.msra.mxu0 0
  %2875 = vmatprep.subr.bf16.mxu0 0
  %2876 = vmatpush1.bf16.msra.mxu0 0
  %2877 = vmatprep.subr.bf16.mxu0 0
  %2878 = vmatpush1.bf16.msra.mxu0 0
  %2879 = vmatprep.mubr.bf16.mxu0 0
  %2880 = vmatmul.mubr.bf16.gmra.mrb[0].mxu0 %v2845
  %v2881 = vpop.f32.mrb[0].mxu0
  %v2882 = vadd.f32 %v2819, %v2881
  %v2883 = vpop.f32.mrb[0].mxu0
  %v2884 = vpop.f32.mrb[0].mxu0
  %v2885 = vpop.f32.mrb[0].mxu0
  %2886 = vdwg.mxu0
  %v2887 = vpack.c.bf16 %v2882, %v2882
  %v2888 = vld [vmem:[%s8] sm:$0xf]
  %v2889 = vld [vmem:[%s8 + $0x4] sm:$0xf]
  %v2890 = vld [vmem:[%s8 + $0x8] sm:$0xf]
  %v2891 = vld [vmem:[%s8 + $0xc] sm:$0xf]
  %v2892 = vld [vmem:[%s8 + $0x10] sm:$0xf]
  %v2893 = vld [vmem:[%s8 + $0x14] sm:$0xf]
  %v2894 = vld [vmem:[%s8 + $0x18] sm:$0xf]
  %v2895 = vld [vmem:[%s8 + $0x1c] sm:$0xf]
  %v2896 = vld [vmem:[%s9] sm:$0x1]
  %v2898 = vlaneseq
  %v2899 = vshrl.u32 %v2898, 7
  %v2900 = vsub.s32 0, %v2899
  %v2901 = vrot.slane %v2896, %v2900
  %v2911 = vunpack.c.l.b16 %v2888
  %v2912 = vunpack.c.l.b16 %v2889
  %v2913 = vunpack.c.l.b16 %v2890
  %v2914 = vunpack.c.l.b16 %v2891
  %v2915 = vunpack.c.l.b16 %v2892
  %v2916 = vunpack.c.l.b16 %v2893
  %v2917 = vunpack.c.l.b16 %v2894
  %v2918 = vunpack.c.l.b16 %v2895
  %v2919 = vpack.c.b16 %v2912, %v2911
  %v2920 = vpack.c.b16 %v2914, %v2913
  %v2921 = vpack.c.b16 %v2916, %v2915
  %v2922 = vpack.c.b16 %v2918, %v2917
  %v2928 = vsel %vm312, %v2887, 0
  %2930 = vmatprep.subr.bf16.mxu0 0
  %2931 = vmatpush1.bf16.msra.mxu0 %v2919
  %2932 = vmatprep.subr.bf16.mxu0 0
  %2933 = vmatpush1.bf16.msra.mxu0 %v2920
  %2934 = vmatprep.subr.bf16.mxu0 0
  %2935 = vmatpush1.bf16.msra.mxu0 %v2921
  %2936 = vmatprep.subr.bf16.mxu0 0
  %2937 = vmatpush1.bf16.msra.mxu0 %v2922
  %2938 = vmatprep.subr.bf16.mxu0 0
  %2939 = vmatpush1.bf16.msra.mxu0 0
  %2940 = vmatprep.subr.bf16.mxu0 0
  %2941 = vmatpush1.bf16.msra.mxu0 0
  %2942 = vmatprep.subr.bf16.mxu0 0
  %2943 = vmatpush1.bf16.msra.mxu0 0
  %2944 = vmatprep.subr.bf16.mxu0 0
  %2945 = vmatpush1.bf16.msra.mxu0 0
  %2946 = vmatprep.subr.bf16.mxu0 0
  %2947 = vmatpush1.bf16.msra.mxu0 0
  %2948 = vmatprep.subr.bf16.mxu0 0
  %2949 = vmatpush1.bf16.msra.mxu0 0
  %2950 = vmatprep.subr.bf16.mxu0 0
  %2951 = vmatpush1.bf16.msra.mxu0 0
  %2952 = vmatprep.subr.bf16.mxu0 0
  %2953 = vmatpush1.bf16.msra.mxu0 0
  %2954 = vmatprep.subr.bf16.mxu0 0
  %2955 = vmatpush1.bf16.msra.mxu0 0
  %2956 = vmatprep.subr.bf16.mxu0 0
  %2957 = vmatpush1.bf16.msra.mxu0 0
  %2958 = vmatprep.subr.bf16.mxu0 0
  %2959 = vmatpush1.bf16.msra.mxu0 0
  %2960 = vmatprep.subr.bf16.mxu0 0
  %2961 = vmatpush1.bf16.msra.mxu0 0
  %2962 = vmatprep.mubr.bf16.mxu0 0
  %2963 = vmatmul.mubr.bf16.gmra.mrb[0].mxu0 %v2928
  %v2964 = vpop.f32.mrb[0].mxu0
  %v2965 = vadd.f32 %v2901, %v2964
  %v2966 = vpop.f32.mrb[0].mxu0
  %v2967 = vpop.f32.mrb[0].mxu0
  %v2968 = vpop.f32.mrb[0].mxu0
  %2969 = vdwg.mxu0
  %v2971 = vcombine.high %v2965, %v2965
  %v2973 = vsel %vm2452, %v2965, 0.0
  %2974 = vadd.xlane.f32.xlu0 %v2973
  %v2975 = vpop.xlane.xlu0 %2974
  %v2976 = vsel %vm2452, %v2971, 0.0
  %2977 = vadd.xlane.f32.xlu0 %v2976
  %v2978 = vpop.xlane.xlu0 %2977
  %v2979 = vsel %vm2459, %v2975, 0.0
  %v2980 = vrot.slane %v2979, 4
  %v2981 = vadd.f32 %v2979, %v2980
  %v2982 = vrot.slane %v2981, 2
  %v2983 = vadd.f32 %v2981, %v2982
  %v2984 = vrot.slane %v2983, 1
  %v2985 = vadd.f32 %v2983, %v2984
  %v2986 = vsel %vm2459, %v2978, 0.0
  %v2987 = vrot.slane %v2986, 4
  %v2988 = vadd.f32 %v2986, %v2987
  %v2989 = vrot.slane %v2988, 2
  %v2990 = vadd.f32 %v2988, %v2989
  %v2991 = vrot.slane %v2990, 1
  %v2992 = vadd.f32 %v2990, %v2991
  %v2993 = vadd.f32 %v2474, %v2985
  %v2994 = vadd.f32 %v2475, %v2992
  %v2995 = vrcp.pop 2816.0
  %v2996 = vmul.f32 %v2993, %v2995
  %v2997 = vmul.f32 %v2994, %v2995
  %v2998 = vld [vmem:[%s10] sm:$0x3]
  %vm3001 = vcmask 1041409
  %v3002 = vsel %vm3001, %v2997, %v2996
  %v3003 = vlaneseq
  %v3004 = vand.u32 %v3003, 127
  %v3005 = vlaneseq
  %v3006 = vshrl.u32 %v3005, 7
  %v3007 = vsub.s32 %v3004, %v3006
  %v3008 = vrot.slane %v3002, %v3007
  %v3010 = vmul.f32 %v2998, %v3008
  %vm3011 = vcmask 9216
  %v3012 = vsel %vm3011, %v3010, 0.0
  %3013 = vadd.xlane.f32.xlu0 %v3012
  %v3014 = vpop.xlane.xlu0 %3013
  %v3015 = vxor.u32 %v3014, 2147483648
  %v3016 = vmul.f32 %v3015, 1.442695
  %v3017 = vpow.pop %v3016
  %v3018 = vadd.f32 %v3017, 1.0
  %v3019 = vrcp.pop %v3018
  %v3020 = vmul.f32 1.0, %v3019
  %v3022 = vlaneseq
  %v3023 = vshrl.u32 %v3022, 7
  %v3024 = vsub.s32 0, %v3023
  %v3025 = vrot.slane %v3020, %v3024
  %v3026 = vlaneseq
  %v3027 = vshrl.u32 %v3026, 7
  %v3028 = vsub.s32 1, %v3027
  %v3029 = vrot.slane %v3020, %v3028
  %v3032 = vld [vmem:[%s0] sm:$0xff]
  %v3033 = vld [vmem:[%s0 + $0x8] sm:$0xff]
  %v3034 = vld [vmem:[%s0 + $0x10] sm:$0xff]
  %v3035 = vld [vmem:[%s0 + $0x18] sm:$0xff]
  %v3036 = vld [vmem:[%s0 + $0x20] sm:$0xff]
  %v3037 = vld [vmem:[%s0 + $0x28] sm:$0xff]
  %v3038 = vld [vmem:[%s0 + $0x30] sm:$0xff]
  %v3039 = vld [vmem:[%s0 + $0x38] sm:$0xff]
  %v3040 = vld [vmem:[%s0 + $0x58] sm:$0xff]
  %v3041 = vld [vmem:[%s0 + $0x60] sm:$0xff]
  %v3042 = vld [vmem:[%s0 + $0x68] sm:$0xff]
  %v3043 = vld [vmem:[%s0 + $0x70] sm:$0xff]
  %v3044 = vld [vmem:[%s0 + $0x78] sm:$0xff]
  %v3045 = vld [vmem:[%s0 + $0x80] sm:$0xff]
  %v3046 = vld [vmem:[%s0 + $0x88] sm:$0xff]
  %v3047 = vld [vmem:[%s0 + $0x90] sm:$0xff]
  %v3048 = vld [vmem:[%s1] sm:$0xff]
  %v3049 = vld [vmem:[%s1 + $0x8] sm:$0xff]
  %v3050 = vld [vmem:[%s1 + $0x10] sm:$0xff]
  %v3051 = vld [vmem:[%s1 + $0x18] sm:$0xff]
  %v3052 = vld [vmem:[%s1 + $0x20] sm:$0xff]
  %v3053 = vld [vmem:[%s1 + $0x28] sm:$0xff]
  %v3054 = vld [vmem:[%s1 + $0x30] sm:$0xff]
  %v3055 = vld [vmem:[%s1 + $0x38] sm:$0xff]
  %v3056 = vld [vmem:[%s1 + $0x58] sm:$0xff]
  %v3057 = vld [vmem:[%s1 + $0x60] sm:$0xff]
  %v3058 = vld [vmem:[%s1 + $0x68] sm:$0xff]
  %v3059 = vld [vmem:[%s1 + $0x70] sm:$0xff]
  %v3060 = vld [vmem:[%s1 + $0x78] sm:$0xff]
  %v3061 = vld [vmem:[%s1 + $0x80] sm:$0xff]
  %v3062 = vld [vmem:[%s1 + $0x88] sm:$0xff]
  %v3063 = vld [vmem:[%s1 + $0x90] sm:$0xff]
  %v3064 = vadd.f32 %v3032, %v3048
  %v3065 = vadd.f32 %v3033, %v3049
  %v3066 = vadd.f32 %v3034, %v3050
  %v3067 = vadd.f32 %v3035, %v3051
  %v3068 = vadd.f32 %v3036, %v3052
  %v3069 = vadd.f32 %v3037, %v3053
  %v3070 = vadd.f32 %v3038, %v3054
  %v3071 = vadd.f32 %v3039, %v3055
  %v3072 = vadd.f32 %v3040, %v3056
  %v3073 = vadd.f32 %v3041, %v3057
  %v3074 = vadd.f32 %v3042, %v3058
  %v3075 = vadd.f32 %v3043, %v3059
  %v3076 = vadd.f32 %v3044, %v3060
  %v3077 = vadd.f32 %v3045, %v3061
  %v3078 = vadd.f32 %v3046, %v3062
  %v3079 = vadd.f32 %v3047, %v3063
  %v3080 = vmul.f32 %v1142, %v3025
  %v3081 = vmul.f32 %v1145, %v3025
  %v3082 = vmul.f32 %v1150, %v3025
  %v3083 = vmul.f32 %v1153, %v3025
  %v3084 = vmul.f32 %v1158, %v3025
  %v3085 = vmul.f32 %v1161, %v3025
  %v3086 = vmul.f32 %v1166, %v3025
  %v3087 = vmul.f32 %v1169, %v3025
  %v3088 = vmul.f32 %v1174, %v3029
  %v3089 = vmul.f32 %v1177, %v3029
  %v3090 = vmul.f32 %v1182, %v3029
  %v3091 = vmul.f32 %v1185, %v3029
  %v3092 = vmul.f32 %v1190, %v3029
  %v3093 = vmul.f32 %v1193, %v3029
  %v3094 = vmul.f32 %v1198, %v3029
  %v3095 = vmul.f32 %v1201, %v3029
  %v3096 = vadd.f32 %v3064, %v3080
  %v3097 = vadd.f32 %v3065, %v3081
  %v3098 = vadd.f32 %v3066, %v3082
  %v3099 = vadd.f32 %v3067, %v3083
  %v3100 = vadd.f32 %v3068, %v3084
  %v3101 = vadd.f32 %v3069, %v3085
  %v3102 = vadd.f32 %v3070, %v3086
  %v3103 = vadd.f32 %v3071, %v3087
  %v3104 = vadd.f32 %v3072, %v3088
  %v3105 = vadd.f32 %v3073, %v3089
  %v3106 = vadd.f32 %v3074, %v3090
  %v3107 = vadd.f32 %v3075, %v3091
  %v3108 = vadd.f32 %v3076, %v3092
  %v3109 = vadd.f32 %v3077, %v3093
  %v3110 = vadd.f32 %v3078, %v3094
  %v3111 = vadd.f32 %v3079, %v3095
  %v3112 = vld [vmem:[%s11] sm:$0x1]
  %v3113 = vld [vmem:[%s12] sm:$0x1]
  %v3114 = vsel %vm110, %v3096, 0.0
  %3115 = vadd.xlane.f32.xlu0 %v3114
  %v3116 = vpop.xlane.xlu0 %3115
  %v3117 = vsel %vm110, %v3097, 0.0
  %3118 = vadd.xlane.f32.xlu0 %v3117
  %v3119 = vpop.xlane.xlu0 %3118
  %v3120 = vsel %vm110, %v3098, 0.0
  %3121 = vadd.xlane.f32.xlu0 %v3120
  %v3122 = vpop.xlane.xlu0 %3121
  %v3123 = vsel %vm110, %v3099, 0.0
  %3124 = vadd.xlane.f32.xlu0 %v3123
  %v3125 = vpop.xlane.xlu0 %3124
  %v3126 = vsel %vm110, %v3100, 0.0
  %3127 = vadd.xlane.f32.xlu0 %v3126
  %v3128 = vpop.xlane.xlu0 %3127
  %v3129 = vsel %vm110, %v3101, 0.0
  %3130 = vadd.xlane.f32.xlu0 %v3129
  %v3131 = vpop.xlane.xlu0 %3130
  %v3132 = vsel %vm110, %v3102, 0.0
  %3133 = vadd.xlane.f32.xlu0 %v3132
  %v3134 = vpop.xlane.xlu0 %3133
  %v3135 = vsel %vm110, %v3103, 0.0
  %3136 = vadd.xlane.f32.xlu0 %v3135
  %v3137 = vpop.xlane.xlu0 %3136
  %v3138 = vsel %vm110, %v3104, 0.0
  %3139 = vadd.xlane.f32.xlu0 %v3138
  %v3140 = vpop.xlane.xlu0 %3139
  %v3141 = vsel %vm110, %v3105, 0.0
  %3142 = vadd.xlane.f32.xlu0 %v3141
  %v3143 = vpop.xlane.xlu0 %3142
  %v3144 = vsel %vm110, %v3106, 0.0
  %3145 = vadd.xlane.f32.xlu0 %v3144
  %v3146 = vpop.xlane.xlu0 %3145
  %v3147 = vsel %vm110, %v3107, 0.0
  %3148 = vadd.xlane.f32.xlu0 %v3147
  %v3149 = vpop.xlane.xlu0 %3148
  %v3150 = vsel %vm110, %v3108, 0.0
  %3151 = vadd.xlane.f32.xlu0 %v3150
  %v3152 = vpop.xlane.xlu0 %3151
  %v3153 = vsel %vm110, %v3109, 0.0
  %3154 = vadd.xlane.f32.xlu0 %v3153
  %v3155 = vpop.xlane.xlu0 %3154
  %v3156 = vsel %vm110, %v3110, 0.0
  %3157 = vadd.xlane.f32.xlu0 %v3156
  %v3158 = vpop.xlane.xlu0 %3157
  %v3159 = vsel %vm110, %v3111, 0.0
  %3160 = vadd.xlane.f32.xlu0 %v3159
  %v3161 = vpop.xlane.xlu0 %3160
  %v3162 = vrcp.pop 32.0
  %v3163 = vmul.f32 %v3116, %v3162
  %v3164 = vmul.f32 %v3119, %v3162
  %v3165 = vmul.f32 %v3122, %v3162
  %v3166 = vmul.f32 %v3125, %v3162
  %v3167 = vmul.f32 %v3128, %v3162
  %v3168 = vmul.f32 %v3131, %v3162
  %v3169 = vmul.f32 %v3134, %v3162
  %v3170 = vmul.f32 %v3137, %v3162
  %v3171 = vmul.f32 %v3140, %v3162
  %v3172 = vmul.f32 %v3143, %v3162
  %v3173 = vmul.f32 %v3146, %v3162
  %v3174 = vmul.f32 %v3149, %v3162
  %v3175 = vmul.f32 %v3152, %v3162
  %v3176 = vmul.f32 %v3155, %v3162
  %v3177 = vmul.f32 %v3158, %v3162
  %v3178 = vmul.f32 %v3161, %v3162
  %v3179 = vsub.f32 %v3096, %v3163
  %v3180 = vsub.f32 %v3097, %v3164
  %v3181 = vsub.f32 %v3098, %v3165
  %v3182 = vsub.f32 %v3099, %v3166
  %v3183 = vsub.f32 %v3100, %v3167
  %v3184 = vsub.f32 %v3101, %v3168
  %v3185 = vsub.f32 %v3102, %v3169
  %v3186 = vsub.f32 %v3103, %v3170
  %v3187 = vsub.f32 %v3104, %v3171
  %v3188 = vsub.f32 %v3105, %v3172
  %v3189 = vsub.f32 %v3106, %v3173
  %v3190 = vsub.f32 %v3107, %v3174
  %v3191 = vsub.f32 %v3108, %v3175
  %v3192 = vsub.f32 %v3109, %v3176
  %v3193 = vsub.f32 %v3110, %v3177
  %v3194 = vsub.f32 %v3111, %v3178
  %v3195 = vmul.f32 %v3179, %v3179
  %v3196 = vmul.f32 %v3180, %v3180
  %v3197 = vmul.f32 %v3181, %v3181
  %v3198 = vmul.f32 %v3182, %v3182
  %v3199 = vmul.f32 %v3183, %v3183
  %v3200 = vmul.f32 %v3184, %v3184
  %v3201 = vmul.f32 %v3185, %v3185
  %v3202 = vmul.f32 %v3186, %v3186
  %v3203 = vmul.f32 %v3187, %v3187
  %v3204 = vmul.f32 %v3188, %v3188
  %v3205 = vmul.f32 %v3189, %v3189
  %v3206 = vmul.f32 %v3190, %v3190
  %v3207 = vmul.f32 %v3191, %v3191
  %v3208 = vmul.f32 %v3192, %v3192
  %v3209 = vmul.f32 %v3193, %v3193
  %v3210 = vmul.f32 %v3194, %v3194
  %v3211 = vsel %vm110, %v3195, 0.0
  %3212 = vadd.xlane.f32.xlu0 %v3211
  %v3213 = vpop.xlane.xlu0 %3212
  %v3214 = vsel %vm110, %v3196, 0.0
  %3215 = vadd.xlane.f32.xlu0 %v3214
  %v3216 = vpop.xlane.xlu0 %3215
  %v3217 = vsel %vm110, %v3197, 0.0
  %3218 = vadd.xlane.f32.xlu0 %v3217
  %v3219 = vpop.xlane.xlu0 %3218
  %v3220 = vsel %vm110, %v3198, 0.0
  %3221 = vadd.xlane.f32.xlu0 %v3220
  %v3222 = vpop.xlane.xlu0 %3221
  %v3223 = vsel %vm110, %v3199, 0.0
  %3224 = vadd.xlane.f32.xlu0 %v3223
  %v3225 = vpop.xlane.xlu0 %3224
  %v3226 = vsel %vm110, %v3200, 0.0
  %3227 = vadd.xlane.f32.xlu0 %v3226
  %v3228 = vpop.xlane.xlu0 %3227
  %v3229 = vsel %vm110, %v3201, 0.0
  %3230 = vadd.xlane.f32.xlu0 %v3229
  %v3231 = vpop.xlane.xlu0 %3230
  %v3232 = vsel %vm110, %v3202, 0.0
  %3233 = vadd.xlane.f32.xlu0 %v3232
  %v3234 = vpop.xlane.xlu0 %3233
  %v3235 = vsel %vm110, %v3203, 0.0
  %3236 = vadd.xlane.f32.xlu0 %v3235
  %v3237 = vpop.xlane.xlu0 %3236
  %v3238 = vsel %vm110, %v3204, 0.0
  %3239 = vadd.xlane.f32.xlu0 %v3238
  %v3240 = vpop.xlane.xlu0 %3239
  %v3241 = vsel %vm110, %v3205, 0.0
  %3242 = vadd.xlane.f32.xlu0 %v3241
  %v3243 = vpop.xlane.xlu0 %3242
  %v3244 = vsel %vm110, %v3206, 0.0
  %3245 = vadd.xlane.f32.xlu0 %v3244
  %v3246 = vpop.xlane.xlu0 %3245
  %v3247 = vsel %vm110, %v3207, 0.0
  %3248 = vadd.xlane.f32.xlu0 %v3247
  %v3249 = vpop.xlane.xlu0 %3248
  %v3250 = vsel %vm110, %v3208, 0.0
  %3251 = vadd.xlane.f32.xlu0 %v3250
  %v3252 = vpop.xlane.xlu0 %3251
  %v3253 = vsel %vm110, %v3209, 0.0
  %3254 = vadd.xlane.f32.xlu0 %v3253
  %v3255 = vpop.xlane.xlu0 %3254
  %v3256 = vsel %vm110, %v3210, 0.0
  %3257 = vadd.xlane.f32.xlu0 %v3256
  %v3258 = vpop.xlane.xlu0 %3257
  %v3259 = vmul.f32 %v3213, %v3162
  %v3260 = vmul.f32 %v3216, %v3162
  %v3261 = vmul.f32 %v3219, %v3162
  %v3262 = vmul.f32 %v3222, %v3162
  %v3263 = vmul.f32 %v3225, %v3162
  %v3264 = vmul.f32 %v3228, %v3162
  %v3265 = vmul.f32 %v3231, %v3162
  %v3266 = vmul.f32 %v3234, %v3162
  %v3267 = vmul.f32 %v3237, %v3162
  %v3268 = vmul.f32 %v3240, %v3162
  %v3269 = vmul.f32 %v3243, %v3162
  %v3270 = vmul.f32 %v3246, %v3162
  %v3271 = vmul.f32 %v3249, %v3162
  %v3272 = vmul.f32 %v3252, %v3162
  %v3273 = vmul.f32 %v3255, %v3162
  %v3274 = vmul.f32 %v3258, %v3162
  %v3275 = vadd.f32 %v3259, 1e-05
  %v3276 = vadd.f32 %v3260, 1e-05
  %v3277 = vadd.f32 %v3261, 1e-05
  %v3278 = vadd.f32 %v3262, 1e-05
  %v3279 = vadd.f32 %v3263, 1e-05
  %v3280 = vadd.f32 %v3264, 1e-05
  %v3281 = vadd.f32 %v3265, 1e-05
  %v3282 = vadd.f32 %v3266, 1e-05
  %v3283 = vadd.f32 %v3267, 1e-05
  %v3284 = vadd.f32 %v3268, 1e-05
  %v3285 = vadd.f32 %v3269, 1e-05
  %v3286 = vadd.f32 %v3270, 1e-05
  %v3287 = vadd.f32 %v3271, 1e-05
  %v3288 = vadd.f32 %v3272, 1e-05
  %v3289 = vadd.f32 %v3273, 1e-05
  %v3290 = vadd.f32 %v3274, 1e-05
  %v3291 = vrsqrt.pop %v3275
  %v3292 = vrsqrt.pop %v3276
  %v3293 = vrsqrt.pop %v3277
  %v3294 = vrsqrt.pop %v3278
  %v3295 = vrsqrt.pop %v3279
  %v3296 = vrsqrt.pop %v3280
  %v3297 = vrsqrt.pop %v3281
  %v3298 = vrsqrt.pop %v3282
  %v3299 = vrsqrt.pop %v3283
  %v3300 = vrsqrt.pop %v3284
  %v3301 = vrsqrt.pop %v3285
  %v3302 = vrsqrt.pop %v3286
  %v3303 = vrsqrt.pop %v3287
  %v3304 = vrsqrt.pop %v3288
  %v3305 = vrsqrt.pop %v3289
  %v3306 = vrsqrt.pop %v3290
  %v3307 = vmul.f32 %v3179, %v3291
  %v3308 = vmul.f32 %v3180, %v3292
  %v3309 = vmul.f32 %v3181, %v3293
  %v3310 = vmul.f32 %v3182, %v3294
  %v3311 = vmul.f32 %v3183, %v3295
  %v3312 = vmul.f32 %v3184, %v3296
  %v3313 = vmul.f32 %v3185, %v3297
  %v3314 = vmul.f32 %v3186, %v3298
  %v3315 = vmul.f32 %v3187, %v3299
  %v3316 = vmul.f32 %v3188, %v3300
  %v3317 = vmul.f32 %v3189, %v3301
  %v3318 = vmul.f32 %v3190, %v3302
  %v3319 = vmul.f32 %v3191, %v3303
  %v3320 = vmul.f32 %v3192, %v3304
  %v3321 = vmul.f32 %v3193, %v3305
  %v3322 = vmul.f32 %v3194, %v3306
  %v3324 = vlaneseq
  %v3325 = vshrl.u32 %v3324, 7
  %v3326 = vsub.s32 0, %v3325
  %v3327 = vrot.slane %v3112, %v3326
  %v3329 = vmul.f32 %v3307, %v3327
  %v3330 = vmul.f32 %v3308, %v3327
  %v3331 = vmul.f32 %v3309, %v3327
  %v3332 = vmul.f32 %v3310, %v3327
  %v3333 = vmul.f32 %v3311, %v3327
  %v3334 = vmul.f32 %v3312, %v3327
  %v3335 = vmul.f32 %v3313, %v3327
  %v3336 = vmul.f32 %v3314, %v3327
  %v3337 = vmul.f32 %v3315, %v3327
  %v3338 = vmul.f32 %v3316, %v3327
  %v3339 = vmul.f32 %v3317, %v3327
  %v3340 = vmul.f32 %v3318, %v3327
  %v3341 = vmul.f32 %v3319, %v3327
  %v3342 = vmul.f32 %v3320, %v3327
  %v3343 = vmul.f32 %v3321, %v3327
  %v3344 = vmul.f32 %v3322, %v3327
  %v3346 = vlaneseq
  %v3347 = vshrl.u32 %v3346, 7
  %v3348 = vsub.s32 0, %v3347
  %v3349 = vrot.slane %v3113, %v3348
  %v3351 = vadd.f32 %v3329, %v3349
  %v3352 = vadd.f32 %v3330, %v3349
  %v3353 = vadd.f32 %v3331, %v3349
  %v3354 = vadd.f32 %v3332, %v3349
  %v3355 = vadd.f32 %v3333, %v3349
  %v3356 = vadd.f32 %v3334, %v3349
  %v3357 = vadd.f32 %v3335, %v3349
  %v3358 = vadd.f32 %v3336, %v3349
  %v3359 = vadd.f32 %v3337, %v3349
  %v3360 = vadd.f32 %v3338, %v3349
  %v3361 = vadd.f32 %v3339, %v3349
  %v3362 = vadd.f32 %v3340, %v3349
  %v3363 = vadd.f32 %v3341, %v3349
  %v3364 = vadd.f32 %v3342, %v3349
  %v3365 = vadd.f32 %v3343, %v3349
  %v3366 = vadd.f32 %v3344, %v3349
  %v3367 = vpack.c.bf16 %v3352, %v3351
  %v3368 = vpack.c.bf16 %v3354, %v3353
  %v3369 = vpack.c.bf16 %v3356, %v3355
  %v3370 = vpack.c.bf16 %v3358, %v3357
  %v3371 = vpack.c.bf16 %v3360, %v3359
  %v3372 = vpack.c.bf16 %v3362, %v3361
  %v3373 = vpack.c.bf16 %v3364, %v3363
  %v3374 = vpack.c.bf16 %v3366, %v3365
  %v3375 = vld [vmem:[%s13] sm:$0xf]
  %v3376 = vld [vmem:[%s13 + $0x4] sm:$0xf]
  %v3377 = vld [vmem:[%s13 + $0x8] sm:$0xf]
  %v3378 = vld [vmem:[%s13 + $0xc] sm:$0xf]
  %v3379 = vld [vmem:[%s14] sm:$0x1]
  %v3381 = vlaneseq
  %v3382 = vshrl.u32 %v3381, 7
  %v3383 = vsub.s32 0, %v3382
  %v3384 = vrot.slane %v3379, %v3383
  %v3390 = vunpack.c.l.b16 %v3375
  %v3391 = vunpack.c.l.b16 %v3376
  %v3392 = vunpack.c.l.b16 %v3377
  %v3393 = vunpack.c.l.b16 %v3378
  %v3394 = vpack.c.b16 %v3391, %v3390
  %v3395 = vpack.c.b16 %v3393, %v3392
  %v3399 = vsel %vm110, %v3367, 0
  %v3402 = vsel %vm110, %v3368, 0
  %v3405 = vsel %vm110, %v3369, 0
  %v3408 = vsel %vm110, %v3370, 0
  %v3411 = vsel %vm110, %v3371, 0
  %v3414 = vsel %vm110, %v3372, 0
  %v3417 = vsel %vm110, %v3373, 0
  %v3420 = vsel %vm110, %v3374, 0
  %3422 = vmatprep.subr.bf16.mxu0 0
  %3423 = vmatpush1.bf16.msra.mxu0 %v3394
  %3424 = vmatprep.subr.bf16.mxu0 0
  %3425 = vmatpush1.bf16.msra.mxu0 %v3395
  %3426 = vmatprep.subr.bf16.mxu0 0
  %3427 = vmatpush1.bf16.msra.mxu0 0
  %3428 = vmatprep.subr.bf16.mxu0 0
  %3429 = vmatpush1.bf16.msra.mxu0 0
  %3430 = vmatprep.subr.bf16.mxu0 0
  %3431 = vmatpush1.bf16.msra.mxu0 0
  %3432 = vmatprep.subr.bf16.mxu0 0
  %3433 = vmatpush1.bf16.msra.mxu0 0
  %3434 = vmatprep.subr.bf16.mxu0 0
  %3435 = vmatpush1.bf16.msra.mxu0 0
  %3436 = vmatprep.subr.bf16.mxu0 0
  %3437 = vmatpush1.bf16.msra.mxu0 0
  %3438 = vmatprep.subr.bf16.mxu0 0
  %3439 = vmatpush1.bf16.msra.mxu0 0
  %3440 = vmatprep.subr.bf16.mxu0 0
  %3441 = vmatpush1.bf16.msra.mxu0 0
  %3442 = vmatprep.subr.bf16.mxu0 0
  %3443 = vmatpush1.bf16.msra.mxu0 0
  %3444 = vmatprep.subr.bf16.mxu0 0
  %3445 = vmatpush1.bf16.msra.mxu0 0
  %3446 = vmatprep.subr.bf16.mxu0 0
  %3447 = vmatpush1.bf16.msra.mxu0 0
  %3448 = vmatprep.subr.bf16.mxu0 0
  %3449 = vmatpush1.bf16.msra.mxu0 0
  %3450 = vmatprep.subr.bf16.mxu0 0
  %3451 = vmatpush1.bf16.msra.mxu0 0
  %3452 = vmatprep.subr.bf16.mxu0 0
  %3453 = vmatpush1.bf16.msra.mxu0 0
  %3454 = vmatprep.mubr.bf16.mxu0 0
  %3455 = vmatmul.mubr.bf16.gmra.mrb[0].mxu0 %v3399
  %v3456 = vpop.f32.mrb[0].mxu0
  %v3457 = vadd.f32 %v3384, %v3456
  %v3458 = vpop.f32.mrb[0].mxu0
  %v3459 = vpop.f32.mrb[0].mxu0
  %v3460 = vadd.f32 %v3384, %v3459
  %v3461 = vpop.f32.mrb[0].mxu0
  %3462 = vmatprep.mubr.bf16.mxu0 0
  %3463 = vmatmul.mubr.bf16.gmra.mrb[0].mxu0 %v3402
  %v3464 = vpop.f32.mrb[0].mxu0
  %v3465 = vadd.f32 %v3384, %v3464
  %v3466 = vpop.f32.mrb[0].mxu0
  %v3467 = vpop.f32.mrb[0].mxu0
  %v3468 = vadd.f32 %v3384, %v3467
  %v3469 = vpop.f32.mrb[0].mxu0
  %3470 = vmatprep.mubr.bf16.mxu0 0
  %3471 = vmatmul.mubr.bf16.gmra.mrb[0].mxu0 %v3405
  %v3472 = vpop.f32.mrb[0].mxu0
  %v3473 = vadd.f32 %v3384, %v3472
  %v3474 = vpop.f32.mrb[0].mxu0
  %v3475 = vpop.f32.mrb[0].mxu0
  %v3476 = vadd.f32 %v3384, %v3475
  %v3477 = vpop.f32.mrb[0].mxu0
  %3478 = vmatprep.mubr.bf16.mxu0 0
  %3479 = vmatmul.mubr.bf16.gmra.mrb[0].mxu0 %v3408
  %v3480 = vpop.f32.mrb[0].mxu0
  %v3481 = vadd.f32 %v3384, %v3480
  %v3482 = vpop.f32.mrb[0].mxu0
  %v3483 = vpop.f32.mrb[0].mxu0
  %v3484 = vadd.f32 %v3384, %v3483
  %v3485 = vpop.f32.mrb[0].mxu0
  %3486 = vmatprep.mubr.bf16.mxu0 0
  %3487 = vmatmul.mubr.bf16.gmra.mrb[0].mxu0 %v3411
  %v3488 = vpop.f32.mrb[0].mxu0
  %v3489 = vadd.f32 %v3384, %v3488
  %v3490 = vpop.f32.mrb[0].mxu0
  %v3491 = vpop.f32.mrb[0].mxu0
  %v3492 = vadd.f32 %v3384, %v3491
  %v3493 = vpop.f32.mrb[0].mxu0
  %3494 = vmatprep.mubr.bf16.mxu0 0
  %3495 = vmatmul.mubr.bf16.gmra.mrb[0].mxu0 %v3414
  %v3496 = vpop.f32.mrb[0].mxu0
  %v3497 = vadd.f32 %v3384, %v3496
  %v3498 = vpop.f32.mrb[0].mxu0
  %v3499 = vpop.f32.mrb[0].mxu0
  %v3500 = vadd.f32 %v3384, %v3499
  %v3501 = vpop.f32.mrb[0].mxu0
  %3502 = vmatprep.mubr.bf16.mxu0 0
  %3503 = vmatmul.mubr.bf16.gmra.mrb[0].mxu0 %v3417
  %v3504 = vpop.f32.mrb[0].mxu0
  %v3505 = vadd.f32 %v3384, %v3504
  %v3506 = vpop.f32.mrb[0].mxu0
  %v3507 = vpop.f32.mrb[0].mxu0
  %v3508 = vadd.f32 %v3384, %v3507
  %v3509 = vpop.f32.mrb[0].mxu0
  %3510 = vmatprep.mubr.bf16.mxu0 0
  %3511 = vmatmul.mubr.bf16.gmra.mrb[0].mxu0 %v3420
  %v3512 = vpop.f32.mrb[0].mxu0
  %v3513 = vadd.f32 %v3384, %v3512
  %v3514 = vpop.f32.mrb[0].mxu0
  %v3515 = vpop.f32.mrb[0].mxu0
  %v3516 = vadd.f32 %v3384, %v3515
  %v3517 = vpop.f32.mrb[0].mxu0
  %3518 = vdwg.mxu0
  %v3519 = vmax.f32 %v3457, 0.0
  %v3520 = vmax.f32 %v3460, 0.0
  %v3521 = vmax.f32 %v3465, 0.0
  %v3522 = vmax.f32 %v3468, 0.0
  %v3523 = vmax.f32 %v3473, 0.0
  %v3524 = vmax.f32 %v3476, 0.0
  %v3525 = vmax.f32 %v3481, 0.0
  %v3526 = vmax.f32 %v3484, 0.0
  %v3527 = vmax.f32 %v3489, 0.0
  %v3528 = vmax.f32 %v3492, 0.0
  %v3529 = vmax.f32 %v3497, 0.0
  %v3530 = vmax.f32 %v3500, 0.0
  %v3531 = vmax.f32 %v3505, 0.0
  %v3532 = vmax.f32 %v3508, 0.0
  %v3533 = vmax.f32 %v3513, 0.0
  %v3534 = vmax.f32 %v3516, 0.0
  %v3535 = vpack.c.bf16 %v3520, %v3519
  %v3536 = vpack.c.bf16 %v3522, %v3521
  %v3537 = vpack.c.bf16 %v3524, %v3523
  %v3538 = vpack.c.bf16 %v3526, %v3525
  %v3539 = vpack.c.bf16 %v3528, %v3527
  %v3540 = vpack.c.bf16 %v3530, %v3529
  %v3541 = vpack.c.bf16 %v3532, %v3531
  %v3542 = vpack.c.bf16 %v3534, %v3533
  %v3543 = vld [vmem:[%s15] sm:$0xf]
  %v3544 = vld [vmem:[%s15 + $0x4] sm:$0xf]
  %v3545 = vld [vmem:[%s15 + $0x8] sm:$0xf]
  %v3546 = vld [vmem:[%s15 + $0xc] sm:$0xf]
  %v3547 = vld [vmem:[%s15 + $0x10] sm:$0xf]
  %v3548 = vld [vmem:[%s15 + $0x14] sm:$0xf]
  %v3549 = vld [vmem:[%s15 + $0x18] sm:$0xf]
  %v3550 = vld [vmem:[%s15 + $0x1c] sm:$0xf]
  %v3551 = vld [vmem:[%s16] sm:$0x1]
  %v3553 = vlaneseq
  %v3554 = vshrl.u32 %v3553, 7
  %v3555 = vsub.s32 0, %v3554
  %v3556 = vrot.slane %v3551, %v3555
  %v3566 = vunpack.c.l.b16 %v3543
  %v3567 = vunpack.c.l.b16 %v3544
  %v3568 = vunpack.c.l.b16 %v3545
  %v3569 = vunpack.c.l.b16 %v3546
  %v3570 = vunpack.c.l.b16 %v3547
  %v3571 = vunpack.c.l.b16 %v3548
  %v3572 = vunpack.c.l.b16 %v3549
  %v3573 = vunpack.c.l.b16 %v3550
  %v3574 = vpack.c.b16 %v3567, %v3566
  %v3575 = vpack.c.b16 %v3569, %v3568
  %v3576 = vpack.c.b16 %v3571, %v3570
  %v3577 = vpack.c.b16 %v3573, %v3572
  %v3583 = vsel %vm312, %v3535, 0
  %v3586 = vsel %vm312, %v3536, 0
  %v3589 = vsel %vm312, %v3537, 0
  %v3592 = vsel %vm312, %v3538, 0
  %v3595 = vsel %vm312, %v3539, 0
  %v3598 = vsel %vm312, %v3540, 0
  %v3601 = vsel %vm312, %v3541, 0
  %v3604 = vsel %vm312, %v3542, 0
  %3606 = vmatprep.subr.bf16.mxu0 0
  %3607 = vmatpush1.bf16.msra.mxu0 %v3574
  %3608 = vmatprep.subr.bf16.mxu0 0
  %3609 = vmatpush1.bf16.msra.mxu0 %v3575
  %3610 = vmatprep.subr.bf16.mxu0 0
  %3611 = vmatpush1.bf16.msra.mxu0 %v3576
  %3612 = vmatprep.subr.bf16.mxu0 0
  %3613 = vmatpush1.bf16.msra.mxu0 %v3577
  %3614 = vmatprep.subr.bf16.mxu0 0
  %3615 = vmatpush1.bf16.msra.mxu0 0
  %3616 = vmatprep.subr.bf16.mxu0 0
  %3617 = vmatpush1.bf16.msra.mxu0 0
  %3618 = vmatprep.subr.bf16.mxu0 0
  %3619 = vmatpush1.bf16.msra.mxu0 0
  %3620 = vmatprep.subr.bf16.mxu0 0
  %3621 = vmatpush1.bf16.msra.mxu0 0
  %3622 = vmatprep.subr.bf16.mxu0 0
  %3623 = vmatpush1.bf16.msra.mxu0 0
  %3624 = vmatprep.subr.bf16.mxu0 0
  %3625 = vmatpush1.bf16.msra.mxu0 0
  %3626 = vmatprep.subr.bf16.mxu0 0
  %3627 = vmatpush1.bf16.msra.mxu0 0
  %3628 = vmatprep.subr.bf16.mxu0 0
  %3629 = vmatpush1.bf16.msra.mxu0 0
  %3630 = vmatprep.subr.bf16.mxu0 0
  %3631 = vmatpush1.bf16.msra.mxu0 0
  %3632 = vmatprep.subr.bf16.mxu0 0
  %3633 = vmatpush1.bf16.msra.mxu0 0
  %3634 = vmatprep.subr.bf16.mxu0 0
  %3635 = vmatpush1.bf16.msra.mxu0 0
  %3636 = vmatprep.subr.bf16.mxu0 0
  %3637 = vmatpush1.bf16.msra.mxu0 0
  %3638 = vmatprep.mubr.bf16.mxu0 0
  %3639 = vmatmul.mubr.bf16.gmra.mrb[0].mxu0 %v3583
  %v3640 = vpop.f32.mrb[0].mxu0
  %v3641 = vadd.f32 %v3556, %v3640
  %v3642 = vpop.f32.mrb[0].mxu0
  %v3643 = vpop.f32.mrb[0].mxu0
  %v3644 = vadd.f32 %v3556, %v3643
  %v3645 = vpop.f32.mrb[0].mxu0
  %3646 = vmatprep.mubr.bf16.mxu0 0
  %3647 = vmatmul.mubr.bf16.gmra.mrb[0].mxu0 %v3586
  %v3648 = vpop.f32.mrb[0].mxu0
  %v3649 = vadd.f32 %v3556, %v3648
  %v3650 = vpop.f32.mrb[0].mxu0
  %v3651 = vpop.f32.mrb[0].mxu0
  %v3652 = vadd.f32 %v3556, %v3651
  %v3653 = vpop.f32.mrb[0].mxu0
  %3654 = vmatprep.mubr.bf16.mxu0 0
  %3655 = vmatmul.mubr.bf16.gmra.mrb[0].mxu0 %v3589
  %v3656 = vpop.f32.mrb[0].mxu0
  %v3657 = vadd.f32 %v3556, %v3656
  %v3658 = vpop.f32.mrb[0].mxu0
  %v3659 = vpop.f32.mrb[0].mxu0
  %v3660 = vadd.f32 %v3556, %v3659
  %v3661 = vpop.f32.mrb[0].mxu0
  %3662 = vmatprep.mubr.bf16.mxu0 0
  %3663 = vmatmul.mubr.bf16.gmra.mrb[0].mxu0 %v3592
  %v3664 = vpop.f32.mrb[0].mxu0
  %v3665 = vadd.f32 %v3556, %v3664
  %v3666 = vpop.f32.mrb[0].mxu0
  %v3667 = vpop.f32.mrb[0].mxu0
  %v3668 = vadd.f32 %v3556, %v3667
  %v3669 = vpop.f32.mrb[0].mxu0
  %3670 = vmatprep.mubr.bf16.mxu0 0
  %3671 = vmatmul.mubr.bf16.gmra.mrb[0].mxu0 %v3595
  %v3672 = vpop.f32.mrb[0].mxu0
  %v3673 = vadd.f32 %v3556, %v3672
  %v3674 = vpop.f32.mrb[0].mxu0
  %v3675 = vpop.f32.mrb[0].mxu0
  %v3676 = vadd.f32 %v3556, %v3675
  %v3677 = vpop.f32.mrb[0].mxu0
  %3678 = vmatprep.mubr.bf16.mxu0 0
  %3679 = vmatmul.mubr.bf16.gmra.mrb[0].mxu0 %v3598
  %v3680 = vpop.f32.mrb[0].mxu0
  %v3681 = vadd.f32 %v3556, %v3680
  %v3682 = vpop.f32.mrb[0].mxu0
  %v3683 = vpop.f32.mrb[0].mxu0
  %v3684 = vadd.f32 %v3556, %v3683
  %v3685 = vpop.f32.mrb[0].mxu0
  %3686 = vmatprep.mubr.bf16.mxu0 0
  %3687 = vmatmul.mubr.bf16.gmra.mrb[0].mxu0 %v3601
  %v3688 = vpop.f32.mrb[0].mxu0
  %v3689 = vadd.f32 %v3556, %v3688
  %v3690 = vpop.f32.mrb[0].mxu0
  %v3691 = vpop.f32.mrb[0].mxu0
  %v3692 = vadd.f32 %v3556, %v3691
  %v3693 = vpop.f32.mrb[0].mxu0
  %3694 = vmatprep.mubr.bf16.mxu0 0
  %3695 = vmatmul.mubr.bf16.gmra.mrb[0].mxu0 %v3604
  %v3696 = vpop.f32.mrb[0].mxu0
  %v3697 = vadd.f32 %v3556, %v3696
  %v3698 = vpop.f32.mrb[0].mxu0
  %v3699 = vpop.f32.mrb[0].mxu0
  %v3700 = vadd.f32 %v3556, %v3699
  %v3701 = vpop.f32.mrb[0].mxu0
  %3702 = vdwg.mxu0
  %v3703 = vadd.f32 %v3351, %v3641
  %v3704 = vadd.f32 %v3352, %v3644
  %v3705 = vadd.f32 %v3353, %v3649
  %v3706 = vadd.f32 %v3354, %v3652
  %v3707 = vadd.f32 %v3355, %v3657
  %v3708 = vadd.f32 %v3356, %v3660
  %v3709 = vadd.f32 %v3357, %v3665
  %v3710 = vadd.f32 %v3358, %v3668
  %v3711 = vadd.f32 %v3359, %v3673
  %v3712 = vadd.f32 %v3360, %v3676
  %v3713 = vadd.f32 %v3361, %v3681
  %v3714 = vadd.f32 %v3362, %v3684
  %v3715 = vadd.f32 %v3363, %v3689
  %v3716 = vadd.f32 %v3364, %v3692
  %v3717 = vadd.f32 %v3365, %v3697
  %v3718 = vadd.f32 %v3366, %v3700
  %v3719 = vld [vmem:[%s17] sm:$0x1]
  %v3720 = vld [vmem:[%s18] sm:$0x1]
  %v3721 = vsel %vm110, %v3703, 0.0
  %3722 = vadd.xlane.f32.xlu0 %v3721
  %v3723 = vpop.xlane.xlu0 %3722
  %v3724 = vsel %vm110, %v3704, 0.0
  %3725 = vadd.xlane.f32.xlu0 %v3724
  %v3726 = vpop.xlane.xlu0 %3725
  %v3727 = vsel %vm110, %v3705, 0.0
  %3728 = vadd.xlane.f32.xlu0 %v3727
  %v3729 = vpop.xlane.xlu0 %3728
  %v3730 = vsel %vm110, %v3706, 0.0
  %3731 = vadd.xlane.f32.xlu0 %v3730
  %v3732 = vpop.xlane.xlu0 %3731
  %v3733 = vsel %vm110, %v3707, 0.0
  %3734 = vadd.xlane.f32.xlu0 %v3733
  %v3735 = vpop.xlane.xlu0 %3734
  %v3736 = vsel %vm110, %v3708, 0.0
  %3737 = vadd.xlane.f32.xlu0 %v3736
  %v3738 = vpop.xlane.xlu0 %3737
  %v3739 = vsel %vm110, %v3709, 0.0
  %3740 = vadd.xlane.f32.xlu0 %v3739
  %v3741 = vpop.xlane.xlu0 %3740
  %v3742 = vsel %vm110, %v3710, 0.0
  %3743 = vadd.xlane.f32.xlu0 %v3742
  %v3744 = vpop.xlane.xlu0 %3743
  %v3745 = vsel %vm110, %v3711, 0.0
  %3746 = vadd.xlane.f32.xlu0 %v3745
  %v3747 = vpop.xlane.xlu0 %3746
  %v3748 = vsel %vm110, %v3712, 0.0
  %3749 = vadd.xlane.f32.xlu0 %v3748
  %v3750 = vpop.xlane.xlu0 %3749
  %v3751 = vsel %vm110, %v3713, 0.0
  %3752 = vadd.xlane.f32.xlu0 %v3751
  %v3753 = vpop.xlane.xlu0 %3752
  %v3754 = vsel %vm110, %v3714, 0.0
  %3755 = vadd.xlane.f32.xlu0 %v3754
  %v3756 = vpop.xlane.xlu0 %3755
  %v3757 = vsel %vm110, %v3715, 0.0
  %3758 = vadd.xlane.f32.xlu0 %v3757
  %v3759 = vpop.xlane.xlu0 %3758
  %v3760 = vsel %vm110, %v3716, 0.0
  %3761 = vadd.xlane.f32.xlu0 %v3760
  %v3762 = vpop.xlane.xlu0 %3761
  %v3763 = vsel %vm110, %v3717, 0.0
  %3764 = vadd.xlane.f32.xlu0 %v3763
  %v3765 = vpop.xlane.xlu0 %3764
  %v3766 = vsel %vm110, %v3718, 0.0
  %3767 = vadd.xlane.f32.xlu0 %v3766
  %v3768 = vpop.xlane.xlu0 %3767
  %v3769 = vmul.f32 %v3723, %v3162
  %v3770 = vmul.f32 %v3726, %v3162
  %v3771 = vmul.f32 %v3729, %v3162
  %v3772 = vmul.f32 %v3732, %v3162
  %v3773 = vmul.f32 %v3735, %v3162
  %v3774 = vmul.f32 %v3738, %v3162
  %v3775 = vmul.f32 %v3741, %v3162
  %v3776 = vmul.f32 %v3744, %v3162
  %v3777 = vmul.f32 %v3747, %v3162
  %v3778 = vmul.f32 %v3750, %v3162
  %v3779 = vmul.f32 %v3753, %v3162
  %v3780 = vmul.f32 %v3756, %v3162
  %v3781 = vmul.f32 %v3759, %v3162
  %v3782 = vmul.f32 %v3762, %v3162
  %v3783 = vmul.f32 %v3765, %v3162
  %v3784 = vmul.f32 %v3768, %v3162
  %v3785 = vsub.f32 %v3703, %v3769
  %v3786 = vsub.f32 %v3704, %v3770
  %v3787 = vsub.f32 %v3705, %v3771
  %v3788 = vsub.f32 %v3706, %v3772
  %v3789 = vsub.f32 %v3707, %v3773
  %v3790 = vsub.f32 %v3708, %v3774
  %v3791 = vsub.f32 %v3709, %v3775
  %v3792 = vsub.f32 %v3710, %v3776
  %v3793 = vsub.f32 %v3711, %v3777
  %v3794 = vsub.f32 %v3712, %v3778
  %v3795 = vsub.f32 %v3713, %v3779
  %v3796 = vsub.f32 %v3714, %v3780
  %v3797 = vsub.f32 %v3715, %v3781
  %v3798 = vsub.f32 %v3716, %v3782
  %v3799 = vsub.f32 %v3717, %v3783
  %v3800 = vsub.f32 %v3718, %v3784
  %v3801 = vmul.f32 %v3785, %v3785
  %v3802 = vmul.f32 %v3786, %v3786
  %v3803 = vmul.f32 %v3787, %v3787
  %v3804 = vmul.f32 %v3788, %v3788
  %v3805 = vmul.f32 %v3789, %v3789
  %v3806 = vmul.f32 %v3790, %v3790
  %v3807 = vmul.f32 %v3791, %v3791
  %v3808 = vmul.f32 %v3792, %v3792
  %v3809 = vmul.f32 %v3793, %v3793
  %v3810 = vmul.f32 %v3794, %v3794
  %v3811 = vmul.f32 %v3795, %v3795
  %v3812 = vmul.f32 %v3796, %v3796
  %v3813 = vmul.f32 %v3797, %v3797
  %v3814 = vmul.f32 %v3798, %v3798
  %v3815 = vmul.f32 %v3799, %v3799
  %v3816 = vmul.f32 %v3800, %v3800
  %v3817 = vsel %vm110, %v3801, 0.0
  %3818 = vadd.xlane.f32.xlu0 %v3817
  %v3819 = vpop.xlane.xlu0 %3818
  %v3820 = vsel %vm110, %v3802, 0.0
  %3821 = vadd.xlane.f32.xlu0 %v3820
  %v3822 = vpop.xlane.xlu0 %3821
  %v3823 = vsel %vm110, %v3803, 0.0
  %3824 = vadd.xlane.f32.xlu0 %v3823
  %v3825 = vpop.xlane.xlu0 %3824
  %v3826 = vsel %vm110, %v3804, 0.0
  %3827 = vadd.xlane.f32.xlu0 %v3826
  %v3828 = vpop.xlane.xlu0 %3827
  %v3829 = vsel %vm110, %v3805, 0.0
  %3830 = vadd.xlane.f32.xlu0 %v3829
  %v3831 = vpop.xlane.xlu0 %3830
  %v3832 = vsel %vm110, %v3806, 0.0
  %3833 = vadd.xlane.f32.xlu0 %v3832
  %v3834 = vpop.xlane.xlu0 %3833
  %v3835 = vsel %vm110, %v3807, 0.0
  %3836 = vadd.xlane.f32.xlu0 %v3835
  %v3837 = vpop.xlane.xlu0 %3836
  %v3838 = vsel %vm110, %v3808, 0.0
  %3839 = vadd.xlane.f32.xlu0 %v3838
  %v3840 = vpop.xlane.xlu0 %3839
  %v3841 = vsel %vm110, %v3809, 0.0
  %3842 = vadd.xlane.f32.xlu0 %v3841
  %v3843 = vpop.xlane.xlu0 %3842
  %v3844 = vsel %vm110, %v3810, 0.0
  %3845 = vadd.xlane.f32.xlu0 %v3844
  %v3846 = vpop.xlane.xlu0 %3845
  %v3847 = vsel %vm110, %v3811, 0.0
  %3848 = vadd.xlane.f32.xlu0 %v3847
  %v3849 = vpop.xlane.xlu0 %3848
  %v3850 = vsel %vm110, %v3812, 0.0
  %3851 = vadd.xlane.f32.xlu0 %v3850
  %v3852 = vpop.xlane.xlu0 %3851
  %v3853 = vsel %vm110, %v3813, 0.0
  %3854 = vadd.xlane.f32.xlu0 %v3853
  %v3855 = vpop.xlane.xlu0 %3854
  %v3856 = vsel %vm110, %v3814, 0.0
  %3857 = vadd.xlane.f32.xlu0 %v3856
  %v3858 = vpop.xlane.xlu0 %3857
  %v3859 = vsel %vm110, %v3815, 0.0
  %3860 = vadd.xlane.f32.xlu0 %v3859
  %v3861 = vpop.xlane.xlu0 %3860
  %v3862 = vsel %vm110, %v3816, 0.0
  %3863 = vadd.xlane.f32.xlu0 %v3862
  %v3864 = vpop.xlane.xlu0 %3863
  %v3865 = vmul.f32 %v3819, %v3162
  %v3866 = vmul.f32 %v3822, %v3162
  %v3867 = vmul.f32 %v3825, %v3162
  %v3868 = vmul.f32 %v3828, %v3162
  %v3869 = vmul.f32 %v3831, %v3162
  %v3870 = vmul.f32 %v3834, %v3162
  %v3871 = vmul.f32 %v3837, %v3162
  %v3872 = vmul.f32 %v3840, %v3162
  %v3873 = vmul.f32 %v3843, %v3162
  %v3874 = vmul.f32 %v3846, %v3162
  %v3875 = vmul.f32 %v3849, %v3162
  %v3876 = vmul.f32 %v3852, %v3162
  %v3877 = vmul.f32 %v3855, %v3162
  %v3878 = vmul.f32 %v3858, %v3162
  %v3879 = vmul.f32 %v3861, %v3162
  %v3880 = vmul.f32 %v3864, %v3162
  %v3881 = vadd.f32 %v3865, 1e-05
  %v3882 = vadd.f32 %v3866, 1e-05
  %v3883 = vadd.f32 %v3867, 1e-05
  %v3884 = vadd.f32 %v3868, 1e-05
  %v3885 = vadd.f32 %v3869, 1e-05
  %v3886 = vadd.f32 %v3870, 1e-05
  %v3887 = vadd.f32 %v3871, 1e-05
  %v3888 = vadd.f32 %v3872, 1e-05
  %v3889 = vadd.f32 %v3873, 1e-05
  %v3890 = vadd.f32 %v3874, 1e-05
  %v3891 = vadd.f32 %v3875, 1e-05
  %v3892 = vadd.f32 %v3876, 1e-05
  %v3893 = vadd.f32 %v3877, 1e-05
  %v3894 = vadd.f32 %v3878, 1e-05
  %v3895 = vadd.f32 %v3879, 1e-05
  %v3896 = vadd.f32 %v3880, 1e-05
  %v3897 = vrsqrt.pop %v3881
  %v3898 = vrsqrt.pop %v3882
  %v3899 = vrsqrt.pop %v3883
  %v3900 = vrsqrt.pop %v3884
  %v3901 = vrsqrt.pop %v3885
  %v3902 = vrsqrt.pop %v3886
  %v3903 = vrsqrt.pop %v3887
  %v3904 = vrsqrt.pop %v3888
  %v3905 = vrsqrt.pop %v3889
  %v3906 = vrsqrt.pop %v3890
  %v3907 = vrsqrt.pop %v3891
  %v3908 = vrsqrt.pop %v3892
  %v3909 = vrsqrt.pop %v3893
  %v3910 = vrsqrt.pop %v3894
  %v3911 = vrsqrt.pop %v3895
  %v3912 = vrsqrt.pop %v3896
  %v3913 = vmul.f32 %v3785, %v3897
  %v3914 = vmul.f32 %v3786, %v3898
  %v3915 = vmul.f32 %v3787, %v3899
  %v3916 = vmul.f32 %v3788, %v3900
  %v3917 = vmul.f32 %v3789, %v3901
  %v3918 = vmul.f32 %v3790, %v3902
  %v3919 = vmul.f32 %v3791, %v3903
  %v3920 = vmul.f32 %v3792, %v3904
  %v3921 = vmul.f32 %v3793, %v3905
  %v3922 = vmul.f32 %v3794, %v3906
  %v3923 = vmul.f32 %v3795, %v3907
  %v3924 = vmul.f32 %v3796, %v3908
  %v3925 = vmul.f32 %v3797, %v3909
  %v3926 = vmul.f32 %v3798, %v3910
  %v3927 = vmul.f32 %v3799, %v3911
  %v3928 = vmul.f32 %v3800, %v3912
  %v3930 = vlaneseq
  %v3931 = vshrl.u32 %v3930, 7
  %v3932 = vsub.s32 0, %v3931
  %v3933 = vrot.slane %v3719, %v3932
  %v3935 = vmul.f32 %v3913, %v3933
  %v3936 = vmul.f32 %v3914, %v3933
  %v3937 = vmul.f32 %v3915, %v3933
  %v3938 = vmul.f32 %v3916, %v3933
  %v3939 = vmul.f32 %v3917, %v3933
  %v3940 = vmul.f32 %v3918, %v3933
  %v3941 = vmul.f32 %v3919, %v3933
  %v3942 = vmul.f32 %v3920, %v3933
  %v3943 = vmul.f32 %v3921, %v3933
  %v3944 = vmul.f32 %v3922, %v3933
  %v3945 = vmul.f32 %v3923, %v3933
  %v3946 = vmul.f32 %v3924, %v3933
  %v3947 = vmul.f32 %v3925, %v3933
  %v3948 = vmul.f32 %v3926, %v3933
  %v3949 = vmul.f32 %v3927, %v3933
  %v3950 = vmul.f32 %v3928, %v3933
  %v3952 = vlaneseq
  %v3953 = vshrl.u32 %v3952, 7
  %v3954 = vsub.s32 0, %v3953
  %v3955 = vrot.slane %v3720, %v3954
  %v3957 = vadd.f32 %v3935, %v3955
  %v3958 = vadd.f32 %v3936, %v3955
  %v3959 = vadd.f32 %v3937, %v3955
  %v3960 = vadd.f32 %v3938, %v3955
  %v3961 = vadd.f32 %v3939, %v3955
  %v3962 = vadd.f32 %v3940, %v3955
  %v3963 = vadd.f32 %v3941, %v3955
  %v3964 = vadd.f32 %v3942, %v3955
  %v3965 = vadd.f32 %v3943, %v3955
  %v3966 = vadd.f32 %v3944, %v3955
  %v3967 = vadd.f32 %v3945, %v3955
  %v3968 = vadd.f32 %v3946, %v3955
  %v3969 = vadd.f32 %v3947, %v3955
  %v3970 = vadd.f32 %v3948, %v3955
  %v3971 = vadd.f32 %v3949, %v3955
  %v3972 = vadd.f32 %v3950, %v3955
  %3973 = vst.msk [vmem:[%s19] sm:$0xff] %vm110, %v3957
  %3974 = vst.msk [vmem:[%s19 + $0x8] sm:$0xff] %vm110, %v3958
  %3975 = vst.msk [vmem:[%s19 + $0x10] sm:$0xff] %vm110, %v3959
  %3976 = vst.msk [vmem:[%s19 + $0x18] sm:$0xff] %vm110, %v3960
  %3977 = vst.msk [vmem:[%s19 + $0x20] sm:$0xff] %vm110, %v3961
  %3978 = vst.msk [vmem:[%s19 + $0x28] sm:$0xff] %vm110, %v3962
  %3979 = vst.msk [vmem:[%s19 + $0x30] sm:$0xff] %vm110, %v3963
  %3980 = vst.msk [vmem:[%s19 + $0x38] sm:$0xff] %vm110, %v3964
  %3981 = vst.msk [vmem:[%s19 + $0x58] sm:$0xff] %vm110, %v3965
  %3982 = vst.msk [vmem:[%s19 + $0x60] sm:$0xff] %vm110, %v3966
  %3983 = vst.msk [vmem:[%s19 + $0x68] sm:$0xff] %vm110, %v3967
  %3984 = vst.msk [vmem:[%s19 + $0x70] sm:$0xff] %vm110, %v3968
  %3985 = vst.msk [vmem:[%s19 + $0x78] sm:$0xff] %vm110, %v3969
  %3986 = vst.msk [vmem:[%s19 + $0x80] sm:$0xff] %vm110, %v3970
  %3987 = vst.msk [vmem:[%s19 + $0x88] sm:$0xff] %vm110, %v3971
  %3988 = vst.msk [vmem:[%s19 + $0x90] sm:$0xff] %vm110, %v3972
  %v3989 = vld [vmem:[%s0 + $0x40] sm:$0xff]
  %v3990 = vld [vmem:[%s0 + $0x48] sm:$0xff]
  %v3991 = vld [vmem:[%s0 + $0x98] sm:$0xff]
  %v3992 = vld [vmem:[%s0 + $0xa0] sm:$0xff]
  %v3993 = vld [vmem:[%s1 + $0x40] sm:$0xff]
  %v3994 = vld [vmem:[%s1 + $0x48] sm:$0xff]
  %v3995 = vld [vmem:[%s1 + $0x98] sm:$0xff]
  %v3996 = vld [vmem:[%s1 + $0xa0] sm:$0xff]
  %v3997 = vadd.f32 %v3989, %v3993
  %v3998 = vadd.f32 %v3990, %v3994
  %v3999 = vadd.f32 %v3991, %v3995
  %v4000 = vadd.f32 %v3992, %v3996
  %v4001 = vmul.f32 %v1913, %v3025
  %v4002 = vmul.f32 %v1916, %v3025
  %v4003 = vmul.f32 %v1921, %v3029
  %v4004 = vmul.f32 %v1924, %v3029
  %v4005 = vadd.f32 %v3997, %v4001
  %v4006 = vadd.f32 %v3998, %v4002
  %v4007 = vadd.f32 %v3999, %v4003
  %v4008 = vadd.f32 %v4000, %v4004
  %v4009 = vld [vmem:[%s11] sm:$0x1]
  %v4010 = vld [vmem:[%s12] sm:$0x1]
  %v4011 = vsel %vm110, %v4005, 0.0
  %4012 = vadd.xlane.f32.xlu0 %v4011
  %v4013 = vpop.xlane.xlu0 %4012
  %v4014 = vsel %vm110, %v4006, 0.0
  %4015 = vadd.xlane.f32.xlu0 %v4014
  %v4016 = vpop.xlane.xlu0 %4015
  %v4017 = vsel %vm110, %v4007, 0.0
  %4018 = vadd.xlane.f32.xlu0 %v4017
  %v4019 = vpop.xlane.xlu0 %4018
  %v4020 = vsel %vm110, %v4008, 0.0
  %4021 = vadd.xlane.f32.xlu0 %v4020
  %v4022 = vpop.xlane.xlu0 %4021
  %v4023 = vmul.f32 %v4013, %v3162
  %v4024 = vmul.f32 %v4016, %v3162
  %v4025 = vmul.f32 %v4019, %v3162
  %v4026 = vmul.f32 %v4022, %v3162
  %v4027 = vsub.f32 %v4005, %v4023
  %v4028 = vsub.f32 %v4006, %v4024
  %v4029 = vsub.f32 %v4007, %v4025
  %v4030 = vsub.f32 %v4008, %v4026
  %v4031 = vmul.f32 %v4027, %v4027
  %v4032 = vmul.f32 %v4028, %v4028
  %v4033 = vmul.f32 %v4029, %v4029
  %v4034 = vmul.f32 %v4030, %v4030
  %v4035 = vsel %vm110, %v4031, 0.0
  %4036 = vadd.xlane.f32.xlu0 %v4035
  %v4037 = vpop.xlane.xlu0 %4036
  %v4038 = vsel %vm110, %v4032, 0.0
  %4039 = vadd.xlane.f32.xlu0 %v4038
  %v4040 = vpop.xlane.xlu0 %4039
  %v4041 = vsel %vm110, %v4033, 0.0
  %4042 = vadd.xlane.f32.xlu0 %v4041
  %v4043 = vpop.xlane.xlu0 %4042
  %v4044 = vsel %vm110, %v4034, 0.0
  %4045 = vadd.xlane.f32.xlu0 %v4044
  %v4046 = vpop.xlane.xlu0 %4045
  %v4047 = vmul.f32 %v4037, %v3162
  %v4048 = vmul.f32 %v4040, %v3162
  %v4049 = vmul.f32 %v4043, %v3162
  %v4050 = vmul.f32 %v4046, %v3162
  %v4051 = vadd.f32 %v4047, 1e-05
  %v4052 = vadd.f32 %v4048, 1e-05
  %v4053 = vadd.f32 %v4049, 1e-05
  %v4054 = vadd.f32 %v4050, 1e-05
  %v4055 = vrsqrt.pop %v4051
  %v4056 = vrsqrt.pop %v4052
  %v4057 = vrsqrt.pop %v4053
  %v4058 = vrsqrt.pop %v4054
  %v4059 = vmul.f32 %v4027, %v4055
  %v4060 = vmul.f32 %v4028, %v4056
  %v4061 = vmul.f32 %v4029, %v4057
  %v4062 = vmul.f32 %v4030, %v4058
  %v4064 = vlaneseq
  %v4065 = vshrl.u32 %v4064, 7
  %v4066 = vsub.s32 0, %v4065
  %v4067 = vrot.slane %v4009, %v4066
  %v4069 = vmul.f32 %v4059, %v4067
  %v4070 = vmul.f32 %v4060, %v4067
  %v4071 = vmul.f32 %v4061, %v4067
  %v4072 = vmul.f32 %v4062, %v4067
  %v4074 = vlaneseq
  %v4075 = vshrl.u32 %v4074, 7
  %v4076 = vsub.s32 0, %v4075
  %v4077 = vrot.slane %v4010, %v4076
  %v4079 = vadd.f32 %v4069, %v4077
  %v4080 = vadd.f32 %v4070, %v4077
  %v4081 = vadd.f32 %v4071, %v4077
  %v4082 = vadd.f32 %v4072, %v4077
  %v4083 = vpack.c.bf16 %v4080, %v4079
  %v4084 = vpack.c.bf16 %v4082, %v4081
  %v4085 = vld [vmem:[%s13] sm:$0xf]
  %v4086 = vld [vmem:[%s13 + $0x4] sm:$0xf]
  %v4087 = vld [vmem:[%s13 + $0x8] sm:$0xf]
  %v4088 = vld [vmem:[%s13 + $0xc] sm:$0xf]
  %v4089 = vld [vmem:[%s14] sm:$0x1]
  %v4091 = vlaneseq
  %v4092 = vshrl.u32 %v4091, 7
  %v4093 = vsub.s32 0, %v4092
  %v4094 = vrot.slane %v4089, %v4093
  %v4100 = vunpack.c.l.b16 %v4085
  %v4101 = vunpack.c.l.b16 %v4086
  %v4102 = vunpack.c.l.b16 %v4087
  %v4103 = vunpack.c.l.b16 %v4088
  %v4104 = vpack.c.b16 %v4101, %v4100
  %v4105 = vpack.c.b16 %v4103, %v4102
  %v4109 = vsel %vm110, %v4083, 0
  %v4112 = vsel %vm110, %v4084, 0
  %4114 = vmatprep.subr.bf16.mxu0 0
  %4115 = vmatpush1.bf16.msra.mxu0 %v4104
  %4116 = vmatprep.subr.bf16.mxu0 0
  %4117 = vmatpush1.bf16.msra.mxu0 %v4105
  %4118 = vmatprep.subr.bf16.mxu0 0
  %4119 = vmatpush1.bf16.msra.mxu0 0
  %4120 = vmatprep.subr.bf16.mxu0 0
  %4121 = vmatpush1.bf16.msra.mxu0 0
  %4122 = vmatprep.subr.bf16.mxu0 0
  %4123 = vmatpush1.bf16.msra.mxu0 0
  %4124 = vmatprep.subr.bf16.mxu0 0
  %4125 = vmatpush1.bf16.msra.mxu0 0
  %4126 = vmatprep.subr.bf16.mxu0 0
  %4127 = vmatpush1.bf16.msra.mxu0 0
  %4128 = vmatprep.subr.bf16.mxu0 0
  %4129 = vmatpush1.bf16.msra.mxu0 0
  %4130 = vmatprep.subr.bf16.mxu0 0
  %4131 = vmatpush1.bf16.msra.mxu0 0
  %4132 = vmatprep.subr.bf16.mxu0 0
  %4133 = vmatpush1.bf16.msra.mxu0 0
  %4134 = vmatprep.subr.bf16.mxu0 0
  %4135 = vmatpush1.bf16.msra.mxu0 0
  %4136 = vmatprep.subr.bf16.mxu0 0
  %4137 = vmatpush1.bf16.msra.mxu0 0
  %4138 = vmatprep.subr.bf16.mxu0 0
  %4139 = vmatpush1.bf16.msra.mxu0 0
  %4140 = vmatprep.subr.bf16.mxu0 0
  %4141 = vmatpush1.bf16.msra.mxu0 0
  %4142 = vmatprep.subr.bf16.mxu0 0
  %4143 = vmatpush1.bf16.msra.mxu0 0
  %4144 = vmatprep.subr.bf16.mxu0 0
  %4145 = vmatpush1.bf16.msra.mxu0 0
  %4146 = vmatprep.mubr.bf16.mxu0 0
  %4147 = vmatmul.mubr.bf16.gmra.mrb[0].mxu0 %v4109
  %v4148 = vpop.f32.mrb[0].mxu0
  %v4149 = vadd.f32 %v4094, %v4148
  %v4150 = vpop.f32.mrb[0].mxu0
  %v4151 = vpop.f32.mrb[0].mxu0
  %v4152 = vadd.f32 %v4094, %v4151
  %v4153 = vpop.f32.mrb[0].mxu0
  %4154 = vmatprep.mubr.bf16.mxu0 0
  %4155 = vmatmul.mubr.bf16.gmra.mrb[0].mxu0 %v4112
  %v4156 = vpop.f32.mrb[0].mxu0
  %v4157 = vadd.f32 %v4094, %v4156
  %v4158 = vpop.f32.mrb[0].mxu0
  %v4159 = vpop.f32.mrb[0].mxu0
  %v4160 = vadd.f32 %v4094, %v4159
  %v4161 = vpop.f32.mrb[0].mxu0
  %4162 = vdwg.mxu0
  %v4163 = vmax.f32 %v4149, 0.0
  %v4164 = vmax.f32 %v4152, 0.0
  %v4165 = vmax.f32 %v4157, 0.0
  %v4166 = vmax.f32 %v4160, 0.0
  %v4167 = vpack.c.bf16 %v4164, %v4163
  %v4168 = vpack.c.bf16 %v4166, %v4165
  %v4169 = vld [vmem:[%s15] sm:$0xf]
  %v4170 = vld [vmem:[%s15 + $0x4] sm:$0xf]
  %v4171 = vld [vmem:[%s15 + $0x8] sm:$0xf]
  %v4172 = vld [vmem:[%s15 + $0xc] sm:$0xf]
  %v4173 = vld [vmem:[%s15 + $0x10] sm:$0xf]
  %v4174 = vld [vmem:[%s15 + $0x14] sm:$0xf]
  %v4175 = vld [vmem:[%s15 + $0x18] sm:$0xf]
  %v4176 = vld [vmem:[%s15 + $0x1c] sm:$0xf]
  %v4177 = vld [vmem:[%s16] sm:$0x1]
  %v4179 = vlaneseq
  %v4180 = vshrl.u32 %v4179, 7
  %v4181 = vsub.s32 0, %v4180
  %v4182 = vrot.slane %v4177, %v4181
  %v4192 = vunpack.c.l.b16 %v4169
  %v4193 = vunpack.c.l.b16 %v4170
  %v4194 = vunpack.c.l.b16 %v4171
  %v4195 = vunpack.c.l.b16 %v4172
  %v4196 = vunpack.c.l.b16 %v4173
  %v4197 = vunpack.c.l.b16 %v4174
  %v4198 = vunpack.c.l.b16 %v4175
  %v4199 = vunpack.c.l.b16 %v4176
  %v4200 = vpack.c.b16 %v4193, %v4192
  %v4201 = vpack.c.b16 %v4195, %v4194
  %v4202 = vpack.c.b16 %v4197, %v4196
  %v4203 = vpack.c.b16 %v4199, %v4198
  %v4209 = vsel %vm312, %v4167, 0
  %v4212 = vsel %vm312, %v4168, 0
  %4214 = vmatprep.subr.bf16.mxu0 0
  %4215 = vmatpush1.bf16.msra.mxu0 %v4200
  %4216 = vmatprep.subr.bf16.mxu0 0
  %4217 = vmatpush1.bf16.msra.mxu0 %v4201
  %4218 = vmatprep.subr.bf16.mxu0 0
  %4219 = vmatpush1.bf16.msra.mxu0 %v4202
  %4220 = vmatprep.subr.bf16.mxu0 0
  %4221 = vmatpush1.bf16.msra.mxu0 %v4203
  %4222 = vmatprep.subr.bf16.mxu0 0
  %4223 = vmatpush1.bf16.msra.mxu0 0
  %4224 = vmatprep.subr.bf16.mxu0 0
  %4225 = vmatpush1.bf16.msra.mxu0 0
  %4226 = vmatprep.subr.bf16.mxu0 0
  %4227 = vmatpush1.bf16.msra.mxu0 0
  %4228 = vmatprep.subr.bf16.mxu0 0
  %4229 = vmatpush1.bf16.msra.mxu0 0
  %4230 = vmatprep.subr.bf16.mxu0 0
  %4231 = vmatpush1.bf16.msra.mxu0 0
  %4232 = vmatprep.subr.bf16.mxu0 0
  %4233 = vmatpush1.bf16.msra.mxu0 0
  %4234 = vmatprep.subr.bf16.mxu0 0
  %4235 = vmatpush1.bf16.msra.mxu0 0
  %4236 = vmatprep.subr.bf16.mxu0 0
  %4237 = vmatpush1.bf16.msra.mxu0 0
  %4238 = vmatprep.subr.bf16.mxu0 0
  %4239 = vmatpush1.bf16.msra.mxu0 0
  %4240 = vmatprep.subr.bf16.mxu0 0
  %4241 = vmatpush1.bf16.msra.mxu0 0
  %4242 = vmatprep.subr.bf16.mxu0 0
  %4243 = vmatpush1.bf16.msra.mxu0 0
  %4244 = vmatprep.subr.bf16.mxu0 0
  %4245 = vmatpush1.bf16.msra.mxu0 0
  %4246 = vmatprep.mubr.bf16.mxu0 0
  %4247 = vmatmul.mubr.bf16.gmra.mrb[0].mxu0 %v4209
  %v4248 = vpop.f32.mrb[0].mxu0
  %v4249 = vadd.f32 %v4182, %v4248
  %v4250 = vpop.f32.mrb[0].mxu0
  %v4251 = vpop.f32.mrb[0].mxu0
  %v4252 = vadd.f32 %v4182, %v4251
  %v4253 = vpop.f32.mrb[0].mxu0
  %4254 = vmatprep.mubr.bf16.mxu0 0
  %4255 = vmatmul.mubr.bf16.gmra.mrb[0].mxu0 %v4212
  %v4256 = vpop.f32.mrb[0].mxu0
  %v4257 = vadd.f32 %v4182, %v4256
  %v4258 = vpop.f32.mrb[0].mxu0
  %v4259 = vpop.f32.mrb[0].mxu0
  %v4260 = vadd.f32 %v4182, %v4259
  %v4261 = vpop.f32.mrb[0].mxu0
  %4262 = vdwg.mxu0
  %v4263 = vadd.f32 %v4079, %v4249
  %v4264 = vadd.f32 %v4080, %v4252
  %v4265 = vadd.f32 %v4081, %v4257
  %v4266 = vadd.f32 %v4082, %v4260
  %v4267 = vld [vmem:[%s17] sm:$0x1]
  %v4268 = vld [vmem:[%s18] sm:$0x1]
  %v4269 = vsel %vm110, %v4263, 0.0
  %4270 = vadd.xlane.f32.xlu0 %v4269
  %v4271 = vpop.xlane.xlu0 %4270
  %v4272 = vsel %vm110, %v4264, 0.0
  %4273 = vadd.xlane.f32.xlu0 %v4272
  %v4274 = vpop.xlane.xlu0 %4273
  %v4275 = vsel %vm110, %v4265, 0.0
  %4276 = vadd.xlane.f32.xlu0 %v4275
  %v4277 = vpop.xlane.xlu0 %4276
  %v4278 = vsel %vm110, %v4266, 0.0
  %4279 = vadd.xlane.f32.xlu0 %v4278
  %v4280 = vpop.xlane.xlu0 %4279
  %v4281 = vmul.f32 %v4271, %v3162
  %v4282 = vmul.f32 %v4274, %v3162
  %v4283 = vmul.f32 %v4277, %v3162
  %v4284 = vmul.f32 %v4280, %v3162
  %v4285 = vsub.f32 %v4263, %v4281
  %v4286 = vsub.f32 %v4264, %v4282
  %v4287 = vsub.f32 %v4265, %v4283
  %v4288 = vsub.f32 %v4266, %v4284
  %v4289 = vmul.f32 %v4285, %v4285
  %v4290 = vmul.f32 %v4286, %v4286
  %v4291 = vmul.f32 %v4287, %v4287
  %v4292 = vmul.f32 %v4288, %v4288
  %v4293 = vsel %vm110, %v4289, 0.0
  %4294 = vadd.xlane.f32.xlu0 %v4293
  %v4295 = vpop.xlane.xlu0 %4294
  %v4296 = vsel %vm110, %v4290, 0.0
  %4297 = vadd.xlane.f32.xlu0 %v4296
  %v4298 = vpop.xlane.xlu0 %4297
  %v4299 = vsel %vm110, %v4291, 0.0
  %4300 = vadd.xlane.f32.xlu0 %v4299
  %v4301 = vpop.xlane.xlu0 %4300
  %v4302 = vsel %vm110, %v4292, 0.0
  %4303 = vadd.xlane.f32.xlu0 %v4302
  %v4304 = vpop.xlane.xlu0 %4303
  %v4305 = vmul.f32 %v4295, %v3162
  %v4306 = vmul.f32 %v4298, %v3162
  %v4307 = vmul.f32 %v4301, %v3162
  %v4308 = vmul.f32 %v4304, %v3162
  %v4309 = vadd.f32 %v4305, 1e-05
  %v4310 = vadd.f32 %v4306, 1e-05
  %v4311 = vadd.f32 %v4307, 1e-05
  %v4312 = vadd.f32 %v4308, 1e-05
  %v4313 = vrsqrt.pop %v4309
  %v4314 = vrsqrt.pop %v4310
  %v4315 = vrsqrt.pop %v4311
  %v4316 = vrsqrt.pop %v4312
  %v4317 = vmul.f32 %v4285, %v4313
  %v4318 = vmul.f32 %v4286, %v4314
  %v4319 = vmul.f32 %v4287, %v4315
  %v4320 = vmul.f32 %v4288, %v4316
  %v4322 = vlaneseq
  %v4323 = vshrl.u32 %v4322, 7
  %v4324 = vsub.s32 0, %v4323
  %v4325 = vrot.slane %v4267, %v4324
  %v4327 = vmul.f32 %v4317, %v4325
  %v4328 = vmul.f32 %v4318, %v4325
  %v4329 = vmul.f32 %v4319, %v4325
  %v4330 = vmul.f32 %v4320, %v4325
  %v4332 = vlaneseq
  %v4333 = vshrl.u32 %v4332, 7
  %v4334 = vsub.s32 0, %v4333
  %v4335 = vrot.slane %v4268, %v4334
  %v4337 = vadd.f32 %v4327, %v4335
  %v4338 = vadd.f32 %v4328, %v4335
  %v4339 = vadd.f32 %v4329, %v4335
  %v4340 = vadd.f32 %v4330, %v4335
  %4341 = vst.msk [vmem:[%s19 + $0x40] sm:$0xff] %vm110, %v4337
  %4342 = vst.msk [vmem:[%s19 + $0x48] sm:$0xff] %vm110, %v4338
  %4343 = vst.msk [vmem:[%s19 + $0x98] sm:$0xff] %vm110, %v4339
  %4344 = vst.msk [vmem:[%s19 + $0xa0] sm:$0xff] %vm110, %v4340
  %v4345 = vld [vmem:[%s0 + $0x50] sm:$0xf]
  %v4346 = vld [vmem:[%s0 + $0xa8] sm:$0xf]
  %v4347 = vld [vmem:[%s1 + $0x50] sm:$0xf]
  %v4348 = vld [vmem:[%s1 + $0xa8] sm:$0xf]
  %v4349 = vadd.f32 %v4345, %v4347
  %v4350 = vadd.f32 %v4346, %v4348
  %v4351 = vmul.f32 %v2444, %v3025
  %v4352 = vmul.f32 %v2450, %v3029
  %v4353 = vadd.f32 %v4349, %v4351
  %v4354 = vadd.f32 %v4350, %v4352
  %v4355 = vld [vmem:[%s11] sm:$0x1]
  %v4356 = vld [vmem:[%s12] sm:$0x1]
  %v4357 = vsel %vm2452, %v4353, 0.0
  %4358 = vadd.xlane.f32.xlu0 %v4357
  %v4359 = vpop.xlane.xlu0 %4358
  %v4360 = vsel %vm2452, %v4354, 0.0
  %4361 = vadd.xlane.f32.xlu0 %v4360
  %v4362 = vpop.xlane.xlu0 %4361
  %v4363 = vmul.f32 %v4359, %v3162
  %v4364 = vmul.f32 %v4362, %v3162
  %v4365 = vsub.f32 %v4353, %v4363
  %v4366 = vsub.f32 %v4354, %v4364
  %v4367 = vmul.f32 %v4365, %v4365
  %v4368 = vmul.f32 %v4366, %v4366
  %v4369 = vsel %vm2452, %v4367, 0.0
  %4370 = vadd.xlane.f32.xlu0 %v4369
  %v4371 = vpop.xlane.xlu0 %4370
  %v4372 = vsel %vm2452, %v4368, 0.0
  %4373 = vadd.xlane.f32.xlu0 %v4372
  %v4374 = vpop.xlane.xlu0 %4373
  %v4375 = vmul.f32 %v4371, %v3162
  %v4376 = vmul.f32 %v4374, %v3162
  %v4377 = vadd.f32 %v4375, 1e-05
  %v4378 = vadd.f32 %v4376, 1e-05
  %v4379 = vrsqrt.pop %v4377
  %v4380 = vrsqrt.pop %v4378
  %v4381 = vmul.f32 %v4365, %v4379
  %v4382 = vmul.f32 %v4366, %v4380
  %v4384 = vlaneseq
  %v4385 = vshrl.u32 %v4384, 7
  %v4386 = vsub.s32 0, %v4385
  %v4387 = vrot.slane %v4355, %v4386
  %v4389 = vmul.f32 %v4381, %v4387
  %v4390 = vmul.f32 %v4382, %v4387
  %v4392 = vlaneseq
  %v4393 = vshrl.u32 %v4392, 7
  %v4394 = vsub.s32 0, %v4393
  %v4395 = vrot.slane %v4356, %v4394
  %v4397 = vadd.f32 %v4389, %v4395
  %v4398 = vadd.f32 %v4390, %v4395
  %v4401 = vcombine.low %v4397, %v4398
  %v4403 = vpack.c.bf16 %v4401, %v4401
  %v4404 = vld [vmem:[%s13] sm:$0xf]
  %v4405 = vld [vmem:[%s13 + $0x4] sm:$0xf]
  %v4406 = vld [vmem:[%s13 + $0x8] sm:$0xf]
  %v4407 = vld [vmem:[%s13 + $0xc] sm:$0xf]
  %v4408 = vld [vmem:[%s14] sm:$0x1]
  %v4410 = vlaneseq
  %v4411 = vshrl.u32 %v4410, 7
  %v4412 = vsub.s32 0, %v4411
  %v4413 = vrot.slane %v4408, %v4412
  %v4419 = vunpack.c.l.b16 %v4404
  %v4420 = vunpack.c.l.b16 %v4405
  %v4421 = vunpack.c.l.b16 %v4406
  %v4422 = vunpack.c.l.b16 %v4407
  %v4423 = vpack.c.b16 %v4420, %v4419
  %v4424 = vpack.c.b16 %v4422, %v4421
  %v4428 = vsel %vm110, %v4403, 0
  %4430 = vmatprep.subr.bf16.mxu0 0
  %4431 = vmatpush1.bf16.msra.mxu0 %v4423
  %4432 = vmatprep.subr.bf16.mxu0 0
  %4433 = vmatpush1.bf16.msra.mxu0 %v4424
  %4434 = vmatprep.subr.bf16.mxu0 0
  %4435 = vmatpush1.bf16.msra.mxu0 0
  %4436 = vmatprep.subr.bf16.mxu0 0
  %4437 = vmatpush1.bf16.msra.mxu0 0
  %4438 = vmatprep.subr.bf16.mxu0 0
  %4439 = vmatpush1.bf16.msra.mxu0 0
  %4440 = vmatprep.subr.bf16.mxu0 0
  %4441 = vmatpush1.bf16.msra.mxu0 0
  %4442 = vmatprep.subr.bf16.mxu0 0
  %4443 = vmatpush1.bf16.msra.mxu0 0
  %4444 = vmatprep.subr.bf16.mxu0 0
  %4445 = vmatpush1.bf16.msra.mxu0 0
  %4446 = vmatprep.subr.bf16.mxu0 0
  %4447 = vmatpush1.bf16.msra.mxu0 0
  %4448 = vmatprep.subr.bf16.mxu0 0
  %4449 = vmatpush1.bf16.msra.mxu0 0
  %4450 = vmatprep.subr.bf16.mxu0 0
  %4451 = vmatpush1.bf16.msra.mxu0 0
  %4452 = vmatprep.subr.bf16.mxu0 0
  %4453 = vmatpush1.bf16.msra.mxu0 0
  %4454 = vmatprep.subr.bf16.mxu0 0
  %4455 = vmatpush1.bf16.msra.mxu0 0
  %4456 = vmatprep.subr.bf16.mxu0 0
  %4457 = vmatpush1.bf16.msra.mxu0 0
  %4458 = vmatprep.subr.bf16.mxu0 0
  %4459 = vmatpush1.bf16.msra.mxu0 0
  %4460 = vmatprep.subr.bf16.mxu0 0
  %4461 = vmatpush1.bf16.msra.mxu0 0
  %4462 = vmatprep.mubr.bf16.mxu0 0
  %4463 = vmatmul.mubr.bf16.gmra.mrb[0].mxu0 %v4428
  %v4464 = vpop.f32.mrb[0].mxu0
  %v4465 = vadd.f32 %v4413, %v4464
  %v4466 = vpop.f32.mrb[0].mxu0
  %v4467 = vpop.f32.mrb[0].mxu0
  %v4468 = vpop.f32.mrb[0].mxu0
  %4469 = vdwg.mxu0
  %v4470 = vmax.f32 %v4465, 0.0
  %v4471 = vpack.c.bf16 %v4470, %v4470
  %v4472 = vld [vmem:[%s15] sm:$0xf]
  %v4473 = vld [vmem:[%s15 + $0x4] sm:$0xf]
  %v4474 = vld [vmem:[%s15 + $0x8] sm:$0xf]
  %v4475 = vld [vmem:[%s15 + $0xc] sm:$0xf]
  %v4476 = vld [vmem:[%s15 + $0x10] sm:$0xf]
  %v4477 = vld [vmem:[%s15 + $0x14] sm:$0xf]
  %v4478 = vld [vmem:[%s15 + $0x18] sm:$0xf]
  %v4479 = vld [vmem:[%s15 + $0x1c] sm:$0xf]
  %v4480 = vld [vmem:[%s16] sm:$0x1]
  %v4482 = vlaneseq
  %v4483 = vshrl.u32 %v4482, 7
  %v4484 = vsub.s32 0, %v4483
  %v4485 = vrot.slane %v4480, %v4484
  %v4495 = vunpack.c.l.b16 %v4472
  %v4496 = vunpack.c.l.b16 %v4473
  %v4497 = vunpack.c.l.b16 %v4474
  %v4498 = vunpack.c.l.b16 %v4475
  %v4499 = vunpack.c.l.b16 %v4476
  %v4500 = vunpack.c.l.b16 %v4477
  %v4501 = vunpack.c.l.b16 %v4478
  %v4502 = vunpack.c.l.b16 %v4479
  %v4503 = vpack.c.b16 %v4496, %v4495
  %v4504 = vpack.c.b16 %v4498, %v4497
  %v4505 = vpack.c.b16 %v4500, %v4499
  %v4506 = vpack.c.b16 %v4502, %v4501
  %v4512 = vsel %vm312, %v4471, 0
  %4514 = vmatprep.subr.bf16.mxu0 0
  %4515 = vmatpush1.bf16.msra.mxu0 %v4503
  %4516 = vmatprep.subr.bf16.mxu0 0
  %4517 = vmatpush1.bf16.msra.mxu0 %v4504
  %4518 = vmatprep.subr.bf16.mxu0 0
  %4519 = vmatpush1.bf16.msra.mxu0 %v4505
  %4520 = vmatprep.subr.bf16.mxu0 0
  %4521 = vmatpush1.bf16.msra.mxu0 %v4506
  %4522 = vmatprep.subr.bf16.mxu0 0
  %4523 = vmatpush1.bf16.msra.mxu0 0
  %4524 = vmatprep.subr.bf16.mxu0 0
  %4525 = vmatpush1.bf16.msra.mxu0 0
  %4526 = vmatprep.subr.bf16.mxu0 0
  %4527 = vmatpush1.bf16.msra.mxu0 0
  %4528 = vmatprep.subr.bf16.mxu0 0
  %4529 = vmatpush1.bf16.msra.mxu0 0
  %4530 = vmatprep.subr.bf16.mxu0 0
  %4531 = vmatpush1.bf16.msra.mxu0 0
  %4532 = vmatprep.subr.bf16.mxu0 0
  %4533 = vmatpush1.bf16.msra.mxu0 0
  %4534 = vmatprep.subr.bf16.mxu0 0
  %4535 = vmatpush1.bf16.msra.mxu0 0
  %4536 = vmatprep.subr.bf16.mxu0 0
  %4537 = vmatpush1.bf16.msra.mxu0 0
  %4538 = vmatprep.subr.bf16.mxu0 0
  %4539 = vmatpush1.bf16.msra.mxu0 0
  %4540 = vmatprep.subr.bf16.mxu0 0
  %4541 = vmatpush1.bf16.msra.mxu0 0
  %4542 = vmatprep.subr.bf16.mxu0 0
  %4543 = vmatpush1.bf16.msra.mxu0 0
  %4544 = vmatprep.subr.bf16.mxu0 0
  %4545 = vmatpush1.bf16.msra.mxu0 0
  %4546 = vmatprep.mubr.bf16.mxu0 0
  %4547 = vmatmul.mubr.bf16.gmra.mrb[0].mxu0 %v4512
  %v4548 = vpop.f32.mrb[0].mxu0
  %v4549 = vadd.f32 %v4485, %v4548
  %v4550 = vpop.f32.mrb[0].mxu0
  %v4551 = vpop.f32.mrb[0].mxu0
  %v4552 = vpop.f32.mrb[0].mxu0
  %4553 = vdwg.mxu0
  %v4555 = vcombine.high %v4549, %v4549
  %v4557 = vadd.f32 %v4397, %v4549
  %v4558 = vadd.f32 %v4398, %v4555
  %v4559 = vld [vmem:[%s17] sm:$0x1]
  %v4560 = vld [vmem:[%s18] sm:$0x1]
  %v4563 = vcombine.low %v4557, %v4558
  %v4565 = vsel %vm110, %v4563, 0.0
  %4566 = vadd.xlane.f32.xlu0 %v4565
  %v4567 = vpop.xlane.xlu0 %4566
  %v4568 = vmul.f32 %v4567, %v3162
  %v4571 = vunpack.c.l.s4 839922192
  %v4572 = vunpack.c.0.s8 %v4571
  %v4573 = vlaneseq
  %v4574 = vshrl.u32 %v4573, 7
  %v4575 = vsub.s32 %v4572, %v4574
  %v4576 = vrot.slane %v4568, %v4575
  %v4578 = vunpack.c.l.s4 1985246804
  %v4579 = vunpack.c.0.s8 %v4578
  %v4580 = vlaneseq
  %v4581 = vshrl.u32 %v4580, 7
  %v4582 = vsub.s32 %v4579, %v4581
  %v4583 = vrot.slane %v4568, %v4582
  %v4586 = vsub.f32 %v4557, %v4576
  %v4587 = vsub.f32 %v4558, %v4583
  %v4588 = vmul.f32 %v4586, %v4586
  %v4589 = vmul.f32 %v4587, %v4587
  %v4592 = vcombine.low %v4588, %v4589
  %v4594 = vsel %vm110, %v4592, 0.0
  %4595 = vadd.xlane.f32.xlu0 %v4594
  %v4596 = vpop.xlane.xlu0 %4595
  %v4597 = vmul.f32 %v4596, %v3162
  %v4598 = vadd.f32 %v4597, 1e-05
  %v4599 = vrsqrt.pop %v4598
  %v4602 = vunpack.c.l.s4 839922192
  %v4603 = vunpack.c.0.s8 %v4602
  %v4604 = vlaneseq
  %v4605 = vshrl.u32 %v4604, 7
  %v4606 = vsub.s32 %v4603, %v4605
  %v4607 = vrot.slane %v4599, %v4606
  %v4609 = vunpack.c.l.s4 1985246804
  %v4610 = vunpack.c.0.s8 %v4609
  %v4611 = vlaneseq
  %v4612 = vshrl.u32 %v4611, 7
  %v4613 = vsub.s32 %v4610, %v4612
  %v4614 = vrot.slane %v4599, %v4613
  %v4617 = vmul.f32 %v4586, %v4607
  %v4618 = vmul.f32 %v4587, %v4614
  %v4620 = vlaneseq
  %v4621 = vshrl.u32 %v4620, 7
  %v4622 = vsub.s32 0, %v4621
  %v4623 = vrot.slane %v4559, %v4622
  %v4625 = vcombine.high %v4623, %v4623
  %v4627 = vmul.f32 %v4617, %v4623
  %v4628 = vmul.f32 %v4618, %v4625
  %v4630 = vlaneseq
  %v4631 = vshrl.u32 %v4630, 7
  %v4632 = vsub.s32 0, %v4631
  %v4633 = vrot.slane %v4560, %v4632
  %v4635 = vcombine.high %v4633, %v4633
  %v4637 = vadd.f32 %v4627, %v4633
  %v4638 = vadd.f32 %v4628, %v4635
  %4639 = vst.msk [vmem:[%s19 + $0x50] sm:$0xf] %vm2452, %v4637
  %4640 = vst.msk [vmem:[%s19 + $0xa8] sm:$0xf] %vm2452, %v4638
  %v4641 = vld [vmem:[%s0 + $0x54] sm:$0xf]
  %v4642 = vld [vmem:[%s0 + $0xac] sm:$0xf]
  %v4643 = vld [vmem:[%s1 + $0x54] sm:$0xf]
  %v4644 = vld [vmem:[%s1 + $0xac] sm:$0xf]
  %v4645 = vadd.f32 %v4641, %v4643
  %v4646 = vadd.f32 %v4642, %v4644
  %v4647 = vmul.f32 %v2965, %v3025
  %v4648 = vmul.f32 %v2971, %v3029
  %v4649 = vadd.f32 %v4645, %v4647
  %v4650 = vadd.f32 %v4646, %v4648
  %v4651 = vld [vmem:[%s11] sm:$0x1]
  %v4652 = vld [vmem:[%s12] sm:$0x1]
  %v4653 = vsel %vm2452, %v4649, 0.0
  %4654 = vadd.xlane.f32.xlu0 %v4653
  %v4655 = vpop.xlane.xlu0 %4654
  %v4656 = vsel %vm2452, %v4650, 0.0
  %4657 = vadd.xlane.f32.xlu0 %v4656
  %v4658 = vpop.xlane.xlu0 %4657
  %v4659 = vmul.f32 %v4655, %v3162
  %v4660 = vmul.f32 %v4658, %v3162
  %v4661 = vsub.f32 %v4649, %v4659
  %v4662 = vsub.f32 %v4650, %v4660
  %v4663 = vmul.f32 %v4661, %v4661
  %v4664 = vmul.f32 %v4662, %v4662
  %v4665 = vsel %vm2452, %v4663, 0.0
  %4666 = vadd.xlane.f32.xlu0 %v4665
  %v4667 = vpop.xlane.xlu0 %4666
  %v4668 = vsel %vm2452, %v4664, 0.0
  %4669 = vadd.xlane.f32.xlu0 %v4668
  %v4670 = vpop.xlane.xlu0 %4669
  %v4671 = vmul.f32 %v4667, %v3162
  %v4672 = vmul.f32 %v4670, %v3162
  %v4673 = vadd.f32 %v4671, 1e-05
  %v4674 = vadd.f32 %v4672, 1e-05
  %v4675 = vrsqrt.pop %v4673
  %v4676 = vrsqrt.pop %v4674
  %v4677 = vmul.f32 %v4661, %v4675
  %v4678 = vmul.f32 %v4662, %v4676
  %v4680 = vlaneseq
  %v4681 = vshrl.u32 %v4680, 7
  %v4682 = vsub.s32 0, %v4681
  %v4683 = vrot.slane %v4651, %v4682
  %v4685 = vmul.f32 %v4677, %v4683
  %v4686 = vmul.f32 %v4678, %v4683
  %v4688 = vlaneseq
  %v4689 = vshrl.u32 %v4688, 7
  %v4690 = vsub.s32 0, %v4689
  %v4691 = vrot.slane %v4652, %v4690
  %v4693 = vadd.f32 %v4685, %v4691
  %v4694 = vadd.f32 %v4686, %v4691
  %v4697 = vcombine.low %v4693, %v4694
  %v4699 = vpack.c.bf16 %v4697, %v4697
  %v4700 = vld [vmem:[%s13] sm:$0xf]
  %v4701 = vld [vmem:[%s13 + $0x4] sm:$0xf]
  %v4702 = vld [vmem:[%s13 + $0x8] sm:$0xf]
  %v4703 = vld [vmem:[%s13 + $0xc] sm:$0xf]
  %v4704 = vld [vmem:[%s14] sm:$0x1]
  %v4706 = vlaneseq
  %v4707 = vshrl.u32 %v4706, 7
  %v4708 = vsub.s32 0, %v4707
  %v4709 = vrot.slane %v4704, %v4708
  %v4715 = vunpack.c.l.b16 %v4700
  %v4716 = vunpack.c.l.b16 %v4701
  %v4717 = vunpack.c.l.b16 %v4702
  %v4718 = vunpack.c.l.b16 %v4703
  %v4719 = vpack.c.b16 %v4716, %v4715
  %v4720 = vpack.c.b16 %v4718, %v4717
  %v4724 = vsel %vm110, %v4699, 0
  %4726 = vmatprep.subr.bf16.mxu0 0
  %4727 = vmatpush1.bf16.msra.mxu0 %v4719
  %4728 = vmatprep.subr.bf16.mxu0 0
  %4729 = vmatpush1.bf16.msra.mxu0 %v4720
  %4730 = vmatprep.subr.bf16.mxu0 0
  %4731 = vmatpush1.bf16.msra.mxu0 0
  %4732 = vmatprep.subr.bf16.mxu0 0
  %4733 = vmatpush1.bf16.msra.mxu0 0
  %4734 = vmatprep.subr.bf16.mxu0 0
  %4735 = vmatpush1.bf16.msra.mxu0 0
  %4736 = vmatprep.subr.bf16.mxu0 0
  %4737 = vmatpush1.bf16.msra.mxu0 0
  %4738 = vmatprep.subr.bf16.mxu0 0
  %4739 = vmatpush1.bf16.msra.mxu0 0
  %4740 = vmatprep.subr.bf16.mxu0 0
  %4741 = vmatpush1.bf16.msra.mxu0 0
  %4742 = vmatprep.subr.bf16.mxu0 0
  %4743 = vmatpush1.bf16.msra.mxu0 0
  %4744 = vmatprep.subr.bf16.mxu0 0
  %4745 = vmatpush1.bf16.msra.mxu0 0
  %4746 = vmatprep.subr.bf16.mxu0 0
  %4747 = vmatpush1.bf16.msra.mxu0 0
  %4748 = vmatprep.subr.bf16.mxu0 0
  %4749 = vmatpush1.bf16.msra.mxu0 0
  %4750 = vmatprep.subr.bf16.mxu0 0
  %4751 = vmatpush1.bf16.msra.mxu0 0
  %4752 = vmatprep.subr.bf16.mxu0 0
  %4753 = vmatpush1.bf16.msra.mxu0 0
  %4754 = vmatprep.subr.bf16.mxu0 0
  %4755 = vmatpush1.bf16.msra.mxu0 0
  %4756 = vmatprep.subr.bf16.mxu0 0
  %4757 = vmatpush1.bf16.msra.mxu0 0
  %4758 = vmatprep.mubr.bf16.mxu0 0
  %4759 = vmatmul.mubr.bf16.gmra.mrb[0].mxu0 %v4724
  %v4760 = vpop.f32.mrb[0].mxu0
  %v4761 = vadd.f32 %v4709, %v4760
  %v4762 = vpop.f32.mrb[0].mxu0
  %v4763 = vpop.f32.mrb[0].mxu0
  %v4764 = vpop.f32.mrb[0].mxu0
  %4765 = vdwg.mxu0
  %v4766 = vmax.f32 %v4761, 0.0
  %v4767 = vpack.c.bf16 %v4766, %v4766
  %v4768 = vld [vmem:[%s15] sm:$0xf]
  %v4769 = vld [vmem:[%s15 + $0x4] sm:$0xf]
  %v4770 = vld [vmem:[%s15 + $0x8] sm:$0xf]
  %v4771 = vld [vmem:[%s15 + $0xc] sm:$0xf]
  %v4772 = vld [vmem:[%s15 + $0x10] sm:$0xf]
  %v4773 = vld [vmem:[%s15 + $0x14] sm:$0xf]
  %v4774 = vld [vmem:[%s15 + $0x18] sm:$0xf]
  %v4775 = vld [vmem:[%s15 + $0x1c] sm:$0xf]
  %v4776 = vld [vmem:[%s16] sm:$0x1]
  %v4778 = vlaneseq
  %v4779 = vshrl.u32 %v4778, 7
  %v4780 = vsub.s32 0, %v4779
  %v4781 = vrot.slane %v4776, %v4780
  %v4791 = vunpack.c.l.b16 %v4768
  %v4792 = vunpack.c.l.b16 %v4769
  %v4793 = vunpack.c.l.b16 %v4770
  %v4794 = vunpack.c.l.b16 %v4771
  %v4795 = vunpack.c.l.b16 %v4772
  %v4796 = vunpack.c.l.b16 %v4773
  %v4797 = vunpack.c.l.b16 %v4774
  %v4798 = vunpack.c.l.b16 %v4775
  %v4799 = vpack.c.b16 %v4792, %v4791
  %v4800 = vpack.c.b16 %v4794, %v4793
  %v4801 = vpack.c.b16 %v4796, %v4795
  %v4802 = vpack.c.b16 %v4798, %v4797
  %v4808 = vsel %vm312, %v4767, 0
  %4810 = vmatprep.subr.bf16.mxu0 0
  %4811 = vmatpush1.bf16.msra.mxu0 %v4799
  %4812 = vmatprep.subr.bf16.mxu0 0
  %4813 = vmatpush1.bf16.msra.mxu0 %v4800
  %4814 = vmatprep.subr.bf16.mxu0 0
  %4815 = vmatpush1.bf16.msra.mxu0 %v4801
  %4816 = vmatprep.subr.bf16.mxu0 0
  %4817 = vmatpush1.bf16.msra.mxu0 %v4802
  %4818 = vmatprep.subr.bf16.mxu0 0
  %4819 = vmatpush1.bf16.msra.mxu0 0
  %4820 = vmatprep.subr.bf16.mxu0 0
  %4821 = vmatpush1.bf16.msra.mxu0 0
  %4822 = vmatprep.subr.bf16.mxu0 0
  %4823 = vmatpush1.bf16.msra.mxu0 0
  %4824 = vmatprep.subr.bf16.mxu0 0
  %4825 = vmatpush1.bf16.msra.mxu0 0
  %4826 = vmatprep.subr.bf16.mxu0 0
  %4827 = vmatpush1.bf16.msra.mxu0 0
  %4828 = vmatprep.subr.bf16.mxu0 0
  %4829 = vmatpush1.bf16.msra.mxu0 0
  %4830 = vmatprep.subr.bf16.mxu0 0
  %4831 = vmatpush1.bf16.msra.mxu0 0
  %4832 = vmatprep.subr.bf16.mxu0 0
  %4833 = vmatpush1.bf16.msra.mxu0 0
  %4834 = vmatprep.subr.bf16.mxu0 0
  %4835 = vmatpush1.bf16.msra.mxu0 0
  %4836 = vmatprep.subr.bf16.mxu0 0
  %4837 = vmatpush1.bf16.msra.mxu0 0
  %4838 = vmatprep.subr.bf16.mxu0 0
  %4839 = vmatpush1.bf16.msra.mxu0 0
  %4840 = vmatprep.subr.bf16.mxu0 0
  %4841 = vmatpush1.bf16.msra.mxu0 0
  %4842 = vmatprep.mubr.bf16.mxu0 0
  %4843 = vmatmul.mubr.bf16.gmra.mrb[0].mxu0 %v4808
  %v4844 = vpop.f32.mrb[0].mxu0
  %v4845 = vadd.f32 %v4781, %v4844
  %v4846 = vpop.f32.mrb[0].mxu0
  %v4847 = vpop.f32.mrb[0].mxu0
  %v4848 = vpop.f32.mrb[0].mxu0
  %4849 = vdwg.mxu0
  %v4851 = vcombine.high %v4845, %v4845
  %v4853 = vadd.f32 %v4693, %v4845
  %v4854 = vadd.f32 %v4694, %v4851
  %v4855 = vld [vmem:[%s17] sm:$0x1]
  %v4856 = vld [vmem:[%s18] sm:$0x1]
  %v4859 = vcombine.low %v4853, %v4854
  %v4861 = vsel %vm110, %v4859, 0.0
  %4862 = vadd.xlane.f32.xlu0 %v4861
  %v4863 = vpop.xlane.xlu0 %4862
  %v4864 = vmul.f32 %v4863, %v3162
  %v4867 = vunpack.c.l.s4 839922192
  %v4868 = vunpack.c.0.s8 %v4867
  %v4869 = vlaneseq
  %v4870 = vshrl.u32 %v4869, 7
  %v4871 = vsub.s32 %v4868, %v4870
  %v4872 = vrot.slane %v4864, %v4871
  %v4874 = vunpack.c.l.s4 1985246804
  %v4875 = vunpack.c.0.s8 %v4874
  %v4876 = vlaneseq
  %v4877 = vshrl.u32 %v4876, 7
  %v4878 = vsub.s32 %v4875, %v4877
  %v4879 = vrot.slane %v4864, %v4878
  %v4882 = vsub.f32 %v4853, %v4872
  %v4883 = vsub.f32 %v4854, %v4879
  %v4884 = vmul.f32 %v4882, %v4882
  %v4885 = vmul.f32 %v4883, %v4883
  %v4888 = vcombine.low %v4884, %v4885
  %v4890 = vsel %vm110, %v4888, 0.0
  %4891 = vadd.xlane.f32.xlu0 %v4890
  %v4892 = vpop.xlane.xlu0 %4891
  %v4893 = vmul.f32 %v4892, %v3162
  %v4894 = vadd.f32 %v4893, 1e-05
  %v4895 = vrsqrt.pop %v4894
  %v4898 = vunpack.c.l.s4 839922192
  %v4899 = vunpack.c.0.s8 %v4898
  %v4900 = vlaneseq
  %v4901 = vshrl.u32 %v4900, 7
  %v4902 = vsub.s32 %v4899, %v4901
  %v4903 = vrot.slane %v4895, %v4902
  %v4905 = vunpack.c.l.s4 1985246804
  %v4906 = vunpack.c.0.s8 %v4905
  %v4907 = vlaneseq
  %v4908 = vshrl.u32 %v4907, 7
  %v4909 = vsub.s32 %v4906, %v4908
  %v4910 = vrot.slane %v4895, %v4909
  %v4913 = vmul.f32 %v4882, %v4903
  %v4914 = vmul.f32 %v4883, %v4910
  %v4916 = vlaneseq
  %v4917 = vshrl.u32 %v4916, 7
  %v4918 = vsub.s32 0, %v4917
  %v4919 = vrot.slane %v4855, %v4918
  %v4921 = vcombine.high %v4919, %v4919
  %v4923 = vmul.f32 %v4913, %v4919
  %v4924 = vmul.f32 %v4914, %v4921
  %v4926 = vlaneseq
  %v4927 = vshrl.u32 %v4926, 7
  %v4928 = vsub.s32 0, %v4927
  %v4929 = vrot.slane %v4856, %v4928
  %v4931 = vcombine.high %v4929, %v4929
  %v4933 = vadd.f32 %v4923, %v4929
  %v4934 = vadd.f32 %v4924, %v4931
  %4935 = vst.msk [vmem:[%s19 + $0x54] sm:$0xf] %vm2452, %v4933
  %4936 = vst.msk [vmem:[%s19 + $0xac] sm:$0xf] %vm2452, %v4934
  // Predicated region
  $region78: #{tpu_custom_call.1} parent=0 // pred_check
    _
  $region79: #{tpu_custom_call.1} parent=0 // pred_check_branch
    %4938 = sbr.rel (0) target = $region81
  $region80: #{tpu_custom_call.1} parent=0 // pred_region
    _
  $region81: #{tpu_custom_call.1} parent=0 // pred_fallthru
    _
  // Predicated region
  $region82: #{tpu_custom_call.1} parent=0 // pred_check
    _
  $region83: #{tpu_custom_call.1} parent=0 // pred_check_branch
    %4940 = sbr.rel (0) target = $region85
  $region84: #{tpu_custom_call.1} parent=0 // pred_region
    _
  $region85: #{tpu_custom_call.1} parent=0 // pred_fallthru
    _

</llo_original>
